<compile_context>
chip_gen: v5e
topology: v5e:2x2
jax: 0.10.0
libtpu: 0.0.40
codegen_flags: <defaults>
</compile_context>

<pallas_src>
import jax
import jax.numpy as jnp
from jax.experimental import pallas as pl
from jax.experimental.pallas import tpu as pltpu


def _prelu(x, a):
    return jnp.where(x >= 0, x, a * x)


def _make_skblock_kernel(H, W, C):
    HW = H * W

    def kernel(x_ref, wconv_ref, wdw_ref, wfc1_ref, wfc2_ref,
               wt1_ref, wdn_ref, wup_ref, wt2_ref,
               alphas_ref, o_ref, pad_ref):
        f32 = jnp.float32
        inv_hw = 1.0 / float(HW)

        # halo scratch: zero border; interior rewritten per conv stage
        pad_ref[...] = jnp.zeros((H + 4, W + 4, C), f32)

        def set_interior(v):                       # v: (H, W, C) f32
            pad_ref[2:2 + H, 2:2 + W, :] = v

        def conv3x3(i, alpha):
            # Dense 3x3, padding 1: one im2col matmul (HW, 9C) @ (9C, C).
            # Window order (dy, dx, ci) matches the (3,3,Ci,Co) -> (9Ci, Co)
            # weight packing done in the wrapper.
            wins = []
            for dy in range(3):
                for dx in range(3):
                    wins.append(pad_ref[1 + dy:1 + dy + H,
                                        1 + dx:1 + dx + W, :])
            patch = jnp.concatenate(wins, axis=-1).reshape(HW, 9 * C)
            return _prelu(jnp.dot(patch, wconv_ref[i],
                                  preferred_element_type=f32), alpha)

        def depthwise3x3(i, off, step, alpha):
            # groups == channels: 9 broadcast multiply-adds on the VPU;
            # no patch concat, no MXU matmul.
            taps = wdw_ref[i]                                       # (9, C)
            acc = None
            for dy in range(3):
                for dx in range(3):
                    t = dy * 3 + dx
                    r = off + step * dy
                    c = off + step * dx
                    win = pad_ref[r:r + H, c:c + W, :]              # (H, W, C)
                    term = win * taps[t:t + 1, :].reshape(1, 1, C)
                    acc = term if acc is None else acc + term
            return _prelu(acc.reshape(HW, C), alpha)

        def channel_attention(v, i, a1, a2):
            # trans1 (1x1) + PReLU
            ex = _prelu(jnp.dot(v, wt1_ref[i], preferred_element_type=f32), a1)
            # channel squeeze (global average pool)
            sq = jnp.sum(ex, axis=0, keepdims=True) * inv_hw        # (1, 4C)
            # conv_down + SiLU
            dn = jnp.dot(sq, wdn_ref[i], preferred_element_type=f32)
            dn = dn * jax.nn.sigmoid(dn)
            # conv_up + sigmoid gate
            up = jnp.dot(dn, wup_ref[i], preferred_element_type=f32)
            gate = jax.nn.sigmoid(up)                               # (1, 4C)
            # trans2 (1x1) + PReLU on gated activations
            return _prelu(jnp.dot(ex * gate, wt2_ref[i],
                                  preferred_element_type=f32), a2)

        a_c1 = alphas_ref[0]      # conv1 PReLU
        a_c2 = alphas_ref[1]      # conv2 PReLU
        a_b0 = alphas_ref[2]      # SK branch 0 PReLU
        a_b1 = alphas_ref[3]      # SK branch 1 PReLU
        a_fc = alphas_ref[4]      # SK fc1 PReLU
        a_s1 = alphas_ref[5]      # SKLayer CA trans1 PReLU
        a_s2 = alphas_ref[6]      # SKLayer CA trans2 PReLU
        a_k1 = alphas_ref[7]      # SKBlock CA trans1 PReLU
        a_k2 = alphas_ref[8]      # SKBlock CA trans2 PReLU

        x3d = x_ref[0].astype(f32)                 # (H, W, C); also residual

        # conv1 + PReLU, conv2 + PReLU (single im2col matmul each)
        set_interior(x3d)
        out = conv3x3(0, a_c1)                                      # (HW, C)
        set_interior(out.reshape(H, W, C))
        out = conv3x3(1, a_c2)

        # ---- SKLayer: dilation-1 and dilation-2 depthwise branches ----
        set_interior(out.reshape(H, W, C))
        b0 = depthwise3x3(0, 1, 1, a_b0)           # dilation 1, padding 1
        b1 = depthwise3x3(1, 0, 2, a_b1)           # dilation 2, padding 2
        # global pool of U = b0 + b1 (U itself never materialized)
        s = (jnp.sum(b0, axis=0, keepdims=True)
             + jnp.sum(b1, axis=0, keepdims=True)) * inv_hw         # (1, C)
        z = _prelu(jnp.dot(s, wfc1_ref[...],
                           preferred_element_type=f32), a_fc)       # (1, d)
        ab = jnp.dot(z, wfc2_ref[...], preferred_element_type=f32)  # (1, 2C)
        l0 = ab[:, :C]
        l1 = ab[:, C:]
        m = jnp.maximum(l0, l1)
        e0 = jnp.exp(l0 - m)
        e1 = jnp.exp(l1 - m)
        inv = 1.0 / (e0 + e1)
        v = b0 * (e0 * inv) + b1 * (e1 * inv)                       # (HW, C)

        # SKLayer.channelAttention, then SKBlock.channelAttention
        v = channel_attention(v, 0, a_s1, a_s2)
        v = channel_attention(v, 1, a_k1, a_k2)

        # residual add (original block input) and single output store
        v = v + x3d.reshape(HW, C)
        o_ref[0] = v.reshape(H, W, C).astype(o_ref.dtype)

    return kernel


def skblock_forward(x_nchw, p):
    """SKBlock forward (NCHW in / NCHW out) as one fused Pallas TPU kernel."""
    B, C, H, W = x_nchw.shape
    d = p["sk_fc1"].shape[1]

    x_nhwc = jnp.transpose(x_nchw, (0, 2, 3, 1))          # boundary transpose

    # --- pre-pack weights into a few stacked, kernel-ready arrays ---------
    wconv = jnp.stack([p["conv1_w"].reshape(9 * C, C),
                       p["conv2_w"].reshape(9 * C, C)])            # (2, 9C, C)
    wdw = jnp.stack([p["sk_dw0"].reshape(9, C),
                     p["sk_dw1"].reshape(9, C)])                   # (2, 9, C)
    wt1 = jnp.stack([p["ca_sk"]["wt1"], p["ca_blk"]["wt1"]])       # (2, C, 4C)
    wdn = jnp.stack([p["ca_sk"]["wdn"], p["ca_blk"]["wdn"]])       # (2, 4C, C/4)
    wup = jnp.stack([p["ca_sk"]["wup"], p["ca_blk"]["wup"]])       # (2, C/4, 4C)
    wt2 = jnp.stack([p["ca_sk"]["wt2"], p["ca_blk"]["wt2"]])       # (2, 4C, C)

    alphas = jnp.concatenate([
        p["alpha1"], p["alpha2"], p["sk_alphas"],
        p["ca_sk"]["alphas"], p["ca_blk"]["alphas"]]).astype(jnp.float32)

    def wspec(shape):
        n = len(shape)
        return pl.BlockSpec(shape, lambda b, _n=n: (0,) * _n)

    out = pl.pallas_call(
        _make_skblock_kernel(H, W, C),
        out_shape=jax.ShapeDtypeStruct((B, H, W, C), x_nchw.dtype),
        grid=(B,),
        in_specs=[
            pl.BlockSpec((1, H, W, C), lambda b: (b, 0, 0, 0)),   # x
            wspec((2, 9 * C, C)),         # conv1 / conv2 (stacked)
            wspec((2, 9, C)),             # SK depthwise taps (dil 1, dil 2)
            wspec((C, d)),                # SK fc1
            wspec((d, 2 * C)),            # SK fc2 (M=2 merged in columns)
            wspec((2, C, 4 * C)),         # CA trans1     (SKLayer, SKBlock)
            wspec((2, 4 * C, C // 4)),    # CA conv_down  (SKLayer, SKBlock)
            wspec((2, C // 4, 4 * C)),    # CA conv_up    (SKLayer, SKBlock)
            wspec((2, 4 * C, C)),         # CA trans2     (SKLayer, SKBlock)
            pl.BlockSpec(memory_space=pltpu.MemorySpace.SMEM),    # PReLU alphas
        ],
        out_specs=pl.BlockSpec((1, H, W, C), lambda b: (b, 0, 0, 0)),
        scratch_shapes=[pltpu.VMEM((H + 4, W + 4, C), jnp.float32)],
        compiler_params=pltpu.CompilerParams(
            dimension_semantics=("parallel",)),
    )(x_nhwc, wconv, wdw, p["sk_fc1"], p["sk_fc2"], wt1, wdn, wup, wt2, alphas)
    return jnp.transpose(out, (0, 3, 1, 2))               # NHWC -> NCHW


# ------------------------------------------------------------------------
# Parameter init (deterministic, PyTorch-like uniform(+-1/sqrt(fan_in)))
# ------------------------------------------------------------------------
def init_params(key, C):
    assert C % 32 == 0 and C % 4 == 0, "SKLayer uses groups=32"
    assert C == 32, "depthwise path assumes channels_per_group == 1"
    d = max(C // 16, 32)
    ks = jax.random.split(key, 8)

    def u(k, shape, fan_in):
        b = 1.0 / (fan_in ** 0.5)
        return jax.random.uniform(k, shape, jnp.float32, -b, b)

    def ca_params(k, cin, cout):
        k1, k2, k3, k4 = jax.random.split(k, 4)
        return dict(
            wt1=u(k1, (cin, 4 * cin), cin),            # trans1 (1x1)
            wdn=u(k2, (4 * cin, cin // 4), 4 * cin),   # conv_down
            wup=u(k3, (cin // 4, 4 * cin), cin // 4),  # conv_up
            wt2=u(k4, (4 * cin, cout), 4 * cin),       # trans2 (1x1)
            alphas=jnp.array([0.25, 0.25], jnp.float32),
        )

    return dict(
        conv1_w=u(ks[0], (3, 3, C, C), 9 * C),
        alpha1=jnp.array([0.25], jnp.float32),
        conv2_w=u(ks[1], (3, 3, C, C), 9 * C),
        alpha2=jnp.array([0.25], jnp.float32),
        sk_dw0=u(ks[2], (3, 3, C), 9),        # grouped conv, dilation 1
        sk_dw1=u(ks[3], (3, 3, C), 9),        # grouped conv, dilation 2
        sk_fc1=u(ks[4], (C, d), C),
        sk_fc2=u(ks[5], (d, 2 * C), d),       # M=2 branches merged in columns
        sk_alphas=jnp.array([0.25, 0.25, 0.25], jnp.float32),
        ca_sk=ca_params(ks[6], C, C),         # SKLayer.channelAttention
        ca_blk=ca_params(ks[7], C, C),        # SKBlock.channelAttention
    )


if __name__ == "__main__":
    B, C, H, W = 2, 32, 16, 16   # planes=32 (required by groups=32)
    key = jax.random.PRNGKey(0)
    kx, kp = jax.random.split(key)
    x = jax.random.normal(kx, (B, C, H, W), jnp.float32)
    params = init_params(kp, C)

    fwd = jax.jit(skblock_forward)
    y = jax.block_until_ready(fwd(x, params))
    assert y.shape == (B, C, H, W) and y.dtype == jnp.float32
    assert bool(jnp.all(jnp.isfinite(y)))
    print("KERNEL_OK")
</pallas_src>

<mosaic_0001>
module attributes {stable_mosaic.version = 11 : i64} {
  func.func @kernel(%arg0: i32, %arg1: memref<1x16x16x32xf32, #tpu.memory_space<vmem>>, %arg2: memref<2x288x32xf32, #tpu.memory_space<vmem>>, %arg3: memref<2x9x32xf32, #tpu.memory_space<vmem>>, %arg4: memref<32x32xf32, #tpu.memory_space<vmem>>, %arg5: memref<32x64xf32, #tpu.memory_space<vmem>>, %arg6: memref<2x32x128xf32, #tpu.memory_space<vmem>>, %arg7: memref<2x128x8xf32, #tpu.memory_space<vmem>>, %arg8: memref<2x8x128xf32, #tpu.memory_space<vmem>>, %arg9: memref<2x128x32xf32, #tpu.memory_space<vmem>>, %arg10: memref<9xf32, #tpu.memory_space<smem>>, %arg11: memref<1x16x16x32xf32, #tpu.memory_space<vmem>>, %arg12: memref<20x20x32xf32, #tpu.memory_space<vmem>>) attributes {dimension_semantics = [#tpu.dimension_semantics<parallel>], iteration_bounds = array<i64: 2>, scalar_prefetch = 0 : i64, scratch_operands = 1 : i64, tpu.core_type = #tpu.core_type<tc>, window_params = [{transform_indices = @transform_0, window_bounds = array<i64: 1, 16, 16, 32>}, {pipeline_mode = #tpu.pipeline_mode<synchronous>, transform_indices = @transform_1, window_bounds = array<i64: 2, 288, 32>}, {pipeline_mode = #tpu.pipeline_mode<synchronous>, transform_indices = @transform_2, window_bounds = array<i64: 2, 9, 32>}, {pipeline_mode = #tpu.pipeline_mode<synchronous>, transform_indices = @transform_3, window_bounds = array<i64: 32, 32>}, {pipeline_mode = #tpu.pipeline_mode<synchronous>, transform_indices = @transform_4, window_bounds = array<i64: 32, 64>}, {pipeline_mode = #tpu.pipeline_mode<synchronous>, transform_indices = @transform_5, window_bounds = array<i64: 2, 32, 128>}, {pipeline_mode = #tpu.pipeline_mode<synchronous>, transform_indices = @transform_6, window_bounds = array<i64: 2, 128, 8>}, {pipeline_mode = #tpu.pipeline_mode<synchronous>, transform_indices = @transform_7, window_bounds = array<i64: 2, 8, 128>}, {pipeline_mode = #tpu.pipeline_mode<synchronous>, transform_indices = @transform_8, window_bounds = array<i64: 2, 128, 32>}, {transform_indices = @transform_9, window_bounds = array<i64: 9>}, {transform_indices = @transform_10, window_bounds = array<i64: 1, 16, 16, 32>}]} {
    %cst = arith.constant 0.000000e+00 : f32
    %0 = vector.broadcast %cst : f32 to vector<20x20x32xf32>
    %c0 = arith.constant 0 : index
    %c0_0 = arith.constant 0 : index
    %c0_1 = arith.constant 0 : index
    %1 = vector.load %arg12[%c0, %c0_0, %c0_1] : memref<20x20x32xf32, #tpu.memory_space<vmem>>, vector<20x20x32xf32>
    tpu.vector_store %arg12[%c0, %c0_0, %c0_1], %0 {strides = array<i32>} : memref<20x20x32xf32, #tpu.memory_space<vmem>>, vector<20x20x32xf32>,
    %c0_2 = arith.constant 0 : index
    %2 = memref.load %arg10[%c0_2] : memref<9xf32, #tpu.memory_space<smem>>
    %c1 = arith.constant 1 : index
    %3 = memref.load %arg10[%c1] : memref<9xf32, #tpu.memory_space<smem>>
    %c2 = arith.constant 2 : index
    %4 = memref.load %arg10[%c2] : memref<9xf32, #tpu.memory_space<smem>>
    %c3 = arith.constant 3 : index
    %5 = memref.load %arg10[%c3] : memref<9xf32, #tpu.memory_space<smem>>
    %c4 = arith.constant 4 : index
    %6 = memref.load %arg10[%c4] : memref<9xf32, #tpu.memory_space<smem>>
    %c5 = arith.constant 5 : index
    %7 = memref.load %arg10[%c5] : memref<9xf32, #tpu.memory_space<smem>>
    %c6 = arith.constant 6 : index
    %8 = memref.load %arg10[%c6] : memref<9xf32, #tpu.memory_space<smem>>
    %c7 = arith.constant 7 : index
    %9 = memref.load %arg10[%c7] : memref<9xf32, #tpu.memory_space<smem>>
    %c8 = arith.constant 8 : index
    %10 = memref.load %arg10[%c8] : memref<9xf32, #tpu.memory_space<smem>>
    %c0_3 = arith.constant 0 : index
    %c0_4 = arith.constant 0 : index
    %c0_5 = arith.constant 0 : index
    %c0_6 = arith.constant 0 : index
    %11 = vector.load %arg1[%c0_3, %c0_4, %c0_5, %c0_6] : memref<1x16x16x32xf32, #tpu.memory_space<vmem>>, vector<1x16x16x32xf32>
    %12 = vector.shape_cast %11 : vector<1x16x16x32xf32> to vector<16x16x32xf32>
    %c2_7 = arith.constant 2 : index
    %c2_8 = arith.constant 2 : index
    %c0_9 = arith.constant 0 : index
    %13 = vector.load %arg12[%c2_7, %c2_8, %c0_9] : memref<20x20x32xf32, #tpu.memory_space<vmem>>, vector<16x16x32xf32>
    tpu.vector_store %arg12[%c2_7, %c2_8, %c0_9], %12 {strides = array<i32>} : memref<20x20x32xf32, #tpu.memory_space<vmem>>, vector<16x16x32xf32>,
    %c1_10 = arith.constant 1 : index
    %c1_11 = arith.constant 1 : index
    %c0_12 = arith.constant 0 : index
    %14 = vector.load %arg12[%c1_10, %c1_11, %c0_12] : memref<20x20x32xf32, #tpu.memory_space<vmem>>, vector<16x16x32xf32>
    %c1_13 = arith.constant 1 : index
    %c2_14 = arith.constant 2 : index
    %c0_15 = arith.constant 0 : index
    %15 = vector.load %arg12[%c1_13, %c2_14, %c0_15] : memref<20x20x32xf32, #tpu.memory_space<vmem>>, vector<16x16x32xf32>
    %c1_16 = arith.constant 1 : index
    %c3_17 = arith.constant 3 : index
    %c0_18 = arith.constant 0 : index
    %16 = vector.load %arg12[%c1_16, %c3_17, %c0_18] : memref<20x20x32xf32, #tpu.memory_space<vmem>>, vector<16x16x32xf32>
    %c2_19 = arith.constant 2 : index
    %c1_20 = arith.constant 1 : index
    %c0_21 = arith.constant 0 : index
    %17 = vector.load %arg12[%c2_19, %c1_20, %c0_21] : memref<20x20x32xf32, #tpu.memory_space<vmem>>, vector<16x16x32xf32>
    %c2_22 = arith.constant 2 : index
    %c2_23 = arith.constant 2 : index
    %c0_24 = arith.constant 0 : index
    %18 = vector.load %arg12[%c2_22, %c2_23, %c0_24] : memref<20x20x32xf32, #tpu.memory_space<vmem>>, vector<16x16x32xf32>
    %c2_25 = arith.constant 2 : index
    %c3_26 = arith.constant 3 : index
    %c0_27 = arith.constant 0 : index
    %19 = vector.load %arg12[%c2_25, %c3_26, %c0_27] : memref<20x20x32xf32, #tpu.memory_space<vmem>>, vector<16x16x32xf32>
    %c3_28 = arith.constant 3 : index
    %c1_29 = arith.constant 1 : index
    %c0_30 = arith.constant 0 : index
    %20 = vector.load %arg12[%c3_28, %c1_29, %c0_30] : memref<20x20x32xf32, #tpu.memory_space<vmem>>, vector<16x16x32xf32>
    %c3_31 = arith.constant 3 : index
    %c2_32 = arith.constant 2 : index
    %c0_33 = arith.constant 0 : index
    %21 = vector.load %arg12[%c3_31, %c2_32, %c0_33] : memref<20x20x32xf32, #tpu.memory_space<vmem>>, vector<16x16x32xf32>
    %c3_34 = arith.constant 3 : index
    %c3_35 = arith.constant 3 : index
    %c0_36 = arith.constant 0 : index
    %22 = vector.load %arg12[%c3_34, %c3_35, %c0_36] : memref<20x20x32xf32, #tpu.memory_space<vmem>>, vector<16x16x32xf32>
    %23 = tpu.concatenate %14, %15, %16, %17, %18, %19, %20, %21, %22 in 2 : vector<16x16x32xf32>, vector<16x16x32xf32>, vector<16x16x32xf32>, vector<16x16x32xf32>, vector<16x16x32xf32>, vector<16x16x32xf32>, vector<16x16x32xf32>, vector<16x16x32xf32>, vector<16x16x32xf32> -> vector<16x16x288xf32>
    %24 = vector.shape_cast %23 : vector<16x16x288xf32> to vector<256x288xf32>
    %c0_37 = arith.constant 0 : index
    %c0_38 = arith.constant 0 : index
    %c0_39 = arith.constant 0 : index
    %25 = vector.load %arg2[%c0_37, %c0_38, %c0_39] : memref<2x288x32xf32, #tpu.memory_space<vmem>>, vector<1x288x32xf32>
    %26 = vector.shape_cast %25 : vector<1x288x32xf32> to vector<288x32xf32>
    %cst_40 = arith.constant dense<0.000000e+00> : vector<256x32xf32>
    %27 = tpu.matmul %24, %26, %cst_40 {dimension_numbers = #tpu.dot_dimension_numbers<[1], [0], [0], [1], [0, 0, 1, 1], [], []>} : vector<256x288xf32>, vector<288x32xf32>, vector<256x32xf32> -> vector<256x32xf32>
    %cst_41 = arith.constant 0.000000e+00 : f32
    %28 = vector.broadcast %cst_41 : f32 to vector<256x32xf32>
    %29 = arith.cmpf oge, %27, %28 : vector<256x32xf32>
    %30 = vector.broadcast %2 : f32 to vector<256x32xf32>
    %31 = arith.mulf %30, %27 : vector<256x32xf32>
    %32 = arith.select %29, %27, %31 : vector<256x32xi1>, vector<256x32xf32>
    %33 = vector.shape_cast %32 : vector<256x32xf32> to vector<16x16x32xf32>
    %c2_42 = arith.constant 2 : index
    %c2_43 = arith.constant 2 : index
    %c0_44 = arith.constant 0 : index
    %34 = vector.load %arg12[%c2_42, %c2_43, %c0_44] : memref<20x20x32xf32, #tpu.memory_space<vmem>>, vector<16x16x32xf32>
    tpu.vector_store %arg12[%c2_42, %c2_43, %c0_44], %33 {strides = array<i32>} : memref<20x20x32xf32, #tpu.memory_space<vmem>>, vector<16x16x32xf32>,
    %c1_45 = arith.constant 1 : index
    %c1_46 = arith.constant 1 : index
    %c0_47 = arith.constant 0 : index
    %35 = vector.load %arg12[%c1_45, %c1_46, %c0_47] : memref<20x20x32xf32, #tpu.memory_space<vmem>>, vector<16x16x32xf32>
    %c1_48 = arith.constant 1 : index
    %c2_49 = arith.constant 2 : index
    %c0_50 = arith.constant 0 : index
    %36 = vector.load %arg12[%c1_48, %c2_49, %c0_50] : memref<20x20x32xf32, #tpu.memory_space<vmem>>, vector<16x16x32xf32>
    %c1_51 = arith.constant 1 : index
    %c3_52 = arith.constant 3 : index
    %c0_53 = arith.constant 0 : index
    %37 = vector.load %arg12[%c1_51, %c3_52, %c0_53] : memref<20x20x32xf32, #tpu.memory_space<vmem>>, vector<16x16x32xf32>
    %c2_54 = arith.constant 2 : index
    %c1_55 = arith.constant 1 : index
    %c0_56 = arith.constant 0 : index
    %38 = vector.load %arg12[%c2_54, %c1_55, %c0_56] : memref<20x20x32xf32, #tpu.memory_space<vmem>>, vector<16x16x32xf32>
    %c2_57 = arith.constant 2 : index
    %c2_58 = arith.constant 2 : index
    %c0_59 = arith.constant 0 : index
    %39 = vector.load %arg12[%c2_57, %c2_58, %c0_59] : memref<20x20x32xf32, #tpu.memory_space<vmem>>, vector<16x16x32xf32>
    %c2_60 = arith.constant 2 : index
    %c3_61 = arith.constant 3 : index
    %c0_62 = arith.constant 0 : index
    %40 = vector.load %arg12[%c2_60, %c3_61, %c0_62] : memref<20x20x32xf32, #tpu.memory_space<vmem>>, vector<16x16x32xf32>
    %c3_63 = arith.constant 3 : index
    %c1_64 = arith.constant 1 : index
    %c0_65 = arith.constant 0 : index
    %41 = vector.load %arg12[%c3_63, %c1_64, %c0_65] : memref<20x20x32xf32, #tpu.memory_space<vmem>>, vector<16x16x32xf32>
    %c3_66 = arith.constant 3 : index
    %c2_67 = arith.constant 2 : index
    %c0_68 = arith.constant 0 : index
    %42 = vector.load %arg12[%c3_66, %c2_67, %c0_68] : memref<20x20x32xf32, #tpu.memory_space<vmem>>, vector<16x16x32xf32>
    %c3_69 = arith.constant 3 : index
    %c3_70 = arith.constant 3 : index
    %c0_71 = arith.constant 0 : index
    %43 = vector.load %arg12[%c3_69, %c3_70, %c0_71] : memref<20x20x32xf32, #tpu.memory_space<vmem>>, vector<16x16x32xf32>
    %44 = tpu.concatenate %35, %36, %37, %38, %39, %40, %41, %42, %43 in 2 : vector<16x16x32xf32>, vector<16x16x32xf32>, vector<16x16x32xf32>, vector<16x16x32xf32>, vector<16x16x32xf32>, vector<16x16x32xf32>, vector<16x16x32xf32>, vector<16x16x32xf32>, vector<16x16x32xf32> -> vector<16x16x288xf32>
    %45 = vector.shape_cast %44 : vector<16x16x288xf32> to vector<256x288xf32>
    %c1_72 = arith.constant 1 : index
    %c0_73 = arith.constant 0 : index
    %c0_74 = arith.constant 0 : index
    %46 = vector.load %arg2[%c1_72, %c0_73, %c0_74] : memref<2x288x32xf32, #tpu.memory_space<vmem>>, vector<1x288x32xf32>
    %47 = vector.shape_cast %46 : vector<1x288x32xf32> to vector<288x32xf32>
    %cst_75 = arith.constant dense<0.000000e+00> : vector<256x32xf32>
    %48 = tpu.matmul %45, %47, %cst_75 {dimension_numbers = #tpu.dot_dimension_numbers<[1], [0], [0], [1], [0, 0, 1, 1], [], []>} : vector<256x288xf32>, vector<288x32xf32>, vector<256x32xf32> -> vector<256x32xf32>
    %cst_76 = arith.constant 0.000000e+00 : f32
    %49 = vector.broadcast %cst_76 : f32 to vector<256x32xf32>
    %50 = arith.cmpf oge, %48, %49 : vector<256x32xf32>
    %51 = vector.broadcast %3 : f32 to vector<256x32xf32>
    %52 = arith.mulf %51, %48 : vector<256x32xf32>
    %53 = arith.select %50, %48, %52 : vector<256x32xi1>, vector<256x32xf32>
    %54 = vector.shape_cast %53 : vector<256x32xf32> to vector<16x16x32xf32>
    %c2_77 = arith.constant 2 : index
    %c2_78 = arith.constant 2 : index
    %c0_79 = arith.constant 0 : index
    %55 = vector.load %arg12[%c2_77, %c2_78, %c0_79] : memref<20x20x32xf32, #tpu.memory_space<vmem>>, vector<16x16x32xf32>
    tpu.vector_store %arg12[%c2_77, %c2_78, %c0_79], %54 {strides = array<i32>} : memref<20x20x32xf32, #tpu.memory_space<vmem>>, vector<16x16x32xf32>,
    %c0_80 = arith.constant 0 : index
    %c0_81 = arith.constant 0 : index
    %c0_82 = arith.constant 0 : index
    %56 = vector.load %arg3[%c0_80, %c0_81, %c0_82] : memref<2x9x32xf32, #tpu.memory_space<vmem>>, vector<1x9x32xf32>
    %57 = vector.shape_cast %56 : vector<1x9x32xf32> to vector<9x32xf32>
    %c1_83 = arith.constant 1 : index
    %c1_84 = arith.constant 1 : index
    %c0_85 = arith.constant 0 : index
    %58 = vector.load %arg12[%c1_83, %c1_84, %c0_85] : memref<20x20x32xf32, #tpu.memory_space<vmem>>, vector<16x16x32xf32>
    %59 = vector.extract_strided_slice %57 {offsets = [0, 0], sizes = [1, 32], strides = [1, 1]} : vector<9x32xf32> to vector<1x32xf32>
    %60 = vector.shape_cast %59 : vector<1x32xf32> to vector<1x1x32xf32>
    %61 = vector.broadcast %60 : vector<1x1x32xf32> to vector<16x16x32xf32>
    %62 = arith.mulf %58, %61 : vector<16x16x32xf32>
    %c1_86 = arith.constant 1 : index
    %c2_87 = arith.constant 2 : index
    %c0_88 = arith.constant 0 : index
    %63 = vector.load %arg12[%c1_86, %c2_87, %c0_88] : memref<20x20x32xf32, #tpu.memory_space<vmem>>, vector<16x16x32xf32>
    %64 = vector.extract_strided_slice %57 {offsets = [1, 0], sizes = [1, 32], strides = [1, 1]} : vector<9x32xf32> to vector<1x32xf32>
    %65 = vector.shape_cast %64 : vector<1x32xf32> to vector<1x1x32xf32>
    %66 = vector.broadcast %65 : vector<1x1x32xf32> to vector<16x16x32xf32>
    %67 = arith.mulf %63, %66 : vector<16x16x32xf32>
    %68 = arith.addf %62, %67 : vector<16x16x32xf32>
    %c1_89 = arith.constant 1 : index
    %c3_90 = arith.constant 3 : index
    %c0_91 = arith.constant 0 : index
    %69 = vector.load %arg12[%c1_89, %c3_90, %c0_91] : memref<20x20x32xf32, #tpu.memory_space<vmem>>, vector<16x16x32xf32>
    %70 = vector.extract_strided_slice %57 {offsets = [2, 0], sizes = [1, 32], strides = [1, 1]} : vector<9x32xf32> to vector<1x32xf32>
    %71 = vector.shape_cast %70 : vector<1x32xf32> to vector<1x1x32xf32>
    %72 = vector.broadcast %71 : vector<1x1x32xf32> to vector<16x16x32xf32>
    %73 = arith.mulf %69, %72 : vector<16x16x32xf32>
    %74 = arith.addf %68, %73 : vector<16x16x32xf32>
    %c2_92 = arith.constant 2 : index
    %c1_93 = arith.constant 1 : index
    %c0_94 = arith.constant 0 : index
    %75 = vector.load %arg12[%c2_92, %c1_93, %c0_94] : memref<20x20x32xf32, #tpu.memory_space<vmem>>, vector<16x16x32xf32>
    %76 = vector.extract_strided_slice %57 {offsets = [3, 0], sizes = [1, 32], strides = [1, 1]} : vector<9x32xf32> to vector<1x32xf32>
    %77 = vector.shape_cast %76 : vector<1x32xf32> to vector<1x1x32xf32>
    %78 = vector.broadcast %77 : vector<1x1x32xf32> to vector<16x16x32xf32>
    %79 = arith.mulf %75, %78 : vector<16x16x32xf32>
    %80 = arith.addf %74, %79 : vector<16x16x32xf32>
    %c2_95 = arith.constant 2 : index
    %c2_96 = arith.constant 2 : index
    %c0_97 = arith.constant 0 : index
    %81 = vector.load %arg12[%c2_95, %c2_96, %c0_97] : memref<20x20x32xf32, #tpu.memory_space<vmem>>, vector<16x16x32xf32>
    %82 = vector.extract_strided_slice %57 {offsets = [4, 0], sizes = [1, 32], strides = [1, 1]} : vector<9x32xf32> to vector<1x32xf32>
    %83 = vector.shape_cast %82 : vector<1x32xf32> to vector<1x1x32xf32>
    %84 = vector.broadcast %83 : vector<1x1x32xf32> to vector<16x16x32xf32>
    %85 = arith.mulf %81, %84 : vector<16x16x32xf32>
    %86 = arith.addf %80, %85 : vector<16x16x32xf32>
    %c2_98 = arith.constant 2 : index
    %c3_99 = arith.constant 3 : index
    %c0_100 = arith.constant 0 : index
    %87 = vector.load %arg12[%c2_98, %c3_99, %c0_100] : memref<20x20x32xf32, #tpu.memory_space<vmem>>, vector<16x16x32xf32>
    %88 = vector.extract_strided_slice %57 {offsets = [5, 0], sizes = [1, 32], strides = [1, 1]} : vector<9x32xf32> to vector<1x32xf32>
    %89 = vector.shape_cast %88 : vector<1x32xf32> to vector<1x1x32xf32>
    %90 = vector.broadcast %89 : vector<1x1x32xf32> to vector<16x16x32xf32>
    %91 = arith.mulf %87, %90 : vector<16x16x32xf32>
    %92 = arith.addf %86, %91 : vector<16x16x32xf32>
    %c3_101 = arith.constant 3 : index
    %c1_102 = arith.constant 1 : index
    %c0_103 = arith.constant 0 : index
    %93 = vector.load %arg12[%c3_101, %c1_102, %c0_103] : memref<20x20x32xf32, #tpu.memory_space<vmem>>, vector<16x16x32xf32>
    %94 = vector.extract_strided_slice %57 {offsets = [6, 0], sizes = [1, 32], strides = [1, 1]} : vector<9x32xf32> to vector<1x32xf32>
    %95 = vector.shape_cast %94 : vector<1x32xf32> to vector<1x1x32xf32>
    %96 = vector.broadcast %95 : vector<1x1x32xf32> to vector<16x16x32xf32>
    %97 = arith.mulf %93, %96 : vector<16x16x32xf32>
    %98 = arith.addf %92, %97 : vector<16x16x32xf32>
    %c3_104 = arith.constant 3 : index
    %c2_105 = arith.constant 2 : index
    %c0_106 = arith.constant 0 : index
    %99 = vector.load %arg12[%c3_104, %c2_105, %c0_106] : memref<20x20x32xf32, #tpu.memory_space<vmem>>, vector<16x16x32xf32>
    %100 = vector.extract_strided_slice %57 {offsets = [7, 0], sizes = [1, 32], strides = [1, 1]} : vector<9x32xf32> to vector<1x32xf32>
    %101 = vector.shape_cast %100 : vector<1x32xf32> to vector<1x1x32xf32>
    %102 = vector.broadcast %101 : vector<1x1x32xf32> to vector<16x16x32xf32>
    %103 = arith.mulf %99, %102 : vector<16x16x32xf32>
    %104 = arith.addf %98, %103 : vector<16x16x32xf32>
    %c3_107 = arith.constant 3 : index
    %c3_108 = arith.constant 3 : index
    %c0_109 = arith.constant 0 : index
    %105 = vector.load %arg12[%c3_107, %c3_108, %c0_109] : memref<20x20x32xf32, #tpu.memory_space<vmem>>, vector<16x16x32xf32>
    %106 = vector.extract_strided_slice %57 {offsets = [8, 0], sizes = [1, 32], strides = [1, 1]} : vector<9x32xf32> to vector<1x32xf32>
    %107 = vector.shape_cast %106 : vector<1x32xf32> to vector<1x1x32xf32>
    %108 = vector.broadcast %107 : vector<1x1x32xf32> to vector<16x16x32xf32>
    %109 = arith.mulf %105, %108 : vector<16x16x32xf32>
    %110 = arith.addf %104, %109 : vector<16x16x32xf32>
    %111 = vector.shape_cast %110 : vector<16x16x32xf32> to vector<256x32xf32>
    %cst_110 = arith.constant 0.000000e+00 : f32
    %112 = vector.broadcast %cst_110 : f32 to vector<256x32xf32>
    %113 = arith.cmpf oge, %111, %112 : vector<256x32xf32>
    %114 = vector.broadcast %4 : f32 to vector<256x32xf32>
    %115 = arith.mulf %114, %111 : vector<256x32xf32>
    %116 = arith.select %113, %111, %115 : vector<256x32xi1>, vector<256x32xf32>
    %c1_111 = arith.constant 1 : index
    %c0_112 = arith.constant 0 : index
    %c0_113 = arith.constant 0 : index
    %117 = vector.load %arg3[%c1_111, %c0_112, %c0_113] : memref<2x9x32xf32, #tpu.memory_space<vmem>>, vector<1x9x32xf32>
    %118 = vector.shape_cast %117 : vector<1x9x32xf32> to vector<9x32xf32>
    %c0_114 = arith.constant 0 : index
    %c0_115 = arith.constant 0 : index
    %c0_116 = arith.constant 0 : index
    %119 = vector.load %arg12[%c0_114, %c0_115, %c0_116] : memref<20x20x32xf32, #tpu.memory_space<vmem>>, vector<16x16x32xf32>
    %120 = vector.extract_strided_slice %118 {offsets = [0, 0], sizes = [1, 32], strides = [1, 1]} : vector<9x32xf32> to vector<1x32xf32>
    %121 = vector.shape_cast %120 : vector<1x32xf32> to vector<1x1x32xf32>
    %122 = vector.broadcast %121 : vector<1x1x32xf32> to vector<16x16x32xf32>
    %123 = arith.mulf %119, %122 : vector<16x16x32xf32>
    %c0_117 = arith.constant 0 : index
    %c2_118 = arith.constant 2 : index
    %c0_119 = arith.constant 0 : index
    %124 = vector.load %arg12[%c0_117, %c2_118, %c0_119] : memref<20x20x32xf32, #tpu.memory_space<vmem>>, vector<16x16x32xf32>
    %125 = vector.extract_strided_slice %118 {offsets = [1, 0], sizes = [1, 32], strides = [1, 1]} : vector<9x32xf32> to vector<1x32xf32>
    %126 = vector.shape_cast %125 : vector<1x32xf32> to vector<1x1x32xf32>
    %127 = vector.broadcast %126 : vector<1x1x32xf32> to vector<16x16x32xf32>
    %128 = arith.mulf %124, %127 : vector<16x16x32xf32>
    %129 = arith.addf %123, %128 : vector<16x16x32xf32>
    %c0_120 = arith.constant 0 : index
    %c4_121 = arith.constant 4 : index
    %c0_122 = arith.constant 0 : index
    %130 = vector.load %arg12[%c0_120, %c4_121, %c0_122] : memref<20x20x32xf32, #tpu.memory_space<vmem>>, vector<16x16x32xf32>
    %131 = vector.extract_strided_slice %118 {offsets = [2, 0], sizes = [1, 32], strides = [1, 1]} : vector<9x32xf32> to vector<1x32xf32>
    %132 = vector.shape_cast %131 : vector<1x32xf32> to vector<1x1x32xf32>
    %133 = vector.broadcast %132 : vector<1x1x32xf32> to vector<16x16x32xf32>
    %134 = arith.mulf %130, %133 : vector<16x16x32xf32>
    %135 = arith.addf %129, %134 : vector<16x16x32xf32>
    %c2_123 = arith.constant 2 : index
    %c0_124 = arith.constant 0 : index
    %c0_125 = arith.constant 0 : index
    %136 = vector.load %arg12[%c2_123, %c0_124, %c0_125] : memref<20x20x32xf32, #tpu.memory_space<vmem>>, vector<16x16x32xf32>
    %137 = vector.extract_strided_slice %118 {offsets = [3, 0], sizes = [1, 32], strides = [1, 1]} : vector<9x32xf32> to vector<1x32xf32>
    %138 = vector.shape_cast %137 : vector<1x32xf32> to vector<1x1x32xf32>
    %139 = vector.broadcast %138 : vector<1x1x32xf32> to vector<16x16x32xf32>
    %140 = arith.mulf %136, %139 : vector<16x16x32xf32>
    %141 = arith.addf %135, %140 : vector<16x16x32xf32>
    %c2_126 = arith.constant 2 : index
    %c2_127 = arith.constant 2 : index
    %c0_128 = arith.constant 0 : index
    %142 = vector.load %arg12[%c2_126, %c2_127, %c0_128] : memref<20x20x32xf32, #tpu.memory_space<vmem>>, vector<16x16x32xf32>
    %143 = vector.extract_strided_slice %118 {offsets = [4, 0], sizes = [1, 32], strides = [1, 1]} : vector<9x32xf32> to vector<1x32xf32>
    %144 = vector.shape_cast %143 : vector<1x32xf32> to vector<1x1x32xf32>
    %145 = vector.broadcast %144 : vector<1x1x32xf32> to vector<16x16x32xf32>
    %146 = arith.mulf %142, %145 : vector<16x16x32xf32>
    %147 = arith.addf %141, %146 : vector<16x16x32xf32>
    %c2_129 = arith.constant 2 : index
    %c4_130 = arith.constant 4 : index
    %c0_131 = arith.constant 0 : index
    %148 = vector.load %arg12[%c2_129, %c4_130, %c0_131] : memref<20x20x32xf32, #tpu.memory_space<vmem>>, vector<16x16x32xf32>
    %149 = vector.extract_strided_slice %118 {offsets = [5, 0], sizes = [1, 32], strides = [1, 1]} : vector<9x32xf32> to vector<1x32xf32>
    %150 = vector.shape_cast %149 : vector<1x32xf32> to vector<1x1x32xf32>
    %151 = vector.broadcast %150 : vector<1x1x32xf32> to vector<16x16x32xf32>
    %152 = arith.mulf %148, %151 : vector<16x16x32xf32>
    %153 = arith.addf %147, %152 : vector<16x16x32xf32>
    %c4_132 = arith.constant 4 : index
    %c0_133 = arith.constant 0 : index
    %c0_134 = arith.constant 0 : index
    %154 = vector.load %arg12[%c4_132, %c0_133, %c0_134] : memref<20x20x32xf32, #tpu.memory_space<vmem>>, vector<16x16x32xf32>
    %155 = vector.extract_strided_slice %118 {offsets = [6, 0], sizes = [1, 32], strides = [1, 1]} : vector<9x32xf32> to vector<1x32xf32>
    %156 = vector.shape_cast %155 : vector<1x32xf32> to vector<1x1x32xf32>
    %157 = vector.broadcast %156 : vector<1x1x32xf32> to vector<16x16x32xf32>
    %158 = arith.mulf %154, %157 : vector<16x16x32xf32>
    %159 = arith.addf %153, %158 : vector<16x16x32xf32>
    %c4_135 = arith.constant 4 : index
    %c2_136 = arith.constant 2 : index
    %c0_137 = arith.constant 0 : index
    %160 = vector.load %arg12[%c4_135, %c2_136, %c0_137] : memref<20x20x32xf32, #tpu.memory_space<vmem>>, vector<16x16x32xf32>
    %161 = vector.extract_strided_slice %118 {offsets = [7, 0], sizes = [1, 32], strides = [1, 1]} : vector<9x32xf32> to vector<1x32xf32>
    %162 = vector.shape_cast %161 : vector<1x32xf32> to vector<1x1x32xf32>
    %163 = vector.broadcast %162 : vector<1x1x32xf32> to vector<16x16x32xf32>
    %164 = arith.mulf %160, %163 : vector<16x16x32xf32>
    %165 = arith.addf %159, %164 : vector<16x16x32xf32>
    %c4_138 = arith.constant 4 : index
    %c4_139 = arith.constant 4 : index
    %c0_140 = arith.constant 0 : index
    %166 = vector.load %arg12[%c4_138, %c4_139, %c0_140] : memref<20x20x32xf32, #tpu.memory_space<vmem>>, vector<16x16x32xf32>
    %167 = vector.extract_strided_slice %118 {offsets = [8, 0], sizes = [1, 32], strides = [1, 1]} : vector<9x32xf32> to vector<1x32xf32>
    %168 = vector.shape_cast %167 : vector<1x32xf32> to vector<1x1x32xf32>
    %169 = vector.broadcast %168 : vector<1x1x32xf32> to vector<16x16x32xf32>
    %170 = arith.mulf %166, %169 : vector<16x16x32xf32>
    %171 = arith.addf %165, %170 : vector<16x16x32xf32>
    %172 = vector.shape_cast %171 : vector<16x16x32xf32> to vector<256x32xf32>
    %cst_141 = arith.constant 0.000000e+00 : f32
    %173 = vector.broadcast %cst_141 : f32 to vector<256x32xf32>
    %174 = arith.cmpf oge, %172, %173 : vector<256x32xf32>
    %175 = vector.broadcast %5 : f32 to vector<256x32xf32>
    %176 = arith.mulf %175, %172 : vector<256x32xf32>
    %177 = arith.select %174, %172, %176 : vector<256x32xi1>, vector<256x32xf32>
    %cst_142 = arith.constant dense<0.000000e+00> : vector<32xf32>
    %178 = vector.multi_reduction <add>, %116, %cst_142 [0] : vector<256x32xf32> to vector<32xf32>
    %179 = vector.shape_cast %178 : vector<32xf32> to vector<1x32xf32>
    %cst_143 = arith.constant dense<0.000000e+00> : vector<32xf32>
    %180 = vector.multi_reduction <add>, %177, %cst_143 [0] : vector<256x32xf32> to vector<32xf32>
    %181 = vector.shape_cast %180 : vector<32xf32> to vector<1x32xf32>
    %182 = arith.addf %179, %181 : vector<1x32xf32>
    %cst_144 = arith.constant 3.906250e-03 : f32
    %183 = vector.broadcast %cst_144 : f32 to vector<1x32xf32>
    %184 = arith.mulf %182, %183 : vector<1x32xf32>
    %c0_145 = arith.constant 0 : index
    %c0_146 = arith.constant 0 : index
    %185 = vector.load %arg4[%c0_145, %c0_146] : memref<32x32xf32, #tpu.memory_space<vmem>>, vector<32x32xf32>
    %cst_147 = arith.constant dense<0.000000e+00> : vector<1x32xf32>
    %186 = tpu.matmul %184, %185, %cst_147 {dimension_numbers = #tpu.dot_dimension_numbers<[1], [0], [0], [1], [0, 0, 1, 1], [], []>} : vector<1x32xf32>, vector<32x32xf32>, vector<1x32xf32> -> vector<1x32xf32>
    %cst_148 = arith.constant 0.000000e+00 : f32
    %187 = vector.broadcast %cst_148 : f32 to vector<1x32xf32>
    %188 = arith.cmpf oge, %186, %187 : vector<1x32xf32>
    %189 = vector.broadcast %6 : f32 to vector<1x32xf32>
    %190 = arith.mulf %189, %186 : vector<1x32xf32>
    %191 = arith.select %188, %186, %190 : vector<1x32xi1>, vector<1x32xf32>
    %c0_149 = arith.constant 0 : index
    %c0_150 = arith.constant 0 : index
    %192 = vector.load %arg5[%c0_149, %c0_150] : memref<32x64xf32, #tpu.memory_space<vmem>>, vector<32x64xf32>
    %cst_151 = arith.constant dense<0.000000e+00> : vector<1x64xf32>
    %193 = tpu.matmul %191, %192, %cst_151 {dimension_numbers = #tpu.dot_dimension_numbers<[1], [0], [0], [1], [0, 0, 1, 1], [], []>} : vector<1x32xf32>, vector<32x64xf32>, vector<1x64xf32> -> vector<1x64xf32>
    %194 = vector.extract_strided_slice %193 {offsets = [0, 0], sizes = [1, 32], strides = [1, 1]} : vector<1x64xf32> to vector<1x32xf32>
    %195 = vector.extract_strided_slice %193 {offsets = [0, 32], sizes = [1, 32], strides = [1, 1]} : vector<1x64xf32> to vector<1x32xf32>
    %196 = arith.maximumf %194, %195 : vector<1x32xf32>
    %197 = arith.subf %194, %196 : vector<1x32xf32>
    %198 = math.exp %197 : vector<1x32xf32>
    %199 = arith.subf %195, %196 : vector<1x32xf32>
    %200 = math.exp %199 : vector<1x32xf32>
    %201 = arith.addf %198, %200 : vector<1x32xf32>
    %cst_152 = arith.constant 1.000000e+00 : f32
    %202 = vector.broadcast %cst_152 : f32 to vector<1x32xf32>
    %203 = arith.divf %202, %201 : vector<1x32xf32>
    %204 = arith.mulf %198, %203 : vector<1x32xf32>
    %205 = vector.broadcast %204 : vector<1x32xf32> to vector<256x32xf32>
    %206 = arith.mulf %116, %205 : vector<256x32xf32>
    %207 = arith.mulf %200, %203 : vector<1x32xf32>
    %208 = vector.broadcast %207 : vector<1x32xf32> to vector<256x32xf32>
    %209 = arith.mulf %177, %208 : vector<256x32xf32>
    %210 = arith.addf %206, %209 : vector<256x32xf32>
    %c0_153 = arith.constant 0 : index
    %c0_154 = arith.constant 0 : index
    %c0_155 = arith.constant 0 : index
    %211 = vector.load %arg6[%c0_153, %c0_154, %c0_155] : memref<2x32x128xf32, #tpu.memory_space<vmem>>, vector<1x32x128xf32>
    %212 = vector.shape_cast %211 : vector<1x32x128xf32> to vector<32x128xf32>
    %cst_156 = arith.constant dense<0.000000e+00> : vector<256x128xf32>
    %213 = tpu.matmul %210, %212, %cst_156 {dimension_numbers = #tpu.dot_dimension_numbers<[1], [0], [0], [1], [0, 0, 1, 1], [], []>} : vector<256x32xf32>, vector<32x128xf32>, vector<256x128xf32> -> vector<256x128xf32>
    %cst_157 = arith.constant 0.000000e+00 : f32
    %214 = vector.broadcast %cst_157 : f32 to vector<256x128xf32>
    %215 = arith.cmpf oge, %213, %214 : vector<256x128xf32>
    %216 = vector.broadcast %7 : f32 to vector<256x128xf32>
    %217 = arith.mulf %216, %213 : vector<256x128xf32>
    %218 = arith.select %215, %213, %217 : vector<256x128xi1>, vector<256x128xf32>
    %cst_158 = arith.constant dense<0.000000e+00> : vector<128xf32>
    %219 = vector.multi_reduction <add>, %218, %cst_158 [0] : vector<256x128xf32> to vector<128xf32>
    %220 = vector.shape_cast %219 : vector<128xf32> to vector<1x128xf32>
    %cst_159 = arith.constant 3.906250e-03 : f32
    %221 = vector.broadcast %cst_159 : f32 to vector<1x128xf32>
    %222 = arith.mulf %220, %221 : vector<1x128xf32>
    %c0_160 = arith.constant 0 : index
    %c0_161 = arith.constant 0 : index
    %c0_162 = arith.constant 0 : index
    %223 = vector.load %arg7[%c0_160, %c0_161, %c0_162] : memref<2x128x8xf32, #tpu.memory_space<vmem>>, vector<1x128x8xf32>
    %224 = vector.shape_cast %223 : vector<1x128x8xf32> to vector<128x8xf32>
    %cst_163 = arith.constant dense<0.000000e+00> : vector<1x8xf32>
    %225 = tpu.matmul %222, %224, %cst_163 {dimension_numbers = #tpu.dot_dimension_numbers<[1], [0], [0], [1], [0, 0, 1, 1], [], []>} : vector<1x128xf32>, vector<128x8xf32>, vector<1x8xf32> -> vector<1x8xf32>
    %226 = arith.negf %225 : vector<1x8xf32>
    %227 = math.exp %226 : vector<1x8xf32>
    %cst_164 = arith.constant 1.000000e+00 : f32
    %228 = vector.broadcast %cst_164 : f32 to vector<1x8xf32>
    %229 = arith.addf %228, %227 : vector<1x8xf32>
    %230 = arith.divf %228, %229 : vector<1x8xf32>
    %231 = arith.mulf %225, %230 : vector<1x8xf32>
    %c0_165 = arith.constant 0 : index
    %c0_166 = arith.constant 0 : index
    %c0_167 = arith.constant 0 : index
    %232 = vector.load %arg8[%c0_165, %c0_166, %c0_167] : memref<2x8x128xf32, #tpu.memory_space<vmem>>, vector<1x8x128xf32>
    %233 = vector.shape_cast %232 : vector<1x8x128xf32> to vector<8x128xf32>
    %cst_168 = arith.constant dense<0.000000e+00> : vector<1x128xf32>
    %234 = tpu.matmul %231, %233, %cst_168 {dimension_numbers = #tpu.dot_dimension_numbers<[1], [0], [0], [1], [0, 0, 1, 1], [], []>} : vector<1x8xf32>, vector<8x128xf32>, vector<1x128xf32> -> vector<1x128xf32>
    %235 = arith.negf %234 : vector<1x128xf32>
    %236 = math.exp %235 : vector<1x128xf32>
    %cst_169 = arith.constant 1.000000e+00 : f32
    %237 = vector.broadcast %cst_169 : f32 to vector<1x128xf32>
    %238 = arith.addf %237, %236 : vector<1x128xf32>
    %239 = arith.divf %237, %238 : vector<1x128xf32>
    %240 = vector.broadcast %239 : vector<1x128xf32> to vector<256x128xf32>
    %241 = arith.mulf %218, %240 : vector<256x128xf32>
    %c0_170 = arith.constant 0 : index
    %c0_171 = arith.constant 0 : index
    %c0_172 = arith.constant 0 : index
    %242 = vector.load %arg9[%c0_170, %c0_171, %c0_172] : memref<2x128x32xf32, #tpu.memory_space<vmem>>, vector<1x128x32xf32>
    %243 = vector.shape_cast %242 : vector<1x128x32xf32> to vector<128x32xf32>
    %cst_173 = arith.constant dense<0.000000e+00> : vector<256x32xf32>
    %244 = tpu.matmul %241, %243, %cst_173 {dimension_numbers = #tpu.dot_dimension_numbers<[1], [0], [0], [1], [0, 0, 1, 1], [], []>} : vector<256x128xf32>, vector<128x32xf32>, vector<256x32xf32> -> vector<256x32xf32>
    %cst_174 = arith.constant 0.000000e+00 : f32
    %245 = vector.broadcast %cst_174 : f32 to vector<256x32xf32>
    %246 = arith.cmpf oge, %244, %245 : vector<256x32xf32>
    %247 = vector.broadcast %8 : f32 to vector<256x32xf32>
    %248 = arith.mulf %247, %244 : vector<256x32xf32>
    %249 = arith.select %246, %244, %248 : vector<256x32xi1>, vector<256x32xf32>
    %c1_175 = arith.constant 1 : index
    %c0_176 = arith.constant 0 : index
    %c0_177 = arith.constant 0 : index
    %250 = vector.load %arg6[%c1_175, %c0_176, %c0_177] : memref<2x32x128xf32, #tpu.memory_space<vmem>>, vector<1x32x128xf32>
    %251 = vector.shape_cast %250 : vector<1x32x128xf32> to vector<32x128xf32>
    %cst_178 = arith.constant dense<0.000000e+00> : vector<256x128xf32>
    %252 = tpu.matmul %249, %251, %cst_178 {dimension_numbers = #tpu.dot_dimension_numbers<[1], [0], [0], [1], [0, 0, 1, 1], [], []>} : vector<256x32xf32>, vector<32x128xf32>, vector<256x128xf32> -> vector<256x128xf32>
    %cst_179 = arith.constant 0.000000e+00 : f32
    %253 = vector.broadcast %cst_179 : f32 to vector<256x128xf32>
    %254 = arith.cmpf oge, %252, %253 : vector<256x128xf32>
    %255 = vector.broadcast %9 : f32 to vector<256x128xf32>
    %256 = arith.mulf %255, %252 : vector<256x128xf32>
    %257 = arith.select %254, %252, %256 : vector<256x128xi1>, vector<256x128xf32>
    %cst_180 = arith.constant dense<0.000000e+00> : vector<128xf32>
    %258 = vector.multi_reduction <add>, %257, %cst_180 [0] : vector<256x128xf32> to vector<128xf32>
    %259 = vector.shape_cast %258 : vector<128xf32> to vector<1x128xf32>
    %cst_181 = arith.constant 3.906250e-03 : f32
    %260 = vector.broadcast %cst_181 : f32 to vector<1x128xf32>
    %261 = arith.mulf %259, %260 : vector<1x128xf32>
    %c1_182 = arith.constant 1 : index
    %c0_183 = arith.constant 0 : index
    %c0_184 = arith.constant 0 : index
    %262 = vector.load %arg7[%c1_182, %c0_183, %c0_184] : memref<2x128x8xf32, #tpu.memory_space<vmem>>, vector<1x128x8xf32>
    %263 = vector.shape_cast %262 : vector<1x128x8xf32> to vector<128x8xf32>
    %cst_185 = arith.constant dense<0.000000e+00> : vector<1x8xf32>
    %264 = tpu.matmul %261, %263, %cst_185 {dimension_numbers = #tpu.dot_dimension_numbers<[1], [0], [0], [1], [0, 0, 1, 1], [], []>} : vector<1x128xf32>, vector<128x8xf32>, vector<1x8xf32> -> vector<1x8xf32>
    %265 = arith.negf %264 : vector<1x8xf32>
    %266 = math.exp %265 : vector<1x8xf32>
    %cst_186 = arith.constant 1.000000e+00 : f32
    %267 = vector.broadcast %cst_186 : f32 to vector<1x8xf32>
    %268 = arith.addf %267, %266 : vector<1x8xf32>
    %269 = arith.divf %267, %268 : vector<1x8xf32>
    %270 = arith.mulf %264, %269 : vector<1x8xf32>
    %c1_187 = arith.constant 1 : index
    %c0_188 = arith.constant 0 : index
    %c0_189 = arith.constant 0 : index
    %271 = vector.load %arg8[%c1_187, %c0_188, %c0_189] : memref<2x8x128xf32, #tpu.memory_space<vmem>>, vector<1x8x128xf32>
    %272 = vector.shape_cast %271 : vector<1x8x128xf32> to vector<8x128xf32>
    %cst_190 = arith.constant dense<0.000000e+00> : vector<1x128xf32>
    %273 = tpu.matmul %270, %272, %cst_190 {dimension_numbers = #tpu.dot_dimension_numbers<[1], [0], [0], [1], [0, 0, 1, 1], [], []>} : vector<1x8xf32>, vector<8x128xf32>, vector<1x128xf32> -> vector<1x128xf32>
    %274 = arith.negf %273 : vector<1x128xf32>
    %275 = math.exp %274 : vector<1x128xf32>
    %cst_191 = arith.constant 1.000000e+00 : f32
    %276 = vector.broadcast %cst_191 : f32 to vector<1x128xf32>
    %277 = arith.addf %276, %275 : vector<1x128xf32>
    %278 = arith.divf %276, %277 : vector<1x128xf32>
    %279 = vector.broadcast %278 : vector<1x128xf32> to vector<256x128xf32>
    %280 = arith.mulf %257, %279 : vector<256x128xf32>
    %c1_192 = arith.constant 1 : index
    %c0_193 = arith.constant 0 : index
    %c0_194 = arith.constant 0 : index
    %281 = vector.load %arg9[%c1_192, %c0_193, %c0_194] : memref<2x128x32xf32, #tpu.memory_space<vmem>>, vector<1x128x32xf32>
    %282 = vector.shape_cast %281 : vector<1x128x32xf32> to vector<128x32xf32>
    %cst_195 = arith.constant dense<0.000000e+00> : vector<256x32xf32>
    %283 = tpu.matmul %280, %282, %cst_195 {dimension_numbers = #tpu.dot_dimension_numbers<[1], [0], [0], [1], [0, 0, 1, 1], [], []>} : vector<256x128xf32>, vector<128x32xf32>, vector<256x32xf32> -> vector<256x32xf32>
    %cst_196 = arith.constant 0.000000e+00 : f32
    %284 = vector.broadcast %cst_196 : f32 to vector<256x32xf32>
    %285 = arith.cmpf oge, %283, %284 : vector<256x32xf32>
    %286 = vector.broadcast %10 : f32 to vector<256x32xf32>
    %287 = arith.mulf %286, %283 : vector<256x32xf32>
    %288 = arith.select %285, %283, %287 : vector<256x32xi1>, vector<256x32xf32>
    %289 = vector.shape_cast %12 : vector<16x16x32xf32> to vector<256x32xf32>
    %290 = arith.addf %288, %289 : vector<256x32xf32>
    %291 = vector.shape_cast %290 : vector<256x32xf32> to vector<16x16x32xf32>
    %c0_197 = arith.constant 0 : index
    %c0_198 = arith.constant 0 : index
    %c0_199 = arith.constant 0 : index
    %c0_200 = arith.constant 0 : index
    %292 = vector.load %arg11[%c0_197, %c0_198, %c0_199, %c0_200] : memref<1x16x16x32xf32, #tpu.memory_space<vmem>>, vector<1x16x16x32xf32>
    %293 = vector.shape_cast %292 : vector<1x16x16x32xf32> to vector<16x16x32xf32>
    %294 = vector.shape_cast %291 : vector<16x16x32xf32> to vector<1x16x16x32xf32>
    tpu.vector_store %arg11[%c0_197, %c0_198, %c0_199, %c0_200], %294 {strides = array<i32>} : memref<1x16x16x32xf32, #tpu.memory_space<vmem>>, vector<1x16x16x32xf32>,
    return
  }
  func.func @transform_0(%arg0: i32) -> (i32, i32, i32, i32) {
    %c0_i32 = arith.constant 0 : i32
    %c0_i32_0 = arith.constant 0 : i32
    %c0_i32_1 = arith.constant 0 : i32
    %c0_i32_2 = arith.constant 0 : i32
    return %arg0, %c0_i32, %c0_i32_0, %c0_i32_1 : i32, i32, i32, i32
  }
  func.func @transform_1(%arg0: i32) -> (i32, i32, i32) {
    %c0_i32 = arith.constant 0 : i32
    %c0_i32_0 = arith.constant 0 : i32
    %c0_i32_1 = arith.constant 0 : i32
    %c0_i32_2 = arith.constant 0 : i32
    return %c0_i32, %c0_i32_0, %c0_i32_1 : i32, i32, i32
  }
  func.func @transform_2(%arg0: i32) -> (i32, i32, i32) {
    %c0_i32 = arith.constant 0 : i32
    %c0_i32_0 = arith.constant 0 : i32
    %c0_i32_1 = arith.constant 0 : i32
    %c0_i32_2 = arith.constant 0 : i32
    return %c0_i32, %c0_i32_0, %c0_i32_1 : i32, i32, i32
  }
  func.func @transform_3(%arg0: i32) -> (i32, i32) {
    %c0_i32 = arith.constant 0 : i32
    %c0_i32_0 = arith.constant 0 : i32
    %c0_i32_1 = arith.constant 0 : i32
    return %c0_i32, %c0_i32_0 : i32, i32
  }
  func.func @transform_4(%arg0: i32) -> (i32, i32) {
    %c0_i32 = arith.constant 0 : i32
    %c0_i32_0 = arith.constant 0 : i32
    %c0_i32_1 = arith.constant 0 : i32
    return %c0_i32, %c0_i32_0 : i32, i32
  }
  func.func @transform_5(%arg0: i32) -> (i32, i32, i32) {
    %c0_i32 = arith.constant 0 : i32
    %c0_i32_0 = arith.constant 0 : i32
    %c0_i32_1 = arith.constant 0 : i32
    %c0_i32_2 = arith.constant 0 : i32
    return %c0_i32, %c0_i32_0, %c0_i32_1 : i32, i32, i32
  }
  func.func @transform_6(%arg0: i32) -> (i32, i32, i32) {
    %c0_i32 = arith.constant 0 : i32
    %c0_i32_0 = arith.constant 0 : i32
    %c0_i32_1 = arith.constant 0 : i32
    %c0_i32_2 = arith.constant 0 : i32
    return %c0_i32, %c0_i32_0, %c0_i32_1 : i32, i32, i32
  }
  func.func @transform_7(%arg0: i32) -> (i32, i32, i32) {
    %c0_i32 = arith.constant 0 : i32
    %c0_i32_0 = arith.constant 0 : i32
    %c0_i32_1 = arith.constant 0 : i32
    %c0_i32_2 = arith.constant 0 : i32
    return %c0_i32, %c0_i32_0, %c0_i32_1 : i32, i32, i32
  }
  func.func @transform_8(%arg0: i32) -> (i32, i32, i32) {
    %c0_i32 = arith.constant 0 : i32
    %c0_i32_0 = arith.constant 0 : i32
    %c0_i32_1 = arith.constant 0 : i32
    %c0_i32_2 = arith.constant 0 : i32
    return %c0_i32, %c0_i32_0, %c0_i32_1 : i32, i32, i32
  }
  func.func @transform_9(%arg0: i32) -> i32 {
    %c0_i32 = arith.constant 0 : i32
    %c0_i32_0 = arith.constant 0 : i32
    return %c0_i32 : i32
  }
  func.func @transform_10(%arg0: i32) -> (i32, i32, i32, i32) {
    %c0_i32 = arith.constant 0 : i32
    %c0_i32_0 = arith.constant 0 : i32
    %c0_i32_1 = arith.constant 0 : i32
    %c0_i32_2 = arith.constant 0 : i32
    return %arg0, %c0_i32, %c0_i32_0, %c0_i32_1 : i32, i32, i32, i32
  }
}

</mosaic_0001>

<llo_original>
// kernel: skblock_forward.1
$region0: #{skblock_forward.1}
  #allocation0 [shape = 'u32[]', space=smem, size = 0x4, offset = 0x4, fixed_abs, tag = 'smem constant byte address 0x4 - core index']
  #allocation1 [shape = 'u32[72,128]{1,0:T(1,128)}', space=vmem, size = 0x9000, scoped, tag = 'internal scratch']
  #allocation2 [shape = 'f32[20,20,32]{2,1,0:T(8,128)}', space=vmem, size = 0x3c000, scoped, tag = 'scratch operand']
  %s0 = inlined_call_operand.vmem [shape: f32[2,16,16,32], index: 0, kind: input, shape index: {}]
  %s1 = inlined_call_operand.vmem [shape: f32[2,288,32], index: 1, kind: input, shape index: {}]
  %s2 = inlined_call_operand.vmem [shape: f32[2,9,32], index: 2, kind: input, shape index: {}]
  %s3 = inlined_call_operand.vmem [shape: f32[32,32], index: 3, kind: input, shape index: {}]
  %s4 = inlined_call_operand.vmem [shape: f32[32,64], index: 4, kind: input, shape index: {}]
  %s5 = inlined_call_operand.vmem [shape: f32[2,32,128], index: 5, kind: input, shape index: {}]
  %s6 = inlined_call_operand.vmem [shape: f32[2,128,8], index: 6, kind: input, shape index: {}]
  %s7 = inlined_call_operand.vmem [shape: f32[2,8,128], index: 7, kind: input, shape index: {}]
  %s8 = inlined_call_operand.vmem [shape: f32[2,128,32], index: 8, kind: input, shape index: {}]
  %s9 = inlined_call_operand.vmem [shape: f32[9], index: 9, kind: input, shape index: {}]
  %s10 = inlined_call_operand.hbm [shape: f32[2,16,16,32], index: 10, kind: output, shape index: {}]
  %s11 = sld [smem:[#allocation0]]
  $region77: #{skblock_forward.1} parent=0
    _
  %s13 = ssub.s32 1, %s11
  %s14 = scalar_select 0, %s13, %s11
  $region1: #{skblock_forward.1} parent=0
    #allocation3 [shape = 'u8[512]{0}', space=smem, size = 0x200, scoped, tag = 'input window, operand 9, single buffered']
    #allocation4 [shape = 's32[2]{0}', space=sflag, size = 0x8, scoped, tag = 'scoped memory for skblock_forward.1']
    #allocation5 [shape = 's32[2]{0}', space=sflag, size = 0x8, scoped, tag = 'scoped memory for skblock_forward.1']
    #allocation6 [shape = 'u8[262144]{0}', space=vmem, size = 0x40000, scoped, tag = 'output window, operand 0']
    %15 = vsyncpa [#allocation5], 0
    %16 = vsyncpa [#allocation4], 0
    %s17 = scalar_lea.sflag [#allocation4], 1
    %18 = vsyncpa %s17, 0
    loop: start=0, step=1, limit=4
    $region2: #{skblock_forward.1} parent=1 // loop_pre_header
      _
    $region3: #{skblock_forward.1} parent=1 // loop_header
      %s20 = sphi 0, %s24
      %p21 = scmp.ge.s32.totalorder %s20, 4
      %s30 = sphi 0, %s32
      %s33 = sphi 0, %s30
      %s34 = sphi 0, %s33
      %s50 = sphi 0, %s34
      %s54 = sphi 0, %s54
      %s56 = sphi 0, %s54
      %s57 = sphi 0, %s56
      %s71 = sphi 0, %s57
      %s75 = sphi 0, %s75
      %s77 = sphi 0, %s75
      %s78 = sphi 0, %s77
      %s92 = sphi 0, %s78
      %s96 = sphi 0, %s96
      %s98 = sphi 0, %s96
      %s99 = sphi 0, %s98
      %s113 = sphi 0, %s99
      %s117 = sphi 0, %s117
      %s119 = sphi 0, %s117
      %s120 = sphi 0, %s119
      %s134 = sphi 0, %s120
      %s138 = sphi 0, %s138
      %s140 = sphi 0, %s138
      %s141 = sphi 0, %s140
      %s155 = sphi 0, %s141
      %s159 = sphi 0, %s159
      %s161 = sphi 0, %s159
      %s162 = sphi 0, %s161
      %s176 = sphi 0, %s162
      %s180 = sphi 0, %s180
      %s182 = sphi 0, %s180
      %s183 = sphi 0, %s182
      %s197 = sphi 0, %s183
      %s201 = sphi 0, %s201
      %s203 = sphi 0, %s201
      %s204 = sphi 0, %s203
      %s218 = sphi 0, %s204
      %s222 = sphi 0, %s222
      %s224 = sphi 0, %s222
      %s225 = sphi 0, %s224
      %s239 = sphi 0, %s225
      %s245 = sphi 0, %s247
      %s248 = sphi 0, %s245
      %s249 = sphi 0, %s248
      %s265 = sphi 0, %s249
    $region4: #{skblock_forward.1} parent=1 // loop_header_branch
      %23 = sbr.rel (%p21) target = $region8
    $region5: #{skblock_forward.1} parent=1 // loop_body
      %s25 = ssub.s32 %s20, 1
      %s26 = ssub.s32 %s20, 2
      %s27 = sadd.s32 %s20, 1
      %s28 = ssub.s32 %s20, %s27
      %p29 = scmp.eq.s32.totalorder %s28, 0
      %s31 = sadd.s32 %s30, 1
      %s32 = scalar_select %p29, %s30, %s31
      %p35 = pneg %p29
      %p36 = scmp.eq.s32.totalorder %s20, 1
      %p37 = por %p35, %p36
      %p38 = scmp.ne.s32.totalorder %s30, %s33
      %p39 = scmp.eq.s32.totalorder %s20, 0
      %p40 = por %p38, %p39
      %p41 = scmp.ne.s32.totalorder %s30, %s33
      %p42 = scmp.eq.s32.totalorder %s25, 1
      %p43 = por %p41, %p42
      %p44 = scmp.ne.s32.totalorder %s33, %s34
      %p45 = scmp.eq.s32.totalorder %s25, 0
      %p46 = por %p44, %p45
      %p47 = scmp.ne.s32.totalorder %s33, %s34
      %p48 = scmp.eq.s32.totalorder %s26, 1
      %p49 = por %p47, %p48
      %p51 = scmp.ne.s32.totalorder %s34, %s50
      %p52 = scmp.eq.s32.totalorder %s26, 0
      %p53 = por %p51, %p52
      %s55 = sadd.s32 %s54, 1
      %p58 = scmp.eq.s32.totalorder %s20, 1
      %p59 = scmp.ne.s32.totalorder %s54, %s56
      %p60 = scmp.eq.s32.totalorder %s20, 0
      %p61 = por %p59, %p60
      %p62 = scmp.ne.s32.totalorder %s54, %s56
      %p63 = scmp.eq.s32.totalorder %s25, 1
      %p64 = por %p62, %p63
      %p65 = scmp.ne.s32.totalorder %s56, %s57
      %p66 = scmp.eq.s32.totalorder %s25, 0
      %p67 = por %p65, %p66
      %p68 = scmp.ne.s32.totalorder %s56, %s57
      %p69 = scmp.eq.s32.totalorder %s26, 1
      %p70 = por %p68, %p69
      %p72 = scmp.ne.s32.totalorder %s57, %s71
      %p73 = scmp.eq.s32.totalorder %s26, 0
      %p74 = por %p72, %p73
      %s76 = sadd.s32 %s75, 1
      %p79 = scmp.eq.s32.totalorder %s20, 1
      %p80 = scmp.ne.s32.totalorder %s75, %s77
      %p81 = scmp.eq.s32.totalorder %s20, 0
      %p82 = por %p80, %p81
      %p83 = scmp.ne.s32.totalorder %s75, %s77
      %p84 = scmp.eq.s32.totalorder %s25, 1
      %p85 = por %p83, %p84
      %p86 = scmp.ne.s32.totalorder %s77, %s78
      %p87 = scmp.eq.s32.totalorder %s25, 0
      %p88 = por %p86, %p87
      %p89 = scmp.ne.s32.totalorder %s77, %s78
      %p90 = scmp.eq.s32.totalorder %s26, 1
      %p91 = por %p89, %p90
      %p93 = scmp.ne.s32.totalorder %s78, %s92
      %p94 = scmp.eq.s32.totalorder %s26, 0
      %p95 = por %p93, %p94
      %s97 = sadd.s32 %s96, 1
      %p100 = scmp.eq.s32.totalorder %s20, 1
      %p101 = scmp.ne.s32.totalorder %s96, %s98
      %p102 = scmp.eq.s32.totalorder %s20, 0
      %p103 = por %p101, %p102
      %p104 = scmp.ne.s32.totalorder %s96, %s98
      %p105 = scmp.eq.s32.totalorder %s25, 1
      %p106 = por %p104, %p105
      %p107 = scmp.ne.s32.totalorder %s98, %s99
      %p108 = scmp.eq.s32.totalorder %s25, 0
      %p109 = por %p107, %p108
      %p110 = scmp.ne.s32.totalorder %s98, %s99
      %p111 = scmp.eq.s32.totalorder %s26, 1
      %p112 = por %p110, %p111
      %p114 = scmp.ne.s32.totalorder %s99, %s113
      %p115 = scmp.eq.s32.totalorder %s26, 0
      %p116 = por %p114, %p115
      %s118 = sadd.s32 %s117, 1
      %p121 = scmp.eq.s32.totalorder %s20, 1
      %p122 = scmp.ne.s32.totalorder %s117, %s119
      %p123 = scmp.eq.s32.totalorder %s20, 0
      %p124 = por %p122, %p123
      %p125 = scmp.ne.s32.totalorder %s117, %s119
      %p126 = scmp.eq.s32.totalorder %s25, 1
      %p127 = por %p125, %p126
      %p128 = scmp.ne.s32.totalorder %s119, %s120
      %p129 = scmp.eq.s32.totalorder %s25, 0
      %p130 = por %p128, %p129
      %p131 = scmp.ne.s32.totalorder %s119, %s120
      %p132 = scmp.eq.s32.totalorder %s26, 1
      %p133 = por %p131, %p132
      %p135 = scmp.ne.s32.totalorder %s120, %s134
      %p136 = scmp.eq.s32.totalorder %s26, 0
      %p137 = por %p135, %p136
      %s139 = sadd.s32 %s138, 1
      %p142 = scmp.eq.s32.totalorder %s20, 1
      %p143 = scmp.ne.s32.totalorder %s138, %s140
      %p144 = scmp.eq.s32.totalorder %s20, 0
      %p145 = por %p143, %p144
      %p146 = scmp.ne.s32.totalorder %s138, %s140
      %p147 = scmp.eq.s32.totalorder %s25, 1
      %p148 = por %p146, %p147
      %p149 = scmp.ne.s32.totalorder %s140, %s141
      %p150 = scmp.eq.s32.totalorder %s25, 0
      %p151 = por %p149, %p150
      %p152 = scmp.ne.s32.totalorder %s140, %s141
      %p153 = scmp.eq.s32.totalorder %s26, 1
      %p154 = por %p152, %p153
      %p156 = scmp.ne.s32.totalorder %s141, %s155
      %p157 = scmp.eq.s32.totalorder %s26, 0
      %p158 = por %p156, %p157
      %s160 = sadd.s32 %s159, 1
      %p163 = scmp.eq.s32.totalorder %s20, 1
      %p164 = scmp.ne.s32.totalorder %s159, %s161
      %p165 = scmp.eq.s32.totalorder %s20, 0
      %p166 = por %p164, %p165
      %p167 = scmp.ne.s32.totalorder %s159, %s161
      %p168 = scmp.eq.s32.totalorder %s25, 1
      %p169 = por %p167, %p168
      %p170 = scmp.ne.s32.totalorder %s161, %s162
      %p171 = scmp.eq.s32.totalorder %s25, 0
      %p172 = por %p170, %p171
      %p173 = scmp.ne.s32.totalorder %s161, %s162
      %p174 = scmp.eq.s32.totalorder %s26, 1
      %p175 = por %p173, %p174
      %p177 = scmp.ne.s32.totalorder %s162, %s176
      %p178 = scmp.eq.s32.totalorder %s26, 0
      %p179 = por %p177, %p178
      %s181 = sadd.s32 %s180, 1
      %p184 = scmp.eq.s32.totalorder %s20, 1
      %p185 = scmp.ne.s32.totalorder %s180, %s182
      %p186 = scmp.eq.s32.totalorder %s20, 0
      %p187 = por %p185, %p186
      %p188 = scmp.ne.s32.totalorder %s180, %s182
      %p189 = scmp.eq.s32.totalorder %s25, 1
      %p190 = por %p188, %p189
      %p191 = scmp.ne.s32.totalorder %s182, %s183
      %p192 = scmp.eq.s32.totalorder %s25, 0
      %p193 = por %p191, %p192
      %p194 = scmp.ne.s32.totalorder %s182, %s183
      %p195 = scmp.eq.s32.totalorder %s26, 1
      %p196 = por %p194, %p195
      %p198 = scmp.ne.s32.totalorder %s183, %s197
      %p199 = scmp.eq.s32.totalorder %s26, 0
      %p200 = por %p198, %p199
      %s202 = sadd.s32 %s201, 1
      %p205 = scmp.eq.s32.totalorder %s20, 1
      %p206 = scmp.ne.s32.totalorder %s201, %s203
      %p207 = scmp.eq.s32.totalorder %s20, 0
      %p208 = por %p206, %p207
      %p209 = scmp.ne.s32.totalorder %s201, %s203
      %p210 = scmp.eq.s32.totalorder %s25, 1
      %p211 = por %p209, %p210
      %p212 = scmp.ne.s32.totalorder %s203, %s204
      %p213 = scmp.eq.s32.totalorder %s25, 0
      %p214 = por %p212, %p213
      %p215 = scmp.ne.s32.totalorder %s203, %s204
      %p216 = scmp.eq.s32.totalorder %s26, 1
      %p217 = por %p215, %p216
      %p219 = scmp.ne.s32.totalorder %s204, %s218
      %p220 = scmp.eq.s32.totalorder %s26, 0
      %p221 = por %p219, %p220
      %s223 = sadd.s32 %s222, 1
      %p226 = scmp.eq.s32.totalorder %s20, 1
      %p227 = scmp.ne.s32.totalorder %s222, %s224
      %p228 = scmp.eq.s32.totalorder %s20, 0
      %p229 = por %p227, %p228
      %p230 = scmp.ne.s32.totalorder %s222, %s224
      %p231 = scmp.eq.s32.totalorder %s25, 1
      %p232 = por %p230, %p231
      %p233 = scmp.ne.s32.totalorder %s224, %s225
      %p234 = scmp.eq.s32.totalorder %s25, 0
      %p235 = por %p233, %p234
      %p236 = scmp.ne.s32.totalorder %s224, %s225
      %p237 = scmp.eq.s32.totalorder %s26, 1
      %p238 = por %p236, %p237
      %p240 = scmp.ne.s32.totalorder %s225, %s239
      %p241 = scmp.eq.s32.totalorder %s26, 0
      %p242 = por %p240, %p241
      %s243 = ssub.s32 %s20, %s27
      %p244 = scmp.eq.s32.totalorder %s243, 0
      %s246 = sadd.s32 %s245, 1
      %s247 = scalar_select %p244, %s245, %s246
      %p250 = pneg %p244
      %p251 = scmp.eq.s32.totalorder %s20, 1
      %p252 = por %p250, %p251
      %p253 = scmp.ne.s32.totalorder %s245, %s248
      %p254 = scmp.eq.s32.totalorder %s20, 0
      %p255 = por %p253, %p254
      %p256 = scmp.ne.s32.totalorder %s245, %s248
      %p257 = scmp.eq.s32.totalorder %s25, 1
      %p258 = por %p256, %p257
      %p259 = scmp.ne.s32.totalorder %s248, %s249
      %p260 = scmp.eq.s32.totalorder %s25, 0
      %p261 = por %p259, %p260
      %p262 = scmp.ne.s32.totalorder %s248, %s249
      %p263 = scmp.eq.s32.totalorder %s26, 1
      %p264 = por %p262, %p263
      %p266 = scmp.ne.s32.totalorder %s249, %s265
      %p267 = scmp.eq.s32.totalorder %s26, 0
      %p268 = por %p266, %p267
      %p269 = scmp.le.s32.totalorder 1, %s20
      %p270 = scmp.lt.s32.totalorder %s20, 3
      %p271 = pnand %p269, %p270
      %p272 = pneg %p271
      // Predicated region
      $region9: #{skblock_forward.1} parent=5 // pred_check
        _
      $region10: #{skblock_forward.1} parent=5 // pred_check_branch
        %274 = sbr.rel (%p271) target = $region12
      $region11: #{skblock_forward.1} parent=5 // pred_region
        %s275 = ssub.s32 %s20, 1
        // Predicated region
        $region13: #{skblock_forward.1} parent=11 // pred_check
          %p276 = pneg %p67
        $region14: #{skblock_forward.1} parent=11 // pred_check_branch
          %278 = sbr.rel (%p276) target = $region16
        $region15: #{skblock_forward.1} parent=11 // pred_region
          _
        $region16: #{skblock_forward.1} parent=11 // pred_fallthru
          _
        // Predicated region
        $region17: #{skblock_forward.1} parent=11 // pred_check
          %p279 = pneg %p88
        $region18: #{skblock_forward.1} parent=11 // pred_check_branch
          %281 = sbr.rel (%p279) target = $region20
        $region19: #{skblock_forward.1} parent=11 // pred_region
          _
        $region20: #{skblock_forward.1} parent=11 // pred_fallthru
          _
        // Predicated region
        $region21: #{skblock_forward.1} parent=11 // pred_check
          %p282 = pneg %p109
        $region22: #{skblock_forward.1} parent=11 // pred_check_branch
          %284 = sbr.rel (%p282) target = $region24
        $region23: #{skblock_forward.1} parent=11 // pred_region
          _
        $region24: #{skblock_forward.1} parent=11 // pred_fallthru
          _
        // Predicated region
        $region25: #{skblock_forward.1} parent=11 // pred_check
          %p285 = pneg %p130
        $region26: #{skblock_forward.1} parent=11 // pred_check_branch
          %287 = sbr.rel (%p285) target = $region28
        $region27: #{skblock_forward.1} parent=11 // pred_region
          _
        $region28: #{skblock_forward.1} parent=11 // pred_fallthru
          _
        // Predicated region
        $region29: #{skblock_forward.1} parent=11 // pred_check
          %p288 = pneg %p151
        $region30: #{skblock_forward.1} parent=11 // pred_check_branch
          %290 = sbr.rel (%p288) target = $region32
        $region31: #{skblock_forward.1} parent=11 // pred_region
          _
        $region32: #{skblock_forward.1} parent=11 // pred_fallthru
          _
        // Predicated region
        $region33: #{skblock_forward.1} parent=11 // pred_check
          %p291 = pneg %p172
        $region34: #{skblock_forward.1} parent=11 // pred_check_branch
          %293 = sbr.rel (%p291) target = $region36
        $region35: #{skblock_forward.1} parent=11 // pred_region
          _
        $region36: #{skblock_forward.1} parent=11 // pred_fallthru
          _
        // Predicated region
        $region37: #{skblock_forward.1} parent=11 // pred_check
          %p294 = pneg %p193
        $region38: #{skblock_forward.1} parent=11 // pred_check_branch
          %296 = sbr.rel (%p294) target = $region40
        $region39: #{skblock_forward.1} parent=11 // pred_region
          _
        $region40: #{skblock_forward.1} parent=11 // pred_fallthru
          _
        // Predicated region
        $region41: #{skblock_forward.1} parent=11 // pred_check
          %p297 = pneg %p214
        $region42: #{skblock_forward.1} parent=11 // pred_check_branch
          %299 = sbr.rel (%p297) target = $region44
        $region43: #{skblock_forward.1} parent=11 // pred_region
          _
        $region44: #{skblock_forward.1} parent=11 // pred_fallthru
          _
        // Predicated region
        $region45: #{skblock_forward.1} parent=11 // pred_check
          %p300 = pneg %p235
        $region46: #{skblock_forward.1} parent=11 // pred_check_branch
          %302 = sbr.rel (%p300) target = $region48
        $region47: #{skblock_forward.1} parent=11 // pred_region
          %304 = vsyncadd [#allocation5], 0
          %s306 = sshll.u32 %s9, 4
          %s307 = int_to_ptr.vmem [resolvable:$true] %s306
          %309 = dma.vmem_to_smem %s307, 16, [#allocation3], [#allocation5]
        $region48: #{skblock_forward.1} parent=11 // pred_fallthru
          _
      $region12: #{skblock_forward.1} parent=5 // pred_fallthru
        _
      %p310 = scmp.lt.s32.totalorder %s20, 2
      // Predicated region
      $region49: #{skblock_forward.1} parent=5 // pred_check
        %p311 = pneg %p310
      $region50: #{skblock_forward.1} parent=5 // pred_check_branch
        %313 = sbr.rel (%p311) target = $region52
      $region51: #{skblock_forward.1} parent=5 // pred_region
        // Predicated region
        $region53: #{skblock_forward.1} parent=51 // pred_check
          %p314 = pneg %p40
        $region54: #{skblock_forward.1} parent=51 // pred_check_branch
          %316 = sbr.rel (%p314) target = $region56
        $region55: #{skblock_forward.1} parent=51 // pred_region
          %p317 = scmp.lt.s32.totalorder %s20, 1
          %s318 = scalar_select %p317, %s20, 1
          %s319 = smul.addr %s318, 32
          %s320 = smul.addr %s319, 8
          %s321 = scalar_lea.vmem %s0, %s320
        $region56: #{skblock_forward.1} parent=51 // pred_fallthru
          _
      $region52: #{skblock_forward.1} parent=5 // pred_fallthru
        _
      %p322 = scmp.le.s32.totalorder 1, %s20
      %p323 = scmp.lt.s32.totalorder %s20, 3
      %p324 = pnand %p322, %p323
      %p325 = pneg %p324
      // Predicated region
      $region57: #{skblock_forward.1} parent=5 // pred_check
        _
      $region58: #{skblock_forward.1} parent=5 // pred_check_branch
        %327 = sbr.rel (%p324) target = $region60
      $region59: #{skblock_forward.1} parent=5 // pred_region
        %s328 = ssub.s32 %s20, 1
        // Predicated region
        $region61: #{skblock_forward.1} parent=59 // pred_check
          %p329 = pneg %p235
        $region62: #{skblock_forward.1} parent=59 // pred_check_branch
          %331 = sbr.rel (%p329) target = $region64
        $region63: #{skblock_forward.1} parent=59 // pred_region
          %333 = dma.done [#allocation5], 16
        $region64: #{skblock_forward.1} parent=59 // pred_fallthru
          _
        %334 = sfence
        %p335 = scmp.lt.s32.totalorder %s25, 1
        %s336 = scalar_select %p335, %s25, 1
        %s337 = smul.addr %s336, 32
        %s338 = smul.addr %s337, 8
        %s339 = scalar_lea.vmem %s0, %s338
        %p340 = pneg %p46
        %p341 = pneg %p43
        %p342 = pneg %p67
        %p343 = pneg %p64
        %p344 = pneg %p88
        %p345 = pneg %p85
        %p346 = pneg %p109
        %p347 = pneg %p106
        %p348 = pneg %p130
        %p349 = pneg %p127
        %p350 = pneg %p151
        %p351 = pneg %p148
        %p352 = pneg %p172
        %p353 = pneg %p169
        %p354 = pneg %p193
        %p355 = pneg %p190
        %p356 = pneg %p214
        %p357 = pneg %p211
        %p358 = pneg %p235
        %p359 = pneg %p232
        %p360 = pneg %p261
        %p361 = pneg %p258
        %s362 = sand.u32 %s248, 1
        %s363 = scalar_lea.sflag [#allocation4], %s362
        %s364 = sand.u32 %s248, 1
        %s365 = smul.addr %s364, 256
        %s366 = scalar_lea.vmem [#allocation6], %s365
        %p367 = scmp.lt.s32.totalorder %s25, 1
        %s368 = scalar_select %p367, %s25, 1
        %s369 = smul.addr %s368, 32
        %s370 = smul.addr %s369, 8
        %s371 = scalar_lea.vmem %s0, %s370
        %vm372 = vcmask 261120
        %373 = vst.msk [vmem:[#allocation2] sm:$0xff] %vm372, 0.0
        %374 = vst.msk [vmem:[#allocation2 + $0x8] sm:$0xff] %vm372, 0.0
        %vm375 = vcmask 257024
        %376 = vst.msk [vmem:[#allocation2 + $0x10] sm:$0xf] %vm375, 0.0
        %377 = vst.msk [vmem:[#allocation2 + $0x18] sm:$0xff] %vm372, 0.0
        %378 = vst.msk [vmem:[#allocation2 + $0x20] sm:$0xff] %vm372, 0.0
        %379 = vst.msk [vmem:[#allocation2 + $0x28] sm:$0xf] %vm375, 0.0
        %380 = vst.msk [vmem:[#allocation2 + $0x30] sm:$0xff] %vm372, 0.0
        %381 = vst.msk [vmem:[#allocation2 + $0x38] sm:$0xff] %vm372, 0.0
        %382 = vst.msk [vmem:[#allocation2 + $0x40] sm:$0xf] %vm375, 0.0
        %383 = vst.msk [vmem:[#allocation2 + $0x48] sm:$0xff] %vm372, 0.0
        %384 = vst.msk [vmem:[#allocation2 + $0x50] sm:$0xff] %vm372, 0.0
        %385 = vst.msk [vmem:[#allocation2 + $0x58] sm:$0xf] %vm375, 0.0
        %386 = vst.msk [vmem:[#allocation2 + $0x60] sm:$0xff] %vm372, 0.0
        %387 = vst.msk [vmem:[#allocation2 + $0x68] sm:$0xff] %vm372, 0.0
        %388 = vst.msk [vmem:[#allocation2 + $0x70] sm:$0xf] %vm375, 0.0
        %389 = vst.msk [vmem:[#allocation2 + $0x78] sm:$0xff] %vm372, 0.0
        %390 = vst.msk [vmem:[#allocation2 + $0x80] sm:$0xff] %vm372, 0.0
        %391 = vst.msk [vmem:[#allocation2 + $0x88] sm:$0xf] %vm375, 0.0
        %392 = vst.msk [vmem:[#allocation2 + $0x90] sm:$0xff] %vm372, 0.0
        %393 = vst.msk [vmem:[#allocation2 + $0x98] sm:$0xff] %vm372, 0.0
        %394 = vst.msk [vmem:[#allocation2 + $0xa0] sm:$0xf] %vm375, 0.0
        %395 = vst.msk [vmem:[#allocation2 + $0xa8] sm:$0xff] %vm372, 0.0
        %396 = vst.msk [vmem:[#allocation2 + $0xb0] sm:$0xff] %vm372, 0.0
        %397 = vst.msk [vmem:[#allocation2 + $0xb8] sm:$0xf] %vm375, 0.0
        %398 = vst.msk [vmem:[#allocation2 + $0xc0] sm:$0xff] %vm372, 0.0
        %399 = vst.msk [vmem:[#allocation2 + $0xc8] sm:$0xff] %vm372, 0.0
        %400 = vst.msk [vmem:[#allocation2 + $0xd0] sm:$0xf] %vm375, 0.0
        %401 = vst.msk [vmem:[#allocation2 + $0xd8] sm:$0xff] %vm372, 0.0
        %402 = vst.msk [vmem:[#allocation2 + $0xe0] sm:$0xff] %vm372, 0.0
        %403 = vst.msk [vmem:[#allocation2 + $0xe8] sm:$0xf] %vm375, 0.0
        %404 = vst.msk [vmem:[#allocation2 + $0xf0] sm:$0xff] %vm372, 0.0
        %405 = vst.msk [vmem:[#allocation2 + $0xf8] sm:$0xff] %vm372, 0.0
        %406 = vst.msk [vmem:[#allocation2 + $0x100] sm:$0xf] %vm375, 0.0
        %407 = vst.msk [vmem:[#allocation2 + $0x108] sm:$0xff] %vm372, 0.0
        %408 = vst.msk [vmem:[#allocation2 + $0x110] sm:$0xff] %vm372, 0.0
        %409 = vst.msk [vmem:[#allocation2 + $0x118] sm:$0xf] %vm375, 0.0
        %410 = vst.msk [vmem:[#allocation2 + $0x120] sm:$0xff] %vm372, 0.0
        %411 = vst.msk [vmem:[#allocation2 + $0x128] sm:$0xff] %vm372, 0.0
        %412 = vst.msk [vmem:[#allocation2 + $0x130] sm:$0xf] %vm375, 0.0
        %413 = vst.msk [vmem:[#allocation2 + $0x138] sm:$0xff] %vm372, 0.0
        %414 = vst.msk [vmem:[#allocation2 + $0x140] sm:$0xff] %vm372, 0.0
        %415 = vst.msk [vmem:[#allocation2 + $0x148] sm:$0xf] %vm375, 0.0
        %416 = vst.msk [vmem:[#allocation2 + $0x150] sm:$0xff] %vm372, 0.0
        %417 = vst.msk [vmem:[#allocation2 + $0x158] sm:$0xff] %vm372, 0.0
        %418 = vst.msk [vmem:[#allocation2 + $0x160] sm:$0xf] %vm375, 0.0
        %419 = vst.msk [vmem:[#allocation2 + $0x168] sm:$0xff] %vm372, 0.0
        %420 = vst.msk [vmem:[#allocation2 + $0x170] sm:$0xff] %vm372, 0.0
        %421 = vst.msk [vmem:[#allocation2 + $0x178] sm:$0xf] %vm375, 0.0
        %422 = vst.msk [vmem:[#allocation2 + $0x180] sm:$0xff] %vm372, 0.0
        %423 = vst.msk [vmem:[#allocation2 + $0x188] sm:$0xff] %vm372, 0.0
        %424 = vst.msk [vmem:[#allocation2 + $0x190] sm:$0xf] %vm375, 0.0
        %425 = vst.msk [vmem:[#allocation2 + $0x198] sm:$0xff] %vm372, 0.0
        %426 = vst.msk [vmem:[#allocation2 + $0x1a0] sm:$0xff] %vm372, 0.0
        %427 = vst.msk [vmem:[#allocation2 + $0x1a8] sm:$0xf] %vm375, 0.0
        %428 = vst.msk [vmem:[#allocation2 + $0x1b0] sm:$0xff] %vm372, 0.0
        %429 = vst.msk [vmem:[#allocation2 + $0x1b8] sm:$0xff] %vm372, 0.0
        %430 = vst.msk [vmem:[#allocation2 + $0x1c0] sm:$0xf] %vm375, 0.0
        %431 = vst.msk [vmem:[#allocation2 + $0x1c8] sm:$0xff] %vm372, 0.0
        %432 = vst.msk [vmem:[#allocation2 + $0x1d0] sm:$0xff] %vm372, 0.0
        %433 = vst.msk [vmem:[#allocation2 + $0x1d8] sm:$0xf] %vm375, 0.0
        %s434 = sld [smem:[#allocation3]]
        %s435 = sld [smem:[#allocation3 + $0x1]]
        %s436 = sld [smem:[#allocation3 + $0x2]]
        %s437 = sld [smem:[#allocation3 + $0x3]]
        %s438 = sld [smem:[#allocation3 + $0x4]]
        %s439 = sld [smem:[#allocation3 + $0x5]]
        %s440 = sld [smem:[#allocation3 + $0x6]]
        %s441 = sld [smem:[#allocation3 + $0x7]]
        %s442 = sld [smem:[#allocation3 + $0x8]]
        %v443 = vld [vmem:[%s371] sm:$0xff]
        %v444 = vld [vmem:[%s371 + $0x8] sm:$0xff]
        %v445 = vld [vmem:[%s371 + $0x10] sm:$0xff]
        %v446 = vld [vmem:[%s371 + $0x18] sm:$0xff]
        %v447 = vld [vmem:[%s371 + $0x20] sm:$0xff]
        %v448 = vld [vmem:[%s371 + $0x28] sm:$0xff]
        %v449 = vld [vmem:[%s371 + $0x30] sm:$0xff]
        %v450 = vld [vmem:[%s371 + $0x38] sm:$0xff]
        %v451 = vld [vmem:[%s371 + $0x40] sm:$0xff]
        %v452 = vld [vmem:[%s371 + $0x48] sm:$0xff]
        %v453 = vld [vmem:[%s371 + $0x50] sm:$0xff]
        %v454 = vld [vmem:[%s371 + $0x58] sm:$0xff]
        %v455 = vld [vmem:[%s371 + $0x60] sm:$0xff]
        %v456 = vld [vmem:[%s371 + $0x68] sm:$0xff]
        %v457 = vld [vmem:[%s371 + $0x70] sm:$0xff]
        %v458 = vld [vmem:[%s371 + $0x78] sm:$0xff]
        %v459 = vld [vmem:[%s371 + $0x80] sm:$0xff]
        %v460 = vld [vmem:[%s371 + $0x88] sm:$0xff]
        %v461 = vld [vmem:[%s371 + $0x90] sm:$0xff]
        %v462 = vld [vmem:[%s371 + $0x98] sm:$0xff]
        %v463 = vld [vmem:[%s371 + $0xa0] sm:$0xff]
        %v464 = vld [vmem:[%s371 + $0xa8] sm:$0xff]
        %v465 = vld [vmem:[%s371 + $0xb0] sm:$0xff]
        %v466 = vld [vmem:[%s371 + $0xb8] sm:$0xff]
        %v467 = vld [vmem:[%s371 + $0xc0] sm:$0xff]
        %v468 = vld [vmem:[%s371 + $0xc8] sm:$0xff]
        %v469 = vld [vmem:[%s371 + $0xd0] sm:$0xff]
        %v470 = vld [vmem:[%s371 + $0xd8] sm:$0xff]
        %v471 = vld [vmem:[%s371 + $0xe0] sm:$0xff]
        %v472 = vld [vmem:[%s371 + $0xe8] sm:$0xff]
        %v473 = vld [vmem:[%s371 + $0xf0] sm:$0xff]
        %v474 = vld [vmem:[%s371 + $0xf8] sm:$0xff]
        %s475 = scalar_lea.vmem [#allocation2], 48
        %476 = vst.msk [vmem:[%s475 + $0x2] sm:$0xff] %vm372, %v443
        %477 = vst.msk [vmem:[%s475 + $0xa] sm:$0xff] %vm372, %v444
        %478 = vst.msk [vmem:[%s475 + $0x1a] sm:$0xff] %vm372, %v445
        %479 = vst.msk [vmem:[%s475 + $0x22] sm:$0xff] %vm372, %v446
        %480 = vst.msk [vmem:[%s475 + $0x32] sm:$0xff] %vm372, %v447
        %481 = vst.msk [vmem:[%s475 + $0x3a] sm:$0xff] %vm372, %v448
        %482 = vst.msk [vmem:[%s475 + $0x4a] sm:$0xff] %vm372, %v449
        %483 = vst.msk [vmem:[%s475 + $0x52] sm:$0xff] %vm372, %v450
        %484 = vst.msk [vmem:[%s475 + $0x62] sm:$0xff] %vm372, %v451
        %485 = vst.msk [vmem:[%s475 + $0x6a] sm:$0xff] %vm372, %v452
        %486 = vst.msk [vmem:[%s475 + $0x7a] sm:$0xff] %vm372, %v453
        %487 = vst.msk [vmem:[%s475 + $0x82] sm:$0xff] %vm372, %v454
        %488 = vst.msk [vmem:[%s475 + $0x92] sm:$0xff] %vm372, %v455
        %489 = vst.msk [vmem:[%s475 + $0x9a] sm:$0xff] %vm372, %v456
        %490 = vst.msk [vmem:[%s475 + $0xaa] sm:$0xff] %vm372, %v457
        %491 = vst.msk [vmem:[%s475 + $0xb2] sm:$0xff] %vm372, %v458
        %492 = vst.msk [vmem:[%s475 + $0xc2] sm:$0xff] %vm372, %v459
        %493 = vst.msk [vmem:[%s475 + $0xca] sm:$0xff] %vm372, %v460
        %494 = vst.msk [vmem:[%s475 + $0xda] sm:$0xff] %vm372, %v461
        %495 = vst.msk [vmem:[%s475 + $0xe2] sm:$0xff] %vm372, %v462
        %496 = vst.msk [vmem:[%s475 + $0xf2] sm:$0xff] %vm372, %v463
        %497 = vst.msk [vmem:[%s475 + $0xfa] sm:$0xff] %vm372, %v464
        %498 = vst.msk [vmem:[%s475 + $0x10a] sm:$0xff] %vm372, %v465
        %499 = vst.msk [vmem:[%s475 + $0x112] sm:$0xff] %vm372, %v466
        %500 = vst.msk [vmem:[%s475 + $0x122] sm:$0xff] %vm372, %v467
        %501 = vst.msk [vmem:[%s475 + $0x12a] sm:$0xff] %vm372, %v468
        %502 = vst.msk [vmem:[%s475 + $0x13a] sm:$0xff] %vm372, %v469
        %503 = vst.msk [vmem:[%s475 + $0x142] sm:$0xff] %vm372, %v470
        %504 = vst.msk [vmem:[%s475 + $0x152] sm:$0xff] %vm372, %v471
        %505 = vst.msk [vmem:[%s475 + $0x15a] sm:$0xff] %vm372, %v472
        %506 = vst.msk [vmem:[%s475 + $0x16a] sm:$0xff] %vm372, %v473
        %507 = vst.msk [vmem:[%s475 + $0x172] sm:$0xff] %vm372, %v474
        %s508 = scalar_lea.vmem [#allocation2], 24
        %v509 = vld [vmem:[%s508 + $0x1] sm:$0xff]
        %v510 = vld [vmem:[%s508 + $0x9] sm:$0xff]
        %v511 = vld [vmem:[%s508 + $0x19] sm:$0xff]
        %v512 = vld [vmem:[%s508 + $0x21] sm:$0xff]
        %v513 = vld [vmem:[%s508 + $0x31] sm:$0xff]
        %v514 = vld [vmem:[%s508 + $0x39] sm:$0xff]
        %v515 = vld [vmem:[%s508 + $0x49] sm:$0xff]
        %v516 = vld [vmem:[%s508 + $0x51] sm:$0xff]
        %v517 = vld [vmem:[%s508 + $0x61] sm:$0xff]
        %v518 = vld [vmem:[%s508 + $0x69] sm:$0xff]
        %v519 = vld [vmem:[%s508 + $0x79] sm:$0xff]
        %v520 = vld [vmem:[%s508 + $0x81] sm:$0xff]
        %v521 = vld [vmem:[%s508 + $0x91] sm:$0xff]
        %v522 = vld [vmem:[%s508 + $0x99] sm:$0xff]
        %v523 = vld [vmem:[%s508 + $0xa9] sm:$0xff]
        %v524 = vld [vmem:[%s508 + $0xb1] sm:$0xff]
        %v525 = vld [vmem:[%s508 + $0xc1] sm:$0xff]
        %v526 = vld [vmem:[%s508 + $0xc9] sm:$0xff]
        %v527 = vld [vmem:[%s508 + $0xd9] sm:$0xff]
        %v528 = vld [vmem:[%s508 + $0xe1] sm:$0xff]
        %v529 = vld [vmem:[%s508 + $0xf1] sm:$0xff]
        %v530 = vld [vmem:[%s508 + $0xf9] sm:$0xff]
        %v531 = vld [vmem:[%s508 + $0x109] sm:$0xff]
        %v532 = vld [vmem:[%s508 + $0x111] sm:$0xff]
        %v533 = vld [vmem:[%s508 + $0x121] sm:$0xff]
        %v534 = vld [vmem:[%s508 + $0x129] sm:$0xff]
        %v535 = vld [vmem:[%s508 + $0x139] sm:$0xff]
        %v536 = vld [vmem:[%s508 + $0x141] sm:$0xff]
        %v537 = vld [vmem:[%s508 + $0x151] sm:$0xff]
        %v538 = vld [vmem:[%s508 + $0x159] sm:$0xff]
        %v539 = vld [vmem:[%s508 + $0x169] sm:$0xff]
        %v540 = vld [vmem:[%s508 + $0x171] sm:$0xff]
        %v541 = vld [vmem:[%s508 + $0x2] sm:$0xff]
        %v542 = vld [vmem:[%s508 + $0xa] sm:$0xff]
        %v543 = vld [vmem:[%s508 + $0x1a] sm:$0xff]
        %v544 = vld [vmem:[%s508 + $0x22] sm:$0xff]
        %v545 = vld [vmem:[%s508 + $0x32] sm:$0xff]
        %v546 = vld [vmem:[%s508 + $0x3a] sm:$0xff]
        %v547 = vld [vmem:[%s508 + $0x4a] sm:$0xff]
        %v548 = vld [vmem:[%s508 + $0x52] sm:$0xff]
        %v549 = vld [vmem:[%s508 + $0x62] sm:$0xff]
        %v550 = vld [vmem:[%s508 + $0x6a] sm:$0xff]
        %v551 = vld [vmem:[%s508 + $0x7a] sm:$0xff]
        %v552 = vld [vmem:[%s508 + $0x82] sm:$0xff]
        %v553 = vld [vmem:[%s508 + $0x92] sm:$0xff]
        %v554 = vld [vmem:[%s508 + $0x9a] sm:$0xff]
        %v555 = vld [vmem:[%s508 + $0xaa] sm:$0xff]
        %v556 = vld [vmem:[%s508 + $0xb2] sm:$0xff]
        %v557 = vld [vmem:[%s508 + $0xc2] sm:$0xff]
        %v558 = vld [vmem:[%s508 + $0xca] sm:$0xff]
        %v559 = vld [vmem:[%s508 + $0xda] sm:$0xff]
        %v560 = vld [vmem:[%s508 + $0xe2] sm:$0xff]
        %v561 = vld [vmem:[%s508 + $0xf2] sm:$0xff]
        %v562 = vld [vmem:[%s508 + $0xfa] sm:$0xff]
        %v563 = vld [vmem:[%s508 + $0x10a] sm:$0xff]
        %v564 = vld [vmem:[%s508 + $0x112] sm:$0xff]
        %v565 = vld [vmem:[%s508 + $0x122] sm:$0xff]
        %v566 = vld [vmem:[%s508 + $0x12a] sm:$0xff]
        %v567 = vld [vmem:[%s508 + $0x13a] sm:$0xff]
        %v568 = vld [vmem:[%s508 + $0x142] sm:$0xff]
        %v569 = vld [vmem:[%s508 + $0x152] sm:$0xff]
        %v570 = vld [vmem:[%s508 + $0x15a] sm:$0xff]
        %v571 = vld [vmem:[%s508 + $0x16a] sm:$0xff]
        %v572 = vld [vmem:[%s508 + $0x172] sm:$0xff]
        %v573 = vld [vmem:[%s508 + $0x3] sm:$0xff]
        %v574 = vld [vmem:[%s508 + $0xb] sm:$0xff]
        %v575 = vld [vmem:[%s508 + $0x1b] sm:$0xff]
        %v576 = vld [vmem:[%s508 + $0x23] sm:$0xff]
        %v577 = vld [vmem:[%s508 + $0x33] sm:$0xff]
        %v578 = vld [vmem:[%s508 + $0x3b] sm:$0xff]
        %v579 = vld [vmem:[%s508 + $0x4b] sm:$0xff]
        %v580 = vld [vmem:[%s508 + $0x53] sm:$0xff]
        %v581 = vld [vmem:[%s508 + $0x63] sm:$0xff]
        %v582 = vld [vmem:[%s508 + $0x6b] sm:$0xff]
        %v583 = vld [vmem:[%s508 + $0x7b] sm:$0xff]
        %v584 = vld [vmem:[%s508 + $0x83] sm:$0xff]
        %v585 = vld [vmem:[%s508 + $0x93] sm:$0xff]
        %v586 = vld [vmem:[%s508 + $0x9b] sm:$0xff]
        %v587 = vld [vmem:[%s508 + $0xab] sm:$0xff]
        %v588 = vld [vmem:[%s508 + $0xb3] sm:$0xff]
        %v589 = vld [vmem:[%s508 + $0xc3] sm:$0xff]
        %v590 = vld [vmem:[%s508 + $0xcb] sm:$0xff]
        %v591 = vld [vmem:[%s508 + $0xdb] sm:$0xff]
        %v592 = vld [vmem:[%s508 + $0xe3] sm:$0xff]
        %v593 = vld [vmem:[%s508 + $0xf3] sm:$0xff]
        %v594 = vld [vmem:[%s508 + $0xfb] sm:$0xff]
        %v595 = vld [vmem:[%s508 + $0x10b] sm:$0xff]
        %v596 = vld [vmem:[%s508 + $0x113] sm:$0xff]
        %v597 = vld [vmem:[%s508 + $0x123] sm:$0xff]
        %v598 = vld [vmem:[%s508 + $0x12b] sm:$0xff]
        %v599 = vld [vmem:[%s508 + $0x13b] sm:$0xff]
        %v600 = vld [vmem:[%s508 + $0x143] sm:$0xff]
        %v601 = vld [vmem:[%s508 + $0x153] sm:$0xff]
        %v602 = vld [vmem:[%s508 + $0x15b] sm:$0xff]
        %v603 = vld [vmem:[%s508 + $0x16b] sm:$0xff]
        %v604 = vld [vmem:[%s508 + $0x173] sm:$0xff]
        %v605 = vld [vmem:[%s475 + $0x1] sm:$0xff]
        %v606 = vld [vmem:[%s475 + $0x9] sm:$0xff]
        %v607 = vld [vmem:[%s475 + $0x19] sm:$0xff]
        %v608 = vld [vmem:[%s475 + $0x21] sm:$0xff]
        %v609 = vld [vmem:[%s475 + $0x31] sm:$0xff]
        %v610 = vld [vmem:[%s475 + $0x39] sm:$0xff]
        %v611 = vld [vmem:[%s475 + $0x49] sm:$0xff]
        %v612 = vld [vmem:[%s475 + $0x51] sm:$0xff]
        %v613 = vld [vmem:[%s475 + $0x61] sm:$0xff]
        %v614 = vld [vmem:[%s475 + $0x69] sm:$0xff]
        %v615 = vld [vmem:[%s475 + $0x79] sm:$0xff]
        %v616 = vld [vmem:[%s475 + $0x81] sm:$0xff]
        %v617 = vld [vmem:[%s475 + $0x91] sm:$0xff]
        %v618 = vld [vmem:[%s475 + $0x99] sm:$0xff]
        %v619 = vld [vmem:[%s475 + $0xa9] sm:$0xff]
        %v620 = vld [vmem:[%s475 + $0xb1] sm:$0xff]
        %v621 = vld [vmem:[%s475 + $0xc1] sm:$0xff]
        %v622 = vld [vmem:[%s475 + $0xc9] sm:$0xff]
        %v623 = vld [vmem:[%s475 + $0xd9] sm:$0xff]
        %v624 = vld [vmem:[%s475 + $0xe1] sm:$0xff]
        %v625 = vld [vmem:[%s475 + $0xf1] sm:$0xff]
        %v626 = vld [vmem:[%s475 + $0xf9] sm:$0xff]
        %v627 = vld [vmem:[%s475 + $0x109] sm:$0xff]
        %v628 = vld [vmem:[%s475 + $0x111] sm:$0xff]
        %v629 = vld [vmem:[%s475 + $0x121] sm:$0xff]
        %v630 = vld [vmem:[%s475 + $0x129] sm:$0xff]
        %v631 = vld [vmem:[%s475 + $0x139] sm:$0xff]
        %v632 = vld [vmem:[%s475 + $0x141] sm:$0xff]
        %v633 = vld [vmem:[%s475 + $0x151] sm:$0xff]
        %v634 = vld [vmem:[%s475 + $0x159] sm:$0xff]
        %v635 = vld [vmem:[%s475 + $0x169] sm:$0xff]
        %v636 = vld [vmem:[%s475 + $0x171] sm:$0xff]
        %v637 = vld [vmem:[%s475 + $0x2] sm:$0xff]
        %v638 = vld [vmem:[%s475 + $0xa] sm:$0xff]
        %v639 = vld [vmem:[%s475 + $0x1a] sm:$0xff]
        %v640 = vld [vmem:[%s475 + $0x22] sm:$0xff]
        %v641 = vld [vmem:[%s475 + $0x32] sm:$0xff]
        %v642 = vld [vmem:[%s475 + $0x3a] sm:$0xff]
        %v643 = vld [vmem:[%s475 + $0x4a] sm:$0xff]
        %v644 = vld [vmem:[%s475 + $0x52] sm:$0xff]
        %v645 = vld [vmem:[%s475 + $0x62] sm:$0xff]
        %v646 = vld [vmem:[%s475 + $0x6a] sm:$0xff]
        %v647 = vld [vmem:[%s475 + $0x7a] sm:$0xff]
        %v648 = vld [vmem:[%s475 + $0x82] sm:$0xff]
        %v649 = vld [vmem:[%s475 + $0x92] sm:$0xff]
        %v650 = vld [vmem:[%s475 + $0x9a] sm:$0xff]
        %v651 = vld [vmem:[%s475 + $0xaa] sm:$0xff]
        %v652 = vld [vmem:[%s475 + $0xb2] sm:$0xff]
        %v653 = vld [vmem:[%s475 + $0xc2] sm:$0xff]
        %v654 = vld [vmem:[%s475 + $0xca] sm:$0xff]
        %v655 = vld [vmem:[%s475 + $0xda] sm:$0xff]
        %v656 = vld [vmem:[%s475 + $0xe2] sm:$0xff]
        %v657 = vld [vmem:[%s475 + $0xf2] sm:$0xff]
        %v658 = vld [vmem:[%s475 + $0xfa] sm:$0xff]
        %v659 = vld [vmem:[%s475 + $0x10a] sm:$0xff]
        %v660 = vld [vmem:[%s475 + $0x112] sm:$0xff]
        %v661 = vld [vmem:[%s475 + $0x122] sm:$0xff]
        %v662 = vld [vmem:[%s475 + $0x12a] sm:$0xff]
        %v663 = vld [vmem:[%s475 + $0x13a] sm:$0xff]
        %v664 = vld [vmem:[%s475 + $0x142] sm:$0xff]
        %v665 = vld [vmem:[%s475 + $0x152] sm:$0xff]
        %v666 = vld [vmem:[%s475 + $0x15a] sm:$0xff]
        %v667 = vld [vmem:[%s475 + $0x16a] sm:$0xff]
        %v668 = vld [vmem:[%s475 + $0x172] sm:$0xff]
        %v669 = vld [vmem:[%s475 + $0x3] sm:$0xff]
        %v670 = vld [vmem:[%s475 + $0xb] sm:$0xff]
        %v671 = vld [vmem:[%s475 + $0x1b] sm:$0xff]
        %v672 = vld [vmem:[%s475 + $0x23] sm:$0xff]
        %v673 = vld [vmem:[%s475 + $0x33] sm:$0xff]
        %v674 = vld [vmem:[%s475 + $0x3b] sm:$0xff]
        %v675 = vld [vmem:[%s475 + $0x4b] sm:$0xff]
        %v676 = vld [vmem:[%s475 + $0x53] sm:$0xff]
        %v677 = vld [vmem:[%s475 + $0x63] sm:$0xff]
        %v678 = vld [vmem:[%s475 + $0x6b] sm:$0xff]
        %v679 = vld [vmem:[%s475 + $0x7b] sm:$0xff]
        %v680 = vld [vmem:[%s475 + $0x83] sm:$0xff]
        %v681 = vld [vmem:[%s475 + $0x93] sm:$0xff]
        %v682 = vld [vmem:[%s475 + $0x9b] sm:$0xff]
        %v683 = vld [vmem:[%s475 + $0xab] sm:$0xff]
        %v684 = vld [vmem:[%s475 + $0xb3] sm:$0xff]
        %v685 = vld [vmem:[%s475 + $0xc3] sm:$0xff]
        %v686 = vld [vmem:[%s475 + $0xcb] sm:$0xff]
        %v687 = vld [vmem:[%s475 + $0xdb] sm:$0xff]
        %v688 = vld [vmem:[%s475 + $0xe3] sm:$0xff]
        %v689 = vld [vmem:[%s475 + $0xf3] sm:$0xff]
        %v690 = vld [vmem:[%s475 + $0xfb] sm:$0xff]
        %v691 = vld [vmem:[%s475 + $0x10b] sm:$0xff]
        %v692 = vld [vmem:[%s475 + $0x113] sm:$0xff]
        %v693 = vld [vmem:[%s475 + $0x123] sm:$0xff]
        %v694 = vld [vmem:[%s475 + $0x12b] sm:$0xff]
        %v695 = vld [vmem:[%s475 + $0x13b] sm:$0xff]
        %v696 = vld [vmem:[%s475 + $0x143] sm:$0xff]
        %v697 = vld [vmem:[%s475 + $0x153] sm:$0xff]
        %v698 = vld [vmem:[%s475 + $0x15b] sm:$0xff]
        %v699 = vld [vmem:[%s475 + $0x16b] sm:$0xff]
        %v700 = vld [vmem:[%s475 + $0x173] sm:$0xff]
        %s701 = scalar_lea.vmem [#allocation2], 72
        %v702 = vld [vmem:[%s701 + $0x1] sm:$0xff]
        %v703 = vld [vmem:[%s701 + $0x9] sm:$0xff]
        %v704 = vld [vmem:[%s701 + $0x19] sm:$0xff]
        %v705 = vld [vmem:[%s701 + $0x21] sm:$0xff]
        %v706 = vld [vmem:[%s701 + $0x31] sm:$0xff]
        %v707 = vld [vmem:[%s701 + $0x39] sm:$0xff]
        %v708 = vld [vmem:[%s701 + $0x49] sm:$0xff]
        %v709 = vld [vmem:[%s701 + $0x51] sm:$0xff]
        %v710 = vld [vmem:[%s701 + $0x61] sm:$0xff]
        %v711 = vld [vmem:[%s701 + $0x69] sm:$0xff]
        %v712 = vld [vmem:[%s701 + $0x79] sm:$0xff]
        %v713 = vld [vmem:[%s701 + $0x81] sm:$0xff]
        %v714 = vld [vmem:[%s701 + $0x91] sm:$0xff]
        %v715 = vld [vmem:[%s701 + $0x99] sm:$0xff]
        %v716 = vld [vmem:[%s701 + $0xa9] sm:$0xff]
        %v717 = vld [vmem:[%s701 + $0xb1] sm:$0xff]
        %v718 = vld [vmem:[%s701 + $0xc1] sm:$0xff]
        %v719 = vld [vmem:[%s701 + $0xc9] sm:$0xff]
        %v720 = vld [vmem:[%s701 + $0xd9] sm:$0xff]
        %v721 = vld [vmem:[%s701 + $0xe1] sm:$0xff]
        %v722 = vld [vmem:[%s701 + $0xf1] sm:$0xff]
        %v723 = vld [vmem:[%s701 + $0xf9] sm:$0xff]
        %v724 = vld [vmem:[%s701 + $0x109] sm:$0xff]
        %v725 = vld [vmem:[%s701 + $0x111] sm:$0xff]
        %v726 = vld [vmem:[%s701 + $0x121] sm:$0xff]
        %v727 = vld [vmem:[%s701 + $0x129] sm:$0xff]
        %v728 = vld [vmem:[%s701 + $0x139] sm:$0xff]
        %v729 = vld [vmem:[%s701 + $0x141] sm:$0xff]
        %v730 = vld [vmem:[%s701 + $0x151] sm:$0xff]
        %v731 = vld [vmem:[%s701 + $0x159] sm:$0xff]
        %v732 = vld [vmem:[%s701 + $0x169] sm:$0xff]
        %v733 = vld [vmem:[%s701 + $0x171] sm:$0xff]
        %v734 = vld [vmem:[%s701 + $0x2] sm:$0xff]
        %v735 = vld [vmem:[%s701 + $0xa] sm:$0xff]
        %v736 = vld [vmem:[%s701 + $0x1a] sm:$0xff]
        %v737 = vld [vmem:[%s701 + $0x22] sm:$0xff]
        %v738 = vld [vmem:[%s701 + $0x32] sm:$0xff]
        %v739 = vld [vmem:[%s701 + $0x3a] sm:$0xff]
        %v740 = vld [vmem:[%s701 + $0x4a] sm:$0xff]
        %v741 = vld [vmem:[%s701 + $0x52] sm:$0xff]
        %v742 = vld [vmem:[%s701 + $0x62] sm:$0xff]
        %v743 = vld [vmem:[%s701 + $0x6a] sm:$0xff]
        %v744 = vld [vmem:[%s701 + $0x7a] sm:$0xff]
        %v745 = vld [vmem:[%s701 + $0x82] sm:$0xff]
        %v746 = vld [vmem:[%s701 + $0x92] sm:$0xff]
        %v747 = vld [vmem:[%s701 + $0x9a] sm:$0xff]
        %v748 = vld [vmem:[%s701 + $0xaa] sm:$0xff]
        %v749 = vld [vmem:[%s701 + $0xb2] sm:$0xff]
        %v750 = vld [vmem:[%s701 + $0xc2] sm:$0xff]
        %v751 = vld [vmem:[%s701 + $0xca] sm:$0xff]
        %v752 = vld [vmem:[%s701 + $0xda] sm:$0xff]
        %v753 = vld [vmem:[%s701 + $0xe2] sm:$0xff]
        %v754 = vld [vmem:[%s701 + $0xf2] sm:$0xff]
        %v755 = vld [vmem:[%s701 + $0xfa] sm:$0xff]
        %v756 = vld [vmem:[%s701 + $0x10a] sm:$0xff]
        %v757 = vld [vmem:[%s701 + $0x112] sm:$0xff]
        %v758 = vld [vmem:[%s701 + $0x122] sm:$0xff]
        %v759 = vld [vmem:[%s701 + $0x12a] sm:$0xff]
        %v760 = vld [vmem:[%s701 + $0x13a] sm:$0xff]
        %v761 = vld [vmem:[%s701 + $0x142] sm:$0xff]
        %v762 = vld [vmem:[%s701 + $0x152] sm:$0xff]
        %v763 = vld [vmem:[%s701 + $0x15a] sm:$0xff]
        %v764 = vld [vmem:[%s701 + $0x16a] sm:$0xff]
        %v765 = vld [vmem:[%s701 + $0x172] sm:$0xff]
        %v766 = vld [vmem:[%s701 + $0x3] sm:$0xff]
        %v767 = vld [vmem:[%s701 + $0xb] sm:$0xff]
        %v768 = vld [vmem:[%s701 + $0x1b] sm:$0xff]
        %v769 = vld [vmem:[%s701 + $0x23] sm:$0xff]
        %v770 = vld [vmem:[%s701 + $0x33] sm:$0xff]
        %v771 = vld [vmem:[%s701 + $0x3b] sm:$0xff]
        %v772 = vld [vmem:[%s701 + $0x4b] sm:$0xff]
        %v773 = vld [vmem:[%s701 + $0x53] sm:$0xff]
        %v774 = vld [vmem:[%s701 + $0x63] sm:$0xff]
        %v775 = vld [vmem:[%s701 + $0x6b] sm:$0xff]
        %v776 = vld [vmem:[%s701 + $0x7b] sm:$0xff]
        %v777 = vld [vmem:[%s701 + $0x83] sm:$0xff]
        %v778 = vld [vmem:[%s701 + $0x93] sm:$0xff]
        %v779 = vld [vmem:[%s701 + $0x9b] sm:$0xff]
        %v780 = vld [vmem:[%s701 + $0xab] sm:$0xff]
        %v781 = vld [vmem:[%s701 + $0xb3] sm:$0xff]
        %v782 = vld [vmem:[%s701 + $0xc3] sm:$0xff]
        %v783 = vld [vmem:[%s701 + $0xcb] sm:$0xff]
        %v784 = vld [vmem:[%s701 + $0xdb] sm:$0xff]
        %v785 = vld [vmem:[%s701 + $0xe3] sm:$0xff]
        %v786 = vld [vmem:[%s701 + $0xf3] sm:$0xff]
        %v787 = vld [vmem:[%s701 + $0xfb] sm:$0xff]
        %v788 = vld [vmem:[%s701 + $0x10b] sm:$0xff]
        %v789 = vld [vmem:[%s701 + $0x113] sm:$0xff]
        %v790 = vld [vmem:[%s701 + $0x123] sm:$0xff]
        %v791 = vld [vmem:[%s701 + $0x12b] sm:$0xff]
        %v792 = vld [vmem:[%s701 + $0x13b] sm:$0xff]
        %v793 = vld [vmem:[%s701 + $0x143] sm:$0xff]
        %v794 = vld [vmem:[%s701 + $0x153] sm:$0xff]
        %v795 = vld [vmem:[%s701 + $0x15b] sm:$0xff]
        %v796 = vld [vmem:[%s701 + $0x16b] sm:$0xff]
        %v797 = vld [vmem:[%s701 + $0x173] sm:$0xff]
        %830 = vrot.lane.b32.xlu0 %v541, 32
        %v831 = vpop.permute.xlu0 %830
        %832 = vrot.lane.b32.xlu0 %v542, 32
        %v833 = vpop.permute.xlu0 %832
        %834 = vrot.lane.b32.xlu0 %v543, 32
        %v835 = vpop.permute.xlu0 %834
        %836 = vrot.lane.b32.xlu0 %v544, 32
        %v837 = vpop.permute.xlu0 %836
        %838 = vrot.lane.b32.xlu0 %v545, 32
        %v839 = vpop.permute.xlu0 %838
        %840 = vrot.lane.b32.xlu0 %v546, 32
        %v841 = vpop.permute.xlu0 %840
        %842 = vrot.lane.b32.xlu0 %v547, 32
        %v843 = vpop.permute.xlu0 %842
        %844 = vrot.lane.b32.xlu0 %v548, 32
        %v845 = vpop.permute.xlu0 %844
        %846 = vrot.lane.b32.xlu0 %v549, 32
        %v847 = vpop.permute.xlu0 %846
        %848 = vrot.lane.b32.xlu0 %v550, 32
        %v849 = vpop.permute.xlu0 %848
        %850 = vrot.lane.b32.xlu0 %v551, 32
        %v851 = vpop.permute.xlu0 %850
        %852 = vrot.lane.b32.xlu0 %v552, 32
        %v853 = vpop.permute.xlu0 %852
        %854 = vrot.lane.b32.xlu0 %v553, 32
        %v855 = vpop.permute.xlu0 %854
        %856 = vrot.lane.b32.xlu0 %v554, 32
        %v857 = vpop.permute.xlu0 %856
        %858 = vrot.lane.b32.xlu0 %v555, 32
        %v859 = vpop.permute.xlu0 %858
        %860 = vrot.lane.b32.xlu0 %v556, 32
        %v861 = vpop.permute.xlu0 %860
        %862 = vrot.lane.b32.xlu0 %v557, 32
        %v863 = vpop.permute.xlu0 %862
        %864 = vrot.lane.b32.xlu0 %v558, 32
        %v865 = vpop.permute.xlu0 %864
        %866 = vrot.lane.b32.xlu0 %v559, 32
        %v867 = vpop.permute.xlu0 %866
        %868 = vrot.lane.b32.xlu0 %v560, 32
        %v869 = vpop.permute.xlu0 %868
        %870 = vrot.lane.b32.xlu0 %v561, 32
        %v871 = vpop.permute.xlu0 %870
        %872 = vrot.lane.b32.xlu0 %v562, 32
        %v873 = vpop.permute.xlu0 %872
        %874 = vrot.lane.b32.xlu0 %v563, 32
        %v875 = vpop.permute.xlu0 %874
        %876 = vrot.lane.b32.xlu0 %v564, 32
        %v877 = vpop.permute.xlu0 %876
        %878 = vrot.lane.b32.xlu0 %v565, 32
        %v879 = vpop.permute.xlu0 %878
        %880 = vrot.lane.b32.xlu0 %v566, 32
        %v881 = vpop.permute.xlu0 %880
        %882 = vrot.lane.b32.xlu0 %v567, 32
        %v883 = vpop.permute.xlu0 %882
        %884 = vrot.lane.b32.xlu0 %v568, 32
        %v885 = vpop.permute.xlu0 %884
        %886 = vrot.lane.b32.xlu0 %v569, 32
        %v887 = vpop.permute.xlu0 %886
        %888 = vrot.lane.b32.xlu0 %v570, 32
        %v889 = vpop.permute.xlu0 %888
        %890 = vrot.lane.b32.xlu0 %v571, 32
        %v891 = vpop.permute.xlu0 %890
        %892 = vrot.lane.b32.xlu0 %v572, 32
        %v893 = vpop.permute.xlu0 %892
        %958 = vrot.lane.b32.xlu0 %v573, 64
        %v959 = vpop.permute.xlu0 %958
        %960 = vrot.lane.b32.xlu0 %v574, 64
        %v961 = vpop.permute.xlu0 %960
        %962 = vrot.lane.b32.xlu0 %v575, 64
        %v963 = vpop.permute.xlu0 %962
        %964 = vrot.lane.b32.xlu0 %v576, 64
        %v965 = vpop.permute.xlu0 %964
        %966 = vrot.lane.b32.xlu0 %v577, 64
        %v967 = vpop.permute.xlu0 %966
        %968 = vrot.lane.b32.xlu0 %v578, 64
        %v969 = vpop.permute.xlu0 %968
        %970 = vrot.lane.b32.xlu0 %v579, 64
        %v971 = vpop.permute.xlu0 %970
        %972 = vrot.lane.b32.xlu0 %v580, 64
        %v973 = vpop.permute.xlu0 %972
        %974 = vrot.lane.b32.xlu0 %v581, 64
        %v975 = vpop.permute.xlu0 %974
        %976 = vrot.lane.b32.xlu0 %v582, 64
        %v977 = vpop.permute.xlu0 %976
        %978 = vrot.lane.b32.xlu0 %v583, 64
        %v979 = vpop.permute.xlu0 %978
        %980 = vrot.lane.b32.xlu0 %v584, 64
        %v981 = vpop.permute.xlu0 %980
        %982 = vrot.lane.b32.xlu0 %v585, 64
        %v983 = vpop.permute.xlu0 %982
        %984 = vrot.lane.b32.xlu0 %v586, 64
        %v985 = vpop.permute.xlu0 %984
        %986 = vrot.lane.b32.xlu0 %v587, 64
        %v987 = vpop.permute.xlu0 %986
        %988 = vrot.lane.b32.xlu0 %v588, 64
        %v989 = vpop.permute.xlu0 %988
        %990 = vrot.lane.b32.xlu0 %v589, 64
        %v991 = vpop.permute.xlu0 %990
        %992 = vrot.lane.b32.xlu0 %v590, 64
        %v993 = vpop.permute.xlu0 %992
        %994 = vrot.lane.b32.xlu0 %v591, 64
        %v995 = vpop.permute.xlu0 %994
        %996 = vrot.lane.b32.xlu0 %v592, 64
        %v997 = vpop.permute.xlu0 %996
        %998 = vrot.lane.b32.xlu0 %v593, 64
        %v999 = vpop.permute.xlu0 %998
        %1000 = vrot.lane.b32.xlu0 %v594, 64
        %v1001 = vpop.permute.xlu0 %1000
        %1002 = vrot.lane.b32.xlu0 %v595, 64
        %v1003 = vpop.permute.xlu0 %1002
        %1004 = vrot.lane.b32.xlu0 %v596, 64
        %v1005 = vpop.permute.xlu0 %1004
        %1006 = vrot.lane.b32.xlu0 %v597, 64
        %v1007 = vpop.permute.xlu0 %1006
        %1008 = vrot.lane.b32.xlu0 %v598, 64
        %v1009 = vpop.permute.xlu0 %1008
        %1010 = vrot.lane.b32.xlu0 %v599, 64
        %v1011 = vpop.permute.xlu0 %1010
        %1012 = vrot.lane.b32.xlu0 %v600, 64
        %v1013 = vpop.permute.xlu0 %1012
        %1014 = vrot.lane.b32.xlu0 %v601, 64
        %v1015 = vpop.permute.xlu0 %1014
        %1016 = vrot.lane.b32.xlu0 %v602, 64
        %v1017 = vpop.permute.xlu0 %1016
        %1018 = vrot.lane.b32.xlu0 %v603, 64
        %v1019 = vpop.permute.xlu0 %1018
        %1020 = vrot.lane.b32.xlu0 %v604, 64
        %v1021 = vpop.permute.xlu0 %1020
        %1086 = vrot.lane.b32.xlu0 %v605, 96
        %v1087 = vpop.permute.xlu0 %1086
        %1088 = vrot.lane.b32.xlu0 %v606, 96
        %v1089 = vpop.permute.xlu0 %1088
        %1090 = vrot.lane.b32.xlu0 %v607, 96
        %v1091 = vpop.permute.xlu0 %1090
        %1092 = vrot.lane.b32.xlu0 %v608, 96
        %v1093 = vpop.permute.xlu0 %1092
        %1094 = vrot.lane.b32.xlu0 %v609, 96
        %v1095 = vpop.permute.xlu0 %1094
        %1096 = vrot.lane.b32.xlu0 %v610, 96
        %v1097 = vpop.permute.xlu0 %1096
        %1098 = vrot.lane.b32.xlu0 %v611, 96
        %v1099 = vpop.permute.xlu0 %1098
        %1100 = vrot.lane.b32.xlu0 %v612, 96
        %v1101 = vpop.permute.xlu0 %1100
        %1102 = vrot.lane.b32.xlu0 %v613, 96
        %v1103 = vpop.permute.xlu0 %1102
        %1104 = vrot.lane.b32.xlu0 %v614, 96
        %v1105 = vpop.permute.xlu0 %1104
        %1106 = vrot.lane.b32.xlu0 %v615, 96
        %v1107 = vpop.permute.xlu0 %1106
        %1108 = vrot.lane.b32.xlu0 %v616, 96
        %v1109 = vpop.permute.xlu0 %1108
        %1110 = vrot.lane.b32.xlu0 %v617, 96
        %v1111 = vpop.permute.xlu0 %1110
        %1112 = vrot.lane.b32.xlu0 %v618, 96
        %v1113 = vpop.permute.xlu0 %1112
        %1114 = vrot.lane.b32.xlu0 %v619, 96
        %v1115 = vpop.permute.xlu0 %1114
        %1116 = vrot.lane.b32.xlu0 %v620, 96
        %v1117 = vpop.permute.xlu0 %1116
        %1118 = vrot.lane.b32.xlu0 %v621, 96
        %v1119 = vpop.permute.xlu0 %1118
        %1120 = vrot.lane.b32.xlu0 %v622, 96
        %v1121 = vpop.permute.xlu0 %1120
        %1122 = vrot.lane.b32.xlu0 %v623, 96
        %v1123 = vpop.permute.xlu0 %1122
        %1124 = vrot.lane.b32.xlu0 %v624, 96
        %v1125 = vpop.permute.xlu0 %1124
        %1126 = vrot.lane.b32.xlu0 %v625, 96
        %v1127 = vpop.permute.xlu0 %1126
        %1128 = vrot.lane.b32.xlu0 %v626, 96
        %v1129 = vpop.permute.xlu0 %1128
        %1130 = vrot.lane.b32.xlu0 %v627, 96
        %v1131 = vpop.permute.xlu0 %1130
        %1132 = vrot.lane.b32.xlu0 %v628, 96
        %v1133 = vpop.permute.xlu0 %1132
        %1134 = vrot.lane.b32.xlu0 %v629, 96
        %v1135 = vpop.permute.xlu0 %1134
        %1136 = vrot.lane.b32.xlu0 %v630, 96
        %v1137 = vpop.permute.xlu0 %1136
        %1138 = vrot.lane.b32.xlu0 %v631, 96
        %v1139 = vpop.permute.xlu0 %1138
        %1140 = vrot.lane.b32.xlu0 %v632, 96
        %v1141 = vpop.permute.xlu0 %1140
        %1142 = vrot.lane.b32.xlu0 %v633, 96
        %v1143 = vpop.permute.xlu0 %1142
        %1144 = vrot.lane.b32.xlu0 %v634, 96
        %v1145 = vpop.permute.xlu0 %1144
        %1146 = vrot.lane.b32.xlu0 %v635, 96
        %v1147 = vpop.permute.xlu0 %1146
        %1148 = vrot.lane.b32.xlu0 %v636, 96
        %v1149 = vpop.permute.xlu0 %1148
        %1214 = vrot.lane.b32.xlu0 %v669, 32
        %v1215 = vpop.permute.xlu0 %1214
        %1216 = vrot.lane.b32.xlu0 %v670, 32
        %v1217 = vpop.permute.xlu0 %1216
        %1218 = vrot.lane.b32.xlu0 %v671, 32
        %v1219 = vpop.permute.xlu0 %1218
        %1220 = vrot.lane.b32.xlu0 %v672, 32
        %v1221 = vpop.permute.xlu0 %1220
        %1222 = vrot.lane.b32.xlu0 %v673, 32
        %v1223 = vpop.permute.xlu0 %1222
        %1224 = vrot.lane.b32.xlu0 %v674, 32
        %v1225 = vpop.permute.xlu0 %1224
        %1226 = vrot.lane.b32.xlu0 %v675, 32
        %v1227 = vpop.permute.xlu0 %1226
        %1228 = vrot.lane.b32.xlu0 %v676, 32
        %v1229 = vpop.permute.xlu0 %1228
        %1230 = vrot.lane.b32.xlu0 %v677, 32
        %v1231 = vpop.permute.xlu0 %1230
        %1232 = vrot.lane.b32.xlu0 %v678, 32
        %v1233 = vpop.permute.xlu0 %1232
        %1234 = vrot.lane.b32.xlu0 %v679, 32
        %v1235 = vpop.permute.xlu0 %1234
        %1236 = vrot.lane.b32.xlu0 %v680, 32
        %v1237 = vpop.permute.xlu0 %1236
        %1238 = vrot.lane.b32.xlu0 %v681, 32
        %v1239 = vpop.permute.xlu0 %1238
        %1240 = vrot.lane.b32.xlu0 %v682, 32
        %v1241 = vpop.permute.xlu0 %1240
        %1242 = vrot.lane.b32.xlu0 %v683, 32
        %v1243 = vpop.permute.xlu0 %1242
        %1244 = vrot.lane.b32.xlu0 %v684, 32
        %v1245 = vpop.permute.xlu0 %1244
        %1246 = vrot.lane.b32.xlu0 %v685, 32
        %v1247 = vpop.permute.xlu0 %1246
        %1248 = vrot.lane.b32.xlu0 %v686, 32
        %v1249 = vpop.permute.xlu0 %1248
        %1250 = vrot.lane.b32.xlu0 %v687, 32
        %v1251 = vpop.permute.xlu0 %1250
        %1252 = vrot.lane.b32.xlu0 %v688, 32
        %v1253 = vpop.permute.xlu0 %1252
        %1254 = vrot.lane.b32.xlu0 %v689, 32
        %v1255 = vpop.permute.xlu0 %1254
        %1256 = vrot.lane.b32.xlu0 %v690, 32
        %v1257 = vpop.permute.xlu0 %1256
        %1258 = vrot.lane.b32.xlu0 %v691, 32
        %v1259 = vpop.permute.xlu0 %1258
        %1260 = vrot.lane.b32.xlu0 %v692, 32
        %v1261 = vpop.permute.xlu0 %1260
        %1262 = vrot.lane.b32.xlu0 %v693, 32
        %v1263 = vpop.permute.xlu0 %1262
        %1264 = vrot.lane.b32.xlu0 %v694, 32
        %v1265 = vpop.permute.xlu0 %1264
        %1266 = vrot.lane.b32.xlu0 %v695, 32
        %v1267 = vpop.permute.xlu0 %1266
        %1268 = vrot.lane.b32.xlu0 %v696, 32
        %v1269 = vpop.permute.xlu0 %1268
        %1270 = vrot.lane.b32.xlu0 %v697, 32
        %v1271 = vpop.permute.xlu0 %1270
        %1272 = vrot.lane.b32.xlu0 %v698, 32
        %v1273 = vpop.permute.xlu0 %1272
        %1274 = vrot.lane.b32.xlu0 %v699, 32
        %v1275 = vpop.permute.xlu0 %1274
        %1276 = vrot.lane.b32.xlu0 %v700, 32
        %v1277 = vpop.permute.xlu0 %1276
        %1342 = vrot.lane.b32.xlu0 %v702, 64
        %v1343 = vpop.permute.xlu0 %1342
        %1344 = vrot.lane.b32.xlu0 %v703, 64
        %v1345 = vpop.permute.xlu0 %1344
        %1346 = vrot.lane.b32.xlu0 %v704, 64
        %v1347 = vpop.permute.xlu0 %1346
        %1348 = vrot.lane.b32.xlu0 %v705, 64
        %v1349 = vpop.permute.xlu0 %1348
        %1350 = vrot.lane.b32.xlu0 %v706, 64
        %v1351 = vpop.permute.xlu0 %1350
        %1352 = vrot.lane.b32.xlu0 %v707, 64
        %v1353 = vpop.permute.xlu0 %1352
        %1354 = vrot.lane.b32.xlu0 %v708, 64
        %v1355 = vpop.permute.xlu0 %1354
        %1356 = vrot.lane.b32.xlu0 %v709, 64
        %v1357 = vpop.permute.xlu0 %1356
        %1358 = vrot.lane.b32.xlu0 %v710, 64
        %v1359 = vpop.permute.xlu0 %1358
        %1360 = vrot.lane.b32.xlu0 %v711, 64
        %v1361 = vpop.permute.xlu0 %1360
        %1362 = vrot.lane.b32.xlu0 %v712, 64
        %v1363 = vpop.permute.xlu0 %1362
        %1364 = vrot.lane.b32.xlu0 %v713, 64
        %v1365 = vpop.permute.xlu0 %1364
        %1366 = vrot.lane.b32.xlu0 %v714, 64
        %v1367 = vpop.permute.xlu0 %1366
        %1368 = vrot.lane.b32.xlu0 %v715, 64
        %v1369 = vpop.permute.xlu0 %1368
        %1370 = vrot.lane.b32.xlu0 %v716, 64
        %v1371 = vpop.permute.xlu0 %1370
        %1372 = vrot.lane.b32.xlu0 %v717, 64
        %v1373 = vpop.permute.xlu0 %1372
        %1374 = vrot.lane.b32.xlu0 %v718, 64
        %v1375 = vpop.permute.xlu0 %1374
        %1376 = vrot.lane.b32.xlu0 %v719, 64
        %v1377 = vpop.permute.xlu0 %1376
        %1378 = vrot.lane.b32.xlu0 %v720, 64
        %v1379 = vpop.permute.xlu0 %1378
        %1380 = vrot.lane.b32.xlu0 %v721, 64
        %v1381 = vpop.permute.xlu0 %1380
        %1382 = vrot.lane.b32.xlu0 %v722, 64
        %v1383 = vpop.permute.xlu0 %1382
        %1384 = vrot.lane.b32.xlu0 %v723, 64
        %v1385 = vpop.permute.xlu0 %1384
        %1386 = vrot.lane.b32.xlu0 %v724, 64
        %v1387 = vpop.permute.xlu0 %1386
        %1388 = vrot.lane.b32.xlu0 %v725, 64
        %v1389 = vpop.permute.xlu0 %1388
        %1390 = vrot.lane.b32.xlu0 %v726, 64
        %v1391 = vpop.permute.xlu0 %1390
        %1392 = vrot.lane.b32.xlu0 %v727, 64
        %v1393 = vpop.permute.xlu0 %1392
        %1394 = vrot.lane.b32.xlu0 %v728, 64
        %v1395 = vpop.permute.xlu0 %1394
        %1396 = vrot.lane.b32.xlu0 %v729, 64
        %v1397 = vpop.permute.xlu0 %1396
        %1398 = vrot.lane.b32.xlu0 %v730, 64
        %v1399 = vpop.permute.xlu0 %1398
        %1400 = vrot.lane.b32.xlu0 %v731, 64
        %v1401 = vpop.permute.xlu0 %1400
        %1402 = vrot.lane.b32.xlu0 %v732, 64
        %v1403 = vpop.permute.xlu0 %1402
        %1404 = vrot.lane.b32.xlu0 %v733, 64
        %v1405 = vpop.permute.xlu0 %1404
        %1470 = vrot.lane.b32.xlu0 %v734, 96
        %v1471 = vpop.permute.xlu0 %1470
        %1472 = vrot.lane.b32.xlu0 %v735, 96
        %v1473 = vpop.permute.xlu0 %1472
        %1474 = vrot.lane.b32.xlu0 %v736, 96
        %v1475 = vpop.permute.xlu0 %1474
        %1476 = vrot.lane.b32.xlu0 %v737, 96
        %v1477 = vpop.permute.xlu0 %1476
        %1478 = vrot.lane.b32.xlu0 %v738, 96
        %v1479 = vpop.permute.xlu0 %1478
        %1480 = vrot.lane.b32.xlu0 %v739, 96
        %v1481 = vpop.permute.xlu0 %1480
        %1482 = vrot.lane.b32.xlu0 %v740, 96
        %v1483 = vpop.permute.xlu0 %1482
        %1484 = vrot.lane.b32.xlu0 %v741, 96
        %v1485 = vpop.permute.xlu0 %1484
        %1486 = vrot.lane.b32.xlu0 %v742, 96
        %v1487 = vpop.permute.xlu0 %1486
        %1488 = vrot.lane.b32.xlu0 %v743, 96
        %v1489 = vpop.permute.xlu0 %1488
        %1490 = vrot.lane.b32.xlu0 %v744, 96
        %v1491 = vpop.permute.xlu0 %1490
        %1492 = vrot.lane.b32.xlu0 %v745, 96
        %v1493 = vpop.permute.xlu0 %1492
        %1494 = vrot.lane.b32.xlu0 %v746, 96
        %v1495 = vpop.permute.xlu0 %1494
        %1496 = vrot.lane.b32.xlu0 %v747, 96
        %v1497 = vpop.permute.xlu0 %1496
        %1498 = vrot.lane.b32.xlu0 %v748, 96
        %v1499 = vpop.permute.xlu0 %1498
        %1500 = vrot.lane.b32.xlu0 %v749, 96
        %v1501 = vpop.permute.xlu0 %1500
        %1502 = vrot.lane.b32.xlu0 %v750, 96
        %v1503 = vpop.permute.xlu0 %1502
        %1504 = vrot.lane.b32.xlu0 %v751, 96
        %v1505 = vpop.permute.xlu0 %1504
        %1506 = vrot.lane.b32.xlu0 %v752, 96
        %v1507 = vpop.permute.xlu0 %1506
        %1508 = vrot.lane.b32.xlu0 %v753, 96
        %v1509 = vpop.permute.xlu0 %1508
        %1510 = vrot.lane.b32.xlu0 %v754, 96
        %v1511 = vpop.permute.xlu0 %1510
        %1512 = vrot.lane.b32.xlu0 %v755, 96
        %v1513 = vpop.permute.xlu0 %1512
        %1514 = vrot.lane.b32.xlu0 %v756, 96
        %v1515 = vpop.permute.xlu0 %1514
        %1516 = vrot.lane.b32.xlu0 %v757, 96
        %v1517 = vpop.permute.xlu0 %1516
        %1518 = vrot.lane.b32.xlu0 %v758, 96
        %v1519 = vpop.permute.xlu0 %1518
        %1520 = vrot.lane.b32.xlu0 %v759, 96
        %v1521 = vpop.permute.xlu0 %1520
        %1522 = vrot.lane.b32.xlu0 %v760, 96
        %v1523 = vpop.permute.xlu0 %1522
        %1524 = vrot.lane.b32.xlu0 %v761, 96
        %v1525 = vpop.permute.xlu0 %1524
        %1526 = vrot.lane.b32.xlu0 %v762, 96
        %v1527 = vpop.permute.xlu0 %1526
        %1528 = vrot.lane.b32.xlu0 %v763, 96
        %v1529 = vpop.permute.xlu0 %1528
        %1530 = vrot.lane.b32.xlu0 %v764, 96
        %v1531 = vpop.permute.xlu0 %1530
        %1532 = vrot.lane.b32.xlu0 %v765, 96
        %v1533 = vpop.permute.xlu0 %1532
        %v1566 = vsel %vm372, %v509, %v831
        %v1567 = vsel %vm372, %v510, %v833
        %v1568 = vsel %vm372, %v511, %v835
        %v1569 = vsel %vm372, %v512, %v837
        %v1570 = vsel %vm372, %v513, %v839
        %v1571 = vsel %vm372, %v514, %v841
        %v1572 = vsel %vm372, %v515, %v843
        %v1573 = vsel %vm372, %v516, %v845
        %v1574 = vsel %vm372, %v517, %v847
        %v1575 = vsel %vm372, %v518, %v849
        %v1576 = vsel %vm372, %v519, %v851
        %v1577 = vsel %vm372, %v520, %v853
        %v1578 = vsel %vm372, %v521, %v855
        %v1579 = vsel %vm372, %v522, %v857
        %v1580 = vsel %vm372, %v523, %v859
        %v1581 = vsel %vm372, %v524, %v861
        %v1582 = vsel %vm372, %v525, %v863
        %v1583 = vsel %vm372, %v526, %v865
        %v1584 = vsel %vm372, %v527, %v867
        %v1585 = vsel %vm372, %v528, %v869
        %v1586 = vsel %vm372, %v529, %v871
        %v1587 = vsel %vm372, %v530, %v873
        %v1588 = vsel %vm372, %v531, %v875
        %v1589 = vsel %vm372, %v532, %v877
        %v1590 = vsel %vm372, %v533, %v879
        %v1591 = vsel %vm372, %v534, %v881
        %v1592 = vsel %vm372, %v535, %v883
        %v1593 = vsel %vm372, %v536, %v885
        %v1594 = vsel %vm372, %v537, %v887
        %v1595 = vsel %vm372, %v538, %v889
        %v1596 = vsel %vm372, %v539, %v891
        %v1597 = vsel %vm372, %v540, %v893
        %vm1598 = vcmask 523264
        %v1599 = vsel %vm1598, %v1566, %v959
        %v1600 = vsel %vm1598, %v1567, %v961
        %v1601 = vsel %vm1598, %v1568, %v963
        %v1602 = vsel %vm1598, %v1569, %v965
        %v1603 = vsel %vm1598, %v1570, %v967
        %v1604 = vsel %vm1598, %v1571, %v969
        %v1605 = vsel %vm1598, %v1572, %v971
        %v1606 = vsel %vm1598, %v1573, %v973
        %v1607 = vsel %vm1598, %v1574, %v975
        %v1608 = vsel %vm1598, %v1575, %v977
        %v1609 = vsel %vm1598, %v1576, %v979
        %v1610 = vsel %vm1598, %v1577, %v981
        %v1611 = vsel %vm1598, %v1578, %v983
        %v1612 = vsel %vm1598, %v1579, %v985
        %v1613 = vsel %vm1598, %v1580, %v987
        %v1614 = vsel %vm1598, %v1581, %v989
        %v1615 = vsel %vm1598, %v1582, %v991
        %v1616 = vsel %vm1598, %v1583, %v993
        %v1617 = vsel %vm1598, %v1584, %v995
        %v1618 = vsel %vm1598, %v1585, %v997
        %v1619 = vsel %vm1598, %v1586, %v999
        %v1620 = vsel %vm1598, %v1587, %v1001
        %v1621 = vsel %vm1598, %v1588, %v1003
        %v1622 = vsel %vm1598, %v1589, %v1005
        %v1623 = vsel %vm1598, %v1590, %v1007
        %v1624 = vsel %vm1598, %v1591, %v1009
        %v1625 = vsel %vm1598, %v1592, %v1011
        %v1626 = vsel %vm1598, %v1593, %v1013
        %v1627 = vsel %vm1598, %v1594, %v1015
        %v1628 = vsel %vm1598, %v1595, %v1017
        %v1629 = vsel %vm1598, %v1596, %v1019
        %v1630 = vsel %vm1598, %v1597, %v1021
        %vm1631 = vcmask 785408
        %v1632 = vsel %vm1631, %v1599, %v1087
        %v1633 = vsel %vm1631, %v1600, %v1089
        %v1634 = vsel %vm1631, %v1601, %v1091
        %v1635 = vsel %vm1631, %v1602, %v1093
        %v1636 = vsel %vm1631, %v1603, %v1095
        %v1637 = vsel %vm1631, %v1604, %v1097
        %v1638 = vsel %vm1631, %v1605, %v1099
        %v1639 = vsel %vm1631, %v1606, %v1101
        %v1640 = vsel %vm1631, %v1607, %v1103
        %v1641 = vsel %vm1631, %v1608, %v1105
        %v1642 = vsel %vm1631, %v1609, %v1107
        %v1643 = vsel %vm1631, %v1610, %v1109
        %v1644 = vsel %vm1631, %v1611, %v1111
        %v1645 = vsel %vm1631, %v1612, %v1113
        %v1646 = vsel %vm1631, %v1613, %v1115
        %v1647 = vsel %vm1631, %v1614, %v1117
        %v1648 = vsel %vm1631, %v1615, %v1119
        %v1649 = vsel %vm1631, %v1616, %v1121
        %v1650 = vsel %vm1631, %v1617, %v1123
        %v1651 = vsel %vm1631, %v1618, %v1125
        %v1652 = vsel %vm1631, %v1619, %v1127
        %v1653 = vsel %vm1631, %v1620, %v1129
        %v1654 = vsel %vm1631, %v1621, %v1131
        %v1655 = vsel %vm1631, %v1622, %v1133
        %v1656 = vsel %vm1631, %v1623, %v1135
        %v1657 = vsel %vm1631, %v1624, %v1137
        %v1658 = vsel %vm1631, %v1625, %v1139
        %v1659 = vsel %vm1631, %v1626, %v1141
        %v1660 = vsel %vm1631, %v1627, %v1143
        %v1661 = vsel %vm1631, %v1628, %v1145
        %v1662 = vsel %vm1631, %v1629, %v1147
        %v1663 = vsel %vm1631, %v1630, %v1149
        %v1664 = vsel %vm372, %v637, %v1215
        %v1665 = vsel %vm372, %v638, %v1217
        %v1666 = vsel %vm372, %v639, %v1219
        %v1667 = vsel %vm372, %v640, %v1221
        %v1668 = vsel %vm372, %v641, %v1223
        %v1669 = vsel %vm372, %v642, %v1225
        %v1670 = vsel %vm372, %v643, %v1227
        %v1671 = vsel %vm372, %v644, %v1229
        %v1672 = vsel %vm372, %v645, %v1231
        %v1673 = vsel %vm372, %v646, %v1233
        %v1674 = vsel %vm372, %v647, %v1235
        %v1675 = vsel %vm372, %v648, %v1237
        %v1676 = vsel %vm372, %v649, %v1239
        %v1677 = vsel %vm372, %v650, %v1241
        %v1678 = vsel %vm372, %v651, %v1243
        %v1679 = vsel %vm372, %v652, %v1245
        %v1680 = vsel %vm372, %v653, %v1247
        %v1681 = vsel %vm372, %v654, %v1249
        %v1682 = vsel %vm372, %v655, %v1251
        %v1683 = vsel %vm372, %v656, %v1253
        %v1684 = vsel %vm372, %v657, %v1255
        %v1685 = vsel %vm372, %v658, %v1257
        %v1686 = vsel %vm372, %v659, %v1259
        %v1687 = vsel %vm372, %v660, %v1261
        %v1688 = vsel %vm372, %v661, %v1263
        %v1689 = vsel %vm372, %v662, %v1265
        %v1690 = vsel %vm372, %v663, %v1267
        %v1691 = vsel %vm372, %v664, %v1269
        %v1692 = vsel %vm372, %v665, %v1271
        %v1693 = vsel %vm372, %v666, %v1273
        %v1694 = vsel %vm372, %v667, %v1275
        %v1695 = vsel %vm372, %v668, %v1277
        %v1696 = vsel %vm1598, %v1664, %v1343
        %v1697 = vsel %vm1598, %v1665, %v1345
        %v1698 = vsel %vm1598, %v1666, %v1347
        %v1699 = vsel %vm1598, %v1667, %v1349
        %v1700 = vsel %vm1598, %v1668, %v1351
        %v1701 = vsel %vm1598, %v1669, %v1353
        %v1702 = vsel %vm1598, %v1670, %v1355
        %v1703 = vsel %vm1598, %v1671, %v1357
        %v1704 = vsel %vm1598, %v1672, %v1359
        %v1705 = vsel %vm1598, %v1673, %v1361
        %v1706 = vsel %vm1598, %v1674, %v1363
        %v1707 = vsel %vm1598, %v1675, %v1365
        %v1708 = vsel %vm1598, %v1676, %v1367
        %v1709 = vsel %vm1598, %v1677, %v1369
        %v1710 = vsel %vm1598, %v1678, %v1371
        %v1711 = vsel %vm1598, %v1679, %v1373
        %v1712 = vsel %vm1598, %v1680, %v1375
        %v1713 = vsel %vm1598, %v1681, %v1377
        %v1714 = vsel %vm1598, %v1682, %v1379
        %v1715 = vsel %vm1598, %v1683, %v1381
        %v1716 = vsel %vm1598, %v1684, %v1383
        %v1717 = vsel %vm1598, %v1685, %v1385
        %v1718 = vsel %vm1598, %v1686, %v1387
        %v1719 = vsel %vm1598, %v1687, %v1389
        %v1720 = vsel %vm1598, %v1688, %v1391
        %v1721 = vsel %vm1598, %v1689, %v1393
        %v1722 = vsel %vm1598, %v1690, %v1395
        %v1723 = vsel %vm1598, %v1691, %v1397
        %v1724 = vsel %vm1598, %v1692, %v1399
        %v1725 = vsel %vm1598, %v1693, %v1401
        %v1726 = vsel %vm1598, %v1694, %v1403
        %v1727 = vsel %vm1598, %v1695, %v1405
        %v1728 = vsel %vm1631, %v1696, %v1471
        %v1729 = vsel %vm1631, %v1697, %v1473
        %v1730 = vsel %vm1631, %v1698, %v1475
        %v1731 = vsel %vm1631, %v1699, %v1477
        %v1732 = vsel %vm1631, %v1700, %v1479
        %v1733 = vsel %vm1631, %v1701, %v1481
        %v1734 = vsel %vm1631, %v1702, %v1483
        %v1735 = vsel %vm1631, %v1703, %v1485
        %v1736 = vsel %vm1631, %v1704, %v1487
        %v1737 = vsel %vm1631, %v1705, %v1489
        %v1738 = vsel %vm1631, %v1706, %v1491
        %v1739 = vsel %vm1631, %v1707, %v1493
        %v1740 = vsel %vm1631, %v1708, %v1495
        %v1741 = vsel %vm1631, %v1709, %v1497
        %v1742 = vsel %vm1631, %v1710, %v1499
        %v1743 = vsel %vm1631, %v1711, %v1501
        %v1744 = vsel %vm1631, %v1712, %v1503
        %v1745 = vsel %vm1631, %v1713, %v1505
        %v1746 = vsel %vm1631, %v1714, %v1507
        %v1747 = vsel %vm1631, %v1715, %v1509
        %v1748 = vsel %vm1631, %v1716, %v1511
        %v1749 = vsel %vm1631, %v1717, %v1513
        %v1750 = vsel %vm1631, %v1718, %v1515
        %v1751 = vsel %vm1631, %v1719, %v1517
        %v1752 = vsel %vm1631, %v1720, %v1519
        %v1753 = vsel %vm1631, %v1721, %v1521
        %v1754 = vsel %vm1631, %v1722, %v1523
        %v1755 = vsel %vm1631, %v1723, %v1525
        %v1756 = vsel %vm1631, %v1724, %v1527
        %v1757 = vsel %vm1631, %v1725, %v1529
        %v1758 = vsel %vm1631, %v1726, %v1531
        %v1759 = vsel %vm1631, %v1727, %v1533
        %v1760 = vld [vmem:[%s1] sm:$0xff]
        %v1761 = vld [vmem:[%s1 + $0x8] sm:$0xff]
        %v1762 = vld [vmem:[%s1 + $0x10] sm:$0xff]
        %v1763 = vld [vmem:[%s1 + $0x18] sm:$0xff]
        %v1764 = vld [vmem:[%s1 + $0x20] sm:$0xff]
        %v1765 = vld [vmem:[%s1 + $0x28] sm:$0xff]
        %v1766 = vld [vmem:[%s1 + $0x30] sm:$0xff]
        %v1767 = vld [vmem:[%s1 + $0x38] sm:$0xff]
        %v1768 = vld [vmem:[%s1 + $0x40] sm:$0xff]
        %v1769 = vld [vmem:[%s1 + $0x48] sm:$0xff]
        %v1770 = vld [vmem:[%s1 + $0x50] sm:$0xff]
        %v1771 = vld [vmem:[%s1 + $0x58] sm:$0xff]
        %v1772 = vld [vmem:[%s1 + $0x60] sm:$0xff]
        %v1773 = vld [vmem:[%s1 + $0x68] sm:$0xff]
        %v1774 = vld [vmem:[%s1 + $0x70] sm:$0xff]
        %v1775 = vld [vmem:[%s1 + $0x78] sm:$0xff]
        %v1776 = vld [vmem:[%s1 + $0x80] sm:$0xff]
        %v1777 = vld [vmem:[%s1 + $0x88] sm:$0xff]
        %v1778 = vld [vmem:[%s1 + $0x90] sm:$0xff]
        %v1779 = vld [vmem:[%s1 + $0x98] sm:$0xff]
        %v1780 = vld [vmem:[%s1 + $0xa0] sm:$0xff]
        %v1781 = vld [vmem:[%s1 + $0xa8] sm:$0xff]
        %v1782 = vld [vmem:[%s1 + $0xb0] sm:$0xff]
        %v1783 = vld [vmem:[%s1 + $0xb8] sm:$0xff]
        %v1784 = vld [vmem:[%s1 + $0xc0] sm:$0xff]
        %v1785 = vld [vmem:[%s1 + $0xc8] sm:$0xff]
        %v1786 = vld [vmem:[%s1 + $0xd0] sm:$0xff]
        %v1787 = vld [vmem:[%s1 + $0xd8] sm:$0xff]
        %v1788 = vld [vmem:[%s1 + $0xe0] sm:$0xff]
        %v1789 = vld [vmem:[%s1 + $0xe8] sm:$0xff]
        %v1790 = vld [vmem:[%s1 + $0xf0] sm:$0xff]
        %v1791 = vld [vmem:[%s1 + $0xf8] sm:$0xff]
        %v1792 = vld [vmem:[%s1 + $0x100] sm:$0xff]
        %v1793 = vld [vmem:[%s1 + $0x108] sm:$0xff]
        %v1794 = vld [vmem:[%s1 + $0x110] sm:$0xff]
        %v1795 = vld [vmem:[%s1 + $0x118] sm:$0xff]
        %v1797 = vsel %vm372, %v766, 0
        %v1800 = vsel %vm372, %v767, 0
        %v1803 = vsel %vm372, %v768, 0
        %v1806 = vsel %vm372, %v769, 0
        %v1809 = vsel %vm372, %v770, 0
        %v1812 = vsel %vm372, %v771, 0
        %v1815 = vsel %vm372, %v772, 0
        %v1818 = vsel %vm372, %v773, 0
        %v1821 = vsel %vm372, %v774, 0
        %v1824 = vsel %vm372, %v775, 0
        %v1827 = vsel %vm372, %v776, 0
        %v1830 = vsel %vm372, %v777, 0
        %v1833 = vsel %vm372, %v778, 0
        %v1836 = vsel %vm372, %v779, 0
        %v1839 = vsel %vm372, %v780, 0
        %v1842 = vsel %vm372, %v781, 0
        %v1845 = vsel %vm372, %v782, 0
        %v1848 = vsel %vm372, %v783, 0
        %v1851 = vsel %vm372, %v784, 0
        %v1854 = vsel %vm372, %v785, 0
        %v1857 = vsel %vm372, %v786, 0
        %v1860 = vsel %vm372, %v787, 0
        %v1863 = vsel %vm372, %v788, 0
        %v1866 = vsel %vm372, %v789, 0
        %v1869 = vsel %vm372, %v790, 0
        %v1872 = vsel %vm372, %v791, 0
        %v1875 = vsel %vm372, %v792, 0
        %v1878 = vsel %vm372, %v793, 0
        %v1881 = vsel %vm372, %v794, 0
        %v1884 = vsel %vm372, %v795, 0
        %v1887 = vsel %vm372, %v796, 0
        %v1890 = vsel %vm372, %v797, 0
        %1892 = vmatpush.msra.mxu0 %v1775
        %1893 = vmatpush.msra.mxu0 %v1774
        %1894 = vmatpush.msra.mxu0 %v1773
        %1895 = vmatpush.msra.mxu0 %v1772
        %1896 = vmatpush.msra.mxu0 %v1771
        %1897 = vmatpush.msra.mxu0 %v1770
        %1898 = vmatpush.msra.mxu0 %v1769
        %1899 = vmatpush.msra.mxu0 %v1768
        %1900 = vmatpush.msra.mxu0 %v1767
        %1901 = vmatpush.msra.mxu0 %v1766
        %1902 = vmatpush.msra.mxu0 %v1765
        %1903 = vmatpush.msra.mxu0 %v1764
        %1904 = vmatpush.msra.mxu0 %v1763
        %1905 = vmatpush.msra.mxu0 %v1762
        %1906 = vmatpush.msra.mxu0 %v1761
        %1907 = vmatpush.msra.mxu0 %v1760
        %1908 = vmatmul.f32.gmra.mxu0 %v1632
        %v1909 = vpop.f32.mrf.mxu0
        %v1910 = vadd.f32 0.0, %v1909
        %1911 = vmatmul.f32.gmra.mxu0 %v1633
        %v1912 = vpop.f32.mrf.mxu0
        %v1913 = vadd.f32 0.0, %v1912
        %1914 = vmatmul.f32.gmra.mxu0 %v1634
        %v1915 = vpop.f32.mrf.mxu0
        %v1916 = vadd.f32 0.0, %v1915
        %1917 = vmatmul.f32.gmra.mxu0 %v1635
        %v1918 = vpop.f32.mrf.mxu0
        %v1919 = vadd.f32 0.0, %v1918
        %1920 = vmatmul.f32.gmra.mxu0 %v1636
        %v1921 = vpop.f32.mrf.mxu0
        %v1922 = vadd.f32 0.0, %v1921
        %1923 = vmatmul.f32.gmra.mxu0 %v1637
        %v1924 = vpop.f32.mrf.mxu0
        %v1925 = vadd.f32 0.0, %v1924
        %1926 = vmatmul.f32.gmra.mxu0 %v1638
        %v1927 = vpop.f32.mrf.mxu0
        %v1928 = vadd.f32 0.0, %v1927
        %1929 = vmatmul.f32.gmra.mxu0 %v1639
        %v1930 = vpop.f32.mrf.mxu0
        %v1931 = vadd.f32 0.0, %v1930
        %1932 = vmatmul.f32.gmra.mxu0 %v1640
        %v1933 = vpop.f32.mrf.mxu0
        %v1934 = vadd.f32 0.0, %v1933
        %1935 = vmatmul.f32.gmra.mxu0 %v1641
        %v1936 = vpop.f32.mrf.mxu0
        %v1937 = vadd.f32 0.0, %v1936
        %1938 = vmatmul.f32.gmra.mxu0 %v1642
        %v1939 = vpop.f32.mrf.mxu0
        %v1940 = vadd.f32 0.0, %v1939
        %1941 = vmatmul.f32.gmra.mxu0 %v1643
        %v1942 = vpop.f32.mrf.mxu0
        %v1943 = vadd.f32 0.0, %v1942
        %1944 = vmatmul.f32.gmra.mxu0 %v1644
        %v1945 = vpop.f32.mrf.mxu0
        %v1946 = vadd.f32 0.0, %v1945
        %1947 = vmatmul.f32.gmra.mxu0 %v1645
        %v1948 = vpop.f32.mrf.mxu0
        %v1949 = vadd.f32 0.0, %v1948
        %1950 = vmatmul.f32.gmra.mxu0 %v1646
        %v1951 = vpop.f32.mrf.mxu0
        %v1952 = vadd.f32 0.0, %v1951
        %1953 = vmatmul.f32.gmra.mxu0 %v1647
        %v1954 = vpop.f32.mrf.mxu0
        %v1955 = vadd.f32 0.0, %v1954
        %1956 = vmatmul.f32.gmra.mxu0 %v1648
        %v1957 = vpop.f32.mrf.mxu0
        %v1958 = vadd.f32 0.0, %v1957
        %1959 = vmatmul.f32.gmra.mxu0 %v1649
        %v1960 = vpop.f32.mrf.mxu0
        %v1961 = vadd.f32 0.0, %v1960
        %1962 = vmatmul.f32.gmra.mxu0 %v1650
        %v1963 = vpop.f32.mrf.mxu0
        %v1964 = vadd.f32 0.0, %v1963
        %1965 = vmatmul.f32.gmra.mxu0 %v1651
        %v1966 = vpop.f32.mrf.mxu0
        %v1967 = vadd.f32 0.0, %v1966
        %1968 = vmatmul.f32.gmra.mxu0 %v1652
        %v1969 = vpop.f32.mrf.mxu0
        %v1970 = vadd.f32 0.0, %v1969
        %1971 = vmatmul.f32.gmra.mxu0 %v1653
        %v1972 = vpop.f32.mrf.mxu0
        %v1973 = vadd.f32 0.0, %v1972
        %1974 = vmatmul.f32.gmra.mxu0 %v1654
        %v1975 = vpop.f32.mrf.mxu0
        %v1976 = vadd.f32 0.0, %v1975
        %1977 = vmatmul.f32.gmra.mxu0 %v1655
        %v1978 = vpop.f32.mrf.mxu0
        %v1979 = vadd.f32 0.0, %v1978
        %1980 = vmatmul.f32.gmra.mxu0 %v1656
        %v1981 = vpop.f32.mrf.mxu0
        %v1982 = vadd.f32 0.0, %v1981
        %1983 = vmatmul.f32.gmra.mxu0 %v1657
        %v1984 = vpop.f32.mrf.mxu0
        %v1985 = vadd.f32 0.0, %v1984
        %1986 = vmatmul.f32.gmra.mxu0 %v1658
        %v1987 = vpop.f32.mrf.mxu0
        %v1988 = vadd.f32 0.0, %v1987
        %1989 = vmatmul.f32.gmra.mxu0 %v1659
        %v1990 = vpop.f32.mrf.mxu0
        %v1991 = vadd.f32 0.0, %v1990
        %1992 = vmatmul.f32.gmra.mxu0 %v1660
        %v1993 = vpop.f32.mrf.mxu0
        %v1994 = vadd.f32 0.0, %v1993
        %1995 = vmatmul.f32.gmra.mxu0 %v1661
        %v1996 = vpop.f32.mrf.mxu0
        %v1997 = vadd.f32 0.0, %v1996
        %1998 = vmatmul.f32.gmra.mxu0 %v1662
        %v1999 = vpop.f32.mrf.mxu0
        %v2000 = vadd.f32 0.0, %v1999
        %2001 = vmatmul.f32.gmra.mxu0 %v1663
        %v2002 = vpop.f32.mrf.mxu0
        %v2003 = vadd.f32 0.0, %v2002
        %2004 = vdwg.mxu0
        %2005 = vmatpush.msra.mxu0 %v1791
        %2006 = vmatpush.msra.mxu0 %v1790
        %2007 = vmatpush.msra.mxu0 %v1789
        %2008 = vmatpush.msra.mxu0 %v1788
        %2009 = vmatpush.msra.mxu0 %v1787
        %2010 = vmatpush.msra.mxu0 %v1786
        %2011 = vmatpush.msra.mxu0 %v1785
        %2012 = vmatpush.msra.mxu0 %v1784
        %2013 = vmatpush.msra.mxu0 %v1783
        %2014 = vmatpush.msra.mxu0 %v1782
        %2015 = vmatpush.msra.mxu0 %v1781
        %2016 = vmatpush.msra.mxu0 %v1780
        %2017 = vmatpush.msra.mxu0 %v1779
        %2018 = vmatpush.msra.mxu0 %v1778
        %2019 = vmatpush.msra.mxu0 %v1777
        %2020 = vmatpush.msra.mxu0 %v1776
        %2021 = vmatmul.f32.gmra.mxu0 %v1728
        %v2022 = vpop.f32.mrf.mxu0
        %v2023 = vadd.f32 %v1910, %v2022
        %2024 = vmatmul.f32.gmra.mxu0 %v1729
        %v2025 = vpop.f32.mrf.mxu0
        %v2026 = vadd.f32 %v1913, %v2025
        %2027 = vmatmul.f32.gmra.mxu0 %v1730
        %v2028 = vpop.f32.mrf.mxu0
        %v2029 = vadd.f32 %v1916, %v2028
        %2030 = vmatmul.f32.gmra.mxu0 %v1731
        %v2031 = vpop.f32.mrf.mxu0
        %v2032 = vadd.f32 %v1919, %v2031
        %2033 = vmatmul.f32.gmra.mxu0 %v1732
        %v2034 = vpop.f32.mrf.mxu0
        %v2035 = vadd.f32 %v1922, %v2034
        %2036 = vmatmul.f32.gmra.mxu0 %v1733
        %v2037 = vpop.f32.mrf.mxu0
        %v2038 = vadd.f32 %v1925, %v2037
        %2039 = vmatmul.f32.gmra.mxu0 %v1734
        %v2040 = vpop.f32.mrf.mxu0
        %v2041 = vadd.f32 %v1928, %v2040
        %2042 = vmatmul.f32.gmra.mxu0 %v1735
        %v2043 = vpop.f32.mrf.mxu0
        %v2044 = vadd.f32 %v1931, %v2043
        %2045 = vmatmul.f32.gmra.mxu0 %v1736
        %v2046 = vpop.f32.mrf.mxu0
        %v2047 = vadd.f32 %v1934, %v2046
        %2048 = vmatmul.f32.gmra.mxu0 %v1737
        %v2049 = vpop.f32.mrf.mxu0
        %v2050 = vadd.f32 %v1937, %v2049
        %2051 = vmatmul.f32.gmra.mxu0 %v1738
        %v2052 = vpop.f32.mrf.mxu0
        %v2053 = vadd.f32 %v1940, %v2052
        %2054 = vmatmul.f32.gmra.mxu0 %v1739
        %v2055 = vpop.f32.mrf.mxu0
        %v2056 = vadd.f32 %v1943, %v2055
        %2057 = vmatmul.f32.gmra.mxu0 %v1740
        %v2058 = vpop.f32.mrf.mxu0
        %v2059 = vadd.f32 %v1946, %v2058
        %2060 = vmatmul.f32.gmra.mxu0 %v1741
        %v2061 = vpop.f32.mrf.mxu0
        %v2062 = vadd.f32 %v1949, %v2061
        %2063 = vmatmul.f32.gmra.mxu0 %v1742
        %v2064 = vpop.f32.mrf.mxu0
        %v2065 = vadd.f32 %v1952, %v2064
        %2066 = vmatmul.f32.gmra.mxu0 %v1743
        %v2067 = vpop.f32.mrf.mxu0
        %v2068 = vadd.f32 %v1955, %v2067
        %2069 = vmatmul.f32.gmra.mxu0 %v1744
        %v2070 = vpop.f32.mrf.mxu0
        %v2071 = vadd.f32 %v1958, %v2070
        %2072 = vmatmul.f32.gmra.mxu0 %v1745
        %v2073 = vpop.f32.mrf.mxu0
        %v2074 = vadd.f32 %v1961, %v2073
        %2075 = vmatmul.f32.gmra.mxu0 %v1746
        %v2076 = vpop.f32.mrf.mxu0
        %v2077 = vadd.f32 %v1964, %v2076
        %2078 = vmatmul.f32.gmra.mxu0 %v1747
        %v2079 = vpop.f32.mrf.mxu0
        %v2080 = vadd.f32 %v1967, %v2079
        %2081 = vmatmul.f32.gmra.mxu0 %v1748
        %v2082 = vpop.f32.mrf.mxu0
        %v2083 = vadd.f32 %v1970, %v2082
        %2084 = vmatmul.f32.gmra.mxu0 %v1749
        %v2085 = vpop.f32.mrf.mxu0
        %v2086 = vadd.f32 %v1973, %v2085
        %2087 = vmatmul.f32.gmra.mxu0 %v1750
        %v2088 = vpop.f32.mrf.mxu0
        %v2089 = vadd.f32 %v1976, %v2088
        %2090 = vmatmul.f32.gmra.mxu0 %v1751
        %v2091 = vpop.f32.mrf.mxu0
        %v2092 = vadd.f32 %v1979, %v2091
        %2093 = vmatmul.f32.gmra.mxu0 %v1752
        %v2094 = vpop.f32.mrf.mxu0
        %v2095 = vadd.f32 %v1982, %v2094
        %2096 = vmatmul.f32.gmra.mxu0 %v1753
        %v2097 = vpop.f32.mrf.mxu0
        %v2098 = vadd.f32 %v1985, %v2097
        %2099 = vmatmul.f32.gmra.mxu0 %v1754
        %v2100 = vpop.f32.mrf.mxu0
        %v2101 = vadd.f32 %v1988, %v2100
        %2102 = vmatmul.f32.gmra.mxu0 %v1755
        %v2103 = vpop.f32.mrf.mxu0
        %v2104 = vadd.f32 %v1991, %v2103
        %2105 = vmatmul.f32.gmra.mxu0 %v1756
        %v2106 = vpop.f32.mrf.mxu0
        %v2107 = vadd.f32 %v1994, %v2106
        %2108 = vmatmul.f32.gmra.mxu0 %v1757
        %v2109 = vpop.f32.mrf.mxu0
        %v2110 = vadd.f32 %v1997, %v2109
        %2111 = vmatmul.f32.gmra.mxu0 %v1758
        %v2112 = vpop.f32.mrf.mxu0
        %v2113 = vadd.f32 %v2000, %v2112
        %2114 = vmatmul.f32.gmra.mxu0 %v1759
        %v2115 = vpop.f32.mrf.mxu0
        %v2116 = vadd.f32 %v2003, %v2115
        %2117 = vdwg.mxu0
        %2118 = vmatpush.msra.mxu0 0.0
        %2119 = vmatpush.msra.mxu0 0.0
        %2120 = vmatpush.msra.mxu0 0.0
        %2121 = vmatpush.msra.mxu0 0.0
        %2122 = vmatpush.msra.mxu0 0.0
        %2123 = vmatpush.msra.mxu0 0.0
        %2124 = vmatpush.msra.mxu0 0.0
        %2125 = vmatpush.msra.mxu0 0.0
        %2126 = vmatpush.msra.mxu0 0.0
        %2127 = vmatpush.msra.mxu0 0.0
        %2128 = vmatpush.msra.mxu0 0.0
        %2129 = vmatpush.msra.mxu0 0.0
        %2130 = vmatpush.msra.mxu0 %v1795
        %2131 = vmatpush.msra.mxu0 %v1794
        %2132 = vmatpush.msra.mxu0 %v1793
        %2133 = vmatpush.msra.mxu0 %v1792
        %2134 = vmatmul.f32.gmra.mxu0 %v1797
        %v2135 = vpop.f32.mrf.mxu0
        %v2136 = vadd.f32 %v2023, %v2135
        %2137 = vmatmul.f32.gmra.mxu0 %v1800
        %v2138 = vpop.f32.mrf.mxu0
        %v2139 = vadd.f32 %v2026, %v2138
        %2140 = vmatmul.f32.gmra.mxu0 %v1803
        %v2141 = vpop.f32.mrf.mxu0
        %v2142 = vadd.f32 %v2029, %v2141
        %2143 = vmatmul.f32.gmra.mxu0 %v1806
        %v2144 = vpop.f32.mrf.mxu0
        %v2145 = vadd.f32 %v2032, %v2144
        %2146 = vmatmul.f32.gmra.mxu0 %v1809
        %v2147 = vpop.f32.mrf.mxu0
        %v2148 = vadd.f32 %v2035, %v2147
        %2149 = vmatmul.f32.gmra.mxu0 %v1812
        %v2150 = vpop.f32.mrf.mxu0
        %v2151 = vadd.f32 %v2038, %v2150
        %2152 = vmatmul.f32.gmra.mxu0 %v1815
        %v2153 = vpop.f32.mrf.mxu0
        %v2154 = vadd.f32 %v2041, %v2153
        %2155 = vmatmul.f32.gmra.mxu0 %v1818
        %v2156 = vpop.f32.mrf.mxu0
        %v2157 = vadd.f32 %v2044, %v2156
        %2158 = vmatmul.f32.gmra.mxu0 %v1821
        %v2159 = vpop.f32.mrf.mxu0
        %v2160 = vadd.f32 %v2047, %v2159
        %2161 = vmatmul.f32.gmra.mxu0 %v1824
        %v2162 = vpop.f32.mrf.mxu0
        %v2163 = vadd.f32 %v2050, %v2162
        %2164 = vmatmul.f32.gmra.mxu0 %v1827
        %v2165 = vpop.f32.mrf.mxu0
        %v2166 = vadd.f32 %v2053, %v2165
        %2167 = vmatmul.f32.gmra.mxu0 %v1830
        %v2168 = vpop.f32.mrf.mxu0
        %v2169 = vadd.f32 %v2056, %v2168
        %2170 = vmatmul.f32.gmra.mxu0 %v1833
        %v2171 = vpop.f32.mrf.mxu0
        %v2172 = vadd.f32 %v2059, %v2171
        %2173 = vmatmul.f32.gmra.mxu0 %v1836
        %v2174 = vpop.f32.mrf.mxu0
        %v2175 = vadd.f32 %v2062, %v2174
        %2176 = vmatmul.f32.gmra.mxu0 %v1839
        %v2177 = vpop.f32.mrf.mxu0
        %v2178 = vadd.f32 %v2065, %v2177
        %2179 = vmatmul.f32.gmra.mxu0 %v1842
        %v2180 = vpop.f32.mrf.mxu0
        %v2181 = vadd.f32 %v2068, %v2180
        %2182 = vmatmul.f32.gmra.mxu0 %v1845
        %v2183 = vpop.f32.mrf.mxu0
        %v2184 = vadd.f32 %v2071, %v2183
        %2185 = vmatmul.f32.gmra.mxu0 %v1848
        %v2186 = vpop.f32.mrf.mxu0
        %v2187 = vadd.f32 %v2074, %v2186
        %2188 = vmatmul.f32.gmra.mxu0 %v1851
        %v2189 = vpop.f32.mrf.mxu0
        %v2190 = vadd.f32 %v2077, %v2189
        %2191 = vmatmul.f32.gmra.mxu0 %v1854
        %v2192 = vpop.f32.mrf.mxu0
        %v2193 = vadd.f32 %v2080, %v2192
        %2194 = vmatmul.f32.gmra.mxu0 %v1857
        %v2195 = vpop.f32.mrf.mxu0
        %v2196 = vadd.f32 %v2083, %v2195
        %2197 = vmatmul.f32.gmra.mxu0 %v1860
        %v2198 = vpop.f32.mrf.mxu0
        %v2199 = vadd.f32 %v2086, %v2198
        %2200 = vmatmul.f32.gmra.mxu0 %v1863
        %v2201 = vpop.f32.mrf.mxu0
        %v2202 = vadd.f32 %v2089, %v2201
        %2203 = vmatmul.f32.gmra.mxu0 %v1866
        %v2204 = vpop.f32.mrf.mxu0
        %v2205 = vadd.f32 %v2092, %v2204
        %2206 = vmatmul.f32.gmra.mxu0 %v1869
        %v2207 = vpop.f32.mrf.mxu0
        %v2208 = vadd.f32 %v2095, %v2207
        %2209 = vmatmul.f32.gmra.mxu0 %v1872
        %v2210 = vpop.f32.mrf.mxu0
        %v2211 = vadd.f32 %v2098, %v2210
        %2212 = vmatmul.f32.gmra.mxu0 %v1875
        %v2213 = vpop.f32.mrf.mxu0
        %v2214 = vadd.f32 %v2101, %v2213
        %2215 = vmatmul.f32.gmra.mxu0 %v1878
        %v2216 = vpop.f32.mrf.mxu0
        %v2217 = vadd.f32 %v2104, %v2216
        %2218 = vmatmul.f32.gmra.mxu0 %v1881
        %v2219 = vpop.f32.mrf.mxu0
        %v2220 = vadd.f32 %v2107, %v2219
        %2221 = vmatmul.f32.gmra.mxu0 %v1884
        %v2222 = vpop.f32.mrf.mxu0
        %v2223 = vadd.f32 %v2110, %v2222
        %2224 = vmatmul.f32.gmra.mxu0 %v1887
        %v2225 = vpop.f32.mrf.mxu0
        %v2226 = vadd.f32 %v2113, %v2225
        %2227 = vmatmul.f32.gmra.mxu0 %v1890
        %v2228 = vpop.f32.mrf.mxu0
        %v2229 = vadd.f32 %v2116, %v2228
        %2230 = vdwg.mxu0
        %vm2231 = vcmp.ge.f32.partialorder %v2136, 0.0
        %vm2232 = vcmp.ge.f32.partialorder %v2139, 0.0
        %vm2233 = vcmp.ge.f32.partialorder %v2142, 0.0
        %vm2234 = vcmp.ge.f32.partialorder %v2145, 0.0
        %vm2235 = vcmp.ge.f32.partialorder %v2148, 0.0
        %vm2236 = vcmp.ge.f32.partialorder %v2151, 0.0
        %vm2237 = vcmp.ge.f32.partialorder %v2154, 0.0
        %vm2238 = vcmp.ge.f32.partialorder %v2157, 0.0
        %vm2239 = vcmp.ge.f32.partialorder %v2160, 0.0
        %vm2240 = vcmp.ge.f32.partialorder %v2163, 0.0
        %vm2241 = vcmp.ge.f32.partialorder %v2166, 0.0
        %vm2242 = vcmp.ge.f32.partialorder %v2169, 0.0
        %vm2243 = vcmp.ge.f32.partialorder %v2172, 0.0
        %vm2244 = vcmp.ge.f32.partialorder %v2175, 0.0
        %vm2245 = vcmp.ge.f32.partialorder %v2178, 0.0
        %vm2246 = vcmp.ge.f32.partialorder %v2181, 0.0
        %vm2247 = vcmp.ge.f32.partialorder %v2184, 0.0
        %vm2248 = vcmp.ge.f32.partialorder %v2187, 0.0
        %vm2249 = vcmp.ge.f32.partialorder %v2190, 0.0
        %vm2250 = vcmp.ge.f32.partialorder %v2193, 0.0
        %vm2251 = vcmp.ge.f32.partialorder %v2196, 0.0
        %vm2252 = vcmp.ge.f32.partialorder %v2199, 0.0
        %vm2253 = vcmp.ge.f32.partialorder %v2202, 0.0
        %vm2254 = vcmp.ge.f32.partialorder %v2205, 0.0
        %vm2255 = vcmp.ge.f32.partialorder %v2208, 0.0
        %vm2256 = vcmp.ge.f32.partialorder %v2211, 0.0
        %vm2257 = vcmp.ge.f32.partialorder %v2214, 0.0
        %vm2258 = vcmp.ge.f32.partialorder %v2217, 0.0
        %vm2259 = vcmp.ge.f32.partialorder %v2220, 0.0
        %vm2260 = vcmp.ge.f32.partialorder %v2223, 0.0
        %vm2261 = vcmp.ge.f32.partialorder %v2226, 0.0
        %vm2262 = vcmp.ge.f32.partialorder %v2229, 0.0
        %v2263 = vstv %s434
        %v2264 = vmul.f32 %v2263, %v2136
        %v2265 = vmul.f32 %v2263, %v2139
        %v2266 = vmul.f32 %v2263, %v2142
        %v2267 = vmul.f32 %v2263, %v2145
        %v2268 = vmul.f32 %v2263, %v2148
        %v2269 = vmul.f32 %v2263, %v2151
        %v2270 = vmul.f32 %v2263, %v2154
        %v2271 = vmul.f32 %v2263, %v2157
        %v2272 = vmul.f32 %v2263, %v2160
        %v2273 = vmul.f32 %v2263, %v2163
        %v2274 = vmul.f32 %v2263, %v2166
        %v2275 = vmul.f32 %v2263, %v2169
        %v2276 = vmul.f32 %v2263, %v2172
        %v2277 = vmul.f32 %v2263, %v2175
        %v2278 = vmul.f32 %v2263, %v2178
        %v2279 = vmul.f32 %v2263, %v2181
        %v2280 = vmul.f32 %v2263, %v2184
        %v2281 = vmul.f32 %v2263, %v2187
        %v2282 = vmul.f32 %v2263, %v2190
        %v2283 = vmul.f32 %v2263, %v2193
        %v2284 = vmul.f32 %v2263, %v2196
        %v2285 = vmul.f32 %v2263, %v2199
        %v2286 = vmul.f32 %v2263, %v2202
        %v2287 = vmul.f32 %v2263, %v2205
        %v2288 = vmul.f32 %v2263, %v2208
        %v2289 = vmul.f32 %v2263, %v2211
        %v2290 = vmul.f32 %v2263, %v2214
        %v2291 = vmul.f32 %v2263, %v2217
        %v2292 = vmul.f32 %v2263, %v2220
        %v2293 = vmul.f32 %v2263, %v2223
        %v2294 = vmul.f32 %v2263, %v2226
        %v2295 = vmul.f32 %v2263, %v2229
        %v2296 = vsel %vm2231, %v2136, %v2264
        %v2297 = vsel %vm2232, %v2139, %v2265
        %v2298 = vsel %vm2233, %v2142, %v2266
        %v2299 = vsel %vm2234, %v2145, %v2267
        %v2300 = vsel %vm2235, %v2148, %v2268
        %v2301 = vsel %vm2236, %v2151, %v2269
        %v2302 = vsel %vm2237, %v2154, %v2270
        %v2303 = vsel %vm2238, %v2157, %v2271
        %v2304 = vsel %vm2239, %v2160, %v2272
        %v2305 = vsel %vm2240, %v2163, %v2273
        %v2306 = vsel %vm2241, %v2166, %v2274
        %v2307 = vsel %vm2242, %v2169, %v2275
        %v2308 = vsel %vm2243, %v2172, %v2276
        %v2309 = vsel %vm2244, %v2175, %v2277
        %v2310 = vsel %vm2245, %v2178, %v2278
        %v2311 = vsel %vm2246, %v2181, %v2279
        %v2312 = vsel %vm2247, %v2184, %v2280
        %v2313 = vsel %vm2248, %v2187, %v2281
        %v2314 = vsel %vm2249, %v2190, %v2282
        %v2315 = vsel %vm2250, %v2193, %v2283
        %v2316 = vsel %vm2251, %v2196, %v2284
        %v2317 = vsel %vm2252, %v2199, %v2285
        %v2318 = vsel %vm2253, %v2202, %v2286
        %v2319 = vsel %vm2254, %v2205, %v2287
        %v2320 = vsel %vm2255, %v2208, %v2288
        %v2321 = vsel %vm2256, %v2211, %v2289
        %v2322 = vsel %vm2257, %v2214, %v2290
        %v2323 = vsel %vm2258, %v2217, %v2291
        %v2324 = vsel %vm2259, %v2220, %v2292
        %v2325 = vsel %vm2260, %v2223, %v2293
        %v2326 = vsel %vm2261, %v2226, %v2294
        %v2327 = vsel %vm2262, %v2229, %v2295
        %2328 = vst.msk [vmem:[%s475 + $0x2] sm:$0xff] %vm372, %v2296
        %2329 = vst.msk [vmem:[%s475 + $0xa] sm:$0xff] %vm372, %v2297
        %2330 = vst.msk [vmem:[%s475 + $0x1a] sm:$0xff] %vm372, %v2298
        %2331 = vst.msk [vmem:[%s475 + $0x22] sm:$0xff] %vm372, %v2299
        %2332 = vst.msk [vmem:[%s475 + $0x32] sm:$0xff] %vm372, %v2300
        %2333 = vst.msk [vmem:[%s475 + $0x3a] sm:$0xff] %vm372, %v2301
        %2334 = vst.msk [vmem:[%s475 + $0x4a] sm:$0xff] %vm372, %v2302
        %2335 = vst.msk [vmem:[%s475 + $0x52] sm:$0xff] %vm372, %v2303
        %2336 = vst.msk [vmem:[%s475 + $0x62] sm:$0xff] %vm372, %v2304
        %2337 = vst.msk [vmem:[%s475 + $0x6a] sm:$0xff] %vm372, %v2305
        %2338 = vst.msk [vmem:[%s475 + $0x7a] sm:$0xff] %vm372, %v2306
        %2339 = vst.msk [vmem:[%s475 + $0x82] sm:$0xff] %vm372, %v2307
        %2340 = vst.msk [vmem:[%s475 + $0x92] sm:$0xff] %vm372, %v2308
        %2341 = vst.msk [vmem:[%s475 + $0x9a] sm:$0xff] %vm372, %v2309
        %2342 = vst.msk [vmem:[%s475 + $0xaa] sm:$0xff] %vm372, %v2310
        %2343 = vst.msk [vmem:[%s475 + $0xb2] sm:$0xff] %vm372, %v2311
        %2344 = vst.msk [vmem:[%s475 + $0xc2] sm:$0xff] %vm372, %v2312
        %2345 = vst.msk [vmem:[%s475 + $0xca] sm:$0xff] %vm372, %v2313
        %2346 = vst.msk [vmem:[%s475 + $0xda] sm:$0xff] %vm372, %v2314
        %2347 = vst.msk [vmem:[%s475 + $0xe2] sm:$0xff] %vm372, %v2315
        %2348 = vst.msk [vmem:[%s475 + $0xf2] sm:$0xff] %vm372, %v2316
        %2349 = vst.msk [vmem:[%s475 + $0xfa] sm:$0xff] %vm372, %v2317
        %2350 = vst.msk [vmem:[%s475 + $0x10a] sm:$0xff] %vm372, %v2318
        %2351 = vst.msk [vmem:[%s475 + $0x112] sm:$0xff] %vm372, %v2319
        %2352 = vst.msk [vmem:[%s475 + $0x122] sm:$0xff] %vm372, %v2320
        %2353 = vst.msk [vmem:[%s475 + $0x12a] sm:$0xff] %vm372, %v2321
        %2354 = vst.msk [vmem:[%s475 + $0x13a] sm:$0xff] %vm372, %v2322
        %2355 = vst.msk [vmem:[%s475 + $0x142] sm:$0xff] %vm372, %v2323
        %2356 = vst.msk [vmem:[%s475 + $0x152] sm:$0xff] %vm372, %v2324
        %2357 = vst.msk [vmem:[%s475 + $0x15a] sm:$0xff] %vm372, %v2325
        %2358 = vst.msk [vmem:[%s475 + $0x16a] sm:$0xff] %vm372, %v2326
        %2359 = vst.msk [vmem:[%s475 + $0x172] sm:$0xff] %vm372, %v2327
        %v2360 = vld [vmem:[%s508 + $0x1] sm:$0xff]
        %v2361 = vld [vmem:[%s508 + $0x9] sm:$0xff]
        %v2362 = vld [vmem:[%s508 + $0x19] sm:$0xff]
        %v2363 = vld [vmem:[%s508 + $0x21] sm:$0xff]
        %v2364 = vld [vmem:[%s508 + $0x31] sm:$0xff]
        %v2365 = vld [vmem:[%s508 + $0x39] sm:$0xff]
        %v2366 = vld [vmem:[%s508 + $0x49] sm:$0xff]
        %v2367 = vld [vmem:[%s508 + $0x51] sm:$0xff]
        %v2368 = vld [vmem:[%s508 + $0x61] sm:$0xff]
        %v2369 = vld [vmem:[%s508 + $0x69] sm:$0xff]
        %v2370 = vld [vmem:[%s508 + $0x79] sm:$0xff]
        %v2371 = vld [vmem:[%s508 + $0x81] sm:$0xff]
        %v2372 = vld [vmem:[%s508 + $0x91] sm:$0xff]
        %v2373 = vld [vmem:[%s508 + $0x99] sm:$0xff]
        %v2374 = vld [vmem:[%s508 + $0xa9] sm:$0xff]
        %v2375 = vld [vmem:[%s508 + $0xb1] sm:$0xff]
        %v2376 = vld [vmem:[%s508 + $0xc1] sm:$0xff]
        %v2377 = vld [vmem:[%s508 + $0xc9] sm:$0xff]
        %v2378 = vld [vmem:[%s508 + $0xd9] sm:$0xff]
        %v2379 = vld [vmem:[%s508 + $0xe1] sm:$0xff]
        %v2380 = vld [vmem:[%s508 + $0xf1] sm:$0xff]
        %v2381 = vld [vmem:[%s508 + $0xf9] sm:$0xff]
        %v2382 = vld [vmem:[%s508 + $0x109] sm:$0xff]
        %v2383 = vld [vmem:[%s508 + $0x111] sm:$0xff]
        %v2384 = vld [vmem:[%s508 + $0x121] sm:$0xff]
        %v2385 = vld [vmem:[%s508 + $0x129] sm:$0xff]
        %v2386 = vld [vmem:[%s508 + $0x139] sm:$0xff]
        %v2387 = vld [vmem:[%s508 + $0x141] sm:$0xff]
        %v2388 = vld [vmem:[%s508 + $0x151] sm:$0xff]
        %v2389 = vld [vmem:[%s508 + $0x159] sm:$0xff]
        %v2390 = vld [vmem:[%s508 + $0x169] sm:$0xff]
        %v2391 = vld [vmem:[%s508 + $0x171] sm:$0xff]
        %v2392 = vld [vmem:[%s508 + $0x2] sm:$0xff]
        %v2393 = vld [vmem:[%s508 + $0xa] sm:$0xff]
        %v2394 = vld [vmem:[%s508 + $0x1a] sm:$0xff]
        %v2395 = vld [vmem:[%s508 + $0x22] sm:$0xff]
        %v2396 = vld [vmem:[%s508 + $0x32] sm:$0xff]
        %v2397 = vld [vmem:[%s508 + $0x3a] sm:$0xff]
        %v2398 = vld [vmem:[%s508 + $0x4a] sm:$0xff]
        %v2399 = vld [vmem:[%s508 + $0x52] sm:$0xff]
        %v2400 = vld [vmem:[%s508 + $0x62] sm:$0xff]
        %v2401 = vld [vmem:[%s508 + $0x6a] sm:$0xff]
        %v2402 = vld [vmem:[%s508 + $0x7a] sm:$0xff]
        %v2403 = vld [vmem:[%s508 + $0x82] sm:$0xff]
        %v2404 = vld [vmem:[%s508 + $0x92] sm:$0xff]
        %v2405 = vld [vmem:[%s508 + $0x9a] sm:$0xff]
        %v2406 = vld [vmem:[%s508 + $0xaa] sm:$0xff]
        %v2407 = vld [vmem:[%s508 + $0xb2] sm:$0xff]
        %v2408 = vld [vmem:[%s508 + $0xc2] sm:$0xff]
        %v2409 = vld [vmem:[%s508 + $0xca] sm:$0xff]
        %v2410 = vld [vmem:[%s508 + $0xda] sm:$0xff]
        %v2411 = vld [vmem:[%s508 + $0xe2] sm:$0xff]
        %v2412 = vld [vmem:[%s508 + $0xf2] sm:$0xff]
        %v2413 = vld [vmem:[%s508 + $0xfa] sm:$0xff]
        %v2414 = vld [vmem:[%s508 + $0x10a] sm:$0xff]
        %v2415 = vld [vmem:[%s508 + $0x112] sm:$0xff]
        %v2416 = vld [vmem:[%s508 + $0x122] sm:$0xff]
        %v2417 = vld [vmem:[%s508 + $0x12a] sm:$0xff]
        %v2418 = vld [vmem:[%s508 + $0x13a] sm:$0xff]
        %v2419 = vld [vmem:[%s508 + $0x142] sm:$0xff]
        %v2420 = vld [vmem:[%s508 + $0x152] sm:$0xff]
        %v2421 = vld [vmem:[%s508 + $0x15a] sm:$0xff]
        %v2422 = vld [vmem:[%s508 + $0x16a] sm:$0xff]
        %v2423 = vld [vmem:[%s508 + $0x172] sm:$0xff]
        %v2424 = vld [vmem:[%s508 + $0x3] sm:$0xff]
        %v2425 = vld [vmem:[%s508 + $0xb] sm:$0xff]
        %v2426 = vld [vmem:[%s508 + $0x1b] sm:$0xff]
        %v2427 = vld [vmem:[%s508 + $0x23] sm:$0xff]
        %v2428 = vld [vmem:[%s508 + $0x33] sm:$0xff]
        %v2429 = vld [vmem:[%s508 + $0x3b] sm:$0xff]
        %v2430 = vld [vmem:[%s508 + $0x4b] sm:$0xff]
        %v2431 = vld [vmem:[%s508 + $0x53] sm:$0xff]
        %v2432 = vld [vmem:[%s508 + $0x63] sm:$0xff]
        %v2433 = vld [vmem:[%s508 + $0x6b] sm:$0xff]
        %v2434 = vld [vmem:[%s508 + $0x7b] sm:$0xff]
        %v2435 = vld [vmem:[%s508 + $0x83] sm:$0xff]
        %v2436 = vld [vmem:[%s508 + $0x93] sm:$0xff]
        %v2437 = vld [vmem:[%s508 + $0x9b] sm:$0xff]
        %v2438 = vld [vmem:[%s508 + $0xab] sm:$0xff]
        %v2439 = vld [vmem:[%s508 + $0xb3] sm:$0xff]
        %v2440 = vld [vmem:[%s508 + $0xc3] sm:$0xff]
        %v2441 = vld [vmem:[%s508 + $0xcb] sm:$0xff]
        %v2442 = vld [vmem:[%s508 + $0xdb] sm:$0xff]
        %v2443 = vld [vmem:[%s508 + $0xe3] sm:$0xff]
        %v2444 = vld [vmem:[%s508 + $0xf3] sm:$0xff]
        %v2445 = vld [vmem:[%s508 + $0xfb] sm:$0xff]
        %v2446 = vld [vmem:[%s508 + $0x10b] sm:$0xff]
        %v2447 = vld [vmem:[%s508 + $0x113] sm:$0xff]
        %v2448 = vld [vmem:[%s508 + $0x123] sm:$0xff]
        %v2449 = vld [vmem:[%s508 + $0x12b] sm:$0xff]
        %v2450 = vld [vmem:[%s508 + $0x13b] sm:$0xff]
        %v2451 = vld [vmem:[%s508 + $0x143] sm:$0xff]
        %v2452 = vld [vmem:[%s508 + $0x153] sm:$0xff]
        %v2453 = vld [vmem:[%s508 + $0x15b] sm:$0xff]
        %v2454 = vld [vmem:[%s508 + $0x16b] sm:$0xff]
        %v2455 = vld [vmem:[%s508 + $0x173] sm:$0xff]
        %v2456 = vld [vmem:[%s475 + $0x1] sm:$0xff]
        %v2457 = vld [vmem:[%s475 + $0x9] sm:$0xff]
        %v2458 = vld [vmem:[%s475 + $0x19] sm:$0xff]
        %v2459 = vld [vmem:[%s475 + $0x21] sm:$0xff]
        %v2460 = vld [vmem:[%s475 + $0x31] sm:$0xff]
        %v2461 = vld [vmem:[%s475 + $0x39] sm:$0xff]
        %v2462 = vld [vmem:[%s475 + $0x49] sm:$0xff]
        %v2463 = vld [vmem:[%s475 + $0x51] sm:$0xff]
        %v2464 = vld [vmem:[%s475 + $0x61] sm:$0xff]
        %v2465 = vld [vmem:[%s475 + $0x69] sm:$0xff]
        %v2466 = vld [vmem:[%s475 + $0x79] sm:$0xff]
        %v2467 = vld [vmem:[%s475 + $0x81] sm:$0xff]
        %v2468 = vld [vmem:[%s475 + $0x91] sm:$0xff]
        %v2469 = vld [vmem:[%s475 + $0x99] sm:$0xff]
        %v2470 = vld [vmem:[%s475 + $0xa9] sm:$0xff]
        %v2471 = vld [vmem:[%s475 + $0xb1] sm:$0xff]
        %v2472 = vld [vmem:[%s475 + $0xc1] sm:$0xff]
        %v2473 = vld [vmem:[%s475 + $0xc9] sm:$0xff]
        %v2474 = vld [vmem:[%s475 + $0xd9] sm:$0xff]
        %v2475 = vld [vmem:[%s475 + $0xe1] sm:$0xff]
        %v2476 = vld [vmem:[%s475 + $0xf1] sm:$0xff]
        %v2477 = vld [vmem:[%s475 + $0xf9] sm:$0xff]
        %v2478 = vld [vmem:[%s475 + $0x109] sm:$0xff]
        %v2479 = vld [vmem:[%s475 + $0x111] sm:$0xff]
        %v2480 = vld [vmem:[%s475 + $0x121] sm:$0xff]
        %v2481 = vld [vmem:[%s475 + $0x129] sm:$0xff]
        %v2482 = vld [vmem:[%s475 + $0x139] sm:$0xff]
        %v2483 = vld [vmem:[%s475 + $0x141] sm:$0xff]
        %v2484 = vld [vmem:[%s475 + $0x151] sm:$0xff]
        %v2485 = vld [vmem:[%s475 + $0x159] sm:$0xff]
        %v2486 = vld [vmem:[%s475 + $0x169] sm:$0xff]
        %v2487 = vld [vmem:[%s475 + $0x171] sm:$0xff]
        %v2488 = vld [vmem:[%s475 + $0x2] sm:$0xff]
        %v2489 = vld [vmem:[%s475 + $0xa] sm:$0xff]
        %v2490 = vld [vmem:[%s475 + $0x1a] sm:$0xff]
        %v2491 = vld [vmem:[%s475 + $0x22] sm:$0xff]
        %v2492 = vld [vmem:[%s475 + $0x32] sm:$0xff]
        %v2493 = vld [vmem:[%s475 + $0x3a] sm:$0xff]
        %v2494 = vld [vmem:[%s475 + $0x4a] sm:$0xff]
        %v2495 = vld [vmem:[%s475 + $0x52] sm:$0xff]
        %v2496 = vld [vmem:[%s475 + $0x62] sm:$0xff]
        %v2497 = vld [vmem:[%s475 + $0x6a] sm:$0xff]
        %v2498 = vld [vmem:[%s475 + $0x7a] sm:$0xff]
        %v2499 = vld [vmem:[%s475 + $0x82] sm:$0xff]
        %v2500 = vld [vmem:[%s475 + $0x92] sm:$0xff]
        %v2501 = vld [vmem:[%s475 + $0x9a] sm:$0xff]
        %v2502 = vld [vmem:[%s475 + $0xaa] sm:$0xff]
        %v2503 = vld [vmem:[%s475 + $0xb2] sm:$0xff]
        %v2504 = vld [vmem:[%s475 + $0xc2] sm:$0xff]
        %v2505 = vld [vmem:[%s475 + $0xca] sm:$0xff]
        %v2506 = vld [vmem:[%s475 + $0xda] sm:$0xff]
        %v2507 = vld [vmem:[%s475 + $0xe2] sm:$0xff]
        %v2508 = vld [vmem:[%s475 + $0xf2] sm:$0xff]
        %v2509 = vld [vmem:[%s475 + $0xfa] sm:$0xff]
        %v2510 = vld [vmem:[%s475 + $0x10a] sm:$0xff]
        %v2511 = vld [vmem:[%s475 + $0x112] sm:$0xff]
        %v2512 = vld [vmem:[%s475 + $0x122] sm:$0xff]
        %v2513 = vld [vmem:[%s475 + $0x12a] sm:$0xff]
        %v2514 = vld [vmem:[%s475 + $0x13a] sm:$0xff]
        %v2515 = vld [vmem:[%s475 + $0x142] sm:$0xff]
        %v2516 = vld [vmem:[%s475 + $0x152] sm:$0xff]
        %v2517 = vld [vmem:[%s475 + $0x15a] sm:$0xff]
        %v2518 = vld [vmem:[%s475 + $0x16a] sm:$0xff]
        %v2519 = vld [vmem:[%s475 + $0x172] sm:$0xff]
        %v2520 = vld [vmem:[%s475 + $0x3] sm:$0xff]
        %v2521 = vld [vmem:[%s475 + $0xb] sm:$0xff]
        %v2522 = vld [vmem:[%s475 + $0x1b] sm:$0xff]
        %v2523 = vld [vmem:[%s475 + $0x23] sm:$0xff]
        %v2524 = vld [vmem:[%s475 + $0x33] sm:$0xff]
        %v2525 = vld [vmem:[%s475 + $0x3b] sm:$0xff]
        %v2526 = vld [vmem:[%s475 + $0x4b] sm:$0xff]
        %v2527 = vld [vmem:[%s475 + $0x53] sm:$0xff]
        %v2528 = vld [vmem:[%s475 + $0x63] sm:$0xff]
        %v2529 = vld [vmem:[%s475 + $0x6b] sm:$0xff]
        %v2530 = vld [vmem:[%s475 + $0x7b] sm:$0xff]
        %v2531 = vld [vmem:[%s475 + $0x83] sm:$0xff]
        %v2532 = vld [vmem:[%s475 + $0x93] sm:$0xff]
        %v2533 = vld [vmem:[%s475 + $0x9b] sm:$0xff]
        %v2534 = vld [vmem:[%s475 + $0xab] sm:$0xff]
        %v2535 = vld [vmem:[%s475 + $0xb3] sm:$0xff]
        %v2536 = vld [vmem:[%s475 + $0xc3] sm:$0xff]
        %v2537 = vld [vmem:[%s475 + $0xcb] sm:$0xff]
        %v2538 = vld [vmem:[%s475 + $0xdb] sm:$0xff]
        %v2539 = vld [vmem:[%s475 + $0xe3] sm:$0xff]
        %v2540 = vld [vmem:[%s475 + $0xf3] sm:$0xff]
        %v2541 = vld [vmem:[%s475 + $0xfb] sm:$0xff]
        %v2542 = vld [vmem:[%s475 + $0x10b] sm:$0xff]
        %v2543 = vld [vmem:[%s475 + $0x113] sm:$0xff]
        %v2544 = vld [vmem:[%s475 + $0x123] sm:$0xff]
        %v2545 = vld [vmem:[%s475 + $0x12b] sm:$0xff]
        %v2546 = vld [vmem:[%s475 + $0x13b] sm:$0xff]
        %v2547 = vld [vmem:[%s475 + $0x143] sm:$0xff]
        %v2548 = vld [vmem:[%s475 + $0x153] sm:$0xff]
        %v2549 = vld [vmem:[%s475 + $0x15b] sm:$0xff]
        %v2550 = vld [vmem:[%s475 + $0x16b] sm:$0xff]
        %v2551 = vld [vmem:[%s475 + $0x173] sm:$0xff]
        %v2552 = vld [vmem:[%s701 + $0x1] sm:$0xff]
        %v2553 = vld [vmem:[%s701 + $0x9] sm:$0xff]
        %v2554 = vld [vmem:[%s701 + $0x19] sm:$0xff]
        %v2555 = vld [vmem:[%s701 + $0x21] sm:$0xff]
        %v2556 = vld [vmem:[%s701 + $0x31] sm:$0xff]
        %v2557 = vld [vmem:[%s701 + $0x39] sm:$0xff]
        %v2558 = vld [vmem:[%s701 + $0x49] sm:$0xff]
        %v2559 = vld [vmem:[%s701 + $0x51] sm:$0xff]
        %v2560 = vld [vmem:[%s701 + $0x61] sm:$0xff]
        %v2561 = vld [vmem:[%s701 + $0x69] sm:$0xff]
        %v2562 = vld [vmem:[%s701 + $0x79] sm:$0xff]
        %v2563 = vld [vmem:[%s701 + $0x81] sm:$0xff]
        %v2564 = vld [vmem:[%s701 + $0x91] sm:$0xff]
        %v2565 = vld [vmem:[%s701 + $0x99] sm:$0xff]
        %v2566 = vld [vmem:[%s701 + $0xa9] sm:$0xff]
        %v2567 = vld [vmem:[%s701 + $0xb1] sm:$0xff]
        %v2568 = vld [vmem:[%s701 + $0xc1] sm:$0xff]
        %v2569 = vld [vmem:[%s701 + $0xc9] sm:$0xff]
        %v2570 = vld [vmem:[%s701 + $0xd9] sm:$0xff]
        %v2571 = vld [vmem:[%s701 + $0xe1] sm:$0xff]
        %v2572 = vld [vmem:[%s701 + $0xf1] sm:$0xff]
        %v2573 = vld [vmem:[%s701 + $0xf9] sm:$0xff]
        %v2574 = vld [vmem:[%s701 + $0x109] sm:$0xff]
        %v2575 = vld [vmem:[%s701 + $0x111] sm:$0xff]
        %v2576 = vld [vmem:[%s701 + $0x121] sm:$0xff]
        %v2577 = vld [vmem:[%s701 + $0x129] sm:$0xff]
        %v2578 = vld [vmem:[%s701 + $0x139] sm:$0xff]
        %v2579 = vld [vmem:[%s701 + $0x141] sm:$0xff]
        %v2580 = vld [vmem:[%s701 + $0x151] sm:$0xff]
        %v2581 = vld [vmem:[%s701 + $0x159] sm:$0xff]
        %v2582 = vld [vmem:[%s701 + $0x169] sm:$0xff]
        %v2583 = vld [vmem:[%s701 + $0x171] sm:$0xff]
        %v2584 = vld [vmem:[%s701 + $0x2] sm:$0xff]
        %v2585 = vld [vmem:[%s701 + $0xa] sm:$0xff]
        %v2586 = vld [vmem:[%s701 + $0x1a] sm:$0xff]
        %v2587 = vld [vmem:[%s701 + $0x22] sm:$0xff]
        %v2588 = vld [vmem:[%s701 + $0x32] sm:$0xff]
        %v2589 = vld [vmem:[%s701 + $0x3a] sm:$0xff]
        %v2590 = vld [vmem:[%s701 + $0x4a] sm:$0xff]
        %v2591 = vld [vmem:[%s701 + $0x52] sm:$0xff]
        %v2592 = vld [vmem:[%s701 + $0x62] sm:$0xff]
        %v2593 = vld [vmem:[%s701 + $0x6a] sm:$0xff]
        %v2594 = vld [vmem:[%s701 + $0x7a] sm:$0xff]
        %v2595 = vld [vmem:[%s701 + $0x82] sm:$0xff]
        %v2596 = vld [vmem:[%s701 + $0x92] sm:$0xff]
        %v2597 = vld [vmem:[%s701 + $0x9a] sm:$0xff]
        %v2598 = vld [vmem:[%s701 + $0xaa] sm:$0xff]
        %v2599 = vld [vmem:[%s701 + $0xb2] sm:$0xff]
        %v2600 = vld [vmem:[%s701 + $0xc2] sm:$0xff]
        %v2601 = vld [vmem:[%s701 + $0xca] sm:$0xff]
        %v2602 = vld [vmem:[%s701 + $0xda] sm:$0xff]
        %v2603 = vld [vmem:[%s701 + $0xe2] sm:$0xff]
        %v2604 = vld [vmem:[%s701 + $0xf2] sm:$0xff]
        %v2605 = vld [vmem:[%s701 + $0xfa] sm:$0xff]
        %v2606 = vld [vmem:[%s701 + $0x10a] sm:$0xff]
        %v2607 = vld [vmem:[%s701 + $0x112] sm:$0xff]
        %v2608 = vld [vmem:[%s701 + $0x122] sm:$0xff]
        %v2609 = vld [vmem:[%s701 + $0x12a] sm:$0xff]
        %v2610 = vld [vmem:[%s701 + $0x13a] sm:$0xff]
        %v2611 = vld [vmem:[%s701 + $0x142] sm:$0xff]
        %v2612 = vld [vmem:[%s701 + $0x152] sm:$0xff]
        %v2613 = vld [vmem:[%s701 + $0x15a] sm:$0xff]
        %v2614 = vld [vmem:[%s701 + $0x16a] sm:$0xff]
        %v2615 = vld [vmem:[%s701 + $0x172] sm:$0xff]
        %v2616 = vld [vmem:[%s701 + $0x3] sm:$0xff]
        %v2617 = vld [vmem:[%s701 + $0xb] sm:$0xff]
        %v2618 = vld [vmem:[%s701 + $0x1b] sm:$0xff]
        %v2619 = vld [vmem:[%s701 + $0x23] sm:$0xff]
        %v2620 = vld [vmem:[%s701 + $0x33] sm:$0xff]
        %v2621 = vld [vmem:[%s701 + $0x3b] sm:$0xff]
        %v2622 = vld [vmem:[%s701 + $0x4b] sm:$0xff]
        %v2623 = vld [vmem:[%s701 + $0x53] sm:$0xff]
        %v2624 = vld [vmem:[%s701 + $0x63] sm:$0xff]
        %v2625 = vld [vmem:[%s701 + $0x6b] sm:$0xff]
        %v2626 = vld [vmem:[%s701 + $0x7b] sm:$0xff]
        %v2627 = vld [vmem:[%s701 + $0x83] sm:$0xff]
        %v2628 = vld [vmem:[%s701 + $0x93] sm:$0xff]
        %v2629 = vld [vmem:[%s701 + $0x9b] sm:$0xff]
        %v2630 = vld [vmem:[%s701 + $0xab] sm:$0xff]
        %v2631 = vld [vmem:[%s701 + $0xb3] sm:$0xff]
        %v2632 = vld [vmem:[%s701 + $0xc3] sm:$0xff]
        %v2633 = vld [vmem:[%s701 + $0xcb] sm:$0xff]
        %v2634 = vld [vmem:[%s701 + $0xdb] sm:$0xff]
        %v2635 = vld [vmem:[%s701 + $0xe3] sm:$0xff]
        %v2636 = vld [vmem:[%s701 + $0xf3] sm:$0xff]
        %v2637 = vld [vmem:[%s701 + $0xfb] sm:$0xff]
        %v2638 = vld [vmem:[%s701 + $0x10b] sm:$0xff]
        %v2639 = vld [vmem:[%s701 + $0x113] sm:$0xff]
        %v2640 = vld [vmem:[%s701 + $0x123] sm:$0xff]
        %v2641 = vld [vmem:[%s701 + $0x12b] sm:$0xff]
        %v2642 = vld [vmem:[%s701 + $0x13b] sm:$0xff]
        %v2643 = vld [vmem:[%s701 + $0x143] sm:$0xff]
        %v2644 = vld [vmem:[%s701 + $0x153] sm:$0xff]
        %v2645 = vld [vmem:[%s701 + $0x15b] sm:$0xff]
        %v2646 = vld [vmem:[%s701 + $0x16b] sm:$0xff]
        %v2647 = vld [vmem:[%s701 + $0x173] sm:$0xff]
        %2680 = vrot.lane.b32.xlu0 %v2392, 32
        %v2681 = vpop.permute.xlu0 %2680
        %2682 = vrot.lane.b32.xlu0 %v2393, 32
        %v2683 = vpop.permute.xlu0 %2682
        %2684 = vrot.lane.b32.xlu0 %v2394, 32
        %v2685 = vpop.permute.xlu0 %2684
        %2686 = vrot.lane.b32.xlu0 %v2395, 32
        %v2687 = vpop.permute.xlu0 %2686
        %2688 = vrot.lane.b32.xlu0 %v2396, 32
        %v2689 = vpop.permute.xlu0 %2688
        %2690 = vrot.lane.b32.xlu0 %v2397, 32
        %v2691 = vpop.permute.xlu0 %2690
        %2692 = vrot.lane.b32.xlu0 %v2398, 32
        %v2693 = vpop.permute.xlu0 %2692
        %2694 = vrot.lane.b32.xlu0 %v2399, 32
        %v2695 = vpop.permute.xlu0 %2694
        %2696 = vrot.lane.b32.xlu0 %v2400, 32
        %v2697 = vpop.permute.xlu0 %2696
        %2698 = vrot.lane.b32.xlu0 %v2401, 32
        %v2699 = vpop.permute.xlu0 %2698
        %2700 = vrot.lane.b32.xlu0 %v2402, 32
        %v2701 = vpop.permute.xlu0 %2700
        %2702 = vrot.lane.b32.xlu0 %v2403, 32
        %v2703 = vpop.permute.xlu0 %2702
        %2704 = vrot.lane.b32.xlu0 %v2404, 32
        %v2705 = vpop.permute.xlu0 %2704
        %2706 = vrot.lane.b32.xlu0 %v2405, 32
        %v2707 = vpop.permute.xlu0 %2706
        %2708 = vrot.lane.b32.xlu0 %v2406, 32
        %v2709 = vpop.permute.xlu0 %2708
        %2710 = vrot.lane.b32.xlu0 %v2407, 32
        %v2711 = vpop.permute.xlu0 %2710
        %2712 = vrot.lane.b32.xlu0 %v2408, 32
        %v2713 = vpop.permute.xlu0 %2712
        %2714 = vrot.lane.b32.xlu0 %v2409, 32
        %v2715 = vpop.permute.xlu0 %2714
        %2716 = vrot.lane.b32.xlu0 %v2410, 32
        %v2717 = vpop.permute.xlu0 %2716
        %2718 = vrot.lane.b32.xlu0 %v2411, 32
        %v2719 = vpop.permute.xlu0 %2718
        %2720 = vrot.lane.b32.xlu0 %v2412, 32
        %v2721 = vpop.permute.xlu0 %2720
        %2722 = vrot.lane.b32.xlu0 %v2413, 32
        %v2723 = vpop.permute.xlu0 %2722
        %2724 = vrot.lane.b32.xlu0 %v2414, 32
        %v2725 = vpop.permute.xlu0 %2724
        %2726 = vrot.lane.b32.xlu0 %v2415, 32
        %v2727 = vpop.permute.xlu0 %2726
        %2728 = vrot.lane.b32.xlu0 %v2416, 32
        %v2729 = vpop.permute.xlu0 %2728
        %2730 = vrot.lane.b32.xlu0 %v2417, 32
        %v2731 = vpop.permute.xlu0 %2730
        %2732 = vrot.lane.b32.xlu0 %v2418, 32
        %v2733 = vpop.permute.xlu0 %2732
        %2734 = vrot.lane.b32.xlu0 %v2419, 32
        %v2735 = vpop.permute.xlu0 %2734
        %2736 = vrot.lane.b32.xlu0 %v2420, 32
        %v2737 = vpop.permute.xlu0 %2736
        %2738 = vrot.lane.b32.xlu0 %v2421, 32
        %v2739 = vpop.permute.xlu0 %2738
        %2740 = vrot.lane.b32.xlu0 %v2422, 32
        %v2741 = vpop.permute.xlu0 %2740
        %2742 = vrot.lane.b32.xlu0 %v2423, 32
        %v2743 = vpop.permute.xlu0 %2742
        %2808 = vrot.lane.b32.xlu0 %v2424, 64
        %v2809 = vpop.permute.xlu0 %2808
        %2810 = vrot.lane.b32.xlu0 %v2425, 64
        %v2811 = vpop.permute.xlu0 %2810
        %2812 = vrot.lane.b32.xlu0 %v2426, 64
        %v2813 = vpop.permute.xlu0 %2812
        %2814 = vrot.lane.b32.xlu0 %v2427, 64
        %v2815 = vpop.permute.xlu0 %2814
        %2816 = vrot.lane.b32.xlu0 %v2428, 64
        %v2817 = vpop.permute.xlu0 %2816
        %2818 = vrot.lane.b32.xlu0 %v2429, 64
        %v2819 = vpop.permute.xlu0 %2818
        %2820 = vrot.lane.b32.xlu0 %v2430, 64
        %v2821 = vpop.permute.xlu0 %2820
        %2822 = vrot.lane.b32.xlu0 %v2431, 64
        %v2823 = vpop.permute.xlu0 %2822
        %2824 = vrot.lane.b32.xlu0 %v2432, 64
        %v2825 = vpop.permute.xlu0 %2824
        %2826 = vrot.lane.b32.xlu0 %v2433, 64
        %v2827 = vpop.permute.xlu0 %2826
        %2828 = vrot.lane.b32.xlu0 %v2434, 64
        %v2829 = vpop.permute.xlu0 %2828
        %2830 = vrot.lane.b32.xlu0 %v2435, 64
        %v2831 = vpop.permute.xlu0 %2830
        %2832 = vrot.lane.b32.xlu0 %v2436, 64
        %v2833 = vpop.permute.xlu0 %2832
        %2834 = vrot.lane.b32.xlu0 %v2437, 64
        %v2835 = vpop.permute.xlu0 %2834
        %2836 = vrot.lane.b32.xlu0 %v2438, 64
        %v2837 = vpop.permute.xlu0 %2836
        %2838 = vrot.lane.b32.xlu0 %v2439, 64
        %v2839 = vpop.permute.xlu0 %2838
        %2840 = vrot.lane.b32.xlu0 %v2440, 64
        %v2841 = vpop.permute.xlu0 %2840
        %2842 = vrot.lane.b32.xlu0 %v2441, 64
        %v2843 = vpop.permute.xlu0 %2842
        %2844 = vrot.lane.b32.xlu0 %v2442, 64
        %v2845 = vpop.permute.xlu0 %2844
        %2846 = vrot.lane.b32.xlu0 %v2443, 64
        %v2847 = vpop.permute.xlu0 %2846
        %2848 = vrot.lane.b32.xlu0 %v2444, 64
        %v2849 = vpop.permute.xlu0 %2848
        %2850 = vrot.lane.b32.xlu0 %v2445, 64
        %v2851 = vpop.permute.xlu0 %2850
        %2852 = vrot.lane.b32.xlu0 %v2446, 64
        %v2853 = vpop.permute.xlu0 %2852
        %2854 = vrot.lane.b32.xlu0 %v2447, 64
        %v2855 = vpop.permute.xlu0 %2854
        %2856 = vrot.lane.b32.xlu0 %v2448, 64
        %v2857 = vpop.permute.xlu0 %2856
        %2858 = vrot.lane.b32.xlu0 %v2449, 64
        %v2859 = vpop.permute.xlu0 %2858
        %2860 = vrot.lane.b32.xlu0 %v2450, 64
        %v2861 = vpop.permute.xlu0 %2860
        %2862 = vrot.lane.b32.xlu0 %v2451, 64
        %v2863 = vpop.permute.xlu0 %2862
        %2864 = vrot.lane.b32.xlu0 %v2452, 64
        %v2865 = vpop.permute.xlu0 %2864
        %2866 = vrot.lane.b32.xlu0 %v2453, 64
        %v2867 = vpop.permute.xlu0 %2866
        %2868 = vrot.lane.b32.xlu0 %v2454, 64
        %v2869 = vpop.permute.xlu0 %2868
        %2870 = vrot.lane.b32.xlu0 %v2455, 64
        %v2871 = vpop.permute.xlu0 %2870
        %2936 = vrot.lane.b32.xlu0 %v2456, 96
        %v2937 = vpop.permute.xlu0 %2936
        %2938 = vrot.lane.b32.xlu0 %v2457, 96
        %v2939 = vpop.permute.xlu0 %2938
        %2940 = vrot.lane.b32.xlu0 %v2458, 96
        %v2941 = vpop.permute.xlu0 %2940
        %2942 = vrot.lane.b32.xlu0 %v2459, 96
        %v2943 = vpop.permute.xlu0 %2942
        %2944 = vrot.lane.b32.xlu0 %v2460, 96
        %v2945 = vpop.permute.xlu0 %2944
        %2946 = vrot.lane.b32.xlu0 %v2461, 96
        %v2947 = vpop.permute.xlu0 %2946
        %2948 = vrot.lane.b32.xlu0 %v2462, 96
        %v2949 = vpop.permute.xlu0 %2948
        %2950 = vrot.lane.b32.xlu0 %v2463, 96
        %v2951 = vpop.permute.xlu0 %2950
        %2952 = vrot.lane.b32.xlu0 %v2464, 96
        %v2953 = vpop.permute.xlu0 %2952
        %2954 = vrot.lane.b32.xlu0 %v2465, 96
        %v2955 = vpop.permute.xlu0 %2954
        %2956 = vrot.lane.b32.xlu0 %v2466, 96
        %v2957 = vpop.permute.xlu0 %2956
        %2958 = vrot.lane.b32.xlu0 %v2467, 96
        %v2959 = vpop.permute.xlu0 %2958
        %2960 = vrot.lane.b32.xlu0 %v2468, 96
        %v2961 = vpop.permute.xlu0 %2960
        %2962 = vrot.lane.b32.xlu0 %v2469, 96
        %v2963 = vpop.permute.xlu0 %2962
        %2964 = vrot.lane.b32.xlu0 %v2470, 96
        %v2965 = vpop.permute.xlu0 %2964
        %2966 = vrot.lane.b32.xlu0 %v2471, 96
        %v2967 = vpop.permute.xlu0 %2966
        %2968 = vrot.lane.b32.xlu0 %v2472, 96
        %v2969 = vpop.permute.xlu0 %2968
        %2970 = vrot.lane.b32.xlu0 %v2473, 96
        %v2971 = vpop.permute.xlu0 %2970
        %2972 = vrot.lane.b32.xlu0 %v2474, 96
        %v2973 = vpop.permute.xlu0 %2972
        %2974 = vrot.lane.b32.xlu0 %v2475, 96
        %v2975 = vpop.permute.xlu0 %2974
        %2976 = vrot.lane.b32.xlu0 %v2476, 96
        %v2977 = vpop.permute.xlu0 %2976
        %2978 = vrot.lane.b32.xlu0 %v2477, 96
        %v2979 = vpop.permute.xlu0 %2978
        %2980 = vrot.lane.b32.xlu0 %v2478, 96
        %v2981 = vpop.permute.xlu0 %2980
        %2982 = vrot.lane.b32.xlu0 %v2479, 96
        %v2983 = vpop.permute.xlu0 %2982
        %2984 = vrot.lane.b32.xlu0 %v2480, 96
        %v2985 = vpop.permute.xlu0 %2984
        %2986 = vrot.lane.b32.xlu0 %v2481, 96
        %v2987 = vpop.permute.xlu0 %2986
        %2988 = vrot.lane.b32.xlu0 %v2482, 96
        %v2989 = vpop.permute.xlu0 %2988
        %2990 = vrot.lane.b32.xlu0 %v2483, 96
        %v2991 = vpop.permute.xlu0 %2990
        %2992 = vrot.lane.b32.xlu0 %v2484, 96
        %v2993 = vpop.permute.xlu0 %2992
        %2994 = vrot.lane.b32.xlu0 %v2485, 96
        %v2995 = vpop.permute.xlu0 %2994
        %2996 = vrot.lane.b32.xlu0 %v2486, 96
        %v2997 = vpop.permute.xlu0 %2996
        %2998 = vrot.lane.b32.xlu0 %v2487, 96
        %v2999 = vpop.permute.xlu0 %2998
        %3064 = vrot.lane.b32.xlu0 %v2520, 32
        %v3065 = vpop.permute.xlu0 %3064
        %3066 = vrot.lane.b32.xlu0 %v2521, 32
        %v3067 = vpop.permute.xlu0 %3066
        %3068 = vrot.lane.b32.xlu0 %v2522, 32
        %v3069 = vpop.permute.xlu0 %3068
        %3070 = vrot.lane.b32.xlu0 %v2523, 32
        %v3071 = vpop.permute.xlu0 %3070
        %3072 = vrot.lane.b32.xlu0 %v2524, 32
        %v3073 = vpop.permute.xlu0 %3072
        %3074 = vrot.lane.b32.xlu0 %v2525, 32
        %v3075 = vpop.permute.xlu0 %3074
        %3076 = vrot.lane.b32.xlu0 %v2526, 32
        %v3077 = vpop.permute.xlu0 %3076
        %3078 = vrot.lane.b32.xlu0 %v2527, 32
        %v3079 = vpop.permute.xlu0 %3078
        %3080 = vrot.lane.b32.xlu0 %v2528, 32
        %v3081 = vpop.permute.xlu0 %3080
        %3082 = vrot.lane.b32.xlu0 %v2529, 32
        %v3083 = vpop.permute.xlu0 %3082
        %3084 = vrot.lane.b32.xlu0 %v2530, 32
        %v3085 = vpop.permute.xlu0 %3084
        %3086 = vrot.lane.b32.xlu0 %v2531, 32
        %v3087 = vpop.permute.xlu0 %3086
        %3088 = vrot.lane.b32.xlu0 %v2532, 32
        %v3089 = vpop.permute.xlu0 %3088
        %3090 = vrot.lane.b32.xlu0 %v2533, 32
        %v3091 = vpop.permute.xlu0 %3090
        %3092 = vrot.lane.b32.xlu0 %v2534, 32
        %v3093 = vpop.permute.xlu0 %3092
        %3094 = vrot.lane.b32.xlu0 %v2535, 32
        %v3095 = vpop.permute.xlu0 %3094
        %3096 = vrot.lane.b32.xlu0 %v2536, 32
        %v3097 = vpop.permute.xlu0 %3096
        %3098 = vrot.lane.b32.xlu0 %v2537, 32
        %v3099 = vpop.permute.xlu0 %3098
        %3100 = vrot.lane.b32.xlu0 %v2538, 32
        %v3101 = vpop.permute.xlu0 %3100
        %3102 = vrot.lane.b32.xlu0 %v2539, 32
        %v3103 = vpop.permute.xlu0 %3102
        %3104 = vrot.lane.b32.xlu0 %v2540, 32
        %v3105 = vpop.permute.xlu0 %3104
        %3106 = vrot.lane.b32.xlu0 %v2541, 32
        %v3107 = vpop.permute.xlu0 %3106
        %3108 = vrot.lane.b32.xlu0 %v2542, 32
        %v3109 = vpop.permute.xlu0 %3108
        %3110 = vrot.lane.b32.xlu0 %v2543, 32
        %v3111 = vpop.permute.xlu0 %3110
        %3112 = vrot.lane.b32.xlu0 %v2544, 32
        %v3113 = vpop.permute.xlu0 %3112
        %3114 = vrot.lane.b32.xlu0 %v2545, 32
        %v3115 = vpop.permute.xlu0 %3114
        %3116 = vrot.lane.b32.xlu0 %v2546, 32
        %v3117 = vpop.permute.xlu0 %3116
        %3118 = vrot.lane.b32.xlu0 %v2547, 32
        %v3119 = vpop.permute.xlu0 %3118
        %3120 = vrot.lane.b32.xlu0 %v2548, 32
        %v3121 = vpop.permute.xlu0 %3120
        %3122 = vrot.lane.b32.xlu0 %v2549, 32
        %v3123 = vpop.permute.xlu0 %3122
        %3124 = vrot.lane.b32.xlu0 %v2550, 32
        %v3125 = vpop.permute.xlu0 %3124
        %3126 = vrot.lane.b32.xlu0 %v2551, 32
        %v3127 = vpop.permute.xlu0 %3126
        %3192 = vrot.lane.b32.xlu0 %v2552, 64
        %v3193 = vpop.permute.xlu0 %3192
        %3194 = vrot.lane.b32.xlu0 %v2553, 64
        %v3195 = vpop.permute.xlu0 %3194
        %3196 = vrot.lane.b32.xlu0 %v2554, 64
        %v3197 = vpop.permute.xlu0 %3196
        %3198 = vrot.lane.b32.xlu0 %v2555, 64
        %v3199 = vpop.permute.xlu0 %3198
        %3200 = vrot.lane.b32.xlu0 %v2556, 64
        %v3201 = vpop.permute.xlu0 %3200
        %3202 = vrot.lane.b32.xlu0 %v2557, 64
        %v3203 = vpop.permute.xlu0 %3202
        %3204 = vrot.lane.b32.xlu0 %v2558, 64
        %v3205 = vpop.permute.xlu0 %3204
        %3206 = vrot.lane.b32.xlu0 %v2559, 64
        %v3207 = vpop.permute.xlu0 %3206
        %3208 = vrot.lane.b32.xlu0 %v2560, 64
        %v3209 = vpop.permute.xlu0 %3208
        %3210 = vrot.lane.b32.xlu0 %v2561, 64
        %v3211 = vpop.permute.xlu0 %3210
        %3212 = vrot.lane.b32.xlu0 %v2562, 64
        %v3213 = vpop.permute.xlu0 %3212
        %3214 = vrot.lane.b32.xlu0 %v2563, 64
        %v3215 = vpop.permute.xlu0 %3214
        %3216 = vrot.lane.b32.xlu0 %v2564, 64
        %v3217 = vpop.permute.xlu0 %3216
        %3218 = vrot.lane.b32.xlu0 %v2565, 64
        %v3219 = vpop.permute.xlu0 %3218
        %3220 = vrot.lane.b32.xlu0 %v2566, 64
        %v3221 = vpop.permute.xlu0 %3220
        %3222 = vrot.lane.b32.xlu0 %v2567, 64
        %v3223 = vpop.permute.xlu0 %3222
        %3224 = vrot.lane.b32.xlu0 %v2568, 64
        %v3225 = vpop.permute.xlu0 %3224
        %3226 = vrot.lane.b32.xlu0 %v2569, 64
        %v3227 = vpop.permute.xlu0 %3226
        %3228 = vrot.lane.b32.xlu0 %v2570, 64
        %v3229 = vpop.permute.xlu0 %3228
        %3230 = vrot.lane.b32.xlu0 %v2571, 64
        %v3231 = vpop.permute.xlu0 %3230
        %3232 = vrot.lane.b32.xlu0 %v2572, 64
        %v3233 = vpop.permute.xlu0 %3232
        %3234 = vrot.lane.b32.xlu0 %v2573, 64
        %v3235 = vpop.permute.xlu0 %3234
        %3236 = vrot.lane.b32.xlu0 %v2574, 64
        %v3237 = vpop.permute.xlu0 %3236
        %3238 = vrot.lane.b32.xlu0 %v2575, 64
        %v3239 = vpop.permute.xlu0 %3238
        %3240 = vrot.lane.b32.xlu0 %v2576, 64
        %v3241 = vpop.permute.xlu0 %3240
        %3242 = vrot.lane.b32.xlu0 %v2577, 64
        %v3243 = vpop.permute.xlu0 %3242
        %3244 = vrot.lane.b32.xlu0 %v2578, 64
        %v3245 = vpop.permute.xlu0 %3244
        %3246 = vrot.lane.b32.xlu0 %v2579, 64
        %v3247 = vpop.permute.xlu0 %3246
        %3248 = vrot.lane.b32.xlu0 %v2580, 64
        %v3249 = vpop.permute.xlu0 %3248
        %3250 = vrot.lane.b32.xlu0 %v2581, 64
        %v3251 = vpop.permute.xlu0 %3250
        %3252 = vrot.lane.b32.xlu0 %v2582, 64
        %v3253 = vpop.permute.xlu0 %3252
        %3254 = vrot.lane.b32.xlu0 %v2583, 64
        %v3255 = vpop.permute.xlu0 %3254
        %3320 = vrot.lane.b32.xlu0 %v2584, 96
        %v3321 = vpop.permute.xlu0 %3320
        %3322 = vrot.lane.b32.xlu0 %v2585, 96
        %v3323 = vpop.permute.xlu0 %3322
        %3324 = vrot.lane.b32.xlu0 %v2586, 96
        %v3325 = vpop.permute.xlu0 %3324
        %3326 = vrot.lane.b32.xlu0 %v2587, 96
        %v3327 = vpop.permute.xlu0 %3326
        %3328 = vrot.lane.b32.xlu0 %v2588, 96
        %v3329 = vpop.permute.xlu0 %3328
        %3330 = vrot.lane.b32.xlu0 %v2589, 96
        %v3331 = vpop.permute.xlu0 %3330
        %3332 = vrot.lane.b32.xlu0 %v2590, 96
        %v3333 = vpop.permute.xlu0 %3332
        %3334 = vrot.lane.b32.xlu0 %v2591, 96
        %v3335 = vpop.permute.xlu0 %3334
        %3336 = vrot.lane.b32.xlu0 %v2592, 96
        %v3337 = vpop.permute.xlu0 %3336
        %3338 = vrot.lane.b32.xlu0 %v2593, 96
        %v3339 = vpop.permute.xlu0 %3338
        %3340 = vrot.lane.b32.xlu0 %v2594, 96
        %v3341 = vpop.permute.xlu0 %3340
        %3342 = vrot.lane.b32.xlu0 %v2595, 96
        %v3343 = vpop.permute.xlu0 %3342
        %3344 = vrot.lane.b32.xlu0 %v2596, 96
        %v3345 = vpop.permute.xlu0 %3344
        %3346 = vrot.lane.b32.xlu0 %v2597, 96
        %v3347 = vpop.permute.xlu0 %3346
        %3348 = vrot.lane.b32.xlu0 %v2598, 96
        %v3349 = vpop.permute.xlu0 %3348
        %3350 = vrot.lane.b32.xlu0 %v2599, 96
        %v3351 = vpop.permute.xlu0 %3350
        %3352 = vrot.lane.b32.xlu0 %v2600, 96
        %v3353 = vpop.permute.xlu0 %3352
        %3354 = vrot.lane.b32.xlu0 %v2601, 96
        %v3355 = vpop.permute.xlu0 %3354
        %3356 = vrot.lane.b32.xlu0 %v2602, 96
        %v3357 = vpop.permute.xlu0 %3356
        %3358 = vrot.lane.b32.xlu0 %v2603, 96
        %v3359 = vpop.permute.xlu0 %3358
        %3360 = vrot.lane.b32.xlu0 %v2604, 96
        %v3361 = vpop.permute.xlu0 %3360
        %3362 = vrot.lane.b32.xlu0 %v2605, 96
        %v3363 = vpop.permute.xlu0 %3362
        %3364 = vrot.lane.b32.xlu0 %v2606, 96
        %v3365 = vpop.permute.xlu0 %3364
        %3366 = vrot.lane.b32.xlu0 %v2607, 96
        %v3367 = vpop.permute.xlu0 %3366
        %3368 = vrot.lane.b32.xlu0 %v2608, 96
        %v3369 = vpop.permute.xlu0 %3368
        %3370 = vrot.lane.b32.xlu0 %v2609, 96
        %v3371 = vpop.permute.xlu0 %3370
        %3372 = vrot.lane.b32.xlu0 %v2610, 96
        %v3373 = vpop.permute.xlu0 %3372
        %3374 = vrot.lane.b32.xlu0 %v2611, 96
        %v3375 = vpop.permute.xlu0 %3374
        %3376 = vrot.lane.b32.xlu0 %v2612, 96
        %v3377 = vpop.permute.xlu0 %3376
        %3378 = vrot.lane.b32.xlu0 %v2613, 96
        %v3379 = vpop.permute.xlu0 %3378
        %3380 = vrot.lane.b32.xlu0 %v2614, 96
        %v3381 = vpop.permute.xlu0 %3380
        %3382 = vrot.lane.b32.xlu0 %v2615, 96
        %v3383 = vpop.permute.xlu0 %3382
        %v3416 = vsel %vm372, %v2360, %v2681
        %v3417 = vsel %vm372, %v2361, %v2683
        %v3418 = vsel %vm372, %v2362, %v2685
        %v3419 = vsel %vm372, %v2363, %v2687
        %v3420 = vsel %vm372, %v2364, %v2689
        %v3421 = vsel %vm372, %v2365, %v2691
        %v3422 = vsel %vm372, %v2366, %v2693
        %v3423 = vsel %vm372, %v2367, %v2695
        %v3424 = vsel %vm372, %v2368, %v2697
        %v3425 = vsel %vm372, %v2369, %v2699
        %v3426 = vsel %vm372, %v2370, %v2701
        %v3427 = vsel %vm372, %v2371, %v2703
        %v3428 = vsel %vm372, %v2372, %v2705
        %v3429 = vsel %vm372, %v2373, %v2707
        %v3430 = vsel %vm372, %v2374, %v2709
        %v3431 = vsel %vm372, %v2375, %v2711
        %v3432 = vsel %vm372, %v2376, %v2713
        %v3433 = vsel %vm372, %v2377, %v2715
        %v3434 = vsel %vm372, %v2378, %v2717
        %v3435 = vsel %vm372, %v2379, %v2719
        %v3436 = vsel %vm372, %v2380, %v2721
        %v3437 = vsel %vm372, %v2381, %v2723
        %v3438 = vsel %vm372, %v2382, %v2725
        %v3439 = vsel %vm372, %v2383, %v2727
        %v3440 = vsel %vm372, %v2384, %v2729
        %v3441 = vsel %vm372, %v2385, %v2731
        %v3442 = vsel %vm372, %v2386, %v2733
        %v3443 = vsel %vm372, %v2387, %v2735
        %v3444 = vsel %vm372, %v2388, %v2737
        %v3445 = vsel %vm372, %v2389, %v2739
        %v3446 = vsel %vm372, %v2390, %v2741
        %v3447 = vsel %vm372, %v2391, %v2743
        %v3448 = vsel %vm1598, %v3416, %v2809
        %v3449 = vsel %vm1598, %v3417, %v2811
        %v3450 = vsel %vm1598, %v3418, %v2813
        %v3451 = vsel %vm1598, %v3419, %v2815
        %v3452 = vsel %vm1598, %v3420, %v2817
        %v3453 = vsel %vm1598, %v3421, %v2819
        %v3454 = vsel %vm1598, %v3422, %v2821
        %v3455 = vsel %vm1598, %v3423, %v2823
        %v3456 = vsel %vm1598, %v3424, %v2825
        %v3457 = vsel %vm1598, %v3425, %v2827
        %v3458 = vsel %vm1598, %v3426, %v2829
        %v3459 = vsel %vm1598, %v3427, %v2831
        %v3460 = vsel %vm1598, %v3428, %v2833
        %v3461 = vsel %vm1598, %v3429, %v2835
        %v3462 = vsel %vm1598, %v3430, %v2837
        %v3463 = vsel %vm1598, %v3431, %v2839
        %v3464 = vsel %vm1598, %v3432, %v2841
        %v3465 = vsel %vm1598, %v3433, %v2843
        %v3466 = vsel %vm1598, %v3434, %v2845
        %v3467 = vsel %vm1598, %v3435, %v2847
        %v3468 = vsel %vm1598, %v3436, %v2849
        %v3469 = vsel %vm1598, %v3437, %v2851
        %v3470 = vsel %vm1598, %v3438, %v2853
        %v3471 = vsel %vm1598, %v3439, %v2855
        %v3472 = vsel %vm1598, %v3440, %v2857
        %v3473 = vsel %vm1598, %v3441, %v2859
        %v3474 = vsel %vm1598, %v3442, %v2861
        %v3475 = vsel %vm1598, %v3443, %v2863
        %v3476 = vsel %vm1598, %v3444, %v2865
        %v3477 = vsel %vm1598, %v3445, %v2867
        %v3478 = vsel %vm1598, %v3446, %v2869
        %v3479 = vsel %vm1598, %v3447, %v2871
        %v3480 = vsel %vm1631, %v3448, %v2937
        %v3481 = vsel %vm1631, %v3449, %v2939
        %v3482 = vsel %vm1631, %v3450, %v2941
        %v3483 = vsel %vm1631, %v3451, %v2943
        %v3484 = vsel %vm1631, %v3452, %v2945
        %v3485 = vsel %vm1631, %v3453, %v2947
        %v3486 = vsel %vm1631, %v3454, %v2949
        %v3487 = vsel %vm1631, %v3455, %v2951
        %v3488 = vsel %vm1631, %v3456, %v2953
        %v3489 = vsel %vm1631, %v3457, %v2955
        %v3490 = vsel %vm1631, %v3458, %v2957
        %v3491 = vsel %vm1631, %v3459, %v2959
        %v3492 = vsel %vm1631, %v3460, %v2961
        %v3493 = vsel %vm1631, %v3461, %v2963
        %v3494 = vsel %vm1631, %v3462, %v2965
        %v3495 = vsel %vm1631, %v3463, %v2967
        %v3496 = vsel %vm1631, %v3464, %v2969
        %v3497 = vsel %vm1631, %v3465, %v2971
        %v3498 = vsel %vm1631, %v3466, %v2973
        %v3499 = vsel %vm1631, %v3467, %v2975
        %v3500 = vsel %vm1631, %v3468, %v2977
        %v3501 = vsel %vm1631, %v3469, %v2979
        %v3502 = vsel %vm1631, %v3470, %v2981
        %v3503 = vsel %vm1631, %v3471, %v2983
        %v3504 = vsel %vm1631, %v3472, %v2985
        %v3505 = vsel %vm1631, %v3473, %v2987
        %v3506 = vsel %vm1631, %v3474, %v2989
        %v3507 = vsel %vm1631, %v3475, %v2991
        %v3508 = vsel %vm1631, %v3476, %v2993
        %v3509 = vsel %vm1631, %v3477, %v2995
        %v3510 = vsel %vm1631, %v3478, %v2997
        %v3511 = vsel %vm1631, %v3479, %v2999
        %v3512 = vsel %vm372, %v2488, %v3065
        %v3513 = vsel %vm372, %v2489, %v3067
        %v3514 = vsel %vm372, %v2490, %v3069
        %v3515 = vsel %vm372, %v2491, %v3071
        %v3516 = vsel %vm372, %v2492, %v3073
        %v3517 = vsel %vm372, %v2493, %v3075
        %v3518 = vsel %vm372, %v2494, %v3077
        %v3519 = vsel %vm372, %v2495, %v3079
        %v3520 = vsel %vm372, %v2496, %v3081
        %v3521 = vsel %vm372, %v2497, %v3083
        %v3522 = vsel %vm372, %v2498, %v3085
        %v3523 = vsel %vm372, %v2499, %v3087
        %v3524 = vsel %vm372, %v2500, %v3089
        %v3525 = vsel %vm372, %v2501, %v3091
        %v3526 = vsel %vm372, %v2502, %v3093
        %v3527 = vsel %vm372, %v2503, %v3095
        %v3528 = vsel %vm372, %v2504, %v3097
        %v3529 = vsel %vm372, %v2505, %v3099
        %v3530 = vsel %vm372, %v2506, %v3101
        %v3531 = vsel %vm372, %v2507, %v3103
        %v3532 = vsel %vm372, %v2508, %v3105
        %v3533 = vsel %vm372, %v2509, %v3107
        %v3534 = vsel %vm372, %v2510, %v3109
        %v3535 = vsel %vm372, %v2511, %v3111
        %v3536 = vsel %vm372, %v2512, %v3113
        %v3537 = vsel %vm372, %v2513, %v3115
        %v3538 = vsel %vm372, %v2514, %v3117
        %v3539 = vsel %vm372, %v2515, %v3119
        %v3540 = vsel %vm372, %v2516, %v3121
        %v3541 = vsel %vm372, %v2517, %v3123
        %v3542 = vsel %vm372, %v2518, %v3125
        %v3543 = vsel %vm372, %v2519, %v3127
        %v3544 = vsel %vm1598, %v3512, %v3193
        %v3545 = vsel %vm1598, %v3513, %v3195
        %v3546 = vsel %vm1598, %v3514, %v3197
        %v3547 = vsel %vm1598, %v3515, %v3199
        %v3548 = vsel %vm1598, %v3516, %v3201
        %v3549 = vsel %vm1598, %v3517, %v3203
        %v3550 = vsel %vm1598, %v3518, %v3205
        %v3551 = vsel %vm1598, %v3519, %v3207
        %v3552 = vsel %vm1598, %v3520, %v3209
        %v3553 = vsel %vm1598, %v3521, %v3211
        %v3554 = vsel %vm1598, %v3522, %v3213
        %v3555 = vsel %vm1598, %v3523, %v3215
        %v3556 = vsel %vm1598, %v3524, %v3217
        %v3557 = vsel %vm1598, %v3525, %v3219
        %v3558 = vsel %vm1598, %v3526, %v3221
        %v3559 = vsel %vm1598, %v3527, %v3223
        %v3560 = vsel %vm1598, %v3528, %v3225
        %v3561 = vsel %vm1598, %v3529, %v3227
        %v3562 = vsel %vm1598, %v3530, %v3229
        %v3563 = vsel %vm1598, %v3531, %v3231
        %v3564 = vsel %vm1598, %v3532, %v3233
        %v3565 = vsel %vm1598, %v3533, %v3235
        %v3566 = vsel %vm1598, %v3534, %v3237
        %v3567 = vsel %vm1598, %v3535, %v3239
        %v3568 = vsel %vm1598, %v3536, %v3241
        %v3569 = vsel %vm1598, %v3537, %v3243
        %v3570 = vsel %vm1598, %v3538, %v3245
        %v3571 = vsel %vm1598, %v3539, %v3247
        %v3572 = vsel %vm1598, %v3540, %v3249
        %v3573 = vsel %vm1598, %v3541, %v3251
        %v3574 = vsel %vm1598, %v3542, %v3253
        %v3575 = vsel %vm1598, %v3543, %v3255
        %v3576 = vsel %vm1631, %v3544, %v3321
        %v3577 = vsel %vm1631, %v3545, %v3323
        %v3578 = vsel %vm1631, %v3546, %v3325
        %v3579 = vsel %vm1631, %v3547, %v3327
        %v3580 = vsel %vm1631, %v3548, %v3329
        %v3581 = vsel %vm1631, %v3549, %v3331
        %v3582 = vsel %vm1631, %v3550, %v3333
        %v3583 = vsel %vm1631, %v3551, %v3335
        %v3584 = vsel %vm1631, %v3552, %v3337
        %v3585 = vsel %vm1631, %v3553, %v3339
        %v3586 = vsel %vm1631, %v3554, %v3341
        %v3587 = vsel %vm1631, %v3555, %v3343
        %v3588 = vsel %vm1631, %v3556, %v3345
        %v3589 = vsel %vm1631, %v3557, %v3347
        %v3590 = vsel %vm1631, %v3558, %v3349
        %v3591 = vsel %vm1631, %v3559, %v3351
        %v3592 = vsel %vm1631, %v3560, %v3353
        %v3593 = vsel %vm1631, %v3561, %v3355
        %v3594 = vsel %vm1631, %v3562, %v3357
        %v3595 = vsel %vm1631, %v3563, %v3359
        %v3596 = vsel %vm1631, %v3564, %v3361
        %v3597 = vsel %vm1631, %v3565, %v3363
        %v3598 = vsel %vm1631, %v3566, %v3365
        %v3599 = vsel %vm1631, %v3567, %v3367
        %v3600 = vsel %vm1631, %v3568, %v3369
        %v3601 = vsel %vm1631, %v3569, %v3371
        %v3602 = vsel %vm1631, %v3570, %v3373
        %v3603 = vsel %vm1631, %v3571, %v3375
        %v3604 = vsel %vm1631, %v3572, %v3377
        %v3605 = vsel %vm1631, %v3573, %v3379
        %v3606 = vsel %vm1631, %v3574, %v3381
        %v3607 = vsel %vm1631, %v3575, %v3383
        %s3608 = scalar_lea.vmem %s1, 288
        %v3609 = vld [vmem:[%s3608] sm:$0xff]
        %v3610 = vld [vmem:[%s3608 + $0x8] sm:$0xff]
        %v3611 = vld [vmem:[%s3608 + $0x10] sm:$0xff]
        %v3612 = vld [vmem:[%s3608 + $0x18] sm:$0xff]
        %v3613 = vld [vmem:[%s3608 + $0x20] sm:$0xff]
        %v3614 = vld [vmem:[%s3608 + $0x28] sm:$0xff]
        %v3615 = vld [vmem:[%s3608 + $0x30] sm:$0xff]
        %v3616 = vld [vmem:[%s3608 + $0x38] sm:$0xff]
        %v3617 = vld [vmem:[%s3608 + $0x40] sm:$0xff]
        %v3618 = vld [vmem:[%s3608 + $0x48] sm:$0xff]
        %v3619 = vld [vmem:[%s3608 + $0x50] sm:$0xff]
        %v3620 = vld [vmem:[%s3608 + $0x58] sm:$0xff]
        %v3621 = vld [vmem:[%s3608 + $0x60] sm:$0xff]
        %v3622 = vld [vmem:[%s3608 + $0x68] sm:$0xff]
        %v3623 = vld [vmem:[%s3608 + $0x70] sm:$0xff]
        %v3624 = vld [vmem:[%s3608 + $0x78] sm:$0xff]
        %v3625 = vld [vmem:[%s3608 + $0x80] sm:$0xff]
        %v3626 = vld [vmem:[%s3608 + $0x88] sm:$0xff]
        %v3627 = vld [vmem:[%s3608 + $0x90] sm:$0xff]
        %v3628 = vld [vmem:[%s3608 + $0x98] sm:$0xff]
        %v3629 = vld [vmem:[%s3608 + $0xa0] sm:$0xff]
        %v3630 = vld [vmem:[%s3608 + $0xa8] sm:$0xff]
        %v3631 = vld [vmem:[%s3608 + $0xb0] sm:$0xff]
        %v3632 = vld [vmem:[%s3608 + $0xb8] sm:$0xff]
        %v3633 = vld [vmem:[%s3608 + $0xc0] sm:$0xff]
        %v3634 = vld [vmem:[%s3608 + $0xc8] sm:$0xff]
        %v3635 = vld [vmem:[%s3608 + $0xd0] sm:$0xff]
        %v3636 = vld [vmem:[%s3608 + $0xd8] sm:$0xff]
        %v3637 = vld [vmem:[%s3608 + $0xe0] sm:$0xff]
        %v3638 = vld [vmem:[%s3608 + $0xe8] sm:$0xff]
        %v3639 = vld [vmem:[%s3608 + $0xf0] sm:$0xff]
        %v3640 = vld [vmem:[%s3608 + $0xf8] sm:$0xff]
        %v3641 = vld [vmem:[%s3608 + $0x100] sm:$0xff]
        %v3642 = vld [vmem:[%s3608 + $0x108] sm:$0xff]
        %v3643 = vld [vmem:[%s3608 + $0x110] sm:$0xff]
        %v3644 = vld [vmem:[%s3608 + $0x118] sm:$0xff]
        %v3646 = vsel %vm372, %v2616, 0
        %v3649 = vsel %vm372, %v2617, 0
        %v3652 = vsel %vm372, %v2618, 0
        %v3655 = vsel %vm372, %v2619, 0
        %v3658 = vsel %vm372, %v2620, 0
        %v3661 = vsel %vm372, %v2621, 0
        %v3664 = vsel %vm372, %v2622, 0
        %v3667 = vsel %vm372, %v2623, 0
        %v3670 = vsel %vm372, %v2624, 0
        %v3673 = vsel %vm372, %v2625, 0
        %v3676 = vsel %vm372, %v2626, 0
        %v3679 = vsel %vm372, %v2627, 0
        %v3682 = vsel %vm372, %v2628, 0
        %v3685 = vsel %vm372, %v2629, 0
        %v3688 = vsel %vm372, %v2630, 0
        %v3691 = vsel %vm372, %v2631, 0
        %v3694 = vsel %vm372, %v2632, 0
        %v3697 = vsel %vm372, %v2633, 0
        %v3700 = vsel %vm372, %v2634, 0
        %v3703 = vsel %vm372, %v2635, 0
        %v3706 = vsel %vm372, %v2636, 0
        %v3709 = vsel %vm372, %v2637, 0
        %v3712 = vsel %vm372, %v2638, 0
        %v3715 = vsel %vm372, %v2639, 0
        %v3718 = vsel %vm372, %v2640, 0
        %v3721 = vsel %vm372, %v2641, 0
        %v3724 = vsel %vm372, %v2642, 0
        %v3727 = vsel %vm372, %v2643, 0
        %v3730 = vsel %vm372, %v2644, 0
        %v3733 = vsel %vm372, %v2645, 0
        %v3736 = vsel %vm372, %v2646, 0
        %v3739 = vsel %vm372, %v2647, 0
        %3741 = vmatpush.msra.mxu0 %v3624
        %3742 = vmatpush.msra.mxu0 %v3623
        %3743 = vmatpush.msra.mxu0 %v3622
        %3744 = vmatpush.msra.mxu0 %v3621
        %3745 = vmatpush.msra.mxu0 %v3620
        %3746 = vmatpush.msra.mxu0 %v3619
        %3747 = vmatpush.msra.mxu0 %v3618
        %3748 = vmatpush.msra.mxu0 %v3617
        %3749 = vmatpush.msra.mxu0 %v3616
        %3750 = vmatpush.msra.mxu0 %v3615
        %3751 = vmatpush.msra.mxu0 %v3614
        %3752 = vmatpush.msra.mxu0 %v3613
        %3753 = vmatpush.msra.mxu0 %v3612
        %3754 = vmatpush.msra.mxu0 %v3611
        %3755 = vmatpush.msra.mxu0 %v3610
        %3756 = vmatpush.msra.mxu0 %v3609
        %3757 = vmatmul.f32.gmra.mxu0 %v3480
        %v3758 = vpop.f32.mrf.mxu0
        %v3759 = vadd.f32 0.0, %v3758
        %3760 = vmatmul.f32.gmra.mxu0 %v3481
        %v3761 = vpop.f32.mrf.mxu0
        %v3762 = vadd.f32 0.0, %v3761
        %3763 = vmatmul.f32.gmra.mxu0 %v3482
        %v3764 = vpop.f32.mrf.mxu0
        %v3765 = vadd.f32 0.0, %v3764
        %3766 = vmatmul.f32.gmra.mxu0 %v3483
        %v3767 = vpop.f32.mrf.mxu0
        %v3768 = vadd.f32 0.0, %v3767
        %3769 = vmatmul.f32.gmra.mxu0 %v3484
        %v3770 = vpop.f32.mrf.mxu0
        %v3771 = vadd.f32 0.0, %v3770
        %3772 = vmatmul.f32.gmra.mxu0 %v3485
        %v3773 = vpop.f32.mrf.mxu0
        %v3774 = vadd.f32 0.0, %v3773
        %3775 = vmatmul.f32.gmra.mxu0 %v3486
        %v3776 = vpop.f32.mrf.mxu0
        %v3777 = vadd.f32 0.0, %v3776
        %3778 = vmatmul.f32.gmra.mxu0 %v3487
        %v3779 = vpop.f32.mrf.mxu0
        %v3780 = vadd.f32 0.0, %v3779
        %3781 = vmatmul.f32.gmra.mxu0 %v3488
        %v3782 = vpop.f32.mrf.mxu0
        %v3783 = vadd.f32 0.0, %v3782
        %3784 = vmatmul.f32.gmra.mxu0 %v3489
        %v3785 = vpop.f32.mrf.mxu0
        %v3786 = vadd.f32 0.0, %v3785
        %3787 = vmatmul.f32.gmra.mxu0 %v3490
        %v3788 = vpop.f32.mrf.mxu0
        %v3789 = vadd.f32 0.0, %v3788
        %3790 = vmatmul.f32.gmra.mxu0 %v3491
        %v3791 = vpop.f32.mrf.mxu0
        %v3792 = vadd.f32 0.0, %v3791
        %3793 = vmatmul.f32.gmra.mxu0 %v3492
        %v3794 = vpop.f32.mrf.mxu0
        %v3795 = vadd.f32 0.0, %v3794
        %3796 = vmatmul.f32.gmra.mxu0 %v3493
        %v3797 = vpop.f32.mrf.mxu0
        %v3798 = vadd.f32 0.0, %v3797
        %3799 = vmatmul.f32.gmra.mxu0 %v3494
        %v3800 = vpop.f32.mrf.mxu0
        %v3801 = vadd.f32 0.0, %v3800
        %3802 = vmatmul.f32.gmra.mxu0 %v3495
        %v3803 = vpop.f32.mrf.mxu0
        %v3804 = vadd.f32 0.0, %v3803
        %3805 = vmatmul.f32.gmra.mxu0 %v3496
        %v3806 = vpop.f32.mrf.mxu0
        %v3807 = vadd.f32 0.0, %v3806
        %3808 = vmatmul.f32.gmra.mxu0 %v3497
        %v3809 = vpop.f32.mrf.mxu0
        %v3810 = vadd.f32 0.0, %v3809
        %3811 = vmatmul.f32.gmra.mxu0 %v3498
        %v3812 = vpop.f32.mrf.mxu0
        %v3813 = vadd.f32 0.0, %v3812
        %3814 = vmatmul.f32.gmra.mxu0 %v3499
        %v3815 = vpop.f32.mrf.mxu0
        %v3816 = vadd.f32 0.0, %v3815
        %3817 = vmatmul.f32.gmra.mxu0 %v3500
        %v3818 = vpop.f32.mrf.mxu0
        %v3819 = vadd.f32 0.0, %v3818
        %3820 = vmatmul.f32.gmra.mxu0 %v3501
        %v3821 = vpop.f32.mrf.mxu0
        %v3822 = vadd.f32 0.0, %v3821
        %3823 = vmatmul.f32.gmra.mxu0 %v3502
        %v3824 = vpop.f32.mrf.mxu0
        %v3825 = vadd.f32 0.0, %v3824
        %3826 = vmatmul.f32.gmra.mxu0 %v3503
        %v3827 = vpop.f32.mrf.mxu0
        %v3828 = vadd.f32 0.0, %v3827
        %3829 = vmatmul.f32.gmra.mxu0 %v3504
        %v3830 = vpop.f32.mrf.mxu0
        %v3831 = vadd.f32 0.0, %v3830
        %3832 = vmatmul.f32.gmra.mxu0 %v3505
        %v3833 = vpop.f32.mrf.mxu0
        %v3834 = vadd.f32 0.0, %v3833
        %3835 = vmatmul.f32.gmra.mxu0 %v3506
        %v3836 = vpop.f32.mrf.mxu0
        %v3837 = vadd.f32 0.0, %v3836
        %3838 = vmatmul.f32.gmra.mxu0 %v3507
        %v3839 = vpop.f32.mrf.mxu0
        %v3840 = vadd.f32 0.0, %v3839
        %3841 = vmatmul.f32.gmra.mxu0 %v3508
        %v3842 = vpop.f32.mrf.mxu0
        %v3843 = vadd.f32 0.0, %v3842
        %3844 = vmatmul.f32.gmra.mxu0 %v3509
        %v3845 = vpop.f32.mrf.mxu0
        %v3846 = vadd.f32 0.0, %v3845
        %3847 = vmatmul.f32.gmra.mxu0 %v3510
        %v3848 = vpop.f32.mrf.mxu0
        %v3849 = vadd.f32 0.0, %v3848
        %3850 = vmatmul.f32.gmra.mxu0 %v3511
        %v3851 = vpop.f32.mrf.mxu0
        %v3852 = vadd.f32 0.0, %v3851
        %3853 = vdwg.mxu0
        %3854 = vmatpush.msra.mxu0 %v3640
        %3855 = vmatpush.msra.mxu0 %v3639
        %3856 = vmatpush.msra.mxu0 %v3638
        %3857 = vmatpush.msra.mxu0 %v3637
        %3858 = vmatpush.msra.mxu0 %v3636
        %3859 = vmatpush.msra.mxu0 %v3635
        %3860 = vmatpush.msra.mxu0 %v3634
        %3861 = vmatpush.msra.mxu0 %v3633
        %3862 = vmatpush.msra.mxu0 %v3632
        %3863 = vmatpush.msra.mxu0 %v3631
        %3864 = vmatpush.msra.mxu0 %v3630
        %3865 = vmatpush.msra.mxu0 %v3629
        %3866 = vmatpush.msra.mxu0 %v3628
        %3867 = vmatpush.msra.mxu0 %v3627
        %3868 = vmatpush.msra.mxu0 %v3626
        %3869 = vmatpush.msra.mxu0 %v3625
        %3870 = vmatmul.f32.gmra.mxu0 %v3576
        %v3871 = vpop.f32.mrf.mxu0
        %v3872 = vadd.f32 %v3759, %v3871
        %3873 = vmatmul.f32.gmra.mxu0 %v3577
        %v3874 = vpop.f32.mrf.mxu0
        %v3875 = vadd.f32 %v3762, %v3874
        %3876 = vmatmul.f32.gmra.mxu0 %v3578
        %v3877 = vpop.f32.mrf.mxu0
        %v3878 = vadd.f32 %v3765, %v3877
        %3879 = vmatmul.f32.gmra.mxu0 %v3579
        %v3880 = vpop.f32.mrf.mxu0
        %v3881 = vadd.f32 %v3768, %v3880
        %3882 = vmatmul.f32.gmra.mxu0 %v3580
        %v3883 = vpop.f32.mrf.mxu0
        %v3884 = vadd.f32 %v3771, %v3883
        %3885 = vmatmul.f32.gmra.mxu0 %v3581
        %v3886 = vpop.f32.mrf.mxu0
        %v3887 = vadd.f32 %v3774, %v3886
        %3888 = vmatmul.f32.gmra.mxu0 %v3582
        %v3889 = vpop.f32.mrf.mxu0
        %v3890 = vadd.f32 %v3777, %v3889
        %3891 = vmatmul.f32.gmra.mxu0 %v3583
        %v3892 = vpop.f32.mrf.mxu0
        %v3893 = vadd.f32 %v3780, %v3892
        %3894 = vmatmul.f32.gmra.mxu0 %v3584
        %v3895 = vpop.f32.mrf.mxu0
        %v3896 = vadd.f32 %v3783, %v3895
        %3897 = vmatmul.f32.gmra.mxu0 %v3585
        %v3898 = vpop.f32.mrf.mxu0
        %v3899 = vadd.f32 %v3786, %v3898
        %3900 = vmatmul.f32.gmra.mxu0 %v3586
        %v3901 = vpop.f32.mrf.mxu0
        %v3902 = vadd.f32 %v3789, %v3901
        %3903 = vmatmul.f32.gmra.mxu0 %v3587
        %v3904 = vpop.f32.mrf.mxu0
        %v3905 = vadd.f32 %v3792, %v3904
        %3906 = vmatmul.f32.gmra.mxu0 %v3588
        %v3907 = vpop.f32.mrf.mxu0
        %v3908 = vadd.f32 %v3795, %v3907
        %3909 = vmatmul.f32.gmra.mxu0 %v3589
        %v3910 = vpop.f32.mrf.mxu0
        %v3911 = vadd.f32 %v3798, %v3910
        %3912 = vmatmul.f32.gmra.mxu0 %v3590
        %v3913 = vpop.f32.mrf.mxu0
        %v3914 = vadd.f32 %v3801, %v3913
        %3915 = vmatmul.f32.gmra.mxu0 %v3591
        %v3916 = vpop.f32.mrf.mxu0
        %v3917 = vadd.f32 %v3804, %v3916
        %3918 = vmatmul.f32.gmra.mxu0 %v3592
        %v3919 = vpop.f32.mrf.mxu0
        %v3920 = vadd.f32 %v3807, %v3919
        %3921 = vmatmul.f32.gmra.mxu0 %v3593
        %v3922 = vpop.f32.mrf.mxu0
        %v3923 = vadd.f32 %v3810, %v3922
        %3924 = vmatmul.f32.gmra.mxu0 %v3594
        %v3925 = vpop.f32.mrf.mxu0
        %v3926 = vadd.f32 %v3813, %v3925
        %3927 = vmatmul.f32.gmra.mxu0 %v3595
        %v3928 = vpop.f32.mrf.mxu0
        %v3929 = vadd.f32 %v3816, %v3928
        %3930 = vmatmul.f32.gmra.mxu0 %v3596
        %v3931 = vpop.f32.mrf.mxu0
        %v3932 = vadd.f32 %v3819, %v3931
        %3933 = vmatmul.f32.gmra.mxu0 %v3597
        %v3934 = vpop.f32.mrf.mxu0
        %v3935 = vadd.f32 %v3822, %v3934
        %3936 = vmatmul.f32.gmra.mxu0 %v3598
        %v3937 = vpop.f32.mrf.mxu0
        %v3938 = vadd.f32 %v3825, %v3937
        %3939 = vmatmul.f32.gmra.mxu0 %v3599
        %v3940 = vpop.f32.mrf.mxu0
        %v3941 = vadd.f32 %v3828, %v3940
        %3942 = vmatmul.f32.gmra.mxu0 %v3600
        %v3943 = vpop.f32.mrf.mxu0
        %v3944 = vadd.f32 %v3831, %v3943
        %3945 = vmatmul.f32.gmra.mxu0 %v3601
        %v3946 = vpop.f32.mrf.mxu0
        %v3947 = vadd.f32 %v3834, %v3946
        %3948 = vmatmul.f32.gmra.mxu0 %v3602
        %v3949 = vpop.f32.mrf.mxu0
        %v3950 = vadd.f32 %v3837, %v3949
        %3951 = vmatmul.f32.gmra.mxu0 %v3603
        %v3952 = vpop.f32.mrf.mxu0
        %v3953 = vadd.f32 %v3840, %v3952
        %3954 = vmatmul.f32.gmra.mxu0 %v3604
        %v3955 = vpop.f32.mrf.mxu0
        %v3956 = vadd.f32 %v3843, %v3955
        %3957 = vmatmul.f32.gmra.mxu0 %v3605
        %v3958 = vpop.f32.mrf.mxu0
        %v3959 = vadd.f32 %v3846, %v3958
        %3960 = vmatmul.f32.gmra.mxu0 %v3606
        %v3961 = vpop.f32.mrf.mxu0
        %v3962 = vadd.f32 %v3849, %v3961
        %3963 = vmatmul.f32.gmra.mxu0 %v3607
        %v3964 = vpop.f32.mrf.mxu0
        %v3965 = vadd.f32 %v3852, %v3964
        %3966 = vdwg.mxu0
        %3967 = vmatpush.msra.mxu0 0.0
        %3968 = vmatpush.msra.mxu0 0.0
        %3969 = vmatpush.msra.mxu0 0.0
        %3970 = vmatpush.msra.mxu0 0.0
        %3971 = vmatpush.msra.mxu0 0.0
        %3972 = vmatpush.msra.mxu0 0.0
        %3973 = vmatpush.msra.mxu0 0.0
        %3974 = vmatpush.msra.mxu0 0.0
        %3975 = vmatpush.msra.mxu0 0.0
        %3976 = vmatpush.msra.mxu0 0.0
        %3977 = vmatpush.msra.mxu0 0.0
        %3978 = vmatpush.msra.mxu0 0.0
        %3979 = vmatpush.msra.mxu0 %v3644
        %3980 = vmatpush.msra.mxu0 %v3643
        %3981 = vmatpush.msra.mxu0 %v3642
        %3982 = vmatpush.msra.mxu0 %v3641
        %3983 = vmatmul.f32.gmra.mxu0 %v3646
        %v3984 = vpop.f32.mrf.mxu0
        %v3985 = vadd.f32 %v3872, %v3984
        %3986 = vmatmul.f32.gmra.mxu0 %v3649
        %v3987 = vpop.f32.mrf.mxu0
        %v3988 = vadd.f32 %v3875, %v3987
        %3989 = vmatmul.f32.gmra.mxu0 %v3652
        %v3990 = vpop.f32.mrf.mxu0
        %v3991 = vadd.f32 %v3878, %v3990
        %3992 = vmatmul.f32.gmra.mxu0 %v3655
        %v3993 = vpop.f32.mrf.mxu0
        %v3994 = vadd.f32 %v3881, %v3993
        %3995 = vmatmul.f32.gmra.mxu0 %v3658
        %v3996 = vpop.f32.mrf.mxu0
        %v3997 = vadd.f32 %v3884, %v3996
        %3998 = vmatmul.f32.gmra.mxu0 %v3661
        %v3999 = vpop.f32.mrf.mxu0
        %v4000 = vadd.f32 %v3887, %v3999
        %4001 = vmatmul.f32.gmra.mxu0 %v3664
        %v4002 = vpop.f32.mrf.mxu0
        %v4003 = vadd.f32 %v3890, %v4002
        %4004 = vmatmul.f32.gmra.mxu0 %v3667
        %v4005 = vpop.f32.mrf.mxu0
        %v4006 = vadd.f32 %v3893, %v4005
        %4007 = vmatmul.f32.gmra.mxu0 %v3670
        %v4008 = vpop.f32.mrf.mxu0
        %v4009 = vadd.f32 %v3896, %v4008
        %4010 = vmatmul.f32.gmra.mxu0 %v3673
        %v4011 = vpop.f32.mrf.mxu0
        %v4012 = vadd.f32 %v3899, %v4011
        %4013 = vmatmul.f32.gmra.mxu0 %v3676
        %v4014 = vpop.f32.mrf.mxu0
        %v4015 = vadd.f32 %v3902, %v4014
        %4016 = vmatmul.f32.gmra.mxu0 %v3679
        %v4017 = vpop.f32.mrf.mxu0
        %v4018 = vadd.f32 %v3905, %v4017
        %4019 = vmatmul.f32.gmra.mxu0 %v3682
        %v4020 = vpop.f32.mrf.mxu0
        %v4021 = vadd.f32 %v3908, %v4020
        %4022 = vmatmul.f32.gmra.mxu0 %v3685
        %v4023 = vpop.f32.mrf.mxu0
        %v4024 = vadd.f32 %v3911, %v4023
        %4025 = vmatmul.f32.gmra.mxu0 %v3688
        %v4026 = vpop.f32.mrf.mxu0
        %v4027 = vadd.f32 %v3914, %v4026
        %4028 = vmatmul.f32.gmra.mxu0 %v3691
        %v4029 = vpop.f32.mrf.mxu0
        %v4030 = vadd.f32 %v3917, %v4029
        %4031 = vmatmul.f32.gmra.mxu0 %v3694
        %v4032 = vpop.f32.mrf.mxu0
        %v4033 = vadd.f32 %v3920, %v4032
        %4034 = vmatmul.f32.gmra.mxu0 %v3697
        %v4035 = vpop.f32.mrf.mxu0
        %v4036 = vadd.f32 %v3923, %v4035
        %4037 = vmatmul.f32.gmra.mxu0 %v3700
        %v4038 = vpop.f32.mrf.mxu0
        %v4039 = vadd.f32 %v3926, %v4038
        %4040 = vmatmul.f32.gmra.mxu0 %v3703
        %v4041 = vpop.f32.mrf.mxu0
        %v4042 = vadd.f32 %v3929, %v4041
        %4043 = vmatmul.f32.gmra.mxu0 %v3706
        %v4044 = vpop.f32.mrf.mxu0
        %v4045 = vadd.f32 %v3932, %v4044
        %4046 = vmatmul.f32.gmra.mxu0 %v3709
        %v4047 = vpop.f32.mrf.mxu0
        %v4048 = vadd.f32 %v3935, %v4047
        %4049 = vmatmul.f32.gmra.mxu0 %v3712
        %v4050 = vpop.f32.mrf.mxu0
        %v4051 = vadd.f32 %v3938, %v4050
        %4052 = vmatmul.f32.gmra.mxu0 %v3715
        %v4053 = vpop.f32.mrf.mxu0
        %v4054 = vadd.f32 %v3941, %v4053
        %4055 = vmatmul.f32.gmra.mxu0 %v3718
        %v4056 = vpop.f32.mrf.mxu0
        %v4057 = vadd.f32 %v3944, %v4056
        %4058 = vmatmul.f32.gmra.mxu0 %v3721
        %v4059 = vpop.f32.mrf.mxu0
        %v4060 = vadd.f32 %v3947, %v4059
        %4061 = vmatmul.f32.gmra.mxu0 %v3724
        %v4062 = vpop.f32.mrf.mxu0
        %v4063 = vadd.f32 %v3950, %v4062
        %4064 = vmatmul.f32.gmra.mxu0 %v3727
        %v4065 = vpop.f32.mrf.mxu0
        %v4066 = vadd.f32 %v3953, %v4065
        %4067 = vmatmul.f32.gmra.mxu0 %v3730
        %v4068 = vpop.f32.mrf.mxu0
        %v4069 = vadd.f32 %v3956, %v4068
        %4070 = vmatmul.f32.gmra.mxu0 %v3733
        %v4071 = vpop.f32.mrf.mxu0
        %v4072 = vadd.f32 %v3959, %v4071
        %4073 = vmatmul.f32.gmra.mxu0 %v3736
        %v4074 = vpop.f32.mrf.mxu0
        %v4075 = vadd.f32 %v3962, %v4074
        %4076 = vmatmul.f32.gmra.mxu0 %v3739
        %v4077 = vpop.f32.mrf.mxu0
        %v4078 = vadd.f32 %v3965, %v4077
        %4079 = vdwg.mxu0
        %vm4080 = vcmp.ge.f32.partialorder %v3985, 0.0
        %vm4081 = vcmp.ge.f32.partialorder %v3988, 0.0
        %vm4082 = vcmp.ge.f32.partialorder %v3991, 0.0
        %vm4083 = vcmp.ge.f32.partialorder %v3994, 0.0
        %vm4084 = vcmp.ge.f32.partialorder %v3997, 0.0
        %vm4085 = vcmp.ge.f32.partialorder %v4000, 0.0
        %vm4086 = vcmp.ge.f32.partialorder %v4003, 0.0
        %vm4087 = vcmp.ge.f32.partialorder %v4006, 0.0
        %vm4088 = vcmp.ge.f32.partialorder %v4009, 0.0
        %vm4089 = vcmp.ge.f32.partialorder %v4012, 0.0
        %vm4090 = vcmp.ge.f32.partialorder %v4015, 0.0
        %vm4091 = vcmp.ge.f32.partialorder %v4018, 0.0
        %vm4092 = vcmp.ge.f32.partialorder %v4021, 0.0
        %vm4093 = vcmp.ge.f32.partialorder %v4024, 0.0
        %vm4094 = vcmp.ge.f32.partialorder %v4027, 0.0
        %vm4095 = vcmp.ge.f32.partialorder %v4030, 0.0
        %vm4096 = vcmp.ge.f32.partialorder %v4033, 0.0
        %vm4097 = vcmp.ge.f32.partialorder %v4036, 0.0
        %vm4098 = vcmp.ge.f32.partialorder %v4039, 0.0
        %vm4099 = vcmp.ge.f32.partialorder %v4042, 0.0
        %vm4100 = vcmp.ge.f32.partialorder %v4045, 0.0
        %vm4101 = vcmp.ge.f32.partialorder %v4048, 0.0
        %vm4102 = vcmp.ge.f32.partialorder %v4051, 0.0
        %vm4103 = vcmp.ge.f32.partialorder %v4054, 0.0
        %vm4104 = vcmp.ge.f32.partialorder %v4057, 0.0
        %vm4105 = vcmp.ge.f32.partialorder %v4060, 0.0
        %vm4106 = vcmp.ge.f32.partialorder %v4063, 0.0
        %vm4107 = vcmp.ge.f32.partialorder %v4066, 0.0
        %vm4108 = vcmp.ge.f32.partialorder %v4069, 0.0
        %vm4109 = vcmp.ge.f32.partialorder %v4072, 0.0
        %vm4110 = vcmp.ge.f32.partialorder %v4075, 0.0
        %vm4111 = vcmp.ge.f32.partialorder %v4078, 0.0
        %v4112 = vstv %s435
        %v4113 = vmul.f32 %v4112, %v3985
        %v4114 = vmul.f32 %v4112, %v3988
        %v4115 = vmul.f32 %v4112, %v3991
        %v4116 = vmul.f32 %v4112, %v3994
        %v4117 = vmul.f32 %v4112, %v3997
        %v4118 = vmul.f32 %v4112, %v4000
        %v4119 = vmul.f32 %v4112, %v4003
        %v4120 = vmul.f32 %v4112, %v4006
        %v4121 = vmul.f32 %v4112, %v4009
        %v4122 = vmul.f32 %v4112, %v4012
        %v4123 = vmul.f32 %v4112, %v4015
        %v4124 = vmul.f32 %v4112, %v4018
        %v4125 = vmul.f32 %v4112, %v4021
        %v4126 = vmul.f32 %v4112, %v4024
        %v4127 = vmul.f32 %v4112, %v4027
        %v4128 = vmul.f32 %v4112, %v4030
        %v4129 = vmul.f32 %v4112, %v4033
        %v4130 = vmul.f32 %v4112, %v4036
        %v4131 = vmul.f32 %v4112, %v4039
        %v4132 = vmul.f32 %v4112, %v4042
        %v4133 = vmul.f32 %v4112, %v4045
        %v4134 = vmul.f32 %v4112, %v4048
        %v4135 = vmul.f32 %v4112, %v4051
        %v4136 = vmul.f32 %v4112, %v4054
        %v4137 = vmul.f32 %v4112, %v4057
        %v4138 = vmul.f32 %v4112, %v4060
        %v4139 = vmul.f32 %v4112, %v4063
        %v4140 = vmul.f32 %v4112, %v4066
        %v4141 = vmul.f32 %v4112, %v4069
        %v4142 = vmul.f32 %v4112, %v4072
        %v4143 = vmul.f32 %v4112, %v4075
        %v4144 = vmul.f32 %v4112, %v4078
        %v4145 = vsel %vm4080, %v3985, %v4113
        %v4146 = vsel %vm4081, %v3988, %v4114
        %v4147 = vsel %vm4082, %v3991, %v4115
        %v4148 = vsel %vm4083, %v3994, %v4116
        %v4149 = vsel %vm4084, %v3997, %v4117
        %v4150 = vsel %vm4085, %v4000, %v4118
        %v4151 = vsel %vm4086, %v4003, %v4119
        %v4152 = vsel %vm4087, %v4006, %v4120
        %v4153 = vsel %vm4088, %v4009, %v4121
        %v4154 = vsel %vm4089, %v4012, %v4122
        %v4155 = vsel %vm4090, %v4015, %v4123
        %v4156 = vsel %vm4091, %v4018, %v4124
        %v4157 = vsel %vm4092, %v4021, %v4125
        %v4158 = vsel %vm4093, %v4024, %v4126
        %v4159 = vsel %vm4094, %v4027, %v4127
        %v4160 = vsel %vm4095, %v4030, %v4128
        %v4161 = vsel %vm4096, %v4033, %v4129
        %v4162 = vsel %vm4097, %v4036, %v4130
        %v4163 = vsel %vm4098, %v4039, %v4131
        %v4164 = vsel %vm4099, %v4042, %v4132
        %v4165 = vsel %vm4100, %v4045, %v4133
        %v4166 = vsel %vm4101, %v4048, %v4134
        %v4167 = vsel %vm4102, %v4051, %v4135
        %v4168 = vsel %vm4103, %v4054, %v4136
        %v4169 = vsel %vm4104, %v4057, %v4137
        %v4170 = vsel %vm4105, %v4060, %v4138
        %v4171 = vsel %vm4106, %v4063, %v4139
        %v4172 = vsel %vm4107, %v4066, %v4140
        %v4173 = vsel %vm4108, %v4069, %v4141
        %v4174 = vsel %vm4109, %v4072, %v4142
        %v4175 = vsel %vm4110, %v4075, %v4143
        %v4176 = vsel %vm4111, %v4078, %v4144
        %4177 = vst.msk [vmem:[%s475 + $0x2] sm:$0xff] %vm372, %v4145
        %4178 = vst.msk [vmem:[%s475 + $0xa] sm:$0xff] %vm372, %v4146
        %4179 = vst.msk [vmem:[%s475 + $0x1a] sm:$0xff] %vm372, %v4147
        %4180 = vst.msk [vmem:[%s475 + $0x22] sm:$0xff] %vm372, %v4148
        %4181 = vst.msk [vmem:[%s475 + $0x32] sm:$0xff] %vm372, %v4149
        %4182 = vst.msk [vmem:[%s475 + $0x3a] sm:$0xff] %vm372, %v4150
        %4183 = vst.msk [vmem:[%s475 + $0x4a] sm:$0xff] %vm372, %v4151
        %4184 = vst.msk [vmem:[%s475 + $0x52] sm:$0xff] %vm372, %v4152
        %4185 = vst.msk [vmem:[%s475 + $0x62] sm:$0xff] %vm372, %v4153
        %4186 = vst.msk [vmem:[%s475 + $0x6a] sm:$0xff] %vm372, %v4154
        %4187 = vst.msk [vmem:[%s475 + $0x7a] sm:$0xff] %vm372, %v4155
        %4188 = vst.msk [vmem:[%s475 + $0x82] sm:$0xff] %vm372, %v4156
        %4189 = vst.msk [vmem:[%s475 + $0x92] sm:$0xff] %vm372, %v4157
        %4190 = vst.msk [vmem:[%s475 + $0x9a] sm:$0xff] %vm372, %v4158
        %4191 = vst.msk [vmem:[%s475 + $0xaa] sm:$0xff] %vm372, %v4159
        %4192 = vst.msk [vmem:[%s475 + $0xb2] sm:$0xff] %vm372, %v4160
        %4193 = vst.msk [vmem:[%s475 + $0xc2] sm:$0xff] %vm372, %v4161
        %4194 = vst.msk [vmem:[%s475 + $0xca] sm:$0xff] %vm372, %v4162
        %4195 = vst.msk [vmem:[%s475 + $0xda] sm:$0xff] %vm372, %v4163
        %4196 = vst.msk [vmem:[%s475 + $0xe2] sm:$0xff] %vm372, %v4164
        %4197 = vst.msk [vmem:[%s475 + $0xf2] sm:$0xff] %vm372, %v4165
        %4198 = vst.msk [vmem:[%s475 + $0xfa] sm:$0xff] %vm372, %v4166
        %4199 = vst.msk [vmem:[%s475 + $0x10a] sm:$0xff] %vm372, %v4167
        %4200 = vst.msk [vmem:[%s475 + $0x112] sm:$0xff] %vm372, %v4168
        %4201 = vst.msk [vmem:[%s475 + $0x122] sm:$0xff] %vm372, %v4169
        %4202 = vst.msk [vmem:[%s475 + $0x12a] sm:$0xff] %vm372, %v4170
        %4203 = vst.msk [vmem:[%s475 + $0x13a] sm:$0xff] %vm372, %v4171
        %4204 = vst.msk [vmem:[%s475 + $0x142] sm:$0xff] %vm372, %v4172
        %4205 = vst.msk [vmem:[%s475 + $0x152] sm:$0xff] %vm372, %v4173
        %4206 = vst.msk [vmem:[%s475 + $0x15a] sm:$0xff] %vm372, %v4174
        %4207 = vst.msk [vmem:[%s475 + $0x16a] sm:$0xff] %vm372, %v4175
        %4208 = vst.msk [vmem:[%s475 + $0x172] sm:$0xff] %vm372, %v4176
        %v4209 = vld [vmem:[%s2] sm:$0xff]
        %v4210 = vld [vmem:[%s2 + $0x8] sm:$0x1]
        %v4211 = vld [vmem:[%s508 + $0x1] sm:$0xff]
        %v4212 = vld [vmem:[%s508 + $0x9] sm:$0xff]
        %v4213 = vld [vmem:[%s508 + $0x19] sm:$0xff]
        %v4214 = vld [vmem:[%s508 + $0x21] sm:$0xff]
        %v4215 = vld [vmem:[%s508 + $0x31] sm:$0xff]
        %v4216 = vld [vmem:[%s508 + $0x39] sm:$0xff]
        %v4217 = vld [vmem:[%s508 + $0x49] sm:$0xff]
        %v4218 = vld [vmem:[%s508 + $0x51] sm:$0xff]
        %v4219 = vld [vmem:[%s508 + $0x61] sm:$0xff]
        %v4220 = vld [vmem:[%s508 + $0x69] sm:$0xff]
        %v4221 = vld [vmem:[%s508 + $0x79] sm:$0xff]
        %v4222 = vld [vmem:[%s508 + $0x81] sm:$0xff]
        %v4223 = vld [vmem:[%s508 + $0x91] sm:$0xff]
        %v4224 = vld [vmem:[%s508 + $0x99] sm:$0xff]
        %v4225 = vld [vmem:[%s508 + $0xa9] sm:$0xff]
        %v4226 = vld [vmem:[%s508 + $0xb1] sm:$0xff]
        %v4227 = vld [vmem:[%s508 + $0xc1] sm:$0xff]
        %v4228 = vld [vmem:[%s508 + $0xc9] sm:$0xff]
        %v4229 = vld [vmem:[%s508 + $0xd9] sm:$0xff]
        %v4230 = vld [vmem:[%s508 + $0xe1] sm:$0xff]
        %v4231 = vld [vmem:[%s508 + $0xf1] sm:$0xff]
        %v4232 = vld [vmem:[%s508 + $0xf9] sm:$0xff]
        %v4233 = vld [vmem:[%s508 + $0x109] sm:$0xff]
        %v4234 = vld [vmem:[%s508 + $0x111] sm:$0xff]
        %v4235 = vld [vmem:[%s508 + $0x121] sm:$0xff]
        %v4236 = vld [vmem:[%s508 + $0x129] sm:$0xff]
        %v4237 = vld [vmem:[%s508 + $0x139] sm:$0xff]
        %v4238 = vld [vmem:[%s508 + $0x141] sm:$0xff]
        %v4239 = vld [vmem:[%s508 + $0x151] sm:$0xff]
        %v4240 = vld [vmem:[%s508 + $0x159] sm:$0xff]
        %v4241 = vld [vmem:[%s508 + $0x169] sm:$0xff]
        %v4242 = vld [vmem:[%s508 + $0x171] sm:$0xff]
        %v4243 = vperm.slane %v4209, 0
        %v4244 = vmul.f32 %v4211, %v4243
        %v4245 = vmul.f32 %v4212, %v4243
        %v4246 = vmul.f32 %v4213, %v4243
        %v4247 = vmul.f32 %v4214, %v4243
        %v4248 = vmul.f32 %v4215, %v4243
        %v4249 = vmul.f32 %v4216, %v4243
        %v4250 = vmul.f32 %v4217, %v4243
        %v4251 = vmul.f32 %v4218, %v4243
        %v4252 = vmul.f32 %v4219, %v4243
        %v4253 = vmul.f32 %v4220, %v4243
        %v4254 = vmul.f32 %v4221, %v4243
        %v4255 = vmul.f32 %v4222, %v4243
        %v4256 = vmul.f32 %v4223, %v4243
        %v4257 = vmul.f32 %v4224, %v4243
        %v4258 = vmul.f32 %v4225, %v4243
        %v4259 = vmul.f32 %v4226, %v4243
        %v4260 = vmul.f32 %v4227, %v4243
        %v4261 = vmul.f32 %v4228, %v4243
        %v4262 = vmul.f32 %v4229, %v4243
        %v4263 = vmul.f32 %v4230, %v4243
        %v4264 = vmul.f32 %v4231, %v4243
        %v4265 = vmul.f32 %v4232, %v4243
        %v4266 = vmul.f32 %v4233, %v4243
        %v4267 = vmul.f32 %v4234, %v4243
        %v4268 = vmul.f32 %v4235, %v4243
        %v4269 = vmul.f32 %v4236, %v4243
        %v4270 = vmul.f32 %v4237, %v4243
        %v4271 = vmul.f32 %v4238, %v4243
        %v4272 = vmul.f32 %v4239, %v4243
        %v4273 = vmul.f32 %v4240, %v4243
        %v4274 = vmul.f32 %v4241, %v4243
        %v4275 = vmul.f32 %v4242, %v4243
        %v4276 = vld [vmem:[%s508 + $0x2] sm:$0xff]
        %v4277 = vld [vmem:[%s508 + $0xa] sm:$0xff]
        %v4278 = vld [vmem:[%s508 + $0x1a] sm:$0xff]
        %v4279 = vld [vmem:[%s508 + $0x22] sm:$0xff]
        %v4280 = vld [vmem:[%s508 + $0x32] sm:$0xff]
        %v4281 = vld [vmem:[%s508 + $0x3a] sm:$0xff]
        %v4282 = vld [vmem:[%s508 + $0x4a] sm:$0xff]
        %v4283 = vld [vmem:[%s508 + $0x52] sm:$0xff]
        %v4284 = vld [vmem:[%s508 + $0x62] sm:$0xff]
        %v4285 = vld [vmem:[%s508 + $0x6a] sm:$0xff]
        %v4286 = vld [vmem:[%s508 + $0x7a] sm:$0xff]
        %v4287 = vld [vmem:[%s508 + $0x82] sm:$0xff]
        %v4288 = vld [vmem:[%s508 + $0x92] sm:$0xff]
        %v4289 = vld [vmem:[%s508 + $0x9a] sm:$0xff]
        %v4290 = vld [vmem:[%s508 + $0xaa] sm:$0xff]
        %v4291 = vld [vmem:[%s508 + $0xb2] sm:$0xff]
        %v4292 = vld [vmem:[%s508 + $0xc2] sm:$0xff]
        %v4293 = vld [vmem:[%s508 + $0xca] sm:$0xff]
        %v4294 = vld [vmem:[%s508 + $0xda] sm:$0xff]
        %v4295 = vld [vmem:[%s508 + $0xe2] sm:$0xff]
        %v4296 = vld [vmem:[%s508 + $0xf2] sm:$0xff]
        %v4297 = vld [vmem:[%s508 + $0xfa] sm:$0xff]
        %v4298 = vld [vmem:[%s508 + $0x10a] sm:$0xff]
        %v4299 = vld [vmem:[%s508 + $0x112] sm:$0xff]
        %v4300 = vld [vmem:[%s508 + $0x122] sm:$0xff]
        %v4301 = vld [vmem:[%s508 + $0x12a] sm:$0xff]
        %v4302 = vld [vmem:[%s508 + $0x13a] sm:$0xff]
        %v4303 = vld [vmem:[%s508 + $0x142] sm:$0xff]
        %v4304 = vld [vmem:[%s508 + $0x152] sm:$0xff]
        %v4305 = vld [vmem:[%s508 + $0x15a] sm:$0xff]
        %v4306 = vld [vmem:[%s508 + $0x16a] sm:$0xff]
        %v4307 = vld [vmem:[%s508 + $0x172] sm:$0xff]
        %v4308 = vperm.slane %v4209, 1
        %v4309 = vmul.f32 %v4276, %v4308
        %v4310 = vmul.f32 %v4277, %v4308
        %v4311 = vmul.f32 %v4278, %v4308
        %v4312 = vmul.f32 %v4279, %v4308
        %v4313 = vmul.f32 %v4280, %v4308
        %v4314 = vmul.f32 %v4281, %v4308
        %v4315 = vmul.f32 %v4282, %v4308
        %v4316 = vmul.f32 %v4283, %v4308
        %v4317 = vmul.f32 %v4284, %v4308
        %v4318 = vmul.f32 %v4285, %v4308
        %v4319 = vmul.f32 %v4286, %v4308
        %v4320 = vmul.f32 %v4287, %v4308
        %v4321 = vmul.f32 %v4288, %v4308
        %v4322 = vmul.f32 %v4289, %v4308
        %v4323 = vmul.f32 %v4290, %v4308
        %v4324 = vmul.f32 %v4291, %v4308
        %v4325 = vmul.f32 %v4292, %v4308
        %v4326 = vmul.f32 %v4293, %v4308
        %v4327 = vmul.f32 %v4294, %v4308
        %v4328 = vmul.f32 %v4295, %v4308
        %v4329 = vmul.f32 %v4296, %v4308
        %v4330 = vmul.f32 %v4297, %v4308
        %v4331 = vmul.f32 %v4298, %v4308
        %v4332 = vmul.f32 %v4299, %v4308
        %v4333 = vmul.f32 %v4300, %v4308
        %v4334 = vmul.f32 %v4301, %v4308
        %v4335 = vmul.f32 %v4302, %v4308
        %v4336 = vmul.f32 %v4303, %v4308
        %v4337 = vmul.f32 %v4304, %v4308
        %v4338 = vmul.f32 %v4305, %v4308
        %v4339 = vmul.f32 %v4306, %v4308
        %v4340 = vmul.f32 %v4307, %v4308
        %v4341 = vadd.f32 %v4244, %v4309
        %v4342 = vadd.f32 %v4245, %v4310
        %v4343 = vadd.f32 %v4246, %v4311
        %v4344 = vadd.f32 %v4247, %v4312
        %v4345 = vadd.f32 %v4248, %v4313
        %v4346 = vadd.f32 %v4249, %v4314
        %v4347 = vadd.f32 %v4250, %v4315
        %v4348 = vadd.f32 %v4251, %v4316
        %v4349 = vadd.f32 %v4252, %v4317
        %v4350 = vadd.f32 %v4253, %v4318
        %v4351 = vadd.f32 %v4254, %v4319
        %v4352 = vadd.f32 %v4255, %v4320
        %v4353 = vadd.f32 %v4256, %v4321
        %v4354 = vadd.f32 %v4257, %v4322
        %v4355 = vadd.f32 %v4258, %v4323
        %v4356 = vadd.f32 %v4259, %v4324
        %v4357 = vadd.f32 %v4260, %v4325
        %v4358 = vadd.f32 %v4261, %v4326
        %v4359 = vadd.f32 %v4262, %v4327
        %v4360 = vadd.f32 %v4263, %v4328
        %v4361 = vadd.f32 %v4264, %v4329
        %v4362 = vadd.f32 %v4265, %v4330
        %v4363 = vadd.f32 %v4266, %v4331
        %v4364 = vadd.f32 %v4267, %v4332
        %v4365 = vadd.f32 %v4268, %v4333
        %v4366 = vadd.f32 %v4269, %v4334
        %v4367 = vadd.f32 %v4270, %v4335
        %v4368 = vadd.f32 %v4271, %v4336
        %v4369 = vadd.f32 %v4272, %v4337
        %v4370 = vadd.f32 %v4273, %v4338
        %v4371 = vadd.f32 %v4274, %v4339
        %v4372 = vadd.f32 %v4275, %v4340
        %v4373 = vld [vmem:[%s508 + $0x3] sm:$0xff]
        %v4374 = vld [vmem:[%s508 + $0xb] sm:$0xff]
        %v4375 = vld [vmem:[%s508 + $0x1b] sm:$0xff]
        %v4376 = vld [vmem:[%s508 + $0x23] sm:$0xff]
        %v4377 = vld [vmem:[%s508 + $0x33] sm:$0xff]
        %v4378 = vld [vmem:[%s508 + $0x3b] sm:$0xff]
        %v4379 = vld [vmem:[%s508 + $0x4b] sm:$0xff]
        %v4380 = vld [vmem:[%s508 + $0x53] sm:$0xff]
        %v4381 = vld [vmem:[%s508 + $0x63] sm:$0xff]
        %v4382 = vld [vmem:[%s508 + $0x6b] sm:$0xff]
        %v4383 = vld [vmem:[%s508 + $0x7b] sm:$0xff]
        %v4384 = vld [vmem:[%s508 + $0x83] sm:$0xff]
        %v4385 = vld [vmem:[%s508 + $0x93] sm:$0xff]
        %v4386 = vld [vmem:[%s508 + $0x9b] sm:$0xff]
        %v4387 = vld [vmem:[%s508 + $0xab] sm:$0xff]
        %v4388 = vld [vmem:[%s508 + $0xb3] sm:$0xff]
        %v4389 = vld [vmem:[%s508 + $0xc3] sm:$0xff]
        %v4390 = vld [vmem:[%s508 + $0xcb] sm:$0xff]
        %v4391 = vld [vmem:[%s508 + $0xdb] sm:$0xff]
        %v4392 = vld [vmem:[%s508 + $0xe3] sm:$0xff]
        %v4393 = vld [vmem:[%s508 + $0xf3] sm:$0xff]
        %v4394 = vld [vmem:[%s508 + $0xfb] sm:$0xff]
        %v4395 = vld [vmem:[%s508 + $0x10b] sm:$0xff]
        %v4396 = vld [vmem:[%s508 + $0x113] sm:$0xff]
        %v4397 = vld [vmem:[%s508 + $0x123] sm:$0xff]
        %v4398 = vld [vmem:[%s508 + $0x12b] sm:$0xff]
        %v4399 = vld [vmem:[%s508 + $0x13b] sm:$0xff]
        %v4400 = vld [vmem:[%s508 + $0x143] sm:$0xff]
        %v4401 = vld [vmem:[%s508 + $0x153] sm:$0xff]
        %v4402 = vld [vmem:[%s508 + $0x15b] sm:$0xff]
        %v4403 = vld [vmem:[%s508 + $0x16b] sm:$0xff]
        %v4404 = vld [vmem:[%s508 + $0x173] sm:$0xff]
        %v4405 = vperm.slane %v4209, 2
        %v4406 = vmul.f32 %v4373, %v4405
        %v4407 = vmul.f32 %v4374, %v4405
        %v4408 = vmul.f32 %v4375, %v4405
        %v4409 = vmul.f32 %v4376, %v4405
        %v4410 = vmul.f32 %v4377, %v4405
        %v4411 = vmul.f32 %v4378, %v4405
        %v4412 = vmul.f32 %v4379, %v4405
        %v4413 = vmul.f32 %v4380, %v4405
        %v4414 = vmul.f32 %v4381, %v4405
        %v4415 = vmul.f32 %v4382, %v4405
        %v4416 = vmul.f32 %v4383, %v4405
        %v4417 = vmul.f32 %v4384, %v4405
        %v4418 = vmul.f32 %v4385, %v4405
        %v4419 = vmul.f32 %v4386, %v4405
        %v4420 = vmul.f32 %v4387, %v4405
        %v4421 = vmul.f32 %v4388, %v4405
        %v4422 = vmul.f32 %v4389, %v4405
        %v4423 = vmul.f32 %v4390, %v4405
        %v4424 = vmul.f32 %v4391, %v4405
        %v4425 = vmul.f32 %v4392, %v4405
        %v4426 = vmul.f32 %v4393, %v4405
        %v4427 = vmul.f32 %v4394, %v4405
        %v4428 = vmul.f32 %v4395, %v4405
        %v4429 = vmul.f32 %v4396, %v4405
        %v4430 = vmul.f32 %v4397, %v4405
        %v4431 = vmul.f32 %v4398, %v4405
        %v4432 = vmul.f32 %v4399, %v4405
        %v4433 = vmul.f32 %v4400, %v4405
        %v4434 = vmul.f32 %v4401, %v4405
        %v4435 = vmul.f32 %v4402, %v4405
        %v4436 = vmul.f32 %v4403, %v4405
        %v4437 = vmul.f32 %v4404, %v4405
        %v4438 = vadd.f32 %v4341, %v4406
        %v4439 = vadd.f32 %v4342, %v4407
        %v4440 = vadd.f32 %v4343, %v4408
        %v4441 = vadd.f32 %v4344, %v4409
        %v4442 = vadd.f32 %v4345, %v4410
        %v4443 = vadd.f32 %v4346, %v4411
        %v4444 = vadd.f32 %v4347, %v4412
        %v4445 = vadd.f32 %v4348, %v4413
        %v4446 = vadd.f32 %v4349, %v4414
        %v4447 = vadd.f32 %v4350, %v4415
        %v4448 = vadd.f32 %v4351, %v4416
        %v4449 = vadd.f32 %v4352, %v4417
        %v4450 = vadd.f32 %v4353, %v4418
        %v4451 = vadd.f32 %v4354, %v4419
        %v4452 = vadd.f32 %v4355, %v4420
        %v4453 = vadd.f32 %v4356, %v4421
        %v4454 = vadd.f32 %v4357, %v4422
        %v4455 = vadd.f32 %v4358, %v4423
        %v4456 = vadd.f32 %v4359, %v4424
        %v4457 = vadd.f32 %v4360, %v4425
        %v4458 = vadd.f32 %v4361, %v4426
        %v4459 = vadd.f32 %v4362, %v4427
        %v4460 = vadd.f32 %v4363, %v4428
        %v4461 = vadd.f32 %v4364, %v4429
        %v4462 = vadd.f32 %v4365, %v4430
        %v4463 = vadd.f32 %v4366, %v4431
        %v4464 = vadd.f32 %v4367, %v4432
        %v4465 = vadd.f32 %v4368, %v4433
        %v4466 = vadd.f32 %v4369, %v4434
        %v4467 = vadd.f32 %v4370, %v4435
        %v4468 = vadd.f32 %v4371, %v4436
        %v4469 = vadd.f32 %v4372, %v4437
        %v4470 = vld [vmem:[%s475 + $0x1] sm:$0xff]
        %v4471 = vld [vmem:[%s475 + $0x9] sm:$0xff]
        %v4472 = vld [vmem:[%s475 + $0x19] sm:$0xff]
        %v4473 = vld [vmem:[%s475 + $0x21] sm:$0xff]
        %v4474 = vld [vmem:[%s475 + $0x31] sm:$0xff]
        %v4475 = vld [vmem:[%s475 + $0x39] sm:$0xff]
        %v4476 = vld [vmem:[%s475 + $0x49] sm:$0xff]
        %v4477 = vld [vmem:[%s475 + $0x51] sm:$0xff]
        %v4478 = vld [vmem:[%s475 + $0x61] sm:$0xff]
        %v4479 = vld [vmem:[%s475 + $0x69] sm:$0xff]
        %v4480 = vld [vmem:[%s475 + $0x79] sm:$0xff]
        %v4481 = vld [vmem:[%s475 + $0x81] sm:$0xff]
        %v4482 = vld [vmem:[%s475 + $0x91] sm:$0xff]
        %v4483 = vld [vmem:[%s475 + $0x99] sm:$0xff]
        %v4484 = vld [vmem:[%s475 + $0xa9] sm:$0xff]
        %v4485 = vld [vmem:[%s475 + $0xb1] sm:$0xff]
        %v4486 = vld [vmem:[%s475 + $0xc1] sm:$0xff]
        %v4487 = vld [vmem:[%s475 + $0xc9] sm:$0xff]
        %v4488 = vld [vmem:[%s475 + $0xd9] sm:$0xff]
        %v4489 = vld [vmem:[%s475 + $0xe1] sm:$0xff]
        %v4490 = vld [vmem:[%s475 + $0xf1] sm:$0xff]
        %v4491 = vld [vmem:[%s475 + $0xf9] sm:$0xff]
        %v4492 = vld [vmem:[%s475 + $0x109] sm:$0xff]
        %v4493 = vld [vmem:[%s475 + $0x111] sm:$0xff]
        %v4494 = vld [vmem:[%s475 + $0x121] sm:$0xff]
        %v4495 = vld [vmem:[%s475 + $0x129] sm:$0xff]
        %v4496 = vld [vmem:[%s475 + $0x139] sm:$0xff]
        %v4497 = vld [vmem:[%s475 + $0x141] sm:$0xff]
        %v4498 = vld [vmem:[%s475 + $0x151] sm:$0xff]
        %v4499 = vld [vmem:[%s475 + $0x159] sm:$0xff]
        %v4500 = vld [vmem:[%s475 + $0x169] sm:$0xff]
        %v4501 = vld [vmem:[%s475 + $0x171] sm:$0xff]
        %v4502 = vperm.slane %v4209, 3
        %v4503 = vmul.f32 %v4470, %v4502
        %v4504 = vmul.f32 %v4471, %v4502
        %v4505 = vmul.f32 %v4472, %v4502
        %v4506 = vmul.f32 %v4473, %v4502
        %v4507 = vmul.f32 %v4474, %v4502
        %v4508 = vmul.f32 %v4475, %v4502
        %v4509 = vmul.f32 %v4476, %v4502
        %v4510 = vmul.f32 %v4477, %v4502
        %v4511 = vmul.f32 %v4478, %v4502
        %v4512 = vmul.f32 %v4479, %v4502
        %v4513 = vmul.f32 %v4480, %v4502
        %v4514 = vmul.f32 %v4481, %v4502
        %v4515 = vmul.f32 %v4482, %v4502
        %v4516 = vmul.f32 %v4483, %v4502
        %v4517 = vmul.f32 %v4484, %v4502
        %v4518 = vmul.f32 %v4485, %v4502
        %v4519 = vmul.f32 %v4486, %v4502
        %v4520 = vmul.f32 %v4487, %v4502
        %v4521 = vmul.f32 %v4488, %v4502
        %v4522 = vmul.f32 %v4489, %v4502
        %v4523 = vmul.f32 %v4490, %v4502
        %v4524 = vmul.f32 %v4491, %v4502
        %v4525 = vmul.f32 %v4492, %v4502
        %v4526 = vmul.f32 %v4493, %v4502
        %v4527 = vmul.f32 %v4494, %v4502
        %v4528 = vmul.f32 %v4495, %v4502
        %v4529 = vmul.f32 %v4496, %v4502
        %v4530 = vmul.f32 %v4497, %v4502
        %v4531 = vmul.f32 %v4498, %v4502
        %v4532 = vmul.f32 %v4499, %v4502
        %v4533 = vmul.f32 %v4500, %v4502
        %v4534 = vmul.f32 %v4501, %v4502
        %v4535 = vadd.f32 %v4438, %v4503
        %v4536 = vadd.f32 %v4439, %v4504
        %v4537 = vadd.f32 %v4440, %v4505
        %v4538 = vadd.f32 %v4441, %v4506
        %v4539 = vadd.f32 %v4442, %v4507
        %v4540 = vadd.f32 %v4443, %v4508
        %v4541 = vadd.f32 %v4444, %v4509
        %v4542 = vadd.f32 %v4445, %v4510
        %v4543 = vadd.f32 %v4446, %v4511
        %v4544 = vadd.f32 %v4447, %v4512
        %v4545 = vadd.f32 %v4448, %v4513
        %v4546 = vadd.f32 %v4449, %v4514
        %v4547 = vadd.f32 %v4450, %v4515
        %v4548 = vadd.f32 %v4451, %v4516
        %v4549 = vadd.f32 %v4452, %v4517
        %v4550 = vadd.f32 %v4453, %v4518
        %v4551 = vadd.f32 %v4454, %v4519
        %v4552 = vadd.f32 %v4455, %v4520
        %v4553 = vadd.f32 %v4456, %v4521
        %v4554 = vadd.f32 %v4457, %v4522
        %v4555 = vadd.f32 %v4458, %v4523
        %v4556 = vadd.f32 %v4459, %v4524
        %v4557 = vadd.f32 %v4460, %v4525
        %v4558 = vadd.f32 %v4461, %v4526
        %v4559 = vadd.f32 %v4462, %v4527
        %v4560 = vadd.f32 %v4463, %v4528
        %v4561 = vadd.f32 %v4464, %v4529
        %v4562 = vadd.f32 %v4465, %v4530
        %v4563 = vadd.f32 %v4466, %v4531
        %v4564 = vadd.f32 %v4467, %v4532
        %v4565 = vadd.f32 %v4468, %v4533
        %v4566 = vadd.f32 %v4469, %v4534
        %v4567 = vld [vmem:[%s475 + $0x2] sm:$0xff]
        %v4568 = vld [vmem:[%s475 + $0xa] sm:$0xff]
        %v4569 = vld [vmem:[%s475 + $0x1a] sm:$0xff]
        %v4570 = vld [vmem:[%s475 + $0x22] sm:$0xff]
        %v4571 = vld [vmem:[%s475 + $0x32] sm:$0xff]
        %v4572 = vld [vmem:[%s475 + $0x3a] sm:$0xff]
        %v4573 = vld [vmem:[%s475 + $0x4a] sm:$0xff]
        %v4574 = vld [vmem:[%s475 + $0x52] sm:$0xff]
        %v4575 = vld [vmem:[%s475 + $0x62] sm:$0xff]
        %v4576 = vld [vmem:[%s475 + $0x6a] sm:$0xff]
        %v4577 = vld [vmem:[%s475 + $0x7a] sm:$0xff]
        %v4578 = vld [vmem:[%s475 + $0x82] sm:$0xff]
        %v4579 = vld [vmem:[%s475 + $0x92] sm:$0xff]
        %v4580 = vld [vmem:[%s475 + $0x9a] sm:$0xff]
        %v4581 = vld [vmem:[%s475 + $0xaa] sm:$0xff]
        %v4582 = vld [vmem:[%s475 + $0xb2] sm:$0xff]
        %v4583 = vld [vmem:[%s475 + $0xc2] sm:$0xff]
        %v4584 = vld [vmem:[%s475 + $0xca] sm:$0xff]
        %v4585 = vld [vmem:[%s475 + $0xda] sm:$0xff]
        %v4586 = vld [vmem:[%s475 + $0xe2] sm:$0xff]
        %v4587 = vld [vmem:[%s475 + $0xf2] sm:$0xff]
        %v4588 = vld [vmem:[%s475 + $0xfa] sm:$0xff]
        %v4589 = vld [vmem:[%s475 + $0x10a] sm:$0xff]
        %v4590 = vld [vmem:[%s475 + $0x112] sm:$0xff]
        %v4591 = vld [vmem:[%s475 + $0x122] sm:$0xff]
        %v4592 = vld [vmem:[%s475 + $0x12a] sm:$0xff]
        %v4593 = vld [vmem:[%s475 + $0x13a] sm:$0xff]
        %v4594 = vld [vmem:[%s475 + $0x142] sm:$0xff]
        %v4595 = vld [vmem:[%s475 + $0x152] sm:$0xff]
        %v4596 = vld [vmem:[%s475 + $0x15a] sm:$0xff]
        %v4597 = vld [vmem:[%s475 + $0x16a] sm:$0xff]
        %v4598 = vld [vmem:[%s475 + $0x172] sm:$0xff]
        %v4599 = vperm.slane %v4209, 4
        %v4600 = vmul.f32 %v4567, %v4599
        %v4601 = vmul.f32 %v4568, %v4599
        %v4602 = vmul.f32 %v4569, %v4599
        %v4603 = vmul.f32 %v4570, %v4599
        %v4604 = vmul.f32 %v4571, %v4599
        %v4605 = vmul.f32 %v4572, %v4599
        %v4606 = vmul.f32 %v4573, %v4599
        %v4607 = vmul.f32 %v4574, %v4599
        %v4608 = vmul.f32 %v4575, %v4599
        %v4609 = vmul.f32 %v4576, %v4599
        %v4610 = vmul.f32 %v4577, %v4599
        %v4611 = vmul.f32 %v4578, %v4599
        %v4612 = vmul.f32 %v4579, %v4599
        %v4613 = vmul.f32 %v4580, %v4599
        %v4614 = vmul.f32 %v4581, %v4599
        %v4615 = vmul.f32 %v4582, %v4599
        %v4616 = vmul.f32 %v4583, %v4599
        %v4617 = vmul.f32 %v4584, %v4599
        %v4618 = vmul.f32 %v4585, %v4599
        %v4619 = vmul.f32 %v4586, %v4599
        %v4620 = vmul.f32 %v4587, %v4599
        %v4621 = vmul.f32 %v4588, %v4599
        %v4622 = vmul.f32 %v4589, %v4599
        %v4623 = vmul.f32 %v4590, %v4599
        %v4624 = vmul.f32 %v4591, %v4599
        %v4625 = vmul.f32 %v4592, %v4599
        %v4626 = vmul.f32 %v4593, %v4599
        %v4627 = vmul.f32 %v4594, %v4599
        %v4628 = vmul.f32 %v4595, %v4599
        %v4629 = vmul.f32 %v4596, %v4599
        %v4630 = vmul.f32 %v4597, %v4599
        %v4631 = vmul.f32 %v4598, %v4599
        %v4632 = vadd.f32 %v4535, %v4600
        %v4633 = vadd.f32 %v4536, %v4601
        %v4634 = vadd.f32 %v4537, %v4602
        %v4635 = vadd.f32 %v4538, %v4603
        %v4636 = vadd.f32 %v4539, %v4604
        %v4637 = vadd.f32 %v4540, %v4605
        %v4638 = vadd.f32 %v4541, %v4606
        %v4639 = vadd.f32 %v4542, %v4607
        %v4640 = vadd.f32 %v4543, %v4608
        %v4641 = vadd.f32 %v4544, %v4609
        %v4642 = vadd.f32 %v4545, %v4610
        %v4643 = vadd.f32 %v4546, %v4611
        %v4644 = vadd.f32 %v4547, %v4612
        %v4645 = vadd.f32 %v4548, %v4613
        %v4646 = vadd.f32 %v4549, %v4614
        %v4647 = vadd.f32 %v4550, %v4615
        %v4648 = vadd.f32 %v4551, %v4616
        %v4649 = vadd.f32 %v4552, %v4617
        %v4650 = vadd.f32 %v4553, %v4618
        %v4651 = vadd.f32 %v4554, %v4619
        %v4652 = vadd.f32 %v4555, %v4620
        %v4653 = vadd.f32 %v4556, %v4621
        %v4654 = vadd.f32 %v4557, %v4622
        %v4655 = vadd.f32 %v4558, %v4623
        %v4656 = vadd.f32 %v4559, %v4624
        %v4657 = vadd.f32 %v4560, %v4625
        %v4658 = vadd.f32 %v4561, %v4626
        %v4659 = vadd.f32 %v4562, %v4627
        %v4660 = vadd.f32 %v4563, %v4628
        %v4661 = vadd.f32 %v4564, %v4629
        %v4662 = vadd.f32 %v4565, %v4630
        %v4663 = vadd.f32 %v4566, %v4631
        %v4664 = vld [vmem:[%s475 + $0x3] sm:$0xff]
        %v4665 = vld [vmem:[%s475 + $0xb] sm:$0xff]
        %v4666 = vld [vmem:[%s475 + $0x1b] sm:$0xff]
        %v4667 = vld [vmem:[%s475 + $0x23] sm:$0xff]
        %v4668 = vld [vmem:[%s475 + $0x33] sm:$0xff]
        %v4669 = vld [vmem:[%s475 + $0x3b] sm:$0xff]
        %v4670 = vld [vmem:[%s475 + $0x4b] sm:$0xff]
        %v4671 = vld [vmem:[%s475 + $0x53] sm:$0xff]
        %v4672 = vld [vmem:[%s475 + $0x63] sm:$0xff]
        %v4673 = vld [vmem:[%s475 + $0x6b] sm:$0xff]
        %v4674 = vld [vmem:[%s475 + $0x7b] sm:$0xff]
        %v4675 = vld [vmem:[%s475 + $0x83] sm:$0xff]
        %v4676 = vld [vmem:[%s475 + $0x93] sm:$0xff]
        %v4677 = vld [vmem:[%s475 + $0x9b] sm:$0xff]
        %v4678 = vld [vmem:[%s475 + $0xab] sm:$0xff]
        %v4679 = vld [vmem:[%s475 + $0xb3] sm:$0xff]
        %v4680 = vld [vmem:[%s475 + $0xc3] sm:$0xff]
        %v4681 = vld [vmem:[%s475 + $0xcb] sm:$0xff]
        %v4682 = vld [vmem:[%s475 + $0xdb] sm:$0xff]
        %v4683 = vld [vmem:[%s475 + $0xe3] sm:$0xff]
        %v4684 = vld [vmem:[%s475 + $0xf3] sm:$0xff]
        %v4685 = vld [vmem:[%s475 + $0xfb] sm:$0xff]
        %v4686 = vld [vmem:[%s475 + $0x10b] sm:$0xff]
        %v4687 = vld [vmem:[%s475 + $0x113] sm:$0xff]
        %v4688 = vld [vmem:[%s475 + $0x123] sm:$0xff]
        %v4689 = vld [vmem:[%s475 + $0x12b] sm:$0xff]
        %v4690 = vld [vmem:[%s475 + $0x13b] sm:$0xff]
        %v4691 = vld [vmem:[%s475 + $0x143] sm:$0xff]
        %v4692 = vld [vmem:[%s475 + $0x153] sm:$0xff]
        %v4693 = vld [vmem:[%s475 + $0x15b] sm:$0xff]
        %v4694 = vld [vmem:[%s475 + $0x16b] sm:$0xff]
        %v4695 = vld [vmem:[%s475 + $0x173] sm:$0xff]
        %v4696 = vperm.slane %v4209, 5
        %v4697 = vmul.f32 %v4664, %v4696
        %v4698 = vmul.f32 %v4665, %v4696
        %v4699 = vmul.f32 %v4666, %v4696
        %v4700 = vmul.f32 %v4667, %v4696
        %v4701 = vmul.f32 %v4668, %v4696
        %v4702 = vmul.f32 %v4669, %v4696
        %v4703 = vmul.f32 %v4670, %v4696
        %v4704 = vmul.f32 %v4671, %v4696
        %v4705 = vmul.f32 %v4672, %v4696
        %v4706 = vmul.f32 %v4673, %v4696
        %v4707 = vmul.f32 %v4674, %v4696
        %v4708 = vmul.f32 %v4675, %v4696
        %v4709 = vmul.f32 %v4676, %v4696
        %v4710 = vmul.f32 %v4677, %v4696
        %v4711 = vmul.f32 %v4678, %v4696
        %v4712 = vmul.f32 %v4679, %v4696
        %v4713 = vmul.f32 %v4680, %v4696
        %v4714 = vmul.f32 %v4681, %v4696
        %v4715 = vmul.f32 %v4682, %v4696
        %v4716 = vmul.f32 %v4683, %v4696
        %v4717 = vmul.f32 %v4684, %v4696
        %v4718 = vmul.f32 %v4685, %v4696
        %v4719 = vmul.f32 %v4686, %v4696
        %v4720 = vmul.f32 %v4687, %v4696
        %v4721 = vmul.f32 %v4688, %v4696
        %v4722 = vmul.f32 %v4689, %v4696
        %v4723 = vmul.f32 %v4690, %v4696
        %v4724 = vmul.f32 %v4691, %v4696
        %v4725 = vmul.f32 %v4692, %v4696
        %v4726 = vmul.f32 %v4693, %v4696
        %v4727 = vmul.f32 %v4694, %v4696
        %v4728 = vmul.f32 %v4695, %v4696
        %v4729 = vadd.f32 %v4632, %v4697
        %v4730 = vadd.f32 %v4633, %v4698
        %v4731 = vadd.f32 %v4634, %v4699
        %v4732 = vadd.f32 %v4635, %v4700
        %v4733 = vadd.f32 %v4636, %v4701
        %v4734 = vadd.f32 %v4637, %v4702
        %v4735 = vadd.f32 %v4638, %v4703
        %v4736 = vadd.f32 %v4639, %v4704
        %v4737 = vadd.f32 %v4640, %v4705
        %v4738 = vadd.f32 %v4641, %v4706
        %v4739 = vadd.f32 %v4642, %v4707
        %v4740 = vadd.f32 %v4643, %v4708
        %v4741 = vadd.f32 %v4644, %v4709
        %v4742 = vadd.f32 %v4645, %v4710
        %v4743 = vadd.f32 %v4646, %v4711
        %v4744 = vadd.f32 %v4647, %v4712
        %v4745 = vadd.f32 %v4648, %v4713
        %v4746 = vadd.f32 %v4649, %v4714
        %v4747 = vadd.f32 %v4650, %v4715
        %v4748 = vadd.f32 %v4651, %v4716
        %v4749 = vadd.f32 %v4652, %v4717
        %v4750 = vadd.f32 %v4653, %v4718
        %v4751 = vadd.f32 %v4654, %v4719
        %v4752 = vadd.f32 %v4655, %v4720
        %v4753 = vadd.f32 %v4656, %v4721
        %v4754 = vadd.f32 %v4657, %v4722
        %v4755 = vadd.f32 %v4658, %v4723
        %v4756 = vadd.f32 %v4659, %v4724
        %v4757 = vadd.f32 %v4660, %v4725
        %v4758 = vadd.f32 %v4661, %v4726
        %v4759 = vadd.f32 %v4662, %v4727
        %v4760 = vadd.f32 %v4663, %v4728
        %v4761 = vld [vmem:[%s701 + $0x1] sm:$0xff]
        %v4762 = vld [vmem:[%s701 + $0x9] sm:$0xff]
        %v4763 = vld [vmem:[%s701 + $0x19] sm:$0xff]
        %v4764 = vld [vmem:[%s701 + $0x21] sm:$0xff]
        %v4765 = vld [vmem:[%s701 + $0x31] sm:$0xff]
        %v4766 = vld [vmem:[%s701 + $0x39] sm:$0xff]
        %v4767 = vld [vmem:[%s701 + $0x49] sm:$0xff]
        %v4768 = vld [vmem:[%s701 + $0x51] sm:$0xff]
        %v4769 = vld [vmem:[%s701 + $0x61] sm:$0xff]
        %v4770 = vld [vmem:[%s701 + $0x69] sm:$0xff]
        %v4771 = vld [vmem:[%s701 + $0x79] sm:$0xff]
        %v4772 = vld [vmem:[%s701 + $0x81] sm:$0xff]
        %v4773 = vld [vmem:[%s701 + $0x91] sm:$0xff]
        %v4774 = vld [vmem:[%s701 + $0x99] sm:$0xff]
        %v4775 = vld [vmem:[%s701 + $0xa9] sm:$0xff]
        %v4776 = vld [vmem:[%s701 + $0xb1] sm:$0xff]
        %v4777 = vld [vmem:[%s701 + $0xc1] sm:$0xff]
        %v4778 = vld [vmem:[%s701 + $0xc9] sm:$0xff]
        %v4779 = vld [vmem:[%s701 + $0xd9] sm:$0xff]
        %v4780 = vld [vmem:[%s701 + $0xe1] sm:$0xff]
        %v4781 = vld [vmem:[%s701 + $0xf1] sm:$0xff]
        %v4782 = vld [vmem:[%s701 + $0xf9] sm:$0xff]
        %v4783 = vld [vmem:[%s701 + $0x109] sm:$0xff]
        %v4784 = vld [vmem:[%s701 + $0x111] sm:$0xff]
        %v4785 = vld [vmem:[%s701 + $0x121] sm:$0xff]
        %v4786 = vld [vmem:[%s701 + $0x129] sm:$0xff]
        %v4787 = vld [vmem:[%s701 + $0x139] sm:$0xff]
        %v4788 = vld [vmem:[%s701 + $0x141] sm:$0xff]
        %v4789 = vld [vmem:[%s701 + $0x151] sm:$0xff]
        %v4790 = vld [vmem:[%s701 + $0x159] sm:$0xff]
        %v4791 = vld [vmem:[%s701 + $0x169] sm:$0xff]
        %v4792 = vld [vmem:[%s701 + $0x171] sm:$0xff]
        %v4793 = vperm.slane %v4209, 6
        %v4794 = vmul.f32 %v4761, %v4793
        %v4795 = vmul.f32 %v4762, %v4793
        %v4796 = vmul.f32 %v4763, %v4793
        %v4797 = vmul.f32 %v4764, %v4793
        %v4798 = vmul.f32 %v4765, %v4793
        %v4799 = vmul.f32 %v4766, %v4793
        %v4800 = vmul.f32 %v4767, %v4793
        %v4801 = vmul.f32 %v4768, %v4793
        %v4802 = vmul.f32 %v4769, %v4793
        %v4803 = vmul.f32 %v4770, %v4793
        %v4804 = vmul.f32 %v4771, %v4793
        %v4805 = vmul.f32 %v4772, %v4793
        %v4806 = vmul.f32 %v4773, %v4793
        %v4807 = vmul.f32 %v4774, %v4793
        %v4808 = vmul.f32 %v4775, %v4793
        %v4809 = vmul.f32 %v4776, %v4793
        %v4810 = vmul.f32 %v4777, %v4793
        %v4811 = vmul.f32 %v4778, %v4793
        %v4812 = vmul.f32 %v4779, %v4793
        %v4813 = vmul.f32 %v4780, %v4793
        %v4814 = vmul.f32 %v4781, %v4793
        %v4815 = vmul.f32 %v4782, %v4793
        %v4816 = vmul.f32 %v4783, %v4793
        %v4817 = vmul.f32 %v4784, %v4793
        %v4818 = vmul.f32 %v4785, %v4793
        %v4819 = vmul.f32 %v4786, %v4793
        %v4820 = vmul.f32 %v4787, %v4793
        %v4821 = vmul.f32 %v4788, %v4793
        %v4822 = vmul.f32 %v4789, %v4793
        %v4823 = vmul.f32 %v4790, %v4793
        %v4824 = vmul.f32 %v4791, %v4793
        %v4825 = vmul.f32 %v4792, %v4793
        %v4826 = vadd.f32 %v4729, %v4794
        %v4827 = vadd.f32 %v4730, %v4795
        %v4828 = vadd.f32 %v4731, %v4796
        %v4829 = vadd.f32 %v4732, %v4797
        %v4830 = vadd.f32 %v4733, %v4798
        %v4831 = vadd.f32 %v4734, %v4799
        %v4832 = vadd.f32 %v4735, %v4800
        %v4833 = vadd.f32 %v4736, %v4801
        %v4834 = vadd.f32 %v4737, %v4802
        %v4835 = vadd.f32 %v4738, %v4803
        %v4836 = vadd.f32 %v4739, %v4804
        %v4837 = vadd.f32 %v4740, %v4805
        %v4838 = vadd.f32 %v4741, %v4806
        %v4839 = vadd.f32 %v4742, %v4807
        %v4840 = vadd.f32 %v4743, %v4808
        %v4841 = vadd.f32 %v4744, %v4809
        %v4842 = vadd.f32 %v4745, %v4810
        %v4843 = vadd.f32 %v4746, %v4811
        %v4844 = vadd.f32 %v4747, %v4812
        %v4845 = vadd.f32 %v4748, %v4813
        %v4846 = vadd.f32 %v4749, %v4814
        %v4847 = vadd.f32 %v4750, %v4815
        %v4848 = vadd.f32 %v4751, %v4816
        %v4849 = vadd.f32 %v4752, %v4817
        %v4850 = vadd.f32 %v4753, %v4818
        %v4851 = vadd.f32 %v4754, %v4819
        %v4852 = vadd.f32 %v4755, %v4820
        %v4853 = vadd.f32 %v4756, %v4821
        %v4854 = vadd.f32 %v4757, %v4822
        %v4855 = vadd.f32 %v4758, %v4823
        %v4856 = vadd.f32 %v4759, %v4824
        %v4857 = vadd.f32 %v4760, %v4825
        %v4858 = vld [vmem:[%s701 + $0x2] sm:$0xff]
        %v4859 = vld [vmem:[%s701 + $0xa] sm:$0xff]
        %v4860 = vld [vmem:[%s701 + $0x1a] sm:$0xff]
        %v4861 = vld [vmem:[%s701 + $0x22] sm:$0xff]
        %v4862 = vld [vmem:[%s701 + $0x32] sm:$0xff]
        %v4863 = vld [vmem:[%s701 + $0x3a] sm:$0xff]
        %v4864 = vld [vmem:[%s701 + $0x4a] sm:$0xff]
        %v4865 = vld [vmem:[%s701 + $0x52] sm:$0xff]
        %v4866 = vld [vmem:[%s701 + $0x62] sm:$0xff]
        %v4867 = vld [vmem:[%s701 + $0x6a] sm:$0xff]
        %v4868 = vld [vmem:[%s701 + $0x7a] sm:$0xff]
        %v4869 = vld [vmem:[%s701 + $0x82] sm:$0xff]
        %v4870 = vld [vmem:[%s701 + $0x92] sm:$0xff]
        %v4871 = vld [vmem:[%s701 + $0x9a] sm:$0xff]
        %v4872 = vld [vmem:[%s701 + $0xaa] sm:$0xff]
        %v4873 = vld [vmem:[%s701 + $0xb2] sm:$0xff]
        %v4874 = vld [vmem:[%s701 + $0xc2] sm:$0xff]
        %v4875 = vld [vmem:[%s701 + $0xca] sm:$0xff]
        %v4876 = vld [vmem:[%s701 + $0xda] sm:$0xff]
        %v4877 = vld [vmem:[%s701 + $0xe2] sm:$0xff]
        %v4878 = vld [vmem:[%s701 + $0xf2] sm:$0xff]
        %v4879 = vld [vmem:[%s701 + $0xfa] sm:$0xff]
        %v4880 = vld [vmem:[%s701 + $0x10a] sm:$0xff]
        %v4881 = vld [vmem:[%s701 + $0x112] sm:$0xff]
        %v4882 = vld [vmem:[%s701 + $0x122] sm:$0xff]
        %v4883 = vld [vmem:[%s701 + $0x12a] sm:$0xff]
        %v4884 = vld [vmem:[%s701 + $0x13a] sm:$0xff]
        %v4885 = vld [vmem:[%s701 + $0x142] sm:$0xff]
        %v4886 = vld [vmem:[%s701 + $0x152] sm:$0xff]
        %v4887 = vld [vmem:[%s701 + $0x15a] sm:$0xff]
        %v4888 = vld [vmem:[%s701 + $0x16a] sm:$0xff]
        %v4889 = vld [vmem:[%s701 + $0x172] sm:$0xff]
        %v4890 = vperm.slane %v4209, 7
        %v4891 = vmul.f32 %v4858, %v4890
        %v4892 = vmul.f32 %v4859, %v4890
        %v4893 = vmul.f32 %v4860, %v4890
        %v4894 = vmul.f32 %v4861, %v4890
        %v4895 = vmul.f32 %v4862, %v4890
        %v4896 = vmul.f32 %v4863, %v4890
        %v4897 = vmul.f32 %v4864, %v4890
        %v4898 = vmul.f32 %v4865, %v4890
        %v4899 = vmul.f32 %v4866, %v4890
        %v4900 = vmul.f32 %v4867, %v4890
        %v4901 = vmul.f32 %v4868, %v4890
        %v4902 = vmul.f32 %v4869, %v4890
        %v4903 = vmul.f32 %v4870, %v4890
        %v4904 = vmul.f32 %v4871, %v4890
        %v4905 = vmul.f32 %v4872, %v4890
        %v4906 = vmul.f32 %v4873, %v4890
        %v4907 = vmul.f32 %v4874, %v4890
        %v4908 = vmul.f32 %v4875, %v4890
        %v4909 = vmul.f32 %v4876, %v4890
        %v4910 = vmul.f32 %v4877, %v4890
        %v4911 = vmul.f32 %v4878, %v4890
        %v4912 = vmul.f32 %v4879, %v4890
        %v4913 = vmul.f32 %v4880, %v4890
        %v4914 = vmul.f32 %v4881, %v4890
        %v4915 = vmul.f32 %v4882, %v4890
        %v4916 = vmul.f32 %v4883, %v4890
        %v4917 = vmul.f32 %v4884, %v4890
        %v4918 = vmul.f32 %v4885, %v4890
        %v4919 = vmul.f32 %v4886, %v4890
        %v4920 = vmul.f32 %v4887, %v4890
        %v4921 = vmul.f32 %v4888, %v4890
        %v4922 = vmul.f32 %v4889, %v4890
        %v4923 = vadd.f32 %v4826, %v4891
        %v4924 = vadd.f32 %v4827, %v4892
        %v4925 = vadd.f32 %v4828, %v4893
        %v4926 = vadd.f32 %v4829, %v4894
        %v4927 = vadd.f32 %v4830, %v4895
        %v4928 = vadd.f32 %v4831, %v4896
        %v4929 = vadd.f32 %v4832, %v4897
        %v4930 = vadd.f32 %v4833, %v4898
        %v4931 = vadd.f32 %v4834, %v4899
        %v4932 = vadd.f32 %v4835, %v4900
        %v4933 = vadd.f32 %v4836, %v4901
        %v4934 = vadd.f32 %v4837, %v4902
        %v4935 = vadd.f32 %v4838, %v4903
        %v4936 = vadd.f32 %v4839, %v4904
        %v4937 = vadd.f32 %v4840, %v4905
        %v4938 = vadd.f32 %v4841, %v4906
        %v4939 = vadd.f32 %v4842, %v4907
        %v4940 = vadd.f32 %v4843, %v4908
        %v4941 = vadd.f32 %v4844, %v4909
        %v4942 = vadd.f32 %v4845, %v4910
        %v4943 = vadd.f32 %v4846, %v4911
        %v4944 = vadd.f32 %v4847, %v4912
        %v4945 = vadd.f32 %v4848, %v4913
        %v4946 = vadd.f32 %v4849, %v4914
        %v4947 = vadd.f32 %v4850, %v4915
        %v4948 = vadd.f32 %v4851, %v4916
        %v4949 = vadd.f32 %v4852, %v4917
        %v4950 = vadd.f32 %v4853, %v4918
        %v4951 = vadd.f32 %v4854, %v4919
        %v4952 = vadd.f32 %v4855, %v4920
        %v4953 = vadd.f32 %v4856, %v4921
        %v4954 = vadd.f32 %v4857, %v4922
        %v4955 = vld [vmem:[%s701 + $0x3] sm:$0xff]
        %v4956 = vld [vmem:[%s701 + $0xb] sm:$0xff]
        %v4957 = vld [vmem:[%s701 + $0x1b] sm:$0xff]
        %v4958 = vld [vmem:[%s701 + $0x23] sm:$0xff]
        %v4959 = vld [vmem:[%s701 + $0x33] sm:$0xff]
        %v4960 = vld [vmem:[%s701 + $0x3b] sm:$0xff]
        %v4961 = vld [vmem:[%s701 + $0x4b] sm:$0xff]
        %v4962 = vld [vmem:[%s701 + $0x53] sm:$0xff]
        %v4963 = vld [vmem:[%s701 + $0x63] sm:$0xff]
        %v4964 = vld [vmem:[%s701 + $0x6b] sm:$0xff]
        %v4965 = vld [vmem:[%s701 + $0x7b] sm:$0xff]
        %v4966 = vld [vmem:[%s701 + $0x83] sm:$0xff]
        %v4967 = vld [vmem:[%s701 + $0x93] sm:$0xff]
        %v4968 = vld [vmem:[%s701 + $0x9b] sm:$0xff]
        %v4969 = vld [vmem:[%s701 + $0xab] sm:$0xff]
        %v4970 = vld [vmem:[%s701 + $0xb3] sm:$0xff]
        %v4971 = vld [vmem:[%s701 + $0xc3] sm:$0xff]
        %v4972 = vld [vmem:[%s701 + $0xcb] sm:$0xff]
        %v4973 = vld [vmem:[%s701 + $0xdb] sm:$0xff]
        %v4974 = vld [vmem:[%s701 + $0xe3] sm:$0xff]
        %v4975 = vld [vmem:[%s701 + $0xf3] sm:$0xff]
        %v4976 = vld [vmem:[%s701 + $0xfb] sm:$0xff]
        %v4977 = vld [vmem:[%s701 + $0x10b] sm:$0xff]
        %v4978 = vld [vmem:[%s701 + $0x113] sm:$0xff]
        %v4979 = vld [vmem:[%s701 + $0x123] sm:$0xff]
        %v4980 = vld [vmem:[%s701 + $0x12b] sm:$0xff]
        %v4981 = vld [vmem:[%s701 + $0x13b] sm:$0xff]
        %v4982 = vld [vmem:[%s701 + $0x143] sm:$0xff]
        %v4983 = vld [vmem:[%s701 + $0x153] sm:$0xff]
        %v4984 = vld [vmem:[%s701 + $0x15b] sm:$0xff]
        %v4985 = vld [vmem:[%s701 + $0x16b] sm:$0xff]
        %v4986 = vld [vmem:[%s701 + $0x173] sm:$0xff]
        %v4987 = vperm.slane %v4210, 0
        %v4988 = vmul.f32 %v4955, %v4987
        %v4989 = vmul.f32 %v4956, %v4987
        %v4990 = vmul.f32 %v4957, %v4987
        %v4991 = vmul.f32 %v4958, %v4987
        %v4992 = vmul.f32 %v4959, %v4987
        %v4993 = vmul.f32 %v4960, %v4987
        %v4994 = vmul.f32 %v4961, %v4987
        %v4995 = vmul.f32 %v4962, %v4987
        %v4996 = vmul.f32 %v4963, %v4987
        %v4997 = vmul.f32 %v4964, %v4987
        %v4998 = vmul.f32 %v4965, %v4987
        %v4999 = vmul.f32 %v4966, %v4987
        %v5000 = vmul.f32 %v4967, %v4987
        %v5001 = vmul.f32 %v4968, %v4987
        %v5002 = vmul.f32 %v4969, %v4987
        %v5003 = vmul.f32 %v4970, %v4987
        %v5004 = vmul.f32 %v4971, %v4987
        %v5005 = vmul.f32 %v4972, %v4987
        %v5006 = vmul.f32 %v4973, %v4987
        %v5007 = vmul.f32 %v4974, %v4987
        %v5008 = vmul.f32 %v4975, %v4987
        %v5009 = vmul.f32 %v4976, %v4987
        %v5010 = vmul.f32 %v4977, %v4987
        %v5011 = vmul.f32 %v4978, %v4987
        %v5012 = vmul.f32 %v4979, %v4987
        %v5013 = vmul.f32 %v4980, %v4987
        %v5014 = vmul.f32 %v4981, %v4987
        %v5015 = vmul.f32 %v4982, %v4987
        %v5016 = vmul.f32 %v4983, %v4987
        %v5017 = vmul.f32 %v4984, %v4987
        %v5018 = vmul.f32 %v4985, %v4987
        %v5019 = vmul.f32 %v4986, %v4987
        %v5020 = vadd.f32 %v4923, %v4988
        %v5021 = vadd.f32 %v4924, %v4989
        %v5022 = vadd.f32 %v4925, %v4990
        %v5023 = vadd.f32 %v4926, %v4991
        %v5024 = vadd.f32 %v4927, %v4992
        %v5025 = vadd.f32 %v4928, %v4993
        %v5026 = vadd.f32 %v4929, %v4994
        %v5027 = vadd.f32 %v4930, %v4995
        %v5028 = vadd.f32 %v4931, %v4996
        %v5029 = vadd.f32 %v4932, %v4997
        %v5030 = vadd.f32 %v4933, %v4998
        %v5031 = vadd.f32 %v4934, %v4999
        %v5032 = vadd.f32 %v4935, %v5000
        %v5033 = vadd.f32 %v4936, %v5001
        %v5034 = vadd.f32 %v4937, %v5002
        %v5035 = vadd.f32 %v4938, %v5003
        %v5036 = vadd.f32 %v4939, %v5004
        %v5037 = vadd.f32 %v4940, %v5005
        %v5038 = vadd.f32 %v4941, %v5006
        %v5039 = vadd.f32 %v4942, %v5007
        %v5040 = vadd.f32 %v4943, %v5008
        %v5041 = vadd.f32 %v4944, %v5009
        %v5042 = vadd.f32 %v4945, %v5010
        %v5043 = vadd.f32 %v4946, %v5011
        %v5044 = vadd.f32 %v4947, %v5012
        %v5045 = vadd.f32 %v4948, %v5013
        %v5046 = vadd.f32 %v4949, %v5014
        %v5047 = vadd.f32 %v4950, %v5015
        %v5048 = vadd.f32 %v4951, %v5016
        %v5049 = vadd.f32 %v4952, %v5017
        %v5050 = vadd.f32 %v4953, %v5018
        %v5051 = vadd.f32 %v4954, %v5019
        %vm5052 = vcmp.ge.f32.partialorder %v5020, 0.0
        %vm5053 = vcmp.ge.f32.partialorder %v5021, 0.0
        %vm5054 = vcmp.ge.f32.partialorder %v5022, 0.0
        %vm5055 = vcmp.ge.f32.partialorder %v5023, 0.0
        %vm5056 = vcmp.ge.f32.partialorder %v5024, 0.0
        %vm5057 = vcmp.ge.f32.partialorder %v5025, 0.0
        %vm5058 = vcmp.ge.f32.partialorder %v5026, 0.0
        %vm5059 = vcmp.ge.f32.partialorder %v5027, 0.0
        %vm5060 = vcmp.ge.f32.partialorder %v5028, 0.0
        %vm5061 = vcmp.ge.f32.partialorder %v5029, 0.0
        %vm5062 = vcmp.ge.f32.partialorder %v5030, 0.0
        %vm5063 = vcmp.ge.f32.partialorder %v5031, 0.0
        %vm5064 = vcmp.ge.f32.partialorder %v5032, 0.0
        %vm5065 = vcmp.ge.f32.partialorder %v5033, 0.0
        %vm5066 = vcmp.ge.f32.partialorder %v5034, 0.0
        %vm5067 = vcmp.ge.f32.partialorder %v5035, 0.0
        %vm5068 = vcmp.ge.f32.partialorder %v5036, 0.0
        %vm5069 = vcmp.ge.f32.partialorder %v5037, 0.0
        %vm5070 = vcmp.ge.f32.partialorder %v5038, 0.0
        %vm5071 = vcmp.ge.f32.partialorder %v5039, 0.0
        %vm5072 = vcmp.ge.f32.partialorder %v5040, 0.0
        %vm5073 = vcmp.ge.f32.partialorder %v5041, 0.0
        %vm5074 = vcmp.ge.f32.partialorder %v5042, 0.0
        %vm5075 = vcmp.ge.f32.partialorder %v5043, 0.0
        %vm5076 = vcmp.ge.f32.partialorder %v5044, 0.0
        %vm5077 = vcmp.ge.f32.partialorder %v5045, 0.0
        %vm5078 = vcmp.ge.f32.partialorder %v5046, 0.0
        %vm5079 = vcmp.ge.f32.partialorder %v5047, 0.0
        %vm5080 = vcmp.ge.f32.partialorder %v5048, 0.0
        %vm5081 = vcmp.ge.f32.partialorder %v5049, 0.0
        %vm5082 = vcmp.ge.f32.partialorder %v5050, 0.0
        %vm5083 = vcmp.ge.f32.partialorder %v5051, 0.0
        %v5084 = vstv %s436
        %v5085 = vmul.f32 %v5084, %v5020
        %v5086 = vmul.f32 %v5084, %v5021
        %v5087 = vmul.f32 %v5084, %v5022
        %v5088 = vmul.f32 %v5084, %v5023
        %v5089 = vmul.f32 %v5084, %v5024
        %v5090 = vmul.f32 %v5084, %v5025
        %v5091 = vmul.f32 %v5084, %v5026
        %v5092 = vmul.f32 %v5084, %v5027
        %v5093 = vmul.f32 %v5084, %v5028
        %v5094 = vmul.f32 %v5084, %v5029
        %v5095 = vmul.f32 %v5084, %v5030
        %v5096 = vmul.f32 %v5084, %v5031
        %v5097 = vmul.f32 %v5084, %v5032
        %v5098 = vmul.f32 %v5084, %v5033
        %v5099 = vmul.f32 %v5084, %v5034
        %v5100 = vmul.f32 %v5084, %v5035
        %v5101 = vmul.f32 %v5084, %v5036
        %v5102 = vmul.f32 %v5084, %v5037
        %v5103 = vmul.f32 %v5084, %v5038
        %v5104 = vmul.f32 %v5084, %v5039
        %v5105 = vmul.f32 %v5084, %v5040
        %v5106 = vmul.f32 %v5084, %v5041
        %v5107 = vmul.f32 %v5084, %v5042
        %v5108 = vmul.f32 %v5084, %v5043
        %v5109 = vmul.f32 %v5084, %v5044
        %v5110 = vmul.f32 %v5084, %v5045
        %v5111 = vmul.f32 %v5084, %v5046
        %v5112 = vmul.f32 %v5084, %v5047
        %v5113 = vmul.f32 %v5084, %v5048
        %v5114 = vmul.f32 %v5084, %v5049
        %v5115 = vmul.f32 %v5084, %v5050
        %v5116 = vmul.f32 %v5084, %v5051
        %v5117 = vsel %vm5052, %v5020, %v5085
        %v5118 = vsel %vm5053, %v5021, %v5086
        %v5119 = vsel %vm5054, %v5022, %v5087
        %v5120 = vsel %vm5055, %v5023, %v5088
        %v5121 = vsel %vm5056, %v5024, %v5089
        %v5122 = vsel %vm5057, %v5025, %v5090
        %v5123 = vsel %vm5058, %v5026, %v5091
        %v5124 = vsel %vm5059, %v5027, %v5092
        %v5125 = vsel %vm5060, %v5028, %v5093
        %v5126 = vsel %vm5061, %v5029, %v5094
        %v5127 = vsel %vm5062, %v5030, %v5095
        %v5128 = vsel %vm5063, %v5031, %v5096
        %v5129 = vsel %vm5064, %v5032, %v5097
        %v5130 = vsel %vm5065, %v5033, %v5098
        %v5131 = vsel %vm5066, %v5034, %v5099
        %v5132 = vsel %vm5067, %v5035, %v5100
        %v5133 = vsel %vm5068, %v5036, %v5101
        %v5134 = vsel %vm5069, %v5037, %v5102
        %v5135 = vsel %vm5070, %v5038, %v5103
        %v5136 = vsel %vm5071, %v5039, %v5104
        %v5137 = vsel %vm5072, %v5040, %v5105
        %v5138 = vsel %vm5073, %v5041, %v5106
        %v5139 = vsel %vm5074, %v5042, %v5107
        %v5140 = vsel %vm5075, %v5043, %v5108
        %v5141 = vsel %vm5076, %v5044, %v5109
        %v5142 = vsel %vm5077, %v5045, %v5110
        %v5143 = vsel %vm5078, %v5046, %v5111
        %v5144 = vsel %vm5079, %v5047, %v5112
        %v5145 = vsel %vm5080, %v5048, %v5113
        %v5146 = vsel %vm5081, %v5049, %v5114
        %v5147 = vsel %vm5082, %v5050, %v5115
        %v5148 = vsel %vm5083, %v5051, %v5116
        %s5149 = scalar_lea.vmem %s2, 16
        %v5150 = vld [vmem:[%s5149] sm:$0xff]
        %v5151 = vld [vmem:[%s5149 + $0x8] sm:$0x1]
        %v5152 = vld [vmem:[#allocation2] sm:$0xff]
        %v5153 = vld [vmem:[#allocation2 + $0x8] sm:$0xff]
        %v5154 = vld [vmem:[#allocation2 + $0x18] sm:$0xff]
        %v5155 = vld [vmem:[#allocation2 + $0x20] sm:$0xff]
        %v5156 = vld [vmem:[#allocation2 + $0x30] sm:$0xff]
        %v5157 = vld [vmem:[#allocation2 + $0x38] sm:$0xff]
        %v5158 = vld [vmem:[#allocation2 + $0x48] sm:$0xff]
        %v5159 = vld [vmem:[#allocation2 + $0x50] sm:$0xff]
        %v5160 = vld [vmem:[#allocation2 + $0x60] sm:$0xff]
        %v5161 = vld [vmem:[#allocation2 + $0x68] sm:$0xff]
        %v5162 = vld [vmem:[#allocation2 + $0x78] sm:$0xff]
        %v5163 = vld [vmem:[#allocation2 + $0x80] sm:$0xff]
        %v5164 = vld [vmem:[#allocation2 + $0x90] sm:$0xff]
        %v5165 = vld [vmem:[#allocation2 + $0x98] sm:$0xff]
        %v5166 = vld [vmem:[#allocation2 + $0xa8] sm:$0xff]
        %v5167 = vld [vmem:[#allocation2 + $0xb0] sm:$0xff]
        %v5168 = vld [vmem:[#allocation2 + $0xc0] sm:$0xff]
        %v5169 = vld [vmem:[#allocation2 + $0xc8] sm:$0xff]
        %v5170 = vld [vmem:[#allocation2 + $0xd8] sm:$0xff]
        %v5171 = vld [vmem:[#allocation2 + $0xe0] sm:$0xff]
        %v5172 = vld [vmem:[#allocation2 + $0xf0] sm:$0xff]
        %v5173 = vld [vmem:[#allocation2 + $0xf8] sm:$0xff]
        %v5174 = vld [vmem:[#allocation2 + $0x108] sm:$0xff]
        %v5175 = vld [vmem:[#allocation2 + $0x110] sm:$0xff]
        %v5176 = vld [vmem:[#allocation2 + $0x120] sm:$0xff]
        %v5177 = vld [vmem:[#allocation2 + $0x128] sm:$0xff]
        %v5178 = vld [vmem:[#allocation2 + $0x138] sm:$0xff]
        %v5179 = vld [vmem:[#allocation2 + $0x140] sm:$0xff]
        %v5180 = vld [vmem:[#allocation2 + $0x150] sm:$0xff]
        %v5181 = vld [vmem:[#allocation2 + $0x158] sm:$0xff]
        %v5182 = vld [vmem:[#allocation2 + $0x168] sm:$0xff]
        %v5183 = vld [vmem:[#allocation2 + $0x170] sm:$0xff]
        %v5184 = vperm.slane %v5150, 0
        %v5185 = vmul.f32 %v5152, %v5184
        %v5186 = vmul.f32 %v5153, %v5184
        %v5187 = vmul.f32 %v5154, %v5184
        %v5188 = vmul.f32 %v5155, %v5184
        %v5189 = vmul.f32 %v5156, %v5184
        %v5190 = vmul.f32 %v5157, %v5184
        %v5191 = vmul.f32 %v5158, %v5184
        %v5192 = vmul.f32 %v5159, %v5184
        %v5193 = vmul.f32 %v5160, %v5184
        %v5194 = vmul.f32 %v5161, %v5184
        %v5195 = vmul.f32 %v5162, %v5184
        %v5196 = vmul.f32 %v5163, %v5184
        %v5197 = vmul.f32 %v5164, %v5184
        %v5198 = vmul.f32 %v5165, %v5184
        %v5199 = vmul.f32 %v5166, %v5184
        %v5200 = vmul.f32 %v5167, %v5184
        %v5201 = vmul.f32 %v5168, %v5184
        %v5202 = vmul.f32 %v5169, %v5184
        %v5203 = vmul.f32 %v5170, %v5184
        %v5204 = vmul.f32 %v5171, %v5184
        %v5205 = vmul.f32 %v5172, %v5184
        %v5206 = vmul.f32 %v5173, %v5184
        %v5207 = vmul.f32 %v5174, %v5184
        %v5208 = vmul.f32 %v5175, %v5184
        %v5209 = vmul.f32 %v5176, %v5184
        %v5210 = vmul.f32 %v5177, %v5184
        %v5211 = vmul.f32 %v5178, %v5184
        %v5212 = vmul.f32 %v5179, %v5184
        %v5213 = vmul.f32 %v5180, %v5184
        %v5214 = vmul.f32 %v5181, %v5184
        %v5215 = vmul.f32 %v5182, %v5184
        %v5216 = vmul.f32 %v5183, %v5184
        %v5217 = vld [vmem:[#allocation2 + $0x2] sm:$0xff]
        %v5218 = vld [vmem:[#allocation2 + $0xa] sm:$0xff]
        %v5219 = vld [vmem:[#allocation2 + $0x1a] sm:$0xff]
        %v5220 = vld [vmem:[#allocation2 + $0x22] sm:$0xff]
        %v5221 = vld [vmem:[#allocation2 + $0x32] sm:$0xff]
        %v5222 = vld [vmem:[#allocation2 + $0x3a] sm:$0xff]
        %v5223 = vld [vmem:[#allocation2 + $0x4a] sm:$0xff]
        %v5224 = vld [vmem:[#allocation2 + $0x52] sm:$0xff]
        %v5225 = vld [vmem:[#allocation2 + $0x62] sm:$0xff]
        %v5226 = vld [vmem:[#allocation2 + $0x6a] sm:$0xff]
        %v5227 = vld [vmem:[#allocation2 + $0x7a] sm:$0xff]
        %v5228 = vld [vmem:[#allocation2 + $0x82] sm:$0xff]
        %v5229 = vld [vmem:[#allocation2 + $0x92] sm:$0xff]
        %v5230 = vld [vmem:[#allocation2 + $0x9a] sm:$0xff]
        %v5231 = vld [vmem:[#allocation2 + $0xaa] sm:$0xff]
        %v5232 = vld [vmem:[#allocation2 + $0xb2] sm:$0xff]
        %v5233 = vld [vmem:[#allocation2 + $0xc2] sm:$0xff]
        %v5234 = vld [vmem:[#allocation2 + $0xca] sm:$0xff]
        %v5235 = vld [vmem:[#allocation2 + $0xda] sm:$0xff]
        %v5236 = vld [vmem:[#allocation2 + $0xe2] sm:$0xff]
        %v5237 = vld [vmem:[#allocation2 + $0xf2] sm:$0xff]
        %v5238 = vld [vmem:[#allocation2 + $0xfa] sm:$0xff]
        %v5239 = vld [vmem:[#allocation2 + $0x10a] sm:$0xff]
        %v5240 = vld [vmem:[#allocation2 + $0x112] sm:$0xff]
        %v5241 = vld [vmem:[#allocation2 + $0x122] sm:$0xff]
        %v5242 = vld [vmem:[#allocation2 + $0x12a] sm:$0xff]
        %v5243 = vld [vmem:[#allocation2 + $0x13a] sm:$0xff]
        %v5244 = vld [vmem:[#allocation2 + $0x142] sm:$0xff]
        %v5245 = vld [vmem:[#allocation2 + $0x152] sm:$0xff]
        %v5246 = vld [vmem:[#allocation2 + $0x15a] sm:$0xff]
        %v5247 = vld [vmem:[#allocation2 + $0x16a] sm:$0xff]
        %v5248 = vld [vmem:[#allocation2 + $0x172] sm:$0xff]
        %v5249 = vperm.slane %v5150, 1
        %v5250 = vmul.f32 %v5217, %v5249
        %v5251 = vmul.f32 %v5218, %v5249
        %v5252 = vmul.f32 %v5219, %v5249
        %v5253 = vmul.f32 %v5220, %v5249
        %v5254 = vmul.f32 %v5221, %v5249
        %v5255 = vmul.f32 %v5222, %v5249
        %v5256 = vmul.f32 %v5223, %v5249
        %v5257 = vmul.f32 %v5224, %v5249
        %v5258 = vmul.f32 %v5225, %v5249
        %v5259 = vmul.f32 %v5226, %v5249
        %v5260 = vmul.f32 %v5227, %v5249
        %v5261 = vmul.f32 %v5228, %v5249
        %v5262 = vmul.f32 %v5229, %v5249
        %v5263 = vmul.f32 %v5230, %v5249
        %v5264 = vmul.f32 %v5231, %v5249
        %v5265 = vmul.f32 %v5232, %v5249
        %v5266 = vmul.f32 %v5233, %v5249
        %v5267 = vmul.f32 %v5234, %v5249
        %v5268 = vmul.f32 %v5235, %v5249
        %v5269 = vmul.f32 %v5236, %v5249
        %v5270 = vmul.f32 %v5237, %v5249
        %v5271 = vmul.f32 %v5238, %v5249
        %v5272 = vmul.f32 %v5239, %v5249
        %v5273 = vmul.f32 %v5240, %v5249
        %v5274 = vmul.f32 %v5241, %v5249
        %v5275 = vmul.f32 %v5242, %v5249
        %v5276 = vmul.f32 %v5243, %v5249
        %v5277 = vmul.f32 %v5244, %v5249
        %v5278 = vmul.f32 %v5245, %v5249
        %v5279 = vmul.f32 %v5246, %v5249
        %v5280 = vmul.f32 %v5247, %v5249
        %v5281 = vmul.f32 %v5248, %v5249
        %v5282 = vadd.f32 %v5185, %v5250
        %v5283 = vadd.f32 %v5186, %v5251
        %v5284 = vadd.f32 %v5187, %v5252
        %v5285 = vadd.f32 %v5188, %v5253
        %v5286 = vadd.f32 %v5189, %v5254
        %v5287 = vadd.f32 %v5190, %v5255
        %v5288 = vadd.f32 %v5191, %v5256
        %v5289 = vadd.f32 %v5192, %v5257
        %v5290 = vadd.f32 %v5193, %v5258
        %v5291 = vadd.f32 %v5194, %v5259
        %v5292 = vadd.f32 %v5195, %v5260
        %v5293 = vadd.f32 %v5196, %v5261
        %v5294 = vadd.f32 %v5197, %v5262
        %v5295 = vadd.f32 %v5198, %v5263
        %v5296 = vadd.f32 %v5199, %v5264
        %v5297 = vadd.f32 %v5200, %v5265
        %v5298 = vadd.f32 %v5201, %v5266
        %v5299 = vadd.f32 %v5202, %v5267
        %v5300 = vadd.f32 %v5203, %v5268
        %v5301 = vadd.f32 %v5204, %v5269
        %v5302 = vadd.f32 %v5205, %v5270
        %v5303 = vadd.f32 %v5206, %v5271
        %v5304 = vadd.f32 %v5207, %v5272
        %v5305 = vadd.f32 %v5208, %v5273
        %v5306 = vadd.f32 %v5209, %v5274
        %v5307 = vadd.f32 %v5210, %v5275
        %v5308 = vadd.f32 %v5211, %v5276
        %v5309 = vadd.f32 %v5212, %v5277
        %v5310 = vadd.f32 %v5213, %v5278
        %v5311 = vadd.f32 %v5214, %v5279
        %v5312 = vadd.f32 %v5215, %v5280
        %v5313 = vadd.f32 %v5216, %v5281
        %v5314 = vld [vmem:[#allocation2 + $0x4] sm:$0xff]
        %v5315 = vld [vmem:[#allocation2 + $0xc] sm:$0xff]
        %v5316 = vld [vmem:[#allocation2 + $0x1c] sm:$0xff]
        %v5317 = vld [vmem:[#allocation2 + $0x24] sm:$0xff]
        %v5318 = vld [vmem:[#allocation2 + $0x34] sm:$0xff]
        %v5319 = vld [vmem:[#allocation2 + $0x3c] sm:$0xff]
        %v5320 = vld [vmem:[#allocation2 + $0x4c] sm:$0xff]
        %v5321 = vld [vmem:[#allocation2 + $0x54] sm:$0xff]
        %v5322 = vld [vmem:[#allocation2 + $0x64] sm:$0xff]
        %v5323 = vld [vmem:[#allocation2 + $0x6c] sm:$0xff]
        %v5324 = vld [vmem:[#allocation2 + $0x7c] sm:$0xff]
        %v5325 = vld [vmem:[#allocation2 + $0x84] sm:$0xff]
        %v5326 = vld [vmem:[#allocation2 + $0x94] sm:$0xff]
        %v5327 = vld [vmem:[#allocation2 + $0x9c] sm:$0xff]
        %v5328 = vld [vmem:[#allocation2 + $0xac] sm:$0xff]
        %v5329 = vld [vmem:[#allocation2 + $0xb4] sm:$0xff]
        %v5330 = vld [vmem:[#allocation2 + $0xc4] sm:$0xff]
        %v5331 = vld [vmem:[#allocation2 + $0xcc] sm:$0xff]
        %v5332 = vld [vmem:[#allocation2 + $0xdc] sm:$0xff]
        %v5333 = vld [vmem:[#allocation2 + $0xe4] sm:$0xff]
        %v5334 = vld [vmem:[#allocation2 + $0xf4] sm:$0xff]
        %v5335 = vld [vmem:[#allocation2 + $0xfc] sm:$0xff]
        %v5336 = vld [vmem:[#allocation2 + $0x10c] sm:$0xff]
        %v5337 = vld [vmem:[#allocation2 + $0x114] sm:$0xff]
        %v5338 = vld [vmem:[#allocation2 + $0x124] sm:$0xff]
        %v5339 = vld [vmem:[#allocation2 + $0x12c] sm:$0xff]
        %v5340 = vld [vmem:[#allocation2 + $0x13c] sm:$0xff]
        %v5341 = vld [vmem:[#allocation2 + $0x144] sm:$0xff]
        %v5342 = vld [vmem:[#allocation2 + $0x154] sm:$0xff]
        %v5343 = vld [vmem:[#allocation2 + $0x15c] sm:$0xff]
        %v5344 = vld [vmem:[#allocation2 + $0x16c] sm:$0xff]
        %v5345 = vld [vmem:[#allocation2 + $0x174] sm:$0xff]
        %v5346 = vperm.slane %v5150, 2
        %v5347 = vmul.f32 %v5314, %v5346
        %v5348 = vmul.f32 %v5315, %v5346
        %v5349 = vmul.f32 %v5316, %v5346
        %v5350 = vmul.f32 %v5317, %v5346
        %v5351 = vmul.f32 %v5318, %v5346
        %v5352 = vmul.f32 %v5319, %v5346
        %v5353 = vmul.f32 %v5320, %v5346
        %v5354 = vmul.f32 %v5321, %v5346
        %v5355 = vmul.f32 %v5322, %v5346
        %v5356 = vmul.f32 %v5323, %v5346
        %v5357 = vmul.f32 %v5324, %v5346
        %v5358 = vmul.f32 %v5325, %v5346
        %v5359 = vmul.f32 %v5326, %v5346
        %v5360 = vmul.f32 %v5327, %v5346
        %v5361 = vmul.f32 %v5328, %v5346
        %v5362 = vmul.f32 %v5329, %v5346
        %v5363 = vmul.f32 %v5330, %v5346
        %v5364 = vmul.f32 %v5331, %v5346
        %v5365 = vmul.f32 %v5332, %v5346
        %v5366 = vmul.f32 %v5333, %v5346
        %v5367 = vmul.f32 %v5334, %v5346
        %v5368 = vmul.f32 %v5335, %v5346
        %v5369 = vmul.f32 %v5336, %v5346
        %v5370 = vmul.f32 %v5337, %v5346
        %v5371 = vmul.f32 %v5338, %v5346
        %v5372 = vmul.f32 %v5339, %v5346
        %v5373 = vmul.f32 %v5340, %v5346
        %v5374 = vmul.f32 %v5341, %v5346
        %v5375 = vmul.f32 %v5342, %v5346
        %v5376 = vmul.f32 %v5343, %v5346
        %v5377 = vmul.f32 %v5344, %v5346
        %v5378 = vmul.f32 %v5345, %v5346
        %v5379 = vadd.f32 %v5282, %v5347
        %v5380 = vadd.f32 %v5283, %v5348
        %v5381 = vadd.f32 %v5284, %v5349
        %v5382 = vadd.f32 %v5285, %v5350
        %v5383 = vadd.f32 %v5286, %v5351
        %v5384 = vadd.f32 %v5287, %v5352
        %v5385 = vadd.f32 %v5288, %v5353
        %v5386 = vadd.f32 %v5289, %v5354
        %v5387 = vadd.f32 %v5290, %v5355
        %v5388 = vadd.f32 %v5291, %v5356
        %v5389 = vadd.f32 %v5292, %v5357
        %v5390 = vadd.f32 %v5293, %v5358
        %v5391 = vadd.f32 %v5294, %v5359
        %v5392 = vadd.f32 %v5295, %v5360
        %v5393 = vadd.f32 %v5296, %v5361
        %v5394 = vadd.f32 %v5297, %v5362
        %v5395 = vadd.f32 %v5298, %v5363
        %v5396 = vadd.f32 %v5299, %v5364
        %v5397 = vadd.f32 %v5300, %v5365
        %v5398 = vadd.f32 %v5301, %v5366
        %v5399 = vadd.f32 %v5302, %v5367
        %v5400 = vadd.f32 %v5303, %v5368
        %v5401 = vadd.f32 %v5304, %v5369
        %v5402 = vadd.f32 %v5305, %v5370
        %v5403 = vadd.f32 %v5306, %v5371
        %v5404 = vadd.f32 %v5307, %v5372
        %v5405 = vadd.f32 %v5308, %v5373
        %v5406 = vadd.f32 %v5309, %v5374
        %v5407 = vadd.f32 %v5310, %v5375
        %v5408 = vadd.f32 %v5311, %v5376
        %v5409 = vadd.f32 %v5312, %v5377
        %v5410 = vadd.f32 %v5313, %v5378
        %v5411 = vld [vmem:[%s475] sm:$0xff]
        %v5412 = vld [vmem:[%s475 + $0x8] sm:$0xff]
        %v5413 = vld [vmem:[%s475 + $0x18] sm:$0xff]
        %v5414 = vld [vmem:[%s475 + $0x20] sm:$0xff]
        %v5415 = vld [vmem:[%s475 + $0x30] sm:$0xff]
        %v5416 = vld [vmem:[%s475 + $0x38] sm:$0xff]
        %v5417 = vld [vmem:[%s475 + $0x48] sm:$0xff]
        %v5418 = vld [vmem:[%s475 + $0x50] sm:$0xff]
        %v5419 = vld [vmem:[%s475 + $0x60] sm:$0xff]
        %v5420 = vld [vmem:[%s475 + $0x68] sm:$0xff]
        %v5421 = vld [vmem:[%s475 + $0x78] sm:$0xff]
        %v5422 = vld [vmem:[%s475 + $0x80] sm:$0xff]
        %v5423 = vld [vmem:[%s475 + $0x90] sm:$0xff]
        %v5424 = vld [vmem:[%s475 + $0x98] sm:$0xff]
        %v5425 = vld [vmem:[%s475 + $0xa8] sm:$0xff]
        %v5426 = vld [vmem:[%s475 + $0xb0] sm:$0xff]
        %v5427 = vld [vmem:[%s475 + $0xc0] sm:$0xff]
        %v5428 = vld [vmem:[%s475 + $0xc8] sm:$0xff]
        %v5429 = vld [vmem:[%s475 + $0xd8] sm:$0xff]
        %v5430 = vld [vmem:[%s475 + $0xe0] sm:$0xff]
        %v5431 = vld [vmem:[%s475 + $0xf0] sm:$0xff]
        %v5432 = vld [vmem:[%s475 + $0xf8] sm:$0xff]
        %v5433 = vld [vmem:[%s475 + $0x108] sm:$0xff]
        %v5434 = vld [vmem:[%s475 + $0x110] sm:$0xff]
        %v5435 = vld [vmem:[%s475 + $0x120] sm:$0xff]
        %v5436 = vld [vmem:[%s475 + $0x128] sm:$0xff]
        %v5437 = vld [vmem:[%s475 + $0x138] sm:$0xff]
        %v5438 = vld [vmem:[%s475 + $0x140] sm:$0xff]
        %v5439 = vld [vmem:[%s475 + $0x150] sm:$0xff]
        %v5440 = vld [vmem:[%s475 + $0x158] sm:$0xff]
        %v5441 = vld [vmem:[%s475 + $0x168] sm:$0xff]
        %v5442 = vld [vmem:[%s475 + $0x170] sm:$0xff]
        %v5443 = vperm.slane %v5150, 3
        %v5444 = vmul.f32 %v5411, %v5443
        %v5445 = vmul.f32 %v5412, %v5443
        %v5446 = vmul.f32 %v5413, %v5443
        %v5447 = vmul.f32 %v5414, %v5443
        %v5448 = vmul.f32 %v5415, %v5443
        %v5449 = vmul.f32 %v5416, %v5443
        %v5450 = vmul.f32 %v5417, %v5443
        %v5451 = vmul.f32 %v5418, %v5443
        %v5452 = vmul.f32 %v5419, %v5443
        %v5453 = vmul.f32 %v5420, %v5443
        %v5454 = vmul.f32 %v5421, %v5443
        %v5455 = vmul.f32 %v5422, %v5443
        %v5456 = vmul.f32 %v5423, %v5443
        %v5457 = vmul.f32 %v5424, %v5443
        %v5458 = vmul.f32 %v5425, %v5443
        %v5459 = vmul.f32 %v5426, %v5443
        %v5460 = vmul.f32 %v5427, %v5443
        %v5461 = vmul.f32 %v5428, %v5443
        %v5462 = vmul.f32 %v5429, %v5443
        %v5463 = vmul.f32 %v5430, %v5443
        %v5464 = vmul.f32 %v5431, %v5443
        %v5465 = vmul.f32 %v5432, %v5443
        %v5466 = vmul.f32 %v5433, %v5443
        %v5467 = vmul.f32 %v5434, %v5443
        %v5468 = vmul.f32 %v5435, %v5443
        %v5469 = vmul.f32 %v5436, %v5443
        %v5470 = vmul.f32 %v5437, %v5443
        %v5471 = vmul.f32 %v5438, %v5443
        %v5472 = vmul.f32 %v5439, %v5443
        %v5473 = vmul.f32 %v5440, %v5443
        %v5474 = vmul.f32 %v5441, %v5443
        %v5475 = vmul.f32 %v5442, %v5443
        %v5476 = vadd.f32 %v5379, %v5444
        %v5477 = vadd.f32 %v5380, %v5445
        %v5478 = vadd.f32 %v5381, %v5446
        %v5479 = vadd.f32 %v5382, %v5447
        %v5480 = vadd.f32 %v5383, %v5448
        %v5481 = vadd.f32 %v5384, %v5449
        %v5482 = vadd.f32 %v5385, %v5450
        %v5483 = vadd.f32 %v5386, %v5451
        %v5484 = vadd.f32 %v5387, %v5452
        %v5485 = vadd.f32 %v5388, %v5453
        %v5486 = vadd.f32 %v5389, %v5454
        %v5487 = vadd.f32 %v5390, %v5455
        %v5488 = vadd.f32 %v5391, %v5456
        %v5489 = vadd.f32 %v5392, %v5457
        %v5490 = vadd.f32 %v5393, %v5458
        %v5491 = vadd.f32 %v5394, %v5459
        %v5492 = vadd.f32 %v5395, %v5460
        %v5493 = vadd.f32 %v5396, %v5461
        %v5494 = vadd.f32 %v5397, %v5462
        %v5495 = vadd.f32 %v5398, %v5463
        %v5496 = vadd.f32 %v5399, %v5464
        %v5497 = vadd.f32 %v5400, %v5465
        %v5498 = vadd.f32 %v5401, %v5466
        %v5499 = vadd.f32 %v5402, %v5467
        %v5500 = vadd.f32 %v5403, %v5468
        %v5501 = vadd.f32 %v5404, %v5469
        %v5502 = vadd.f32 %v5405, %v5470
        %v5503 = vadd.f32 %v5406, %v5471
        %v5504 = vadd.f32 %v5407, %v5472
        %v5505 = vadd.f32 %v5408, %v5473
        %v5506 = vadd.f32 %v5409, %v5474
        %v5507 = vadd.f32 %v5410, %v5475
        %v5508 = vperm.slane %v5150, 4
        %v5509 = vmul.f32 %v4567, %v5508
        %v5510 = vmul.f32 %v4568, %v5508
        %v5511 = vmul.f32 %v4569, %v5508
        %v5512 = vmul.f32 %v4570, %v5508
        %v5513 = vmul.f32 %v4571, %v5508
        %v5514 = vmul.f32 %v4572, %v5508
        %v5515 = vmul.f32 %v4573, %v5508
        %v5516 = vmul.f32 %v4574, %v5508
        %v5517 = vmul.f32 %v4575, %v5508
        %v5518 = vmul.f32 %v4576, %v5508
        %v5519 = vmul.f32 %v4577, %v5508
        %v5520 = vmul.f32 %v4578, %v5508
        %v5521 = vmul.f32 %v4579, %v5508
        %v5522 = vmul.f32 %v4580, %v5508
        %v5523 = vmul.f32 %v4581, %v5508
        %v5524 = vmul.f32 %v4582, %v5508
        %v5525 = vmul.f32 %v4583, %v5508
        %v5526 = vmul.f32 %v4584, %v5508
        %v5527 = vmul.f32 %v4585, %v5508
        %v5528 = vmul.f32 %v4586, %v5508
        %v5529 = vmul.f32 %v4587, %v5508
        %v5530 = vmul.f32 %v4588, %v5508
        %v5531 = vmul.f32 %v4589, %v5508
        %v5532 = vmul.f32 %v4590, %v5508
        %v5533 = vmul.f32 %v4591, %v5508
        %v5534 = vmul.f32 %v4592, %v5508
        %v5535 = vmul.f32 %v4593, %v5508
        %v5536 = vmul.f32 %v4594, %v5508
        %v5537 = vmul.f32 %v4595, %v5508
        %v5538 = vmul.f32 %v4596, %v5508
        %v5539 = vmul.f32 %v4597, %v5508
        %v5540 = vmul.f32 %v4598, %v5508
        %v5541 = vadd.f32 %v5476, %v5509
        %v5542 = vadd.f32 %v5477, %v5510
        %v5543 = vadd.f32 %v5478, %v5511
        %v5544 = vadd.f32 %v5479, %v5512
        %v5545 = vadd.f32 %v5480, %v5513
        %v5546 = vadd.f32 %v5481, %v5514
        %v5547 = vadd.f32 %v5482, %v5515
        %v5548 = vadd.f32 %v5483, %v5516
        %v5549 = vadd.f32 %v5484, %v5517
        %v5550 = vadd.f32 %v5485, %v5518
        %v5551 = vadd.f32 %v5486, %v5519
        %v5552 = vadd.f32 %v5487, %v5520
        %v5553 = vadd.f32 %v5488, %v5521
        %v5554 = vadd.f32 %v5489, %v5522
        %v5555 = vadd.f32 %v5490, %v5523
        %v5556 = vadd.f32 %v5491, %v5524
        %v5557 = vadd.f32 %v5492, %v5525
        %v5558 = vadd.f32 %v5493, %v5526
        %v5559 = vadd.f32 %v5494, %v5527
        %v5560 = vadd.f32 %v5495, %v5528
        %v5561 = vadd.f32 %v5496, %v5529
        %v5562 = vadd.f32 %v5497, %v5530
        %v5563 = vadd.f32 %v5498, %v5531
        %v5564 = vadd.f32 %v5499, %v5532
        %v5565 = vadd.f32 %v5500, %v5533
        %v5566 = vadd.f32 %v5501, %v5534
        %v5567 = vadd.f32 %v5502, %v5535
        %v5568 = vadd.f32 %v5503, %v5536
        %v5569 = vadd.f32 %v5504, %v5537
        %v5570 = vadd.f32 %v5505, %v5538
        %v5571 = vadd.f32 %v5506, %v5539
        %v5572 = vadd.f32 %v5507, %v5540
        %v5573 = vld [vmem:[%s475 + $0x4] sm:$0xff]
        %v5574 = vld [vmem:[%s475 + $0xc] sm:$0xff]
        %v5575 = vld [vmem:[%s475 + $0x1c] sm:$0xff]
        %v5576 = vld [vmem:[%s475 + $0x24] sm:$0xff]
        %v5577 = vld [vmem:[%s475 + $0x34] sm:$0xff]
        %v5578 = vld [vmem:[%s475 + $0x3c] sm:$0xff]
        %v5579 = vld [vmem:[%s475 + $0x4c] sm:$0xff]
        %v5580 = vld [vmem:[%s475 + $0x54] sm:$0xff]
        %v5581 = vld [vmem:[%s475 + $0x64] sm:$0xff]
        %v5582 = vld [vmem:[%s475 + $0x6c] sm:$0xff]
        %v5583 = vld [vmem:[%s475 + $0x7c] sm:$0xff]
        %v5584 = vld [vmem:[%s475 + $0x84] sm:$0xff]
        %v5585 = vld [vmem:[%s475 + $0x94] sm:$0xff]
        %v5586 = vld [vmem:[%s475 + $0x9c] sm:$0xff]
        %v5587 = vld [vmem:[%s475 + $0xac] sm:$0xff]
        %v5588 = vld [vmem:[%s475 + $0xb4] sm:$0xff]
        %v5589 = vld [vmem:[%s475 + $0xc4] sm:$0xff]
        %v5590 = vld [vmem:[%s475 + $0xcc] sm:$0xff]
        %v5591 = vld [vmem:[%s475 + $0xdc] sm:$0xff]
        %v5592 = vld [vmem:[%s475 + $0xe4] sm:$0xff]
        %v5593 = vld [vmem:[%s475 + $0xf4] sm:$0xff]
        %v5594 = vld [vmem:[%s475 + $0xfc] sm:$0xff]
        %v5595 = vld [vmem:[%s475 + $0x10c] sm:$0xff]
        %v5596 = vld [vmem:[%s475 + $0x114] sm:$0xff]
        %v5597 = vld [vmem:[%s475 + $0x124] sm:$0xff]
        %v5598 = vld [vmem:[%s475 + $0x12c] sm:$0xff]
        %v5599 = vld [vmem:[%s475 + $0x13c] sm:$0xff]
        %v5600 = vld [vmem:[%s475 + $0x144] sm:$0xff]
        %v5601 = vld [vmem:[%s475 + $0x154] sm:$0xff]
        %v5602 = vld [vmem:[%s475 + $0x15c] sm:$0xff]
        %v5603 = vld [vmem:[%s475 + $0x16c] sm:$0xff]
        %v5604 = vld [vmem:[%s475 + $0x174] sm:$0xff]
        %v5605 = vperm.slane %v5150, 5
        %v5606 = vmul.f32 %v5573, %v5605
        %v5607 = vmul.f32 %v5574, %v5605
        %v5608 = vmul.f32 %v5575, %v5605
        %v5609 = vmul.f32 %v5576, %v5605
        %v5610 = vmul.f32 %v5577, %v5605
        %v5611 = vmul.f32 %v5578, %v5605
        %v5612 = vmul.f32 %v5579, %v5605
        %v5613 = vmul.f32 %v5580, %v5605
        %v5614 = vmul.f32 %v5581, %v5605
        %v5615 = vmul.f32 %v5582, %v5605
        %v5616 = vmul.f32 %v5583, %v5605
        %v5617 = vmul.f32 %v5584, %v5605
        %v5618 = vmul.f32 %v5585, %v5605
        %v5619 = vmul.f32 %v5586, %v5605
        %v5620 = vmul.f32 %v5587, %v5605
        %v5621 = vmul.f32 %v5588, %v5605
        %v5622 = vmul.f32 %v5589, %v5605
        %v5623 = vmul.f32 %v5590, %v5605
        %v5624 = vmul.f32 %v5591, %v5605
        %v5625 = vmul.f32 %v5592, %v5605
        %v5626 = vmul.f32 %v5593, %v5605
        %v5627 = vmul.f32 %v5594, %v5605
        %v5628 = vmul.f32 %v5595, %v5605
        %v5629 = vmul.f32 %v5596, %v5605
        %v5630 = vmul.f32 %v5597, %v5605
        %v5631 = vmul.f32 %v5598, %v5605
        %v5632 = vmul.f32 %v5599, %v5605
        %v5633 = vmul.f32 %v5600, %v5605
        %v5634 = vmul.f32 %v5601, %v5605
        %v5635 = vmul.f32 %v5602, %v5605
        %v5636 = vmul.f32 %v5603, %v5605
        %v5637 = vmul.f32 %v5604, %v5605
        %v5638 = vadd.f32 %v5541, %v5606
        %v5639 = vadd.f32 %v5542, %v5607
        %v5640 = vadd.f32 %v5543, %v5608
        %v5641 = vadd.f32 %v5544, %v5609
        %v5642 = vadd.f32 %v5545, %v5610
        %v5643 = vadd.f32 %v5546, %v5611
        %v5644 = vadd.f32 %v5547, %v5612
        %v5645 = vadd.f32 %v5548, %v5613
        %v5646 = vadd.f32 %v5549, %v5614
        %v5647 = vadd.f32 %v5550, %v5615
        %v5648 = vadd.f32 %v5551, %v5616
        %v5649 = vadd.f32 %v5552, %v5617
        %v5650 = vadd.f32 %v5553, %v5618
        %v5651 = vadd.f32 %v5554, %v5619
        %v5652 = vadd.f32 %v5555, %v5620
        %v5653 = vadd.f32 %v5556, %v5621
        %v5654 = vadd.f32 %v5557, %v5622
        %v5655 = vadd.f32 %v5558, %v5623
        %v5656 = vadd.f32 %v5559, %v5624
        %v5657 = vadd.f32 %v5560, %v5625
        %v5658 = vadd.f32 %v5561, %v5626
        %v5659 = vadd.f32 %v5562, %v5627
        %v5660 = vadd.f32 %v5563, %v5628
        %v5661 = vadd.f32 %v5564, %v5629
        %v5662 = vadd.f32 %v5565, %v5630
        %v5663 = vadd.f32 %v5566, %v5631
        %v5664 = vadd.f32 %v5567, %v5632
        %v5665 = vadd.f32 %v5568, %v5633
        %v5666 = vadd.f32 %v5569, %v5634
        %v5667 = vadd.f32 %v5570, %v5635
        %v5668 = vadd.f32 %v5571, %v5636
        %v5669 = vadd.f32 %v5572, %v5637
        %s5670 = scalar_lea.vmem [#allocation2], 96
        %v5671 = vld [vmem:[%s5670] sm:$0xff]
        %v5672 = vld [vmem:[%s5670 + $0x8] sm:$0xff]
        %v5673 = vld [vmem:[%s5670 + $0x18] sm:$0xff]
        %v5674 = vld [vmem:[%s5670 + $0x20] sm:$0xff]
        %v5675 = vld [vmem:[%s5670 + $0x30] sm:$0xff]
        %v5676 = vld [vmem:[%s5670 + $0x38] sm:$0xff]
        %v5677 = vld [vmem:[%s5670 + $0x48] sm:$0xff]
        %v5678 = vld [vmem:[%s5670 + $0x50] sm:$0xff]
        %v5679 = vld [vmem:[%s5670 + $0x60] sm:$0xff]
        %v5680 = vld [vmem:[%s5670 + $0x68] sm:$0xff]
        %v5681 = vld [vmem:[%s5670 + $0x78] sm:$0xff]
        %v5682 = vld [vmem:[%s5670 + $0x80] sm:$0xff]
        %v5683 = vld [vmem:[%s5670 + $0x90] sm:$0xff]
        %v5684 = vld [vmem:[%s5670 + $0x98] sm:$0xff]
        %v5685 = vld [vmem:[%s5670 + $0xa8] sm:$0xff]
        %v5686 = vld [vmem:[%s5670 + $0xb0] sm:$0xff]
        %v5687 = vld [vmem:[%s5670 + $0xc0] sm:$0xff]
        %v5688 = vld [vmem:[%s5670 + $0xc8] sm:$0xff]
        %v5689 = vld [vmem:[%s5670 + $0xd8] sm:$0xff]
        %v5690 = vld [vmem:[%s5670 + $0xe0] sm:$0xff]
        %v5691 = vld [vmem:[%s5670 + $0xf0] sm:$0xff]
        %v5692 = vld [vmem:[%s5670 + $0xf8] sm:$0xff]
        %v5693 = vld [vmem:[%s5670 + $0x108] sm:$0xff]
        %v5694 = vld [vmem:[%s5670 + $0x110] sm:$0xff]
        %v5695 = vld [vmem:[%s5670 + $0x120] sm:$0xff]
        %v5696 = vld [vmem:[%s5670 + $0x128] sm:$0xff]
        %v5697 = vld [vmem:[%s5670 + $0x138] sm:$0xff]
        %v5698 = vld [vmem:[%s5670 + $0x140] sm:$0xff]
        %v5699 = vld [vmem:[%s5670 + $0x150] sm:$0xff]
        %v5700 = vld [vmem:[%s5670 + $0x158] sm:$0xff]
        %v5701 = vld [vmem:[%s5670 + $0x168] sm:$0xff]
        %v5702 = vld [vmem:[%s5670 + $0x170] sm:$0xff]
        %v5703 = vperm.slane %v5150, 6
        %v5704 = vmul.f32 %v5671, %v5703
        %v5705 = vmul.f32 %v5672, %v5703
        %v5706 = vmul.f32 %v5673, %v5703
        %v5707 = vmul.f32 %v5674, %v5703
        %v5708 = vmul.f32 %v5675, %v5703
        %v5709 = vmul.f32 %v5676, %v5703
        %v5710 = vmul.f32 %v5677, %v5703
        %v5711 = vmul.f32 %v5678, %v5703
        %v5712 = vmul.f32 %v5679, %v5703
        %v5713 = vmul.f32 %v5680, %v5703
        %v5714 = vmul.f32 %v5681, %v5703
        %v5715 = vmul.f32 %v5682, %v5703
        %v5716 = vmul.f32 %v5683, %v5703
        %v5717 = vmul.f32 %v5684, %v5703
        %v5718 = vmul.f32 %v5685, %v5703
        %v5719 = vmul.f32 %v5686, %v5703
        %v5720 = vmul.f32 %v5687, %v5703
        %v5721 = vmul.f32 %v5688, %v5703
        %v5722 = vmul.f32 %v5689, %v5703
        %v5723 = vmul.f32 %v5690, %v5703
        %v5724 = vmul.f32 %v5691, %v5703
        %v5725 = vmul.f32 %v5692, %v5703
        %v5726 = vmul.f32 %v5693, %v5703
        %v5727 = vmul.f32 %v5694, %v5703
        %v5728 = vmul.f32 %v5695, %v5703
        %v5729 = vmul.f32 %v5696, %v5703
        %v5730 = vmul.f32 %v5697, %v5703
        %v5731 = vmul.f32 %v5698, %v5703
        %v5732 = vmul.f32 %v5699, %v5703
        %v5733 = vmul.f32 %v5700, %v5703
        %v5734 = vmul.f32 %v5701, %v5703
        %v5735 = vmul.f32 %v5702, %v5703
        %v5736 = vadd.f32 %v5638, %v5704
        %v5737 = vadd.f32 %v5639, %v5705
        %v5738 = vadd.f32 %v5640, %v5706
        %v5739 = vadd.f32 %v5641, %v5707
        %v5740 = vadd.f32 %v5642, %v5708
        %v5741 = vadd.f32 %v5643, %v5709
        %v5742 = vadd.f32 %v5644, %v5710
        %v5743 = vadd.f32 %v5645, %v5711
        %v5744 = vadd.f32 %v5646, %v5712
        %v5745 = vadd.f32 %v5647, %v5713
        %v5746 = vadd.f32 %v5648, %v5714
        %v5747 = vadd.f32 %v5649, %v5715
        %v5748 = vadd.f32 %v5650, %v5716
        %v5749 = vadd.f32 %v5651, %v5717
        %v5750 = vadd.f32 %v5652, %v5718
        %v5751 = vadd.f32 %v5653, %v5719
        %v5752 = vadd.f32 %v5654, %v5720
        %v5753 = vadd.f32 %v5655, %v5721
        %v5754 = vadd.f32 %v5656, %v5722
        %v5755 = vadd.f32 %v5657, %v5723
        %v5756 = vadd.f32 %v5658, %v5724
        %v5757 = vadd.f32 %v5659, %v5725
        %v5758 = vadd.f32 %v5660, %v5726
        %v5759 = vadd.f32 %v5661, %v5727
        %v5760 = vadd.f32 %v5662, %v5728
        %v5761 = vadd.f32 %v5663, %v5729
        %v5762 = vadd.f32 %v5664, %v5730
        %v5763 = vadd.f32 %v5665, %v5731
        %v5764 = vadd.f32 %v5666, %v5732
        %v5765 = vadd.f32 %v5667, %v5733
        %v5766 = vadd.f32 %v5668, %v5734
        %v5767 = vadd.f32 %v5669, %v5735
        %v5768 = vld [vmem:[%s5670 + $0x2] sm:$0xff]
        %v5769 = vld [vmem:[%s5670 + $0xa] sm:$0xff]
        %v5770 = vld [vmem:[%s5670 + $0x1a] sm:$0xff]
        %v5771 = vld [vmem:[%s5670 + $0x22] sm:$0xff]
        %v5772 = vld [vmem:[%s5670 + $0x32] sm:$0xff]
        %v5773 = vld [vmem:[%s5670 + $0x3a] sm:$0xff]
        %v5774 = vld [vmem:[%s5670 + $0x4a] sm:$0xff]
        %v5775 = vld [vmem:[%s5670 + $0x52] sm:$0xff]
        %v5776 = vld [vmem:[%s5670 + $0x62] sm:$0xff]
        %v5777 = vld [vmem:[%s5670 + $0x6a] sm:$0xff]
        %v5778 = vld [vmem:[%s5670 + $0x7a] sm:$0xff]
        %v5779 = vld [vmem:[%s5670 + $0x82] sm:$0xff]
        %v5780 = vld [vmem:[%s5670 + $0x92] sm:$0xff]
        %v5781 = vld [vmem:[%s5670 + $0x9a] sm:$0xff]
        %v5782 = vld [vmem:[%s5670 + $0xaa] sm:$0xff]
        %v5783 = vld [vmem:[%s5670 + $0xb2] sm:$0xff]
        %v5784 = vld [vmem:[%s5670 + $0xc2] sm:$0xff]
        %v5785 = vld [vmem:[%s5670 + $0xca] sm:$0xff]
        %v5786 = vld [vmem:[%s5670 + $0xda] sm:$0xff]
        %v5787 = vld [vmem:[%s5670 + $0xe2] sm:$0xff]
        %v5788 = vld [vmem:[%s5670 + $0xf2] sm:$0xff]
        %v5789 = vld [vmem:[%s5670 + $0xfa] sm:$0xff]
        %v5790 = vld [vmem:[%s5670 + $0x10a] sm:$0xff]
        %v5791 = vld [vmem:[%s5670 + $0x112] sm:$0xff]
        %v5792 = vld [vmem:[%s5670 + $0x122] sm:$0xff]
        %v5793 = vld [vmem:[%s5670 + $0x12a] sm:$0xff]
        %v5794 = vld [vmem:[%s5670 + $0x13a] sm:$0xff]
        %v5795 = vld [vmem:[%s5670 + $0x142] sm:$0xff]
        %v5796 = vld [vmem:[%s5670 + $0x152] sm:$0xff]
        %v5797 = vld [vmem:[%s5670 + $0x15a] sm:$0xff]
        %v5798 = vld [vmem:[%s5670 + $0x16a] sm:$0xff]
        %v5799 = vld [vmem:[%s5670 + $0x172] sm:$0xff]
        %v5800 = vperm.slane %v5150, 7
        %v5801 = vmul.f32 %v5768, %v5800
        %v5802 = vmul.f32 %v5769, %v5800
        %v5803 = vmul.f32 %v5770, %v5800
        %v5804 = vmul.f32 %v5771, %v5800
        %v5805 = vmul.f32 %v5772, %v5800
        %v5806 = vmul.f32 %v5773, %v5800
        %v5807 = vmul.f32 %v5774, %v5800
        %v5808 = vmul.f32 %v5775, %v5800
        %v5809 = vmul.f32 %v5776, %v5800
        %v5810 = vmul.f32 %v5777, %v5800
        %v5811 = vmul.f32 %v5778, %v5800
        %v5812 = vmul.f32 %v5779, %v5800
        %v5813 = vmul.f32 %v5780, %v5800
        %v5814 = vmul.f32 %v5781, %v5800
        %v5815 = vmul.f32 %v5782, %v5800
        %v5816 = vmul.f32 %v5783, %v5800
        %v5817 = vmul.f32 %v5784, %v5800
        %v5818 = vmul.f32 %v5785, %v5800
        %v5819 = vmul.f32 %v5786, %v5800
        %v5820 = vmul.f32 %v5787, %v5800
        %v5821 = vmul.f32 %v5788, %v5800
        %v5822 = vmul.f32 %v5789, %v5800
        %v5823 = vmul.f32 %v5790, %v5800
        %v5824 = vmul.f32 %v5791, %v5800
        %v5825 = vmul.f32 %v5792, %v5800
        %v5826 = vmul.f32 %v5793, %v5800
        %v5827 = vmul.f32 %v5794, %v5800
        %v5828 = vmul.f32 %v5795, %v5800
        %v5829 = vmul.f32 %v5796, %v5800
        %v5830 = vmul.f32 %v5797, %v5800
        %v5831 = vmul.f32 %v5798, %v5800
        %v5832 = vmul.f32 %v5799, %v5800
        %v5833 = vadd.f32 %v5736, %v5801
        %v5834 = vadd.f32 %v5737, %v5802
        %v5835 = vadd.f32 %v5738, %v5803
        %v5836 = vadd.f32 %v5739, %v5804
        %v5837 = vadd.f32 %v5740, %v5805
        %v5838 = vadd.f32 %v5741, %v5806
        %v5839 = vadd.f32 %v5742, %v5807
        %v5840 = vadd.f32 %v5743, %v5808
        %v5841 = vadd.f32 %v5744, %v5809
        %v5842 = vadd.f32 %v5745, %v5810
        %v5843 = vadd.f32 %v5746, %v5811
        %v5844 = vadd.f32 %v5747, %v5812
        %v5845 = vadd.f32 %v5748, %v5813
        %v5846 = vadd.f32 %v5749, %v5814
        %v5847 = vadd.f32 %v5750, %v5815
        %v5848 = vadd.f32 %v5751, %v5816
        %v5849 = vadd.f32 %v5752, %v5817
        %v5850 = vadd.f32 %v5753, %v5818
        %v5851 = vadd.f32 %v5754, %v5819
        %v5852 = vadd.f32 %v5755, %v5820
        %v5853 = vadd.f32 %v5756, %v5821
        %v5854 = vadd.f32 %v5757, %v5822
        %v5855 = vadd.f32 %v5758, %v5823
        %v5856 = vadd.f32 %v5759, %v5824
        %v5857 = vadd.f32 %v5760, %v5825
        %v5858 = vadd.f32 %v5761, %v5826
        %v5859 = vadd.f32 %v5762, %v5827
        %v5860 = vadd.f32 %v5763, %v5828
        %v5861 = vadd.f32 %v5764, %v5829
        %v5862 = vadd.f32 %v5765, %v5830
        %v5863 = vadd.f32 %v5766, %v5831
        %v5864 = vadd.f32 %v5767, %v5832
        %v5865 = vld [vmem:[%s5670 + $0x4] sm:$0xff]
        %v5866 = vld [vmem:[%s5670 + $0xc] sm:$0xff]
        %v5867 = vld [vmem:[%s5670 + $0x1c] sm:$0xff]
        %v5868 = vld [vmem:[%s5670 + $0x24] sm:$0xff]
        %v5869 = vld [vmem:[%s5670 + $0x34] sm:$0xff]
        %v5870 = vld [vmem:[%s5670 + $0x3c] sm:$0xff]
        %v5871 = vld [vmem:[%s5670 + $0x4c] sm:$0xff]
        %v5872 = vld [vmem:[%s5670 + $0x54] sm:$0xff]
        %v5873 = vld [vmem:[%s5670 + $0x64] sm:$0xff]
        %v5874 = vld [vmem:[%s5670 + $0x6c] sm:$0xff]
        %v5875 = vld [vmem:[%s5670 + $0x7c] sm:$0xff]
        %v5876 = vld [vmem:[%s5670 + $0x84] sm:$0xff]
        %v5877 = vld [vmem:[%s5670 + $0x94] sm:$0xff]
        %v5878 = vld [vmem:[%s5670 + $0x9c] sm:$0xff]
        %v5879 = vld [vmem:[%s5670 + $0xac] sm:$0xff]
        %v5880 = vld [vmem:[%s5670 + $0xb4] sm:$0xff]
        %v5881 = vld [vmem:[%s5670 + $0xc4] sm:$0xff]
        %v5882 = vld [vmem:[%s5670 + $0xcc] sm:$0xff]
        %v5883 = vld [vmem:[%s5670 + $0xdc] sm:$0xff]
        %v5884 = vld [vmem:[%s5670 + $0xe4] sm:$0xff]
        %v5885 = vld [vmem:[%s5670 + $0xf4] sm:$0xff]
        %v5886 = vld [vmem:[%s5670 + $0xfc] sm:$0xff]
        %v5887 = vld [vmem:[%s5670 + $0x10c] sm:$0xff]
        %v5888 = vld [vmem:[%s5670 + $0x114] sm:$0xff]
        %v5889 = vld [vmem:[%s5670 + $0x124] sm:$0xff]
        %v5890 = vld [vmem:[%s5670 + $0x12c] sm:$0xff]
        %v5891 = vld [vmem:[%s5670 + $0x13c] sm:$0xff]
        %v5892 = vld [vmem:[%s5670 + $0x144] sm:$0xff]
        %v5893 = vld [vmem:[%s5670 + $0x154] sm:$0xff]
        %v5894 = vld [vmem:[%s5670 + $0x15c] sm:$0xff]
        %v5895 = vld [vmem:[%s5670 + $0x16c] sm:$0xff]
        %v5896 = vld [vmem:[%s5670 + $0x174] sm:$0xff]
        %v5897 = vperm.slane %v5151, 0
        %v5898 = vmul.f32 %v5865, %v5897
        %v5899 = vmul.f32 %v5866, %v5897
        %v5900 = vmul.f32 %v5867, %v5897
        %v5901 = vmul.f32 %v5868, %v5897
        %v5902 = vmul.f32 %v5869, %v5897
        %v5903 = vmul.f32 %v5870, %v5897
        %v5904 = vmul.f32 %v5871, %v5897
        %v5905 = vmul.f32 %v5872, %v5897
        %v5906 = vmul.f32 %v5873, %v5897
        %v5907 = vmul.f32 %v5874, %v5897
        %v5908 = vmul.f32 %v5875, %v5897
        %v5909 = vmul.f32 %v5876, %v5897
        %v5910 = vmul.f32 %v5877, %v5897
        %v5911 = vmul.f32 %v5878, %v5897
        %v5912 = vmul.f32 %v5879, %v5897
        %v5913 = vmul.f32 %v5880, %v5897
        %v5914 = vmul.f32 %v5881, %v5897
        %v5915 = vmul.f32 %v5882, %v5897
        %v5916 = vmul.f32 %v5883, %v5897
        %v5917 = vmul.f32 %v5884, %v5897
        %v5918 = vmul.f32 %v5885, %v5897
        %v5919 = vmul.f32 %v5886, %v5897
        %v5920 = vmul.f32 %v5887, %v5897
        %v5921 = vmul.f32 %v5888, %v5897
        %v5922 = vmul.f32 %v5889, %v5897
        %v5923 = vmul.f32 %v5890, %v5897
        %v5924 = vmul.f32 %v5891, %v5897
        %v5925 = vmul.f32 %v5892, %v5897
        %v5926 = vmul.f32 %v5893, %v5897
        %v5927 = vmul.f32 %v5894, %v5897
        %v5928 = vmul.f32 %v5895, %v5897
        %v5929 = vmul.f32 %v5896, %v5897
        %v5930 = vadd.f32 %v5833, %v5898
        %v5931 = vadd.f32 %v5834, %v5899
        %v5932 = vadd.f32 %v5835, %v5900
        %v5933 = vadd.f32 %v5836, %v5901
        %v5934 = vadd.f32 %v5837, %v5902
        %v5935 = vadd.f32 %v5838, %v5903
        %v5936 = vadd.f32 %v5839, %v5904
        %v5937 = vadd.f32 %v5840, %v5905
        %v5938 = vadd.f32 %v5841, %v5906
        %v5939 = vadd.f32 %v5842, %v5907
        %v5940 = vadd.f32 %v5843, %v5908
        %v5941 = vadd.f32 %v5844, %v5909
        %v5942 = vadd.f32 %v5845, %v5910
        %v5943 = vadd.f32 %v5846, %v5911
        %v5944 = vadd.f32 %v5847, %v5912
        %v5945 = vadd.f32 %v5848, %v5913
        %v5946 = vadd.f32 %v5849, %v5914
        %v5947 = vadd.f32 %v5850, %v5915
        %v5948 = vadd.f32 %v5851, %v5916
        %v5949 = vadd.f32 %v5852, %v5917
        %v5950 = vadd.f32 %v5853, %v5918
        %v5951 = vadd.f32 %v5854, %v5919
        %v5952 = vadd.f32 %v5855, %v5920
        %v5953 = vadd.f32 %v5856, %v5921
        %v5954 = vadd.f32 %v5857, %v5922
        %v5955 = vadd.f32 %v5858, %v5923
        %v5956 = vadd.f32 %v5859, %v5924
        %v5957 = vadd.f32 %v5860, %v5925
        %v5958 = vadd.f32 %v5861, %v5926
        %v5959 = vadd.f32 %v5862, %v5927
        %v5960 = vadd.f32 %v5863, %v5928
        %v5961 = vadd.f32 %v5864, %v5929
        %vm5962 = vcmp.ge.f32.partialorder %v5930, 0.0
        %vm5963 = vcmp.ge.f32.partialorder %v5931, 0.0
        %vm5964 = vcmp.ge.f32.partialorder %v5932, 0.0
        %vm5965 = vcmp.ge.f32.partialorder %v5933, 0.0
        %vm5966 = vcmp.ge.f32.partialorder %v5934, 0.0
        %vm5967 = vcmp.ge.f32.partialorder %v5935, 0.0
        %vm5968 = vcmp.ge.f32.partialorder %v5936, 0.0
        %vm5969 = vcmp.ge.f32.partialorder %v5937, 0.0
        %vm5970 = vcmp.ge.f32.partialorder %v5938, 0.0
        %vm5971 = vcmp.ge.f32.partialorder %v5939, 0.0
        %vm5972 = vcmp.ge.f32.partialorder %v5940, 0.0
        %vm5973 = vcmp.ge.f32.partialorder %v5941, 0.0
        %vm5974 = vcmp.ge.f32.partialorder %v5942, 0.0
        %vm5975 = vcmp.ge.f32.partialorder %v5943, 0.0
        %vm5976 = vcmp.ge.f32.partialorder %v5944, 0.0
        %vm5977 = vcmp.ge.f32.partialorder %v5945, 0.0
        %vm5978 = vcmp.ge.f32.partialorder %v5946, 0.0
        %vm5979 = vcmp.ge.f32.partialorder %v5947, 0.0
        %vm5980 = vcmp.ge.f32.partialorder %v5948, 0.0
        %vm5981 = vcmp.ge.f32.partialorder %v5949, 0.0
        %vm5982 = vcmp.ge.f32.partialorder %v5950, 0.0
        %vm5983 = vcmp.ge.f32.partialorder %v5951, 0.0
        %vm5984 = vcmp.ge.f32.partialorder %v5952, 0.0
        %vm5985 = vcmp.ge.f32.partialorder %v5953, 0.0
        %vm5986 = vcmp.ge.f32.partialorder %v5954, 0.0
        %vm5987 = vcmp.ge.f32.partialorder %v5955, 0.0
        %vm5988 = vcmp.ge.f32.partialorder %v5956, 0.0
        %vm5989 = vcmp.ge.f32.partialorder %v5957, 0.0
        %vm5990 = vcmp.ge.f32.partialorder %v5958, 0.0
        %vm5991 = vcmp.ge.f32.partialorder %v5959, 0.0
        %vm5992 = vcmp.ge.f32.partialorder %v5960, 0.0
        %vm5993 = vcmp.ge.f32.partialorder %v5961, 0.0
        %v5994 = vstv %s437
        %v5995 = vmul.f32 %v5994, %v5930
        %v5996 = vmul.f32 %v5994, %v5931
        %v5997 = vmul.f32 %v5994, %v5932
        %v5998 = vmul.f32 %v5994, %v5933
        %v5999 = vmul.f32 %v5994, %v5934
        %v6000 = vmul.f32 %v5994, %v5935
        %v6001 = vmul.f32 %v5994, %v5936
        %v6002 = vmul.f32 %v5994, %v5937
        %v6003 = vmul.f32 %v5994, %v5938
        %v6004 = vmul.f32 %v5994, %v5939
        %v6005 = vmul.f32 %v5994, %v5940
        %v6006 = vmul.f32 %v5994, %v5941
        %v6007 = vmul.f32 %v5994, %v5942
        %v6008 = vmul.f32 %v5994, %v5943
        %v6009 = vmul.f32 %v5994, %v5944
        %v6010 = vmul.f32 %v5994, %v5945
        %v6011 = vmul.f32 %v5994, %v5946
        %v6012 = vmul.f32 %v5994, %v5947
        %v6013 = vmul.f32 %v5994, %v5948
        %v6014 = vmul.f32 %v5994, %v5949
        %v6015 = vmul.f32 %v5994, %v5950
        %v6016 = vmul.f32 %v5994, %v5951
        %v6017 = vmul.f32 %v5994, %v5952
        %v6018 = vmul.f32 %v5994, %v5953
        %v6019 = vmul.f32 %v5994, %v5954
        %v6020 = vmul.f32 %v5994, %v5955
        %v6021 = vmul.f32 %v5994, %v5956
        %v6022 = vmul.f32 %v5994, %v5957
        %v6023 = vmul.f32 %v5994, %v5958
        %v6024 = vmul.f32 %v5994, %v5959
        %v6025 = vmul.f32 %v5994, %v5960
        %v6026 = vmul.f32 %v5994, %v5961
        %v6027 = vsel %vm5962, %v5930, %v5995
        %v6028 = vsel %vm5963, %v5931, %v5996
        %v6029 = vsel %vm5964, %v5932, %v5997
        %v6030 = vsel %vm5965, %v5933, %v5998
        %v6031 = vsel %vm5966, %v5934, %v5999
        %v6032 = vsel %vm5967, %v5935, %v6000
        %v6033 = vsel %vm5968, %v5936, %v6001
        %v6034 = vsel %vm5969, %v5937, %v6002
        %v6035 = vsel %vm5970, %v5938, %v6003
        %v6036 = vsel %vm5971, %v5939, %v6004
        %v6037 = vsel %vm5972, %v5940, %v6005
        %v6038 = vsel %vm5973, %v5941, %v6006
        %v6039 = vsel %vm5974, %v5942, %v6007
        %v6040 = vsel %vm5975, %v5943, %v6008
        %v6041 = vsel %vm5976, %v5944, %v6009
        %v6042 = vsel %vm5977, %v5945, %v6010
        %v6043 = vsel %vm5978, %v5946, %v6011
        %v6044 = vsel %vm5979, %v5947, %v6012
        %v6045 = vsel %vm5980, %v5948, %v6013
        %v6046 = vsel %vm5981, %v5949, %v6014
        %v6047 = vsel %vm5982, %v5950, %v6015
        %v6048 = vsel %vm5983, %v5951, %v6016
        %v6049 = vsel %vm5984, %v5952, %v6017
        %v6050 = vsel %vm5985, %v5953, %v6018
        %v6051 = vsel %vm5986, %v5954, %v6019
        %v6052 = vsel %vm5987, %v5955, %v6020
        %v6053 = vsel %vm5988, %v5956, %v6021
        %v6054 = vsel %vm5989, %v5957, %v6022
        %v6055 = vsel %vm5990, %v5958, %v6023
        %v6056 = vsel %vm5991, %v5959, %v6024
        %v6057 = vsel %vm5992, %v5960, %v6025
        %v6058 = vsel %vm5993, %v5961, %v6026
        %v6059 = vsel %vm372, %v5117, 0.0
        %v6060 = vsel %vm372, %v5118, 0.0
        %v6061 = vadd.f32 %v6059, %v6060
        %v6062 = vsel %vm372, %v5119, 0.0
        %v6063 = vadd.f32 %v6061, %v6062
        %v6064 = vsel %vm372, %v5120, 0.0
        %v6065 = vadd.f32 %v6063, %v6064
        %v6066 = vsel %vm372, %v5121, 0.0
        %v6067 = vadd.f32 %v6065, %v6066
        %v6068 = vsel %vm372, %v5122, 0.0
        %v6069 = vadd.f32 %v6067, %v6068
        %v6070 = vsel %vm372, %v5123, 0.0
        %v6071 = vadd.f32 %v6069, %v6070
        %v6072 = vsel %vm372, %v5124, 0.0
        %v6073 = vadd.f32 %v6071, %v6072
        %v6074 = vsel %vm372, %v5125, 0.0
        %v6075 = vadd.f32 %v6073, %v6074
        %v6076 = vsel %vm372, %v5126, 0.0
        %v6077 = vadd.f32 %v6075, %v6076
        %v6078 = vsel %vm372, %v5127, 0.0
        %v6079 = vadd.f32 %v6077, %v6078
        %v6080 = vsel %vm372, %v5128, 0.0
        %v6081 = vadd.f32 %v6079, %v6080
        %v6082 = vsel %vm372, %v5129, 0.0
        %v6083 = vadd.f32 %v6081, %v6082
        %v6084 = vsel %vm372, %v5130, 0.0
        %v6085 = vadd.f32 %v6083, %v6084
        %v6086 = vsel %vm372, %v5131, 0.0
        %v6087 = vadd.f32 %v6085, %v6086
        %v6088 = vsel %vm372, %v5132, 0.0
        %v6089 = vadd.f32 %v6087, %v6088
        %v6090 = vsel %vm372, %v5133, 0.0
        %v6091 = vadd.f32 %v6089, %v6090
        %v6092 = vsel %vm372, %v5134, 0.0
        %v6093 = vadd.f32 %v6091, %v6092
        %v6094 = vsel %vm372, %v5135, 0.0
        %v6095 = vadd.f32 %v6093, %v6094
        %v6096 = vsel %vm372, %v5136, 0.0
        %v6097 = vadd.f32 %v6095, %v6096
        %v6098 = vsel %vm372, %v5137, 0.0
        %v6099 = vadd.f32 %v6097, %v6098
        %v6100 = vsel %vm372, %v5138, 0.0
        %v6101 = vadd.f32 %v6099, %v6100
        %v6102 = vsel %vm372, %v5139, 0.0
        %v6103 = vadd.f32 %v6101, %v6102
        %v6104 = vsel %vm372, %v5140, 0.0
        %v6105 = vadd.f32 %v6103, %v6104
        %v6106 = vsel %vm372, %v5141, 0.0
        %v6107 = vadd.f32 %v6105, %v6106
        %v6108 = vsel %vm372, %v5142, 0.0
        %v6109 = vadd.f32 %v6107, %v6108
        %v6110 = vsel %vm372, %v5143, 0.0
        %v6111 = vadd.f32 %v6109, %v6110
        %v6112 = vsel %vm372, %v5144, 0.0
        %v6113 = vadd.f32 %v6111, %v6112
        %v6114 = vsel %vm372, %v5145, 0.0
        %v6115 = vadd.f32 %v6113, %v6114
        %v6116 = vsel %vm372, %v5146, 0.0
        %v6117 = vadd.f32 %v6115, %v6116
        %v6118 = vsel %vm372, %v5147, 0.0
        %v6119 = vadd.f32 %v6117, %v6118
        %v6120 = vsel %vm372, %v5148, 0.0
        %v6121 = vadd.f32 %v6119, %v6120
        %v6122 = vrot.slane %v6121, 4
        %v6123 = vadd.f32 %v6121, %v6122
        %v6124 = vrot.slane %v6123, 2
        %v6125 = vadd.f32 %v6123, %v6124
        %v6126 = vrot.slane %v6125, 1
        %v6127 = vadd.f32 %v6125, %v6126
        %v6128 = vsel %vm372, %v6027, 0.0
        %v6129 = vsel %vm372, %v6028, 0.0
        %v6130 = vadd.f32 %v6128, %v6129
        %v6131 = vsel %vm372, %v6029, 0.0
        %v6132 = vadd.f32 %v6130, %v6131
        %v6133 = vsel %vm372, %v6030, 0.0
        %v6134 = vadd.f32 %v6132, %v6133
        %v6135 = vsel %vm372, %v6031, 0.0
        %v6136 = vadd.f32 %v6134, %v6135
        %v6137 = vsel %vm372, %v6032, 0.0
        %v6138 = vadd.f32 %v6136, %v6137
        %v6139 = vsel %vm372, %v6033, 0.0
        %v6140 = vadd.f32 %v6138, %v6139
        %v6141 = vsel %vm372, %v6034, 0.0
        %v6142 = vadd.f32 %v6140, %v6141
        %v6143 = vsel %vm372, %v6035, 0.0
        %v6144 = vadd.f32 %v6142, %v6143
        %v6145 = vsel %vm372, %v6036, 0.0
        %v6146 = vadd.f32 %v6144, %v6145
        %v6147 = vsel %vm372, %v6037, 0.0
        %v6148 = vadd.f32 %v6146, %v6147
        %v6149 = vsel %vm372, %v6038, 0.0
        %v6150 = vadd.f32 %v6148, %v6149
        %v6151 = vsel %vm372, %v6039, 0.0
        %v6152 = vadd.f32 %v6150, %v6151
        %v6153 = vsel %vm372, %v6040, 0.0
        %v6154 = vadd.f32 %v6152, %v6153
        %v6155 = vsel %vm372, %v6041, 0.0
        %v6156 = vadd.f32 %v6154, %v6155
        %v6157 = vsel %vm372, %v6042, 0.0
        %v6158 = vadd.f32 %v6156, %v6157
        %v6159 = vsel %vm372, %v6043, 0.0
        %v6160 = vadd.f32 %v6158, %v6159
        %v6161 = vsel %vm372, %v6044, 0.0
        %v6162 = vadd.f32 %v6160, %v6161
        %v6163 = vsel %vm372, %v6045, 0.0
        %v6164 = vadd.f32 %v6162, %v6163
        %v6165 = vsel %vm372, %v6046, 0.0
        %v6166 = vadd.f32 %v6164, %v6165
        %v6167 = vsel %vm372, %v6047, 0.0
        %v6168 = vadd.f32 %v6166, %v6167
        %v6169 = vsel %vm372, %v6048, 0.0
        %v6170 = vadd.f32 %v6168, %v6169
        %v6171 = vsel %vm372, %v6049, 0.0
        %v6172 = vadd.f32 %v6170, %v6171
        %v6173 = vsel %vm372, %v6050, 0.0
        %v6174 = vadd.f32 %v6172, %v6173
        %v6175 = vsel %vm372, %v6051, 0.0
        %v6176 = vadd.f32 %v6174, %v6175
        %v6177 = vsel %vm372, %v6052, 0.0
        %v6178 = vadd.f32 %v6176, %v6177
        %v6179 = vsel %vm372, %v6053, 0.0
        %v6180 = vadd.f32 %v6178, %v6179
        %v6181 = vsel %vm372, %v6054, 0.0
        %v6182 = vadd.f32 %v6180, %v6181
        %v6183 = vsel %vm372, %v6055, 0.0
        %v6184 = vadd.f32 %v6182, %v6183
        %v6185 = vsel %vm372, %v6056, 0.0
        %v6186 = vadd.f32 %v6184, %v6185
        %v6187 = vsel %vm372, %v6057, 0.0
        %v6188 = vadd.f32 %v6186, %v6187
        %v6189 = vsel %vm372, %v6058, 0.0
        %v6190 = vadd.f32 %v6188, %v6189
        %v6191 = vrot.slane %v6190, 4
        %v6192 = vadd.f32 %v6190, %v6191
        %v6193 = vrot.slane %v6192, 2
        %v6194 = vadd.f32 %v6192, %v6193
        %v6195 = vrot.slane %v6194, 1
        %v6196 = vadd.f32 %v6194, %v6195
        %v6197 = vadd.f32 %v6127, %v6196
        %v6198 = vmul.f32 %v6197, 0.00390625
        %v6199 = vld [vmem:[%s3] sm:$0xff]
        %v6200 = vld [vmem:[%s3 + $0x8] sm:$0xff]
        %v6201 = vld [vmem:[%s3 + $0x10] sm:$0xff]
        %v6202 = vld [vmem:[%s3 + $0x18] sm:$0xff]
        %v6204 = vsel %vm372, %v6198, 0
        %6206 = vmatpush.msra.mxu0 0.0
        %6207 = vmatpush.msra.mxu0 0.0
        %6208 = vmatpush.msra.mxu0 0.0
        %6209 = vmatpush.msra.mxu0 0.0
        %6210 = vmatpush.msra.mxu0 0.0
        %6211 = vmatpush.msra.mxu0 0.0
        %6212 = vmatpush.msra.mxu0 0.0
        %6213 = vmatpush.msra.mxu0 0.0
        %6214 = vmatpush.msra.mxu0 0.0
        %6215 = vmatpush.msra.mxu0 0.0
        %6216 = vmatpush.msra.mxu0 0.0
        %6217 = vmatpush.msra.mxu0 0.0
        %6218 = vmatpush.msra.mxu0 %v6202
        %6219 = vmatpush.msra.mxu0 %v6201
        %6220 = vmatpush.msra.mxu0 %v6200
        %6221 = vmatpush.msra.mxu0 %v6199
        %6222 = vmatmul.f32.gmra.mxu0 %v6204
        %v6223 = vpop.f32.mrf.mxu0
        %v6224 = vadd.f32 0.0, %v6223
        %6225 = vdwg.mxu0
        %vm6226 = vcmp.ge.f32.partialorder %v6224, 0.0
        %v6227 = vstv %s438
        %v6228 = vmul.f32 %v6227, %v6224
        %v6229 = vsel %vm6226, %v6224, %v6228
        %v6230 = vld [vmem:[%s4] sm:$0xff]
        %v6231 = vld [vmem:[%s4 + $0x8] sm:$0xff]
        %v6232 = vld [vmem:[%s4 + $0x10] sm:$0xff]
        %v6233 = vld [vmem:[%s4 + $0x18] sm:$0xff]
        %v6235 = vsel %vm372, %v6229, 0
        %6237 = vmatpush.msra.mxu0 0.0
        %6238 = vmatpush.msra.mxu0 0.0
        %6239 = vmatpush.msra.mxu0 0.0
        %6240 = vmatpush.msra.mxu0 0.0
        %6241 = vmatpush.msra.mxu0 0.0
        %6242 = vmatpush.msra.mxu0 0.0
        %6243 = vmatpush.msra.mxu0 0.0
        %6244 = vmatpush.msra.mxu0 0.0
        %6245 = vmatpush.msra.mxu0 0.0
        %6246 = vmatpush.msra.mxu0 0.0
        %6247 = vmatpush.msra.mxu0 0.0
        %6248 = vmatpush.msra.mxu0 0.0
        %6249 = vmatpush.msra.mxu0 %v6233
        %6250 = vmatpush.msra.mxu0 %v6232
        %6251 = vmatpush.msra.mxu0 %v6231
        %6252 = vmatpush.msra.mxu0 %v6230
        %6253 = vmatmul.f32.gmra.mxu0 %v6235
        %v6254 = vpop.f32.mrf.mxu0
        %v6255 = vadd.f32 0.0, %v6254
        %6256 = vdwg.mxu0
        %6258 = vrot.lane.b32.xlu0 %v6255, 96
        %v6259 = vpop.permute.xlu0 %6258
        %v6261 = vmax.f32 %v6255, %v6259
        %v6262 = vsub.f32 %v6255, %v6261
        %v6263 = vmul.f32 %v6262, 1.442695
        %v6264 = vpow.pop %v6263
        %6266 = vrot.lane.b32.xlu0 %v6261, 32
        %v6267 = vpop.permute.xlu0 %6266
        %v6269 = vsub.f32 %v6255, %v6267
        %v6270 = vmul.f32 %v6269, 1.442695
        %v6271 = vpow.pop %v6270
        %6273 = vrot.lane.b32.xlu0 %v6271, 96
        %v6274 = vpop.permute.xlu0 %6273
        %v6276 = vadd.f32 %v6264, %v6274
        %v6277 = vrcp.pop %v6276
        %v6278 = vmul.f32 %v6276, %v6277
        %v6279 = vsub.f32 1.0, %v6278
        %v6280 = vmul.f32 %v6277, %v6279
        %v6281 = vadd.f32 %v6277, %v6280
        %vm6282 = vweird.f32 %v6276
        %vm6283 = vweird.f32 %v6277
        %vm6284 = vmor %vm6282, %vm6283
        %v6285 = vsel %vm6284, %v6277, %v6281
        %v6286 = vand.u32 2147483647, %v6276
        %vm6287 = vcmp.eq.f32.partialorder %v6286, 8.507059e+37
        %v6288 = vand.u32 %v6276, 2147483648
        %v6289 = vor.u32 1.1754944e-38, %v6288
        %v6290 = vsel %vm6287, %v6289, %v6285
        %v6291 = vmul.f32 1.0, %v6290
        %v6292 = vmul.f32 %v6264, %v6291
        %v6293 = vperm.slane %v6292, 0
        %v6294 = vmul.f32 %v5117, %v6293
        %v6295 = vmul.f32 %v5118, %v6293
        %v6296 = vmul.f32 %v5119, %v6293
        %v6297 = vmul.f32 %v5120, %v6293
        %v6298 = vmul.f32 %v5121, %v6293
        %v6299 = vmul.f32 %v5122, %v6293
        %v6300 = vmul.f32 %v5123, %v6293
        %v6301 = vmul.f32 %v5124, %v6293
        %v6302 = vmul.f32 %v5125, %v6293
        %v6303 = vmul.f32 %v5126, %v6293
        %v6304 = vmul.f32 %v5127, %v6293
        %v6305 = vmul.f32 %v5128, %v6293
        %v6306 = vmul.f32 %v5129, %v6293
        %v6307 = vmul.f32 %v5130, %v6293
        %v6308 = vmul.f32 %v5131, %v6293
        %v6309 = vmul.f32 %v5132, %v6293
        %v6310 = vmul.f32 %v5133, %v6293
        %v6311 = vmul.f32 %v5134, %v6293
        %v6312 = vmul.f32 %v5135, %v6293
        %v6313 = vmul.f32 %v5136, %v6293
        %v6314 = vmul.f32 %v5137, %v6293
        %v6315 = vmul.f32 %v5138, %v6293
        %v6316 = vmul.f32 %v5139, %v6293
        %v6317 = vmul.f32 %v5140, %v6293
        %v6318 = vmul.f32 %v5141, %v6293
        %v6319 = vmul.f32 %v5142, %v6293
        %v6320 = vmul.f32 %v5143, %v6293
        %v6321 = vmul.f32 %v5144, %v6293
        %v6322 = vmul.f32 %v5145, %v6293
        %v6323 = vmul.f32 %v5146, %v6293
        %v6324 = vmul.f32 %v5147, %v6293
        %v6325 = vmul.f32 %v5148, %v6293
        %6327 = vrot.lane.b32.xlu0 %v6291, 32
        %v6328 = vpop.permute.xlu0 %6327
        %v6330 = vmul.f32 %v6271, %v6328
        %v6331 = vperm.slane %v6330, 0
        %6333 = vrot.lane.b32.xlu0 %v6331, 96
        %v6334 = vpop.permute.xlu0 %6333
        %v6336 = vmul.f32 %v6027, %v6334
        %v6337 = vmul.f32 %v6028, %v6334
        %v6338 = vmul.f32 %v6029, %v6334
        %v6339 = vmul.f32 %v6030, %v6334
        %v6340 = vmul.f32 %v6031, %v6334
        %v6341 = vmul.f32 %v6032, %v6334
        %v6342 = vmul.f32 %v6033, %v6334
        %v6343 = vmul.f32 %v6034, %v6334
        %v6344 = vmul.f32 %v6035, %v6334
        %v6345 = vmul.f32 %v6036, %v6334
        %v6346 = vmul.f32 %v6037, %v6334
        %v6347 = vmul.f32 %v6038, %v6334
        %v6348 = vmul.f32 %v6039, %v6334
        %v6349 = vmul.f32 %v6040, %v6334
        %v6350 = vmul.f32 %v6041, %v6334
        %v6351 = vmul.f32 %v6042, %v6334
        %v6352 = vmul.f32 %v6043, %v6334
        %v6353 = vmul.f32 %v6044, %v6334
        %v6354 = vmul.f32 %v6045, %v6334
        %v6355 = vmul.f32 %v6046, %v6334
        %v6356 = vmul.f32 %v6047, %v6334
        %v6357 = vmul.f32 %v6048, %v6334
        %v6358 = vmul.f32 %v6049, %v6334
        %v6359 = vmul.f32 %v6050, %v6334
        %v6360 = vmul.f32 %v6051, %v6334
        %v6361 = vmul.f32 %v6052, %v6334
        %v6362 = vmul.f32 %v6053, %v6334
        %v6363 = vmul.f32 %v6054, %v6334
        %v6364 = vmul.f32 %v6055, %v6334
        %v6365 = vmul.f32 %v6056, %v6334
        %v6366 = vmul.f32 %v6057, %v6334
        %v6367 = vmul.f32 %v6058, %v6334
        %v6368 = vadd.f32 %v6294, %v6336
        %v6369 = vadd.f32 %v6295, %v6337
        %v6370 = vadd.f32 %v6296, %v6338
        %v6371 = vadd.f32 %v6297, %v6339
        %v6372 = vadd.f32 %v6298, %v6340
        %v6373 = vadd.f32 %v6299, %v6341
        %v6374 = vadd.f32 %v6300, %v6342
        %v6375 = vadd.f32 %v6301, %v6343
        %v6376 = vadd.f32 %v6302, %v6344
        %v6377 = vadd.f32 %v6303, %v6345
        %v6378 = vadd.f32 %v6304, %v6346
        %v6379 = vadd.f32 %v6305, %v6347
        %v6380 = vadd.f32 %v6306, %v6348
        %v6381 = vadd.f32 %v6307, %v6349
        %v6382 = vadd.f32 %v6308, %v6350
        %v6383 = vadd.f32 %v6309, %v6351
        %v6384 = vadd.f32 %v6310, %v6352
        %v6385 = vadd.f32 %v6311, %v6353
        %v6386 = vadd.f32 %v6312, %v6354
        %v6387 = vadd.f32 %v6313, %v6355
        %v6388 = vadd.f32 %v6314, %v6356
        %v6389 = vadd.f32 %v6315, %v6357
        %v6390 = vadd.f32 %v6316, %v6358
        %v6391 = vadd.f32 %v6317, %v6359
        %v6392 = vadd.f32 %v6318, %v6360
        %v6393 = vadd.f32 %v6319, %v6361
        %v6394 = vadd.f32 %v6320, %v6362
        %v6395 = vadd.f32 %v6321, %v6363
        %v6396 = vadd.f32 %v6322, %v6364
        %v6397 = vadd.f32 %v6323, %v6365
        %v6398 = vadd.f32 %v6324, %v6366
        %v6399 = vadd.f32 %v6325, %v6367
        %v6400 = vld [vmem:[%s5] sm:$0xff]
        %v6401 = vld [vmem:[%s5 + $0x8] sm:$0xff]
        %v6402 = vld [vmem:[%s5 + $0x10] sm:$0xff]
        %v6403 = vld [vmem:[%s5 + $0x18] sm:$0xff]
        %v6405 = vsel %vm372, %v6368, 0
        %v6408 = vsel %vm372, %v6369, 0
        %v6411 = vsel %vm372, %v6370, 0
        %v6414 = vsel %vm372, %v6371, 0
        %v6417 = vsel %vm372, %v6372, 0
        %v6420 = vsel %vm372, %v6373, 0
        %v6423 = vsel %vm372, %v6374, 0
        %v6426 = vsel %vm372, %v6375, 0
        %v6429 = vsel %vm372, %v6376, 0
        %v6432 = vsel %vm372, %v6377, 0
        %v6435 = vsel %vm372, %v6378, 0
        %v6438 = vsel %vm372, %v6379, 0
        %v6441 = vsel %vm372, %v6380, 0
        %v6444 = vsel %vm372, %v6381, 0
        %v6447 = vsel %vm372, %v6382, 0
        %v6450 = vsel %vm372, %v6383, 0
        %v6453 = vsel %vm372, %v6384, 0
        %v6456 = vsel %vm372, %v6385, 0
        %v6459 = vsel %vm372, %v6386, 0
        %v6462 = vsel %vm372, %v6387, 0
        %v6465 = vsel %vm372, %v6388, 0
        %v6468 = vsel %vm372, %v6389, 0
        %v6471 = vsel %vm372, %v6390, 0
        %v6474 = vsel %vm372, %v6391, 0
        %v6477 = vsel %vm372, %v6392, 0
        %v6480 = vsel %vm372, %v6393, 0
        %v6483 = vsel %vm372, %v6394, 0
        %v6486 = vsel %vm372, %v6395, 0
        %v6489 = vsel %vm372, %v6396, 0
        %v6492 = vsel %vm372, %v6397, 0
        %v6495 = vsel %vm372, %v6398, 0
        %v6498 = vsel %vm372, %v6399, 0
        %6500 = vmatpush.msra.mxu0 0.0
        %6501 = vmatpush.msra.mxu0 0.0
        %6502 = vmatpush.msra.mxu0 0.0
        %6503 = vmatpush.msra.mxu0 0.0
        %6504 = vmatpush.msra.mxu0 0.0
        %6505 = vmatpush.msra.mxu0 0.0
        %6506 = vmatpush.msra.mxu0 0.0
        %6507 = vmatpush.msra.mxu0 0.0
        %6508 = vmatpush.msra.mxu0 0.0
        %6509 = vmatpush.msra.mxu0 0.0
        %6510 = vmatpush.msra.mxu0 0.0
        %6511 = vmatpush.msra.mxu0 0.0
        %6512 = vmatpush.msra.mxu0 %v6403
        %6513 = vmatpush.msra.mxu0 %v6402
        %6514 = vmatpush.msra.mxu0 %v6401
        %6515 = vmatpush.msra.mxu0 %v6400
        %6516 = vmatmul.f32.gmra.mxu0 %v6405
        %v6517 = vpop.f32.mrf.mxu0
        %v6518 = vadd.f32 0.0, %v6517
        %6519 = vmatmul.f32.gmra.mxu0 %v6408
        %v6520 = vpop.f32.mrf.mxu0
        %v6521 = vadd.f32 0.0, %v6520
        %6522 = vmatmul.f32.gmra.mxu0 %v6411
        %v6523 = vpop.f32.mrf.mxu0
        %v6524 = vadd.f32 0.0, %v6523
        %6525 = vmatmul.f32.gmra.mxu0 %v6414
        %v6526 = vpop.f32.mrf.mxu0
        %v6527 = vadd.f32 0.0, %v6526
        %6528 = vmatmul.f32.gmra.mxu0 %v6417
        %v6529 = vpop.f32.mrf.mxu0
        %v6530 = vadd.f32 0.0, %v6529
        %6531 = vmatmul.f32.gmra.mxu0 %v6420
        %v6532 = vpop.f32.mrf.mxu0
        %v6533 = vadd.f32 0.0, %v6532
        %6534 = vmatmul.f32.gmra.mxu0 %v6423
        %v6535 = vpop.f32.mrf.mxu0
        %v6536 = vadd.f32 0.0, %v6535
        %6537 = vmatmul.f32.gmra.mxu0 %v6426
        %v6538 = vpop.f32.mrf.mxu0
        %v6539 = vadd.f32 0.0, %v6538
        %6540 = vmatmul.f32.gmra.mxu0 %v6429
        %v6541 = vpop.f32.mrf.mxu0
        %v6542 = vadd.f32 0.0, %v6541
        %6543 = vmatmul.f32.gmra.mxu0 %v6432
        %v6544 = vpop.f32.mrf.mxu0
        %v6545 = vadd.f32 0.0, %v6544
        %6546 = vmatmul.f32.gmra.mxu0 %v6435
        %v6547 = vpop.f32.mrf.mxu0
        %v6548 = vadd.f32 0.0, %v6547
        %6549 = vmatmul.f32.gmra.mxu0 %v6438
        %v6550 = vpop.f32.mrf.mxu0
        %v6551 = vadd.f32 0.0, %v6550
        %6552 = vmatmul.f32.gmra.mxu0 %v6441
        %v6553 = vpop.f32.mrf.mxu0
        %v6554 = vadd.f32 0.0, %v6553
        %6555 = vmatmul.f32.gmra.mxu0 %v6444
        %v6556 = vpop.f32.mrf.mxu0
        %v6557 = vadd.f32 0.0, %v6556
        %6558 = vmatmul.f32.gmra.mxu0 %v6447
        %v6559 = vpop.f32.mrf.mxu0
        %v6560 = vadd.f32 0.0, %v6559
        %6561 = vmatmul.f32.gmra.mxu0 %v6450
        %v6562 = vpop.f32.mrf.mxu0
        %v6563 = vadd.f32 0.0, %v6562
        %6564 = vmatmul.f32.gmra.mxu0 %v6453
        %v6565 = vpop.f32.mrf.mxu0
        %v6566 = vadd.f32 0.0, %v6565
        %6567 = vmatmul.f32.gmra.mxu0 %v6456
        %v6568 = vpop.f32.mrf.mxu0
        %v6569 = vadd.f32 0.0, %v6568
        %6570 = vmatmul.f32.gmra.mxu0 %v6459
        %v6571 = vpop.f32.mrf.mxu0
        %v6572 = vadd.f32 0.0, %v6571
        %6573 = vmatmul.f32.gmra.mxu0 %v6462
        %v6574 = vpop.f32.mrf.mxu0
        %v6575 = vadd.f32 0.0, %v6574
        %6576 = vmatmul.f32.gmra.mxu0 %v6465
        %v6577 = vpop.f32.mrf.mxu0
        %v6578 = vadd.f32 0.0, %v6577
        %6579 = vmatmul.f32.gmra.mxu0 %v6468
        %v6580 = vpop.f32.mrf.mxu0
        %v6581 = vadd.f32 0.0, %v6580
        %6582 = vmatmul.f32.gmra.mxu0 %v6471
        %v6583 = vpop.f32.mrf.mxu0
        %v6584 = vadd.f32 0.0, %v6583
        %6585 = vmatmul.f32.gmra.mxu0 %v6474
        %v6586 = vpop.f32.mrf.mxu0
        %v6587 = vadd.f32 0.0, %v6586
        %6588 = vmatmul.f32.gmra.mxu0 %v6477
        %v6589 = vpop.f32.mrf.mxu0
        %v6590 = vadd.f32 0.0, %v6589
        %6591 = vmatmul.f32.gmra.mxu0 %v6480
        %v6592 = vpop.f32.mrf.mxu0
        %v6593 = vadd.f32 0.0, %v6592
        %6594 = vmatmul.f32.gmra.mxu0 %v6483
        %v6595 = vpop.f32.mrf.mxu0
        %v6596 = vadd.f32 0.0, %v6595
        %6597 = vmatmul.f32.gmra.mxu0 %v6486
        %v6598 = vpop.f32.mrf.mxu0
        %v6599 = vadd.f32 0.0, %v6598
        %6600 = vmatmul.f32.gmra.mxu0 %v6489
        %v6601 = vpop.f32.mrf.mxu0
        %v6602 = vadd.f32 0.0, %v6601
        %6603 = vmatmul.f32.gmra.mxu0 %v6492
        %v6604 = vpop.f32.mrf.mxu0
        %v6605 = vadd.f32 0.0, %v6604
        %6606 = vmatmul.f32.gmra.mxu0 %v6495
        %v6607 = vpop.f32.mrf.mxu0
        %v6608 = vadd.f32 0.0, %v6607
        %6609 = vmatmul.f32.gmra.mxu0 %v6498
        %v6610 = vpop.f32.mrf.mxu0
        %v6611 = vadd.f32 0.0, %v6610
        %6612 = vdwg.mxu0
        %vm6613 = vcmp.ge.f32.partialorder %v6518, 0.0
        %vm6614 = vcmp.ge.f32.partialorder %v6521, 0.0
        %vm6615 = vcmp.ge.f32.partialorder %v6524, 0.0
        %vm6616 = vcmp.ge.f32.partialorder %v6527, 0.0
        %vm6617 = vcmp.ge.f32.partialorder %v6530, 0.0
        %vm6618 = vcmp.ge.f32.partialorder %v6533, 0.0
        %vm6619 = vcmp.ge.f32.partialorder %v6536, 0.0
        %vm6620 = vcmp.ge.f32.partialorder %v6539, 0.0
        %vm6621 = vcmp.ge.f32.partialorder %v6542, 0.0
        %vm6622 = vcmp.ge.f32.partialorder %v6545, 0.0
        %vm6623 = vcmp.ge.f32.partialorder %v6548, 0.0
        %vm6624 = vcmp.ge.f32.partialorder %v6551, 0.0
        %vm6625 = vcmp.ge.f32.partialorder %v6554, 0.0
        %vm6626 = vcmp.ge.f32.partialorder %v6557, 0.0
        %vm6627 = vcmp.ge.f32.partialorder %v6560, 0.0
        %vm6628 = vcmp.ge.f32.partialorder %v6563, 0.0
        %vm6629 = vcmp.ge.f32.partialorder %v6566, 0.0
        %vm6630 = vcmp.ge.f32.partialorder %v6569, 0.0
        %vm6631 = vcmp.ge.f32.partialorder %v6572, 0.0
        %vm6632 = vcmp.ge.f32.partialorder %v6575, 0.0
        %vm6633 = vcmp.ge.f32.partialorder %v6578, 0.0
        %vm6634 = vcmp.ge.f32.partialorder %v6581, 0.0
        %vm6635 = vcmp.ge.f32.partialorder %v6584, 0.0
        %vm6636 = vcmp.ge.f32.partialorder %v6587, 0.0
        %vm6637 = vcmp.ge.f32.partialorder %v6590, 0.0
        %vm6638 = vcmp.ge.f32.partialorder %v6593, 0.0
        %vm6639 = vcmp.ge.f32.partialorder %v6596, 0.0
        %vm6640 = vcmp.ge.f32.partialorder %v6599, 0.0
        %vm6641 = vcmp.ge.f32.partialorder %v6602, 0.0
        %vm6642 = vcmp.ge.f32.partialorder %v6605, 0.0
        %vm6643 = vcmp.ge.f32.partialorder %v6608, 0.0
        %vm6644 = vcmp.ge.f32.partialorder %v6611, 0.0
        %v6645 = vstv %s439
        %v6646 = vmul.f32 %v6645, %v6518
        %v6647 = vmul.f32 %v6645, %v6521
        %v6648 = vmul.f32 %v6645, %v6524
        %v6649 = vmul.f32 %v6645, %v6527
        %v6650 = vmul.f32 %v6645, %v6530
        %v6651 = vmul.f32 %v6645, %v6533
        %v6652 = vmul.f32 %v6645, %v6536
        %v6653 = vmul.f32 %v6645, %v6539
        %v6654 = vmul.f32 %v6645, %v6542
        %v6655 = vmul.f32 %v6645, %v6545
        %v6656 = vmul.f32 %v6645, %v6548
        %v6657 = vmul.f32 %v6645, %v6551
        %v6658 = vmul.f32 %v6645, %v6554
        %v6659 = vmul.f32 %v6645, %v6557
        %v6660 = vmul.f32 %v6645, %v6560
        %v6661 = vmul.f32 %v6645, %v6563
        %v6662 = vmul.f32 %v6645, %v6566
        %v6663 = vmul.f32 %v6645, %v6569
        %v6664 = vmul.f32 %v6645, %v6572
        %v6665 = vmul.f32 %v6645, %v6575
        %v6666 = vmul.f32 %v6645, %v6578
        %v6667 = vmul.f32 %v6645, %v6581
        %v6668 = vmul.f32 %v6645, %v6584
        %v6669 = vmul.f32 %v6645, %v6587
        %v6670 = vmul.f32 %v6645, %v6590
        %v6671 = vmul.f32 %v6645, %v6593
        %v6672 = vmul.f32 %v6645, %v6596
        %v6673 = vmul.f32 %v6645, %v6599
        %v6674 = vmul.f32 %v6645, %v6602
        %v6675 = vmul.f32 %v6645, %v6605
        %v6676 = vmul.f32 %v6645, %v6608
        %v6677 = vmul.f32 %v6645, %v6611
        %v6678 = vsel %vm6613, %v6518, %v6646
        %v6679 = vsel %vm6614, %v6521, %v6647
        %v6680 = vsel %vm6615, %v6524, %v6648
        %v6681 = vsel %vm6616, %v6527, %v6649
        %v6682 = vsel %vm6617, %v6530, %v6650
        %v6683 = vsel %vm6618, %v6533, %v6651
        %v6684 = vsel %vm6619, %v6536, %v6652
        %v6685 = vsel %vm6620, %v6539, %v6653
        %v6686 = vsel %vm6621, %v6542, %v6654
        %v6687 = vsel %vm6622, %v6545, %v6655
        %v6688 = vsel %vm6623, %v6548, %v6656
        %v6689 = vsel %vm6624, %v6551, %v6657
        %v6690 = vsel %vm6625, %v6554, %v6658
        %v6691 = vsel %vm6626, %v6557, %v6659
        %v6692 = vsel %vm6627, %v6560, %v6660
        %v6693 = vsel %vm6628, %v6563, %v6661
        %v6694 = vsel %vm6629, %v6566, %v6662
        %v6695 = vsel %vm6630, %v6569, %v6663
        %v6696 = vsel %vm6631, %v6572, %v6664
        %v6697 = vsel %vm6632, %v6575, %v6665
        %v6698 = vsel %vm6633, %v6578, %v6666
        %v6699 = vsel %vm6634, %v6581, %v6667
        %v6700 = vsel %vm6635, %v6584, %v6668
        %v6701 = vsel %vm6636, %v6587, %v6669
        %v6702 = vsel %vm6637, %v6590, %v6670
        %v6703 = vsel %vm6638, %v6593, %v6671
        %v6704 = vsel %vm6639, %v6596, %v6672
        %v6705 = vsel %vm6640, %v6599, %v6673
        %v6706 = vsel %vm6641, %v6602, %v6674
        %v6707 = vsel %vm6642, %v6605, %v6675
        %v6708 = vsel %vm6643, %v6608, %v6676
        %v6709 = vsel %vm6644, %v6611, %v6677
        %v6710 = vadd.f32 %v6678, %v6679
        %v6711 = vadd.f32 %v6710, %v6680
        %v6712 = vadd.f32 %v6711, %v6681
        %v6713 = vadd.f32 %v6712, %v6682
        %v6714 = vadd.f32 %v6713, %v6683
        %v6715 = vadd.f32 %v6714, %v6684
        %v6716 = vadd.f32 %v6715, %v6685
        %v6717 = vadd.f32 %v6716, %v6686
        %v6718 = vadd.f32 %v6717, %v6687
        %v6719 = vadd.f32 %v6718, %v6688
        %v6720 = vadd.f32 %v6719, %v6689
        %v6721 = vadd.f32 %v6720, %v6690
        %v6722 = vadd.f32 %v6721, %v6691
        %v6723 = vadd.f32 %v6722, %v6692
        %v6724 = vadd.f32 %v6723, %v6693
        %v6725 = vadd.f32 %v6724, %v6694
        %v6726 = vadd.f32 %v6725, %v6695
        %v6727 = vadd.f32 %v6726, %v6696
        %v6728 = vadd.f32 %v6727, %v6697
        %v6729 = vadd.f32 %v6728, %v6698
        %v6730 = vadd.f32 %v6729, %v6699
        %v6731 = vadd.f32 %v6730, %v6700
        %v6732 = vadd.f32 %v6731, %v6701
        %v6733 = vadd.f32 %v6732, %v6702
        %v6734 = vadd.f32 %v6733, %v6703
        %v6735 = vadd.f32 %v6734, %v6704
        %v6736 = vadd.f32 %v6735, %v6705
        %v6737 = vadd.f32 %v6736, %v6706
        %v6738 = vadd.f32 %v6737, %v6707
        %v6739 = vadd.f32 %v6738, %v6708
        %v6740 = vadd.f32 %v6739, %v6709
        %v6741 = vrot.slane %v6740, 4
        %v6742 = vadd.f32 %v6740, %v6741
        %v6743 = vrot.slane %v6742, 2
        %v6744 = vadd.f32 %v6742, %v6743
        %v6745 = vrot.slane %v6744, 1
        %v6746 = vadd.f32 %v6744, %v6745
        %v6747 = vmul.f32 %v6746, 0.00390625
        %v6748 = vld [vmem:[%s6] sm:$0xff]
        %v6749 = vld [vmem:[%s6 + $0x8] sm:$0xff]
        %v6750 = vld [vmem:[%s6 + $0x10] sm:$0xff]
        %v6751 = vld [vmem:[%s6 + $0x18] sm:$0xff]
        %v6752 = vld [vmem:[%s6 + $0x20] sm:$0xff]
        %v6753 = vld [vmem:[%s6 + $0x28] sm:$0xff]
        %v6754 = vld [vmem:[%s6 + $0x30] sm:$0xff]
        %v6755 = vld [vmem:[%s6 + $0x38] sm:$0xff]
        %v6756 = vld [vmem:[%s6 + $0x40] sm:$0xff]
        %v6757 = vld [vmem:[%s6 + $0x48] sm:$0xff]
        %v6758 = vld [vmem:[%s6 + $0x50] sm:$0xff]
        %v6759 = vld [vmem:[%s6 + $0x58] sm:$0xff]
        %v6760 = vld [vmem:[%s6 + $0x60] sm:$0xff]
        %v6761 = vld [vmem:[%s6 + $0x68] sm:$0xff]
        %v6762 = vld [vmem:[%s6 + $0x70] sm:$0xff]
        %v6763 = vld [vmem:[%s6 + $0x78] sm:$0xff]
        %6764 = vmatpush.msra.mxu0 %v6763
        %6765 = vmatpush.msra.mxu0 %v6762
        %6766 = vmatpush.msra.mxu0 %v6761
        %6767 = vmatpush.msra.mxu0 %v6760
        %6768 = vmatpush.msra.mxu0 %v6759
        %6769 = vmatpush.msra.mxu0 %v6758
        %6770 = vmatpush.msra.mxu0 %v6757
        %6771 = vmatpush.msra.mxu0 %v6756
        %6772 = vmatpush.msra.mxu0 %v6755
        %6773 = vmatpush.msra.mxu0 %v6754
        %6774 = vmatpush.msra.mxu0 %v6753
        %6775 = vmatpush.msra.mxu0 %v6752
        %6776 = vmatpush.msra.mxu0 %v6751
        %6777 = vmatpush.msra.mxu0 %v6750
        %6778 = vmatpush.msra.mxu0 %v6749
        %6779 = vmatpush.msra.mxu0 %v6748
        %6780 = vmatmul.f32.gmra.mxu0 %v6747
        %v6781 = vpop.f32.mrf.mxu0
        %v6782 = vadd.f32 0.0, %v6781
        %6783 = vdwg.mxu0
        %v6784 = vxor.u32 %v6782, 2147483648
        %v6785 = vmul.f32 %v6784, 1.442695
        %v6786 = vpow.pop %v6785
        %v6787 = vadd.f32 %v6786, 1.0
        %v6788 = vrcp.pop %v6787
        %v6789 = vmul.f32 %v6787, %v6788
        %v6790 = vsub.f32 1.0, %v6789
        %v6791 = vmul.f32 %v6788, %v6790
        %v6792 = vadd.f32 %v6788, %v6791
        %vm6793 = vweird.f32 %v6787
        %vm6794 = vweird.f32 %v6788
        %vm6795 = vmor %vm6793, %vm6794
        %v6796 = vsel %vm6795, %v6788, %v6792
        %v6797 = vand.u32 2147483647, %v6787
        %vm6798 = vcmp.eq.f32.partialorder %v6797, 8.507059e+37
        %v6799 = vand.u32 %v6787, 2147483648
        %v6800 = vor.u32 1.1754944e-38, %v6799
        %v6801 = vsel %vm6798, %v6800, %v6796
        %v6802 = vmul.f32 1.0, %v6801
        %v6803 = vmul.f32 %v6782, %v6802
        %v6804 = vld [vmem:[%s7] sm:$0xff]
        %vm6805 = vcmask 64512
        %v6807 = vsel %vm6805, %v6803, 0
        %6809 = vmatpush.msra.mxu0 0.0
        %6810 = vmatpush.msra.mxu0 0.0
        %6811 = vmatpush.msra.mxu0 0.0
        %6812 = vmatpush.msra.mxu0 0.0
        %6813 = vmatpush.msra.mxu0 0.0
        %6814 = vmatpush.msra.mxu0 0.0
        %6815 = vmatpush.msra.mxu0 0.0
        %6816 = vmatpush.msra.mxu0 0.0
        %6817 = vmatpush.msra.mxu0 0.0
        %6818 = vmatpush.msra.mxu0 0.0
        %6819 = vmatpush.msra.mxu0 0.0
        %6820 = vmatpush.msra.mxu0 0.0
        %6821 = vmatpush.msra.mxu0 0.0
        %6822 = vmatpush.msra.mxu0 0.0
        %6823 = vmatpush.msra.mxu0 0.0
        %6824 = vmatpush.msra.mxu0 %v6804
        %6825 = vmatmul.f32.gmra.mxu0 %v6807
        %v6826 = vpop.f32.mrf.mxu0
        %v6827 = vadd.f32 0.0, %v6826
        %6828 = vdwg.mxu0
        %v6829 = vxor.u32 %v6827, 2147483648
        %v6830 = vmul.f32 %v6829, 1.442695
        %v6831 = vpow.pop %v6830
        %v6832 = vadd.f32 %v6831, 1.0
        %v6833 = vrcp.pop %v6832
        %v6834 = vmul.f32 %v6832, %v6833
        %v6835 = vsub.f32 1.0, %v6834
        %v6836 = vmul.f32 %v6833, %v6835
        %v6837 = vadd.f32 %v6833, %v6836
        %vm6838 = vweird.f32 %v6832
        %vm6839 = vweird.f32 %v6833
        %vm6840 = vmor %vm6838, %vm6839
        %v6841 = vsel %vm6840, %v6833, %v6837
        %v6842 = vand.u32 2147483647, %v6832
        %vm6843 = vcmp.eq.f32.partialorder %v6842, 8.507059e+37
        %v6844 = vand.u32 %v6832, 2147483648
        %v6845 = vor.u32 1.1754944e-38, %v6844
        %v6846 = vsel %vm6843, %v6845, %v6841
        %v6847 = vmul.f32 1.0, %v6846
        %v6848 = vperm.slane %v6847, 0
        %v6849 = vmul.f32 %v6678, %v6848
        %v6850 = vmul.f32 %v6679, %v6848
        %v6851 = vmul.f32 %v6680, %v6848
        %v6852 = vmul.f32 %v6681, %v6848
        %v6853 = vmul.f32 %v6682, %v6848
        %v6854 = vmul.f32 %v6683, %v6848
        %v6855 = vmul.f32 %v6684, %v6848
        %v6856 = vmul.f32 %v6685, %v6848
        %v6857 = vmul.f32 %v6686, %v6848
        %v6858 = vmul.f32 %v6687, %v6848
        %v6859 = vmul.f32 %v6688, %v6848
        %v6860 = vmul.f32 %v6689, %v6848
        %v6861 = vmul.f32 %v6690, %v6848
        %v6862 = vmul.f32 %v6691, %v6848
        %v6863 = vmul.f32 %v6692, %v6848
        %v6864 = vmul.f32 %v6693, %v6848
        %v6865 = vmul.f32 %v6694, %v6848
        %v6866 = vmul.f32 %v6695, %v6848
        %v6867 = vmul.f32 %v6696, %v6848
        %v6868 = vmul.f32 %v6697, %v6848
        %v6869 = vmul.f32 %v6698, %v6848
        %v6870 = vmul.f32 %v6699, %v6848
        %v6871 = vmul.f32 %v6700, %v6848
        %v6872 = vmul.f32 %v6701, %v6848
        %v6873 = vmul.f32 %v6702, %v6848
        %v6874 = vmul.f32 %v6703, %v6848
        %v6875 = vmul.f32 %v6704, %v6848
        %v6876 = vmul.f32 %v6705, %v6848
        %v6877 = vmul.f32 %v6706, %v6848
        %v6878 = vmul.f32 %v6707, %v6848
        %v6879 = vmul.f32 %v6708, %v6848
        %v6880 = vmul.f32 %v6709, %v6848
        %v6881 = vld [vmem:[%s8] sm:$0xff]
        %v6882 = vld [vmem:[%s8 + $0x8] sm:$0xff]
        %v6883 = vld [vmem:[%s8 + $0x10] sm:$0xff]
        %v6884 = vld [vmem:[%s8 + $0x18] sm:$0xff]
        %v6885 = vld [vmem:[%s8 + $0x20] sm:$0xff]
        %v6886 = vld [vmem:[%s8 + $0x28] sm:$0xff]
        %v6887 = vld [vmem:[%s8 + $0x30] sm:$0xff]
        %v6888 = vld [vmem:[%s8 + $0x38] sm:$0xff]
        %v6889 = vld [vmem:[%s8 + $0x40] sm:$0xff]
        %v6890 = vld [vmem:[%s8 + $0x48] sm:$0xff]
        %v6891 = vld [vmem:[%s8 + $0x50] sm:$0xff]
        %v6892 = vld [vmem:[%s8 + $0x58] sm:$0xff]
        %v6893 = vld [vmem:[%s8 + $0x60] sm:$0xff]
        %v6894 = vld [vmem:[%s8 + $0x68] sm:$0xff]
        %v6895 = vld [vmem:[%s8 + $0x70] sm:$0xff]
        %v6896 = vld [vmem:[%s8 + $0x78] sm:$0xff]
        %6897 = vmatpush.msra.mxu0 %v6896
        %6898 = vmatpush.msra.mxu0 %v6895
        %6899 = vmatpush.msra.mxu0 %v6894
        %6900 = vmatpush.msra.mxu0 %v6893
        %6901 = vmatpush.msra.mxu0 %v6892
        %6902 = vmatpush.msra.mxu0 %v6891
        %6903 = vmatpush.msra.mxu0 %v6890
        %6904 = vmatpush.msra.mxu0 %v6889
        %6905 = vmatpush.msra.mxu0 %v6888
        %6906 = vmatpush.msra.mxu0 %v6887
        %6907 = vmatpush.msra.mxu0 %v6886
        %6908 = vmatpush.msra.mxu0 %v6885
        %6909 = vmatpush.msra.mxu0 %v6884
        %6910 = vmatpush.msra.mxu0 %v6883
        %6911 = vmatpush.msra.mxu0 %v6882
        %6912 = vmatpush.msra.mxu0 %v6881
        %6913 = vmatmul.f32.gmra.mxu0 %v6849
        %v6914 = vpop.f32.mrf.mxu0
        %v6915 = vadd.f32 0.0, %v6914
        %6916 = vmatmul.f32.gmra.mxu0 %v6850
        %v6917 = vpop.f32.mrf.mxu0
        %v6918 = vadd.f32 0.0, %v6917
        %6919 = vmatmul.f32.gmra.mxu0 %v6851
        %v6920 = vpop.f32.mrf.mxu0
        %v6921 = vadd.f32 0.0, %v6920
        %6922 = vmatmul.f32.gmra.mxu0 %v6852
        %v6923 = vpop.f32.mrf.mxu0
        %v6924 = vadd.f32 0.0, %v6923
        %6925 = vmatmul.f32.gmra.mxu0 %v6853
        %v6926 = vpop.f32.mrf.mxu0
        %v6927 = vadd.f32 0.0, %v6926
        %6928 = vmatmul.f32.gmra.mxu0 %v6854
        %v6929 = vpop.f32.mrf.mxu0
        %v6930 = vadd.f32 0.0, %v6929
        %6931 = vmatmul.f32.gmra.mxu0 %v6855
        %v6932 = vpop.f32.mrf.mxu0
        %v6933 = vadd.f32 0.0, %v6932
        %6934 = vmatmul.f32.gmra.mxu0 %v6856
        %v6935 = vpop.f32.mrf.mxu0
        %v6936 = vadd.f32 0.0, %v6935
        %6937 = vmatmul.f32.gmra.mxu0 %v6857
        %v6938 = vpop.f32.mrf.mxu0
        %v6939 = vadd.f32 0.0, %v6938
        %6940 = vmatmul.f32.gmra.mxu0 %v6858
        %v6941 = vpop.f32.mrf.mxu0
        %v6942 = vadd.f32 0.0, %v6941
        %6943 = vmatmul.f32.gmra.mxu0 %v6859
        %v6944 = vpop.f32.mrf.mxu0
        %v6945 = vadd.f32 0.0, %v6944
        %6946 = vmatmul.f32.gmra.mxu0 %v6860
        %v6947 = vpop.f32.mrf.mxu0
        %v6948 = vadd.f32 0.0, %v6947
        %6949 = vmatmul.f32.gmra.mxu0 %v6861
        %v6950 = vpop.f32.mrf.mxu0
        %v6951 = vadd.f32 0.0, %v6950
        %6952 = vmatmul.f32.gmra.mxu0 %v6862
        %v6953 = vpop.f32.mrf.mxu0
        %v6954 = vadd.f32 0.0, %v6953
        %6955 = vmatmul.f32.gmra.mxu0 %v6863
        %v6956 = vpop.f32.mrf.mxu0
        %v6957 = vadd.f32 0.0, %v6956
        %6958 = vmatmul.f32.gmra.mxu0 %v6864
        %v6959 = vpop.f32.mrf.mxu0
        %v6960 = vadd.f32 0.0, %v6959
        %6961 = vmatmul.f32.gmra.mxu0 %v6865
        %v6962 = vpop.f32.mrf.mxu0
        %v6963 = vadd.f32 0.0, %v6962
        %6964 = vmatmul.f32.gmra.mxu0 %v6866
        %v6965 = vpop.f32.mrf.mxu0
        %v6966 = vadd.f32 0.0, %v6965
        %6967 = vmatmul.f32.gmra.mxu0 %v6867
        %v6968 = vpop.f32.mrf.mxu0
        %v6969 = vadd.f32 0.0, %v6968
        %6970 = vmatmul.f32.gmra.mxu0 %v6868
        %v6971 = vpop.f32.mrf.mxu0
        %v6972 = vadd.f32 0.0, %v6971
        %6973 = vmatmul.f32.gmra.mxu0 %v6869
        %v6974 = vpop.f32.mrf.mxu0
        %v6975 = vadd.f32 0.0, %v6974
        %6976 = vmatmul.f32.gmra.mxu0 %v6870
        %v6977 = vpop.f32.mrf.mxu0
        %v6978 = vadd.f32 0.0, %v6977
        %6979 = vmatmul.f32.gmra.mxu0 %v6871
        %v6980 = vpop.f32.mrf.mxu0
        %v6981 = vadd.f32 0.0, %v6980
        %6982 = vmatmul.f32.gmra.mxu0 %v6872
        %v6983 = vpop.f32.mrf.mxu0
        %v6984 = vadd.f32 0.0, %v6983
        %6985 = vmatmul.f32.gmra.mxu0 %v6873
        %v6986 = vpop.f32.mrf.mxu0
        %v6987 = vadd.f32 0.0, %v6986
        %6988 = vmatmul.f32.gmra.mxu0 %v6874
        %v6989 = vpop.f32.mrf.mxu0
        %v6990 = vadd.f32 0.0, %v6989
        %6991 = vmatmul.f32.gmra.mxu0 %v6875
        %v6992 = vpop.f32.mrf.mxu0
        %v6993 = vadd.f32 0.0, %v6992
        %6994 = vmatmul.f32.gmra.mxu0 %v6876
        %v6995 = vpop.f32.mrf.mxu0
        %v6996 = vadd.f32 0.0, %v6995
        %6997 = vmatmul.f32.gmra.mxu0 %v6877
        %v6998 = vpop.f32.mrf.mxu0
        %v6999 = vadd.f32 0.0, %v6998
        %7000 = vmatmul.f32.gmra.mxu0 %v6878
        %v7001 = vpop.f32.mrf.mxu0
        %v7002 = vadd.f32 0.0, %v7001
        %7003 = vmatmul.f32.gmra.mxu0 %v6879
        %v7004 = vpop.f32.mrf.mxu0
        %v7005 = vadd.f32 0.0, %v7004
        %7006 = vmatmul.f32.gmra.mxu0 %v6880
        %v7007 = vpop.f32.mrf.mxu0
        %v7008 = vadd.f32 0.0, %v7007
        %7009 = vdwg.mxu0
        %vm7010 = vcmp.ge.f32.partialorder %v6915, 0.0
        %vm7011 = vcmp.ge.f32.partialorder %v6918, 0.0
        %vm7012 = vcmp.ge.f32.partialorder %v6921, 0.0
        %vm7013 = vcmp.ge.f32.partialorder %v6924, 0.0
        %vm7014 = vcmp.ge.f32.partialorder %v6927, 0.0
        %vm7015 = vcmp.ge.f32.partialorder %v6930, 0.0
        %vm7016 = vcmp.ge.f32.partialorder %v6933, 0.0
        %vm7017 = vcmp.ge.f32.partialorder %v6936, 0.0
        %vm7018 = vcmp.ge.f32.partialorder %v6939, 0.0
        %vm7019 = vcmp.ge.f32.partialorder %v6942, 0.0
        %vm7020 = vcmp.ge.f32.partialorder %v6945, 0.0
        %vm7021 = vcmp.ge.f32.partialorder %v6948, 0.0
        %vm7022 = vcmp.ge.f32.partialorder %v6951, 0.0
        %vm7023 = vcmp.ge.f32.partialorder %v6954, 0.0
        %vm7024 = vcmp.ge.f32.partialorder %v6957, 0.0
        %vm7025 = vcmp.ge.f32.partialorder %v6960, 0.0
        %vm7026 = vcmp.ge.f32.partialorder %v6963, 0.0
        %vm7027 = vcmp.ge.f32.partialorder %v6966, 0.0
        %vm7028 = vcmp.ge.f32.partialorder %v6969, 0.0
        %vm7029 = vcmp.ge.f32.partialorder %v6972, 0.0
        %vm7030 = vcmp.ge.f32.partialorder %v6975, 0.0
        %vm7031 = vcmp.ge.f32.partialorder %v6978, 0.0
        %vm7032 = vcmp.ge.f32.partialorder %v6981, 0.0
        %vm7033 = vcmp.ge.f32.partialorder %v6984, 0.0
        %vm7034 = vcmp.ge.f32.partialorder %v6987, 0.0
        %vm7035 = vcmp.ge.f32.partialorder %v6990, 0.0
        %vm7036 = vcmp.ge.f32.partialorder %v6993, 0.0
        %vm7037 = vcmp.ge.f32.partialorder %v6996, 0.0
        %vm7038 = vcmp.ge.f32.partialorder %v6999, 0.0
        %vm7039 = vcmp.ge.f32.partialorder %v7002, 0.0
        %vm7040 = vcmp.ge.f32.partialorder %v7005, 0.0
        %vm7041 = vcmp.ge.f32.partialorder %v7008, 0.0
        %v7042 = vstv %s440
        %v7043 = vmul.f32 %v7042, %v6915
        %v7044 = vmul.f32 %v7042, %v6918
        %v7045 = vmul.f32 %v7042, %v6921
        %v7046 = vmul.f32 %v7042, %v6924
        %v7047 = vmul.f32 %v7042, %v6927
        %v7048 = vmul.f32 %v7042, %v6930
        %v7049 = vmul.f32 %v7042, %v6933
        %v7050 = vmul.f32 %v7042, %v6936
        %v7051 = vmul.f32 %v7042, %v6939
        %v7052 = vmul.f32 %v7042, %v6942
        %v7053 = vmul.f32 %v7042, %v6945
        %v7054 = vmul.f32 %v7042, %v6948
        %v7055 = vmul.f32 %v7042, %v6951
        %v7056 = vmul.f32 %v7042, %v6954
        %v7057 = vmul.f32 %v7042, %v6957
        %v7058 = vmul.f32 %v7042, %v6960
        %v7059 = vmul.f32 %v7042, %v6963
        %v7060 = vmul.f32 %v7042, %v6966
        %v7061 = vmul.f32 %v7042, %v6969
        %v7062 = vmul.f32 %v7042, %v6972
        %v7063 = vmul.f32 %v7042, %v6975
        %v7064 = vmul.f32 %v7042, %v6978
        %v7065 = vmul.f32 %v7042, %v6981
        %v7066 = vmul.f32 %v7042, %v6984
        %v7067 = vmul.f32 %v7042, %v6987
        %v7068 = vmul.f32 %v7042, %v6990
        %v7069 = vmul.f32 %v7042, %v6993
        %v7070 = vmul.f32 %v7042, %v6996
        %v7071 = vmul.f32 %v7042, %v6999
        %v7072 = vmul.f32 %v7042, %v7002
        %v7073 = vmul.f32 %v7042, %v7005
        %v7074 = vmul.f32 %v7042, %v7008
        %v7075 = vsel %vm7010, %v6915, %v7043
        %v7076 = vsel %vm7011, %v6918, %v7044
        %v7077 = vsel %vm7012, %v6921, %v7045
        %v7078 = vsel %vm7013, %v6924, %v7046
        %v7079 = vsel %vm7014, %v6927, %v7047
        %v7080 = vsel %vm7015, %v6930, %v7048
        %v7081 = vsel %vm7016, %v6933, %v7049
        %v7082 = vsel %vm7017, %v6936, %v7050
        %v7083 = vsel %vm7018, %v6939, %v7051
        %v7084 = vsel %vm7019, %v6942, %v7052
        %v7085 = vsel %vm7020, %v6945, %v7053
        %v7086 = vsel %vm7021, %v6948, %v7054
        %v7087 = vsel %vm7022, %v6951, %v7055
        %v7088 = vsel %vm7023, %v6954, %v7056
        %v7089 = vsel %vm7024, %v6957, %v7057
        %v7090 = vsel %vm7025, %v6960, %v7058
        %v7091 = vsel %vm7026, %v6963, %v7059
        %v7092 = vsel %vm7027, %v6966, %v7060
        %v7093 = vsel %vm7028, %v6969, %v7061
        %v7094 = vsel %vm7029, %v6972, %v7062
        %v7095 = vsel %vm7030, %v6975, %v7063
        %v7096 = vsel %vm7031, %v6978, %v7064
        %v7097 = vsel %vm7032, %v6981, %v7065
        %v7098 = vsel %vm7033, %v6984, %v7066
        %v7099 = vsel %vm7034, %v6987, %v7067
        %v7100 = vsel %vm7035, %v6990, %v7068
        %v7101 = vsel %vm7036, %v6993, %v7069
        %v7102 = vsel %vm7037, %v6996, %v7070
        %v7103 = vsel %vm7038, %v6999, %v7071
        %v7104 = vsel %vm7039, %v7002, %v7072
        %v7105 = vsel %vm7040, %v7005, %v7073
        %v7106 = vsel %vm7041, %v7008, %v7074
        %s7107 = scalar_lea.vmem %s5, 32
        %v7108 = vld [vmem:[%s7107] sm:$0xff]
        %v7109 = vld [vmem:[%s7107 + $0x8] sm:$0xff]
        %v7110 = vld [vmem:[%s7107 + $0x10] sm:$0xff]
        %v7111 = vld [vmem:[%s7107 + $0x18] sm:$0xff]
        %v7113 = vsel %vm372, %v7075, 0
        %v7116 = vsel %vm372, %v7076, 0
        %v7119 = vsel %vm372, %v7077, 0
        %v7122 = vsel %vm372, %v7078, 0
        %v7125 = vsel %vm372, %v7079, 0
        %v7128 = vsel %vm372, %v7080, 0
        %v7131 = vsel %vm372, %v7081, 0
        %v7134 = vsel %vm372, %v7082, 0
        %v7137 = vsel %vm372, %v7083, 0
        %v7140 = vsel %vm372, %v7084, 0
        %v7143 = vsel %vm372, %v7085, 0
        %v7146 = vsel %vm372, %v7086, 0
        %v7149 = vsel %vm372, %v7087, 0
        %v7152 = vsel %vm372, %v7088, 0
        %v7155 = vsel %vm372, %v7089, 0
        %v7158 = vsel %vm372, %v7090, 0
        %v7161 = vsel %vm372, %v7091, 0
        %v7164 = vsel %vm372, %v7092, 0
        %v7167 = vsel %vm372, %v7093, 0
        %v7170 = vsel %vm372, %v7094, 0
        %v7173 = vsel %vm372, %v7095, 0
        %v7176 = vsel %vm372, %v7096, 0
        %v7179 = vsel %vm372, %v7097, 0
        %v7182 = vsel %vm372, %v7098, 0
        %v7185 = vsel %vm372, %v7099, 0
        %v7188 = vsel %vm372, %v7100, 0
        %v7191 = vsel %vm372, %v7101, 0
        %v7194 = vsel %vm372, %v7102, 0
        %v7197 = vsel %vm372, %v7103, 0
        %v7200 = vsel %vm372, %v7104, 0
        %v7203 = vsel %vm372, %v7105, 0
        %v7206 = vsel %vm372, %v7106, 0
        %7208 = vmatpush.msra.mxu0 0.0
        %7209 = vmatpush.msra.mxu0 0.0
        %7210 = vmatpush.msra.mxu0 0.0
        %7211 = vmatpush.msra.mxu0 0.0
        %7212 = vmatpush.msra.mxu0 0.0
        %7213 = vmatpush.msra.mxu0 0.0
        %7214 = vmatpush.msra.mxu0 0.0
        %7215 = vmatpush.msra.mxu0 0.0
        %7216 = vmatpush.msra.mxu0 0.0
        %7217 = vmatpush.msra.mxu0 0.0
        %7218 = vmatpush.msra.mxu0 0.0
        %7219 = vmatpush.msra.mxu0 0.0
        %7220 = vmatpush.msra.mxu0 %v7111
        %7221 = vmatpush.msra.mxu0 %v7110
        %7222 = vmatpush.msra.mxu0 %v7109
        %7223 = vmatpush.msra.mxu0 %v7108
        %7224 = vmatmul.f32.gmra.mxu0 %v7113
        %v7225 = vpop.f32.mrf.mxu0
        %v7226 = vadd.f32 0.0, %v7225
        %7227 = vmatmul.f32.gmra.mxu0 %v7116
        %v7228 = vpop.f32.mrf.mxu0
        %v7229 = vadd.f32 0.0, %v7228
        %7230 = vmatmul.f32.gmra.mxu0 %v7119
        %v7231 = vpop.f32.mrf.mxu0
        %v7232 = vadd.f32 0.0, %v7231
        %7233 = vmatmul.f32.gmra.mxu0 %v7122
        %v7234 = vpop.f32.mrf.mxu0
        %v7235 = vadd.f32 0.0, %v7234
        %7236 = vmatmul.f32.gmra.mxu0 %v7125
        %v7237 = vpop.f32.mrf.mxu0
        %v7238 = vadd.f32 0.0, %v7237
        %7239 = vmatmul.f32.gmra.mxu0 %v7128
        %v7240 = vpop.f32.mrf.mxu0
        %v7241 = vadd.f32 0.0, %v7240
        %7242 = vmatmul.f32.gmra.mxu0 %v7131
        %v7243 = vpop.f32.mrf.mxu0
        %v7244 = vadd.f32 0.0, %v7243
        %7245 = vmatmul.f32.gmra.mxu0 %v7134
        %v7246 = vpop.f32.mrf.mxu0
        %v7247 = vadd.f32 0.0, %v7246
        %7248 = vmatmul.f32.gmra.mxu0 %v7137
        %v7249 = vpop.f32.mrf.mxu0
        %v7250 = vadd.f32 0.0, %v7249
        %7251 = vmatmul.f32.gmra.mxu0 %v7140
        %v7252 = vpop.f32.mrf.mxu0
        %v7253 = vadd.f32 0.0, %v7252
        %7254 = vmatmul.f32.gmra.mxu0 %v7143
        %v7255 = vpop.f32.mrf.mxu0
        %v7256 = vadd.f32 0.0, %v7255
        %7257 = vmatmul.f32.gmra.mxu0 %v7146
        %v7258 = vpop.f32.mrf.mxu0
        %v7259 = vadd.f32 0.0, %v7258
        %7260 = vmatmul.f32.gmra.mxu0 %v7149
        %v7261 = vpop.f32.mrf.mxu0
        %v7262 = vadd.f32 0.0, %v7261
        %7263 = vmatmul.f32.gmra.mxu0 %v7152
        %v7264 = vpop.f32.mrf.mxu0
        %v7265 = vadd.f32 0.0, %v7264
        %7266 = vmatmul.f32.gmra.mxu0 %v7155
        %v7267 = vpop.f32.mrf.mxu0
        %v7268 = vadd.f32 0.0, %v7267
        %7269 = vmatmul.f32.gmra.mxu0 %v7158
        %v7270 = vpop.f32.mrf.mxu0
        %v7271 = vadd.f32 0.0, %v7270
        %7272 = vmatmul.f32.gmra.mxu0 %v7161
        %v7273 = vpop.f32.mrf.mxu0
        %v7274 = vadd.f32 0.0, %v7273
        %7275 = vmatmul.f32.gmra.mxu0 %v7164
        %v7276 = vpop.f32.mrf.mxu0
        %v7277 = vadd.f32 0.0, %v7276
        %7278 = vmatmul.f32.gmra.mxu0 %v7167
        %v7279 = vpop.f32.mrf.mxu0
        %v7280 = vadd.f32 0.0, %v7279
        %7281 = vmatmul.f32.gmra.mxu0 %v7170
        %v7282 = vpop.f32.mrf.mxu0
        %v7283 = vadd.f32 0.0, %v7282
        %7284 = vmatmul.f32.gmra.mxu0 %v7173
        %v7285 = vpop.f32.mrf.mxu0
        %v7286 = vadd.f32 0.0, %v7285
        %7287 = vmatmul.f32.gmra.mxu0 %v7176
        %v7288 = vpop.f32.mrf.mxu0
        %v7289 = vadd.f32 0.0, %v7288
        %7290 = vmatmul.f32.gmra.mxu0 %v7179
        %v7291 = vpop.f32.mrf.mxu0
        %v7292 = vadd.f32 0.0, %v7291
        %7293 = vmatmul.f32.gmra.mxu0 %v7182
        %v7294 = vpop.f32.mrf.mxu0
        %v7295 = vadd.f32 0.0, %v7294
        %7296 = vmatmul.f32.gmra.mxu0 %v7185
        %v7297 = vpop.f32.mrf.mxu0
        %v7298 = vadd.f32 0.0, %v7297
        %7299 = vmatmul.f32.gmra.mxu0 %v7188
        %v7300 = vpop.f32.mrf.mxu0
        %v7301 = vadd.f32 0.0, %v7300
        %7302 = vmatmul.f32.gmra.mxu0 %v7191
        %v7303 = vpop.f32.mrf.mxu0
        %v7304 = vadd.f32 0.0, %v7303
        %7305 = vmatmul.f32.gmra.mxu0 %v7194
        %v7306 = vpop.f32.mrf.mxu0
        %v7307 = vadd.f32 0.0, %v7306
        %7308 = vmatmul.f32.gmra.mxu0 %v7197
        %v7309 = vpop.f32.mrf.mxu0
        %v7310 = vadd.f32 0.0, %v7309
        %7311 = vmatmul.f32.gmra.mxu0 %v7200
        %v7312 = vpop.f32.mrf.mxu0
        %v7313 = vadd.f32 0.0, %v7312
        %7314 = vmatmul.f32.gmra.mxu0 %v7203
        %v7315 = vpop.f32.mrf.mxu0
        %v7316 = vadd.f32 0.0, %v7315
        %7317 = vmatmul.f32.gmra.mxu0 %v7206
        %v7318 = vpop.f32.mrf.mxu0
        %v7319 = vadd.f32 0.0, %v7318
        %7320 = vdwg.mxu0
        %vm7321 = vcmp.ge.f32.partialorder %v7226, 0.0
        %vm7322 = vcmp.ge.f32.partialorder %v7229, 0.0
        %vm7323 = vcmp.ge.f32.partialorder %v7232, 0.0
        %vm7324 = vcmp.ge.f32.partialorder %v7235, 0.0
        %vm7325 = vcmp.ge.f32.partialorder %v7238, 0.0
        %vm7326 = vcmp.ge.f32.partialorder %v7241, 0.0
        %vm7327 = vcmp.ge.f32.partialorder %v7244, 0.0
        %vm7328 = vcmp.ge.f32.partialorder %v7247, 0.0
        %vm7329 = vcmp.ge.f32.partialorder %v7250, 0.0
        %vm7330 = vcmp.ge.f32.partialorder %v7253, 0.0
        %vm7331 = vcmp.ge.f32.partialorder %v7256, 0.0
        %vm7332 = vcmp.ge.f32.partialorder %v7259, 0.0
        %vm7333 = vcmp.ge.f32.partialorder %v7262, 0.0
        %vm7334 = vcmp.ge.f32.partialorder %v7265, 0.0
        %vm7335 = vcmp.ge.f32.partialorder %v7268, 0.0
        %vm7336 = vcmp.ge.f32.partialorder %v7271, 0.0
        %vm7337 = vcmp.ge.f32.partialorder %v7274, 0.0
        %vm7338 = vcmp.ge.f32.partialorder %v7277, 0.0
        %vm7339 = vcmp.ge.f32.partialorder %v7280, 0.0
        %vm7340 = vcmp.ge.f32.partialorder %v7283, 0.0
        %vm7341 = vcmp.ge.f32.partialorder %v7286, 0.0
        %vm7342 = vcmp.ge.f32.partialorder %v7289, 0.0
        %vm7343 = vcmp.ge.f32.partialorder %v7292, 0.0
        %vm7344 = vcmp.ge.f32.partialorder %v7295, 0.0
        %vm7345 = vcmp.ge.f32.partialorder %v7298, 0.0
        %vm7346 = vcmp.ge.f32.partialorder %v7301, 0.0
        %vm7347 = vcmp.ge.f32.partialorder %v7304, 0.0
        %vm7348 = vcmp.ge.f32.partialorder %v7307, 0.0
        %vm7349 = vcmp.ge.f32.partialorder %v7310, 0.0
        %vm7350 = vcmp.ge.f32.partialorder %v7313, 0.0
        %vm7351 = vcmp.ge.f32.partialorder %v7316, 0.0
        %vm7352 = vcmp.ge.f32.partialorder %v7319, 0.0
        %v7353 = vstv %s441
        %v7354 = vmul.f32 %v7353, %v7226
        %v7355 = vmul.f32 %v7353, %v7229
        %v7356 = vmul.f32 %v7353, %v7232
        %v7357 = vmul.f32 %v7353, %v7235
        %v7358 = vmul.f32 %v7353, %v7238
        %v7359 = vmul.f32 %v7353, %v7241
        %v7360 = vmul.f32 %v7353, %v7244
        %v7361 = vmul.f32 %v7353, %v7247
        %v7362 = vmul.f32 %v7353, %v7250
        %v7363 = vmul.f32 %v7353, %v7253
        %v7364 = vmul.f32 %v7353, %v7256
        %v7365 = vmul.f32 %v7353, %v7259
        %v7366 = vmul.f32 %v7353, %v7262
        %v7367 = vmul.f32 %v7353, %v7265
        %v7368 = vmul.f32 %v7353, %v7268
        %v7369 = vmul.f32 %v7353, %v7271
        %v7370 = vmul.f32 %v7353, %v7274
        %v7371 = vmul.f32 %v7353, %v7277
        %v7372 = vmul.f32 %v7353, %v7280
        %v7373 = vmul.f32 %v7353, %v7283
        %v7374 = vmul.f32 %v7353, %v7286
        %v7375 = vmul.f32 %v7353, %v7289
        %v7376 = vmul.f32 %v7353, %v7292
        %v7377 = vmul.f32 %v7353, %v7295
        %v7378 = vmul.f32 %v7353, %v7298
        %v7379 = vmul.f32 %v7353, %v7301
        %v7380 = vmul.f32 %v7353, %v7304
        %v7381 = vmul.f32 %v7353, %v7307
        %v7382 = vmul.f32 %v7353, %v7310
        %v7383 = vmul.f32 %v7353, %v7313
        %v7384 = vmul.f32 %v7353, %v7316
        %v7385 = vmul.f32 %v7353, %v7319
        %v7386 = vsel %vm7321, %v7226, %v7354
        %v7387 = vsel %vm7322, %v7229, %v7355
        %v7388 = vsel %vm7323, %v7232, %v7356
        %v7389 = vsel %vm7324, %v7235, %v7357
        %v7390 = vsel %vm7325, %v7238, %v7358
        %v7391 = vsel %vm7326, %v7241, %v7359
        %v7392 = vsel %vm7327, %v7244, %v7360
        %v7393 = vsel %vm7328, %v7247, %v7361
        %v7394 = vsel %vm7329, %v7250, %v7362
        %v7395 = vsel %vm7330, %v7253, %v7363
        %v7396 = vsel %vm7331, %v7256, %v7364
        %v7397 = vsel %vm7332, %v7259, %v7365
        %v7398 = vsel %vm7333, %v7262, %v7366
        %v7399 = vsel %vm7334, %v7265, %v7367
        %v7400 = vsel %vm7335, %v7268, %v7368
        %v7401 = vsel %vm7336, %v7271, %v7369
        %v7402 = vsel %vm7337, %v7274, %v7370
        %v7403 = vsel %vm7338, %v7277, %v7371
        %v7404 = vsel %vm7339, %v7280, %v7372
        %v7405 = vsel %vm7340, %v7283, %v7373
        %v7406 = vsel %vm7341, %v7286, %v7374
        %v7407 = vsel %vm7342, %v7289, %v7375
        %v7408 = vsel %vm7343, %v7292, %v7376
        %v7409 = vsel %vm7344, %v7295, %v7377
        %v7410 = vsel %vm7345, %v7298, %v7378
        %v7411 = vsel %vm7346, %v7301, %v7379
        %v7412 = vsel %vm7347, %v7304, %v7380
        %v7413 = vsel %vm7348, %v7307, %v7381
        %v7414 = vsel %vm7349, %v7310, %v7382
        %v7415 = vsel %vm7350, %v7313, %v7383
        %v7416 = vsel %vm7351, %v7316, %v7384
        %v7417 = vsel %vm7352, %v7319, %v7385
        %v7418 = vadd.f32 %v7386, %v7387
        %v7419 = vadd.f32 %v7418, %v7388
        %v7420 = vadd.f32 %v7419, %v7389
        %v7421 = vadd.f32 %v7420, %v7390
        %v7422 = vadd.f32 %v7421, %v7391
        %v7423 = vadd.f32 %v7422, %v7392
        %v7424 = vadd.f32 %v7423, %v7393
        %v7425 = vadd.f32 %v7424, %v7394
        %v7426 = vadd.f32 %v7425, %v7395
        %v7427 = vadd.f32 %v7426, %v7396
        %v7428 = vadd.f32 %v7427, %v7397
        %v7429 = vadd.f32 %v7428, %v7398
        %v7430 = vadd.f32 %v7429, %v7399
        %v7431 = vadd.f32 %v7430, %v7400
        %v7432 = vadd.f32 %v7431, %v7401
        %v7433 = vadd.f32 %v7432, %v7402
        %v7434 = vadd.f32 %v7433, %v7403
        %v7435 = vadd.f32 %v7434, %v7404
        %v7436 = vadd.f32 %v7435, %v7405
        %v7437 = vadd.f32 %v7436, %v7406
        %v7438 = vadd.f32 %v7437, %v7407
        %v7439 = vadd.f32 %v7438, %v7408
        %v7440 = vadd.f32 %v7439, %v7409
        %v7441 = vadd.f32 %v7440, %v7410
        %v7442 = vadd.f32 %v7441, %v7411
        %v7443 = vadd.f32 %v7442, %v7412
        %v7444 = vadd.f32 %v7443, %v7413
        %v7445 = vadd.f32 %v7444, %v7414
        %v7446 = vadd.f32 %v7445, %v7415
        %v7447 = vadd.f32 %v7446, %v7416
        %v7448 = vadd.f32 %v7447, %v7417
        %v7449 = vrot.slane %v7448, 4
        %v7450 = vadd.f32 %v7448, %v7449
        %v7451 = vrot.slane %v7450, 2
        %v7452 = vadd.f32 %v7450, %v7451
        %v7453 = vrot.slane %v7452, 1
        %v7454 = vadd.f32 %v7452, %v7453
        %v7455 = vmul.f32 %v7454, 0.00390625
        %s7456 = scalar_lea.vmem %s6, 128
        %v7457 = vld [vmem:[%s7456] sm:$0xff]
        %v7458 = vld [vmem:[%s7456 + $0x8] sm:$0xff]
        %v7459 = vld [vmem:[%s7456 + $0x10] sm:$0xff]
        %v7460 = vld [vmem:[%s7456 + $0x18] sm:$0xff]
        %v7461 = vld [vmem:[%s7456 + $0x20] sm:$0xff]
        %v7462 = vld [vmem:[%s7456 + $0x28] sm:$0xff]
        %v7463 = vld [vmem:[%s7456 + $0x30] sm:$0xff]
        %v7464 = vld [vmem:[%s7456 + $0x38] sm:$0xff]
        %v7465 = vld [vmem:[%s7456 + $0x40] sm:$0xff]
        %v7466 = vld [vmem:[%s7456 + $0x48] sm:$0xff]
        %v7467 = vld [vmem:[%s7456 + $0x50] sm:$0xff]
        %v7468 = vld [vmem:[%s7456 + $0x58] sm:$0xff]
        %v7469 = vld [vmem:[%s7456 + $0x60] sm:$0xff]
        %v7470 = vld [vmem:[%s7456 + $0x68] sm:$0xff]
        %v7471 = vld [vmem:[%s7456 + $0x70] sm:$0xff]
        %v7472 = vld [vmem:[%s7456 + $0x78] sm:$0xff]
        %7473 = vmatpush.msra.mxu0 %v7472
        %7474 = vmatpush.msra.mxu0 %v7471
        %7475 = vmatpush.msra.mxu0 %v7470
        %7476 = vmatpush.msra.mxu0 %v7469
        %7477 = vmatpush.msra.mxu0 %v7468
        %7478 = vmatpush.msra.mxu0 %v7467
        %7479 = vmatpush.msra.mxu0 %v7466
        %7480 = vmatpush.msra.mxu0 %v7465
        %7481 = vmatpush.msra.mxu0 %v7464
        %7482 = vmatpush.msra.mxu0 %v7463
        %7483 = vmatpush.msra.mxu0 %v7462
        %7484 = vmatpush.msra.mxu0 %v7461
        %7485 = vmatpush.msra.mxu0 %v7460
        %7486 = vmatpush.msra.mxu0 %v7459
        %7487 = vmatpush.msra.mxu0 %v7458
        %7488 = vmatpush.msra.mxu0 %v7457
        %7489 = vmatmul.f32.gmra.mxu0 %v7455
        %v7490 = vpop.f32.mrf.mxu0
        %v7491 = vadd.f32 0.0, %v7490
        %7492 = vdwg.mxu0
        %v7493 = vxor.u32 %v7491, 2147483648
        %v7494 = vmul.f32 %v7493, 1.442695
        %v7495 = vpow.pop %v7494
        %v7496 = vadd.f32 %v7495, 1.0
        %v7497 = vrcp.pop %v7496
        %v7498 = vmul.f32 %v7496, %v7497
        %v7499 = vsub.f32 1.0, %v7498
        %v7500 = vmul.f32 %v7497, %v7499
        %v7501 = vadd.f32 %v7497, %v7500
        %vm7502 = vweird.f32 %v7496
        %vm7503 = vweird.f32 %v7497
        %vm7504 = vmor %vm7502, %vm7503
        %v7505 = vsel %vm7504, %v7497, %v7501
        %v7506 = vand.u32 2147483647, %v7496
        %vm7507 = vcmp.eq.f32.partialorder %v7506, 8.507059e+37
        %v7508 = vand.u32 %v7496, 2147483648
        %v7509 = vor.u32 1.1754944e-38, %v7508
        %v7510 = vsel %vm7507, %v7509, %v7505
        %v7511 = vmul.f32 1.0, %v7510
        %v7512 = vmul.f32 %v7491, %v7511
        %s7513 = scalar_lea.vmem %s7, 8
        %v7514 = vld [vmem:[%s7513] sm:$0xff]
        %v7516 = vsel %vm6805, %v7512, 0
        %7518 = vmatpush.msra.mxu0 0.0
        %7519 = vmatpush.msra.mxu0 0.0
        %7520 = vmatpush.msra.mxu0 0.0
        %7521 = vmatpush.msra.mxu0 0.0
        %7522 = vmatpush.msra.mxu0 0.0
        %7523 = vmatpush.msra.mxu0 0.0
        %7524 = vmatpush.msra.mxu0 0.0
        %7525 = vmatpush.msra.mxu0 0.0
        %7526 = vmatpush.msra.mxu0 0.0
        %7527 = vmatpush.msra.mxu0 0.0
        %7528 = vmatpush.msra.mxu0 0.0
        %7529 = vmatpush.msra.mxu0 0.0
        %7530 = vmatpush.msra.mxu0 0.0
        %7531 = vmatpush.msra.mxu0 0.0
        %7532 = vmatpush.msra.mxu0 0.0
        %7533 = vmatpush.msra.mxu0 %v7514
        %7534 = vmatmul.f32.gmra.mxu0 %v7516
        %v7535 = vpop.f32.mrf.mxu0
        %v7536 = vadd.f32 0.0, %v7535
        %7537 = vdwg.mxu0
        %v7538 = vxor.u32 %v7536, 2147483648
        %v7539 = vmul.f32 %v7538, 1.442695
        %v7540 = vpow.pop %v7539
        %v7541 = vadd.f32 %v7540, 1.0
        %v7542 = vrcp.pop %v7541
        %v7543 = vmul.f32 %v7541, %v7542
        %v7544 = vsub.f32 1.0, %v7543
        %v7545 = vmul.f32 %v7542, %v7544
        %v7546 = vadd.f32 %v7542, %v7545
        %vm7547 = vweird.f32 %v7541
        %vm7548 = vweird.f32 %v7542
        %vm7549 = vmor %vm7547, %vm7548
        %v7550 = vsel %vm7549, %v7542, %v7546
        %v7551 = vand.u32 2147483647, %v7541
        %vm7552 = vcmp.eq.f32.partialorder %v7551, 8.507059e+37
        %v7553 = vand.u32 %v7541, 2147483648
        %v7554 = vor.u32 1.1754944e-38, %v7553
        %v7555 = vsel %vm7552, %v7554, %v7550
        %v7556 = vmul.f32 1.0, %v7555
        %v7557 = vperm.slane %v7556, 0
        %v7558 = vmul.f32 %v7386, %v7557
        %v7559 = vmul.f32 %v7387, %v7557
        %v7560 = vmul.f32 %v7388, %v7557
        %v7561 = vmul.f32 %v7389, %v7557
        %v7562 = vmul.f32 %v7390, %v7557
        %v7563 = vmul.f32 %v7391, %v7557
        %v7564 = vmul.f32 %v7392, %v7557
        %v7565 = vmul.f32 %v7393, %v7557
        %v7566 = vmul.f32 %v7394, %v7557
        %v7567 = vmul.f32 %v7395, %v7557
        %v7568 = vmul.f32 %v7396, %v7557
        %v7569 = vmul.f32 %v7397, %v7557
        %v7570 = vmul.f32 %v7398, %v7557
        %v7571 = vmul.f32 %v7399, %v7557
        %v7572 = vmul.f32 %v7400, %v7557
        %v7573 = vmul.f32 %v7401, %v7557
        %v7574 = vmul.f32 %v7402, %v7557
        %v7575 = vmul.f32 %v7403, %v7557
        %v7576 = vmul.f32 %v7404, %v7557
        %v7577 = vmul.f32 %v7405, %v7557
        %v7578 = vmul.f32 %v7406, %v7557
        %v7579 = vmul.f32 %v7407, %v7557
        %v7580 = vmul.f32 %v7408, %v7557
        %v7581 = vmul.f32 %v7409, %v7557
        %v7582 = vmul.f32 %v7410, %v7557
        %v7583 = vmul.f32 %v7411, %v7557
        %v7584 = vmul.f32 %v7412, %v7557
        %v7585 = vmul.f32 %v7413, %v7557
        %v7586 = vmul.f32 %v7414, %v7557
        %v7587 = vmul.f32 %v7415, %v7557
        %v7588 = vmul.f32 %v7416, %v7557
        %v7589 = vmul.f32 %v7417, %v7557
        %s7590 = scalar_lea.vmem %s8, 128
        %v7591 = vld [vmem:[%s7590] sm:$0xff]
        %v7592 = vld [vmem:[%s7590 + $0x8] sm:$0xff]
        %v7593 = vld [vmem:[%s7590 + $0x10] sm:$0xff]
        %v7594 = vld [vmem:[%s7590 + $0x18] sm:$0xff]
        %v7595 = vld [vmem:[%s7590 + $0x20] sm:$0xff]
        %v7596 = vld [vmem:[%s7590 + $0x28] sm:$0xff]
        %v7597 = vld [vmem:[%s7590 + $0x30] sm:$0xff]
        %v7598 = vld [vmem:[%s7590 + $0x38] sm:$0xff]
        %v7599 = vld [vmem:[%s7590 + $0x40] sm:$0xff]
        %v7600 = vld [vmem:[%s7590 + $0x48] sm:$0xff]
        %v7601 = vld [vmem:[%s7590 + $0x50] sm:$0xff]
        %v7602 = vld [vmem:[%s7590 + $0x58] sm:$0xff]
        %v7603 = vld [vmem:[%s7590 + $0x60] sm:$0xff]
        %v7604 = vld [vmem:[%s7590 + $0x68] sm:$0xff]
        %v7605 = vld [vmem:[%s7590 + $0x70] sm:$0xff]
        %v7606 = vld [vmem:[%s7590 + $0x78] sm:$0xff]
        %7607 = vmatpush.msra.mxu0 %v7606
        %7608 = vmatpush.msra.mxu0 %v7605
        %7609 = vmatpush.msra.mxu0 %v7604
        %7610 = vmatpush.msra.mxu0 %v7603
        %7611 = vmatpush.msra.mxu0 %v7602
        %7612 = vmatpush.msra.mxu0 %v7601
        %7613 = vmatpush.msra.mxu0 %v7600
        %7614 = vmatpush.msra.mxu0 %v7599
        %7615 = vmatpush.msra.mxu0 %v7598
        %7616 = vmatpush.msra.mxu0 %v7597
        %7617 = vmatpush.msra.mxu0 %v7596
        %7618 = vmatpush.msra.mxu0 %v7595
        %7619 = vmatpush.msra.mxu0 %v7594
        %7620 = vmatpush.msra.mxu0 %v7593
        %7621 = vmatpush.msra.mxu0 %v7592
        %7622 = vmatpush.msra.mxu0 %v7591
        %7623 = vmatmul.f32.gmra.mxu0 %v7558
        %v7624 = vpop.f32.mrf.mxu0
        %v7625 = vadd.f32 0.0, %v7624
        %7626 = vmatmul.f32.gmra.mxu0 %v7559
        %v7627 = vpop.f32.mrf.mxu0
        %v7628 = vadd.f32 0.0, %v7627
        %7629 = vmatmul.f32.gmra.mxu0 %v7560
        %v7630 = vpop.f32.mrf.mxu0
        %v7631 = vadd.f32 0.0, %v7630
        %7632 = vmatmul.f32.gmra.mxu0 %v7561
        %v7633 = vpop.f32.mrf.mxu0
        %v7634 = vadd.f32 0.0, %v7633
        %7635 = vmatmul.f32.gmra.mxu0 %v7562
        %v7636 = vpop.f32.mrf.mxu0
        %v7637 = vadd.f32 0.0, %v7636
        %7638 = vmatmul.f32.gmra.mxu0 %v7563
        %v7639 = vpop.f32.mrf.mxu0
        %v7640 = vadd.f32 0.0, %v7639
        %7641 = vmatmul.f32.gmra.mxu0 %v7564
        %v7642 = vpop.f32.mrf.mxu0
        %v7643 = vadd.f32 0.0, %v7642
        %7644 = vmatmul.f32.gmra.mxu0 %v7565
        %v7645 = vpop.f32.mrf.mxu0
        %v7646 = vadd.f32 0.0, %v7645
        %7647 = vmatmul.f32.gmra.mxu0 %v7566
        %v7648 = vpop.f32.mrf.mxu0
        %v7649 = vadd.f32 0.0, %v7648
        %7650 = vmatmul.f32.gmra.mxu0 %v7567
        %v7651 = vpop.f32.mrf.mxu0
        %v7652 = vadd.f32 0.0, %v7651
        %7653 = vmatmul.f32.gmra.mxu0 %v7568
        %v7654 = vpop.f32.mrf.mxu0
        %v7655 = vadd.f32 0.0, %v7654
        %7656 = vmatmul.f32.gmra.mxu0 %v7569
        %v7657 = vpop.f32.mrf.mxu0
        %v7658 = vadd.f32 0.0, %v7657
        %7659 = vmatmul.f32.gmra.mxu0 %v7570
        %v7660 = vpop.f32.mrf.mxu0
        %v7661 = vadd.f32 0.0, %v7660
        %7662 = vmatmul.f32.gmra.mxu0 %v7571
        %v7663 = vpop.f32.mrf.mxu0
        %v7664 = vadd.f32 0.0, %v7663
        %7665 = vmatmul.f32.gmra.mxu0 %v7572
        %v7666 = vpop.f32.mrf.mxu0
        %v7667 = vadd.f32 0.0, %v7666
        %7668 = vmatmul.f32.gmra.mxu0 %v7573
        %v7669 = vpop.f32.mrf.mxu0
        %v7670 = vadd.f32 0.0, %v7669
        %7671 = vmatmul.f32.gmra.mxu0 %v7574
        %v7672 = vpop.f32.mrf.mxu0
        %v7673 = vadd.f32 0.0, %v7672
        %7674 = vmatmul.f32.gmra.mxu0 %v7575
        %v7675 = vpop.f32.mrf.mxu0
        %v7676 = vadd.f32 0.0, %v7675
        %7677 = vmatmul.f32.gmra.mxu0 %v7576
        %v7678 = vpop.f32.mrf.mxu0
        %v7679 = vadd.f32 0.0, %v7678
        %7680 = vmatmul.f32.gmra.mxu0 %v7577
        %v7681 = vpop.f32.mrf.mxu0
        %v7682 = vadd.f32 0.0, %v7681
        %7683 = vmatmul.f32.gmra.mxu0 %v7578
        %v7684 = vpop.f32.mrf.mxu0
        %v7685 = vadd.f32 0.0, %v7684
        %7686 = vmatmul.f32.gmra.mxu0 %v7579
        %v7687 = vpop.f32.mrf.mxu0
        %v7688 = vadd.f32 0.0, %v7687
        %7689 = vmatmul.f32.gmra.mxu0 %v7580
        %v7690 = vpop.f32.mrf.mxu0
        %v7691 = vadd.f32 0.0, %v7690
        %7692 = vmatmul.f32.gmra.mxu0 %v7581
        %v7693 = vpop.f32.mrf.mxu0
        %v7694 = vadd.f32 0.0, %v7693
        %7695 = vmatmul.f32.gmra.mxu0 %v7582
        %v7696 = vpop.f32.mrf.mxu0
        %v7697 = vadd.f32 0.0, %v7696
        %7698 = vmatmul.f32.gmra.mxu0 %v7583
        %v7699 = vpop.f32.mrf.mxu0
        %v7700 = vadd.f32 0.0, %v7699
        %7701 = vmatmul.f32.gmra.mxu0 %v7584
        %v7702 = vpop.f32.mrf.mxu0
        %v7703 = vadd.f32 0.0, %v7702
        %7704 = vmatmul.f32.gmra.mxu0 %v7585
        %v7705 = vpop.f32.mrf.mxu0
        %v7706 = vadd.f32 0.0, %v7705
        %7707 = vmatmul.f32.gmra.mxu0 %v7586
        %v7708 = vpop.f32.mrf.mxu0
        %v7709 = vadd.f32 0.0, %v7708
        %7710 = vmatmul.f32.gmra.mxu0 %v7587
        %v7711 = vpop.f32.mrf.mxu0
        %v7712 = vadd.f32 0.0, %v7711
        %7713 = vmatmul.f32.gmra.mxu0 %v7588
        %v7714 = vpop.f32.mrf.mxu0
        %v7715 = vadd.f32 0.0, %v7714
        %7716 = vmatmul.f32.gmra.mxu0 %v7589
        %v7717 = vpop.f32.mrf.mxu0
        %v7718 = vadd.f32 0.0, %v7717
        %7719 = vdwg.mxu0
        %vm7720 = vcmp.ge.f32.partialorder %v7625, 0.0
        %vm7721 = vcmp.ge.f32.partialorder %v7628, 0.0
        %vm7722 = vcmp.ge.f32.partialorder %v7631, 0.0
        %vm7723 = vcmp.ge.f32.partialorder %v7634, 0.0
        %vm7724 = vcmp.ge.f32.partialorder %v7637, 0.0
        %vm7725 = vcmp.ge.f32.partialorder %v7640, 0.0
        %vm7726 = vcmp.ge.f32.partialorder %v7643, 0.0
        %vm7727 = vcmp.ge.f32.partialorder %v7646, 0.0
        %vm7728 = vcmp.ge.f32.partialorder %v7649, 0.0
        %vm7729 = vcmp.ge.f32.partialorder %v7652, 0.0
        %vm7730 = vcmp.ge.f32.partialorder %v7655, 0.0
        %vm7731 = vcmp.ge.f32.partialorder %v7658, 0.0
        %vm7732 = vcmp.ge.f32.partialorder %v7661, 0.0
        %vm7733 = vcmp.ge.f32.partialorder %v7664, 0.0
        %vm7734 = vcmp.ge.f32.partialorder %v7667, 0.0
        %vm7735 = vcmp.ge.f32.partialorder %v7670, 0.0
        %vm7736 = vcmp.ge.f32.partialorder %v7673, 0.0
        %vm7737 = vcmp.ge.f32.partialorder %v7676, 0.0
        %vm7738 = vcmp.ge.f32.partialorder %v7679, 0.0
        %vm7739 = vcmp.ge.f32.partialorder %v7682, 0.0
        %vm7740 = vcmp.ge.f32.partialorder %v7685, 0.0
        %vm7741 = vcmp.ge.f32.partialorder %v7688, 0.0
        %vm7742 = vcmp.ge.f32.partialorder %v7691, 0.0
        %vm7743 = vcmp.ge.f32.partialorder %v7694, 0.0
        %vm7744 = vcmp.ge.f32.partialorder %v7697, 0.0
        %vm7745 = vcmp.ge.f32.partialorder %v7700, 0.0
        %vm7746 = vcmp.ge.f32.partialorder %v7703, 0.0
        %vm7747 = vcmp.ge.f32.partialorder %v7706, 0.0
        %vm7748 = vcmp.ge.f32.partialorder %v7709, 0.0
        %vm7749 = vcmp.ge.f32.partialorder %v7712, 0.0
        %vm7750 = vcmp.ge.f32.partialorder %v7715, 0.0
        %vm7751 = vcmp.ge.f32.partialorder %v7718, 0.0
        %v7752 = vstv %s442
        %v7753 = vmul.f32 %v7752, %v7625
        %v7754 = vmul.f32 %v7752, %v7628
        %v7755 = vmul.f32 %v7752, %v7631
        %v7756 = vmul.f32 %v7752, %v7634
        %v7757 = vmul.f32 %v7752, %v7637
        %v7758 = vmul.f32 %v7752, %v7640
        %v7759 = vmul.f32 %v7752, %v7643
        %v7760 = vmul.f32 %v7752, %v7646
        %v7761 = vmul.f32 %v7752, %v7649
        %v7762 = vmul.f32 %v7752, %v7652
        %v7763 = vmul.f32 %v7752, %v7655
        %v7764 = vmul.f32 %v7752, %v7658
        %v7765 = vmul.f32 %v7752, %v7661
        %v7766 = vmul.f32 %v7752, %v7664
        %v7767 = vmul.f32 %v7752, %v7667
        %v7768 = vmul.f32 %v7752, %v7670
        %v7769 = vmul.f32 %v7752, %v7673
        %v7770 = vmul.f32 %v7752, %v7676
        %v7771 = vmul.f32 %v7752, %v7679
        %v7772 = vmul.f32 %v7752, %v7682
        %v7773 = vmul.f32 %v7752, %v7685
        %v7774 = vmul.f32 %v7752, %v7688
        %v7775 = vmul.f32 %v7752, %v7691
        %v7776 = vmul.f32 %v7752, %v7694
        %v7777 = vmul.f32 %v7752, %v7697
        %v7778 = vmul.f32 %v7752, %v7700
        %v7779 = vmul.f32 %v7752, %v7703
        %v7780 = vmul.f32 %v7752, %v7706
        %v7781 = vmul.f32 %v7752, %v7709
        %v7782 = vmul.f32 %v7752, %v7712
        %v7783 = vmul.f32 %v7752, %v7715
        %v7784 = vmul.f32 %v7752, %v7718
        %v7785 = vsel %vm7720, %v7625, %v7753
        %v7786 = vsel %vm7721, %v7628, %v7754
        %v7787 = vsel %vm7722, %v7631, %v7755
        %v7788 = vsel %vm7723, %v7634, %v7756
        %v7789 = vsel %vm7724, %v7637, %v7757
        %v7790 = vsel %vm7725, %v7640, %v7758
        %v7791 = vsel %vm7726, %v7643, %v7759
        %v7792 = vsel %vm7727, %v7646, %v7760
        %v7793 = vsel %vm7728, %v7649, %v7761
        %v7794 = vsel %vm7729, %v7652, %v7762
        %v7795 = vsel %vm7730, %v7655, %v7763
        %v7796 = vsel %vm7731, %v7658, %v7764
        %v7797 = vsel %vm7732, %v7661, %v7765
        %v7798 = vsel %vm7733, %v7664, %v7766
        %v7799 = vsel %vm7734, %v7667, %v7767
        %v7800 = vsel %vm7735, %v7670, %v7768
        %v7801 = vsel %vm7736, %v7673, %v7769
        %v7802 = vsel %vm7737, %v7676, %v7770
        %v7803 = vsel %vm7738, %v7679, %v7771
        %v7804 = vsel %vm7739, %v7682, %v7772
        %v7805 = vsel %vm7740, %v7685, %v7773
        %v7806 = vsel %vm7741, %v7688, %v7774
        %v7807 = vsel %vm7742, %v7691, %v7775
        %v7808 = vsel %vm7743, %v7694, %v7776
        %v7809 = vsel %vm7744, %v7697, %v7777
        %v7810 = vsel %vm7745, %v7700, %v7778
        %v7811 = vsel %vm7746, %v7703, %v7779
        %v7812 = vsel %vm7747, %v7706, %v7780
        %v7813 = vsel %vm7748, %v7709, %v7781
        %v7814 = vsel %vm7749, %v7712, %v7782
        %v7815 = vsel %vm7750, %v7715, %v7783
        %v7816 = vsel %vm7751, %v7718, %v7784
        %v7817 = vadd.f32 %v7785, %v443
        %v7818 = vadd.f32 %v7786, %v444
        %v7819 = vadd.f32 %v7787, %v445
        %v7820 = vadd.f32 %v7788, %v446
        %v7821 = vadd.f32 %v7789, %v447
        %v7822 = vadd.f32 %v7790, %v448
        %v7823 = vadd.f32 %v7791, %v449
        %v7824 = vadd.f32 %v7792, %v450
        %v7825 = vadd.f32 %v7793, %v451
        %v7826 = vadd.f32 %v7794, %v452
        %v7827 = vadd.f32 %v7795, %v453
        %v7828 = vadd.f32 %v7796, %v454
        %v7829 = vadd.f32 %v7797, %v455
        %v7830 = vadd.f32 %v7798, %v456
        %v7831 = vadd.f32 %v7799, %v457
        %v7832 = vadd.f32 %v7800, %v458
        %v7833 = vadd.f32 %v7801, %v459
        %v7834 = vadd.f32 %v7802, %v460
        %v7835 = vadd.f32 %v7803, %v461
        %v7836 = vadd.f32 %v7804, %v462
        %v7837 = vadd.f32 %v7805, %v463
        %v7838 = vadd.f32 %v7806, %v464
        %v7839 = vadd.f32 %v7807, %v465
        %v7840 = vadd.f32 %v7808, %v466
        %v7841 = vadd.f32 %v7809, %v467
        %v7842 = vadd.f32 %v7810, %v468
        %v7843 = vadd.f32 %v7811, %v469
        %v7844 = vadd.f32 %v7812, %v470
        %v7845 = vadd.f32 %v7813, %v471
        %v7846 = vadd.f32 %v7814, %v472
        %v7847 = vadd.f32 %v7815, %v473
        %v7848 = vadd.f32 %v7816, %v474
        %7849 = vst.msk [vmem:[%s366] sm:$0xff] %vm372, %v7817
        %7850 = vst.msk [vmem:[%s366 + $0x8] sm:$0xff] %vm372, %v7818
        %7851 = vst.msk [vmem:[%s366 + $0x10] sm:$0xff] %vm372, %v7819
        %7852 = vst.msk [vmem:[%s366 + $0x18] sm:$0xff] %vm372, %v7820
        %7853 = vst.msk [vmem:[%s366 + $0x20] sm:$0xff] %vm372, %v7821
        %7854 = vst.msk [vmem:[%s366 + $0x28] sm:$0xff] %vm372, %v7822
        %7855 = vst.msk [vmem:[%s366 + $0x30] sm:$0xff] %vm372, %v7823
        %7856 = vst.msk [vmem:[%s366 + $0x38] sm:$0xff] %vm372, %v7824
        %7857 = vst.msk [vmem:[%s366 + $0x40] sm:$0xff] %vm372, %v7825
        %7858 = vst.msk [vmem:[%s366 + $0x48] sm:$0xff] %vm372, %v7826
        %7859 = vst.msk [vmem:[%s366 + $0x50] sm:$0xff] %vm372, %v7827
        %7860 = vst.msk [vmem:[%s366 + $0x58] sm:$0xff] %vm372, %v7828
        %7861 = vst.msk [vmem:[%s366 + $0x60] sm:$0xff] %vm372, %v7829
        %7862 = vst.msk [vmem:[%s366 + $0x68] sm:$0xff] %vm372, %v7830
        %7863 = vst.msk [vmem:[%s366 + $0x70] sm:$0xff] %vm372, %v7831
        %7864 = vst.msk [vmem:[%s366 + $0x78] sm:$0xff] %vm372, %v7832
        %7865 = vst.msk [vmem:[%s366 + $0x80] sm:$0xff] %vm372, %v7833
        %7866 = vst.msk [vmem:[%s366 + $0x88] sm:$0xff] %vm372, %v7834
        %7867 = vst.msk [vmem:[%s366 + $0x90] sm:$0xff] %vm372, %v7835
        %7868 = vst.msk [vmem:[%s366 + $0x98] sm:$0xff] %vm372, %v7836
        %7869 = vst.msk [vmem:[%s366 + $0xa0] sm:$0xff] %vm372, %v7837
        %7870 = vst.msk [vmem:[%s366 + $0xa8] sm:$0xff] %vm372, %v7838
        %7871 = vst.msk [vmem:[%s366 + $0xb0] sm:$0xff] %vm372, %v7839
        %7872 = vst.msk [vmem:[%s366 + $0xb8] sm:$0xff] %vm372, %v7840
        %7873 = vst.msk [vmem:[%s366 + $0xc0] sm:$0xff] %vm372, %v7841
        %7874 = vst.msk [vmem:[%s366 + $0xc8] sm:$0xff] %vm372, %v7842
        %7875 = vst.msk [vmem:[%s366 + $0xd0] sm:$0xff] %vm372, %v7843
        %7876 = vst.msk [vmem:[%s366 + $0xd8] sm:$0xff] %vm372, %v7844
        %7877 = vst.msk [vmem:[%s366 + $0xe0] sm:$0xff] %vm372, %v7845
        %7878 = vst.msk [vmem:[%s366 + $0xe8] sm:$0xff] %vm372, %v7846
        %7879 = vst.msk [vmem:[%s366 + $0xf0] sm:$0xff] %vm372, %v7847
        %7880 = vst.msk [vmem:[%s366 + $0xf8] sm:$0xff] %vm372, %v7848
        %s7881 = sand.u32 %s248, 1
        %s7882 = scalar_lea.sflag [#allocation4], %s7881
        %s7883 = sand.u32 %s248, 1
        %s7884 = smul.addr %s7883, 256
        %s7885 = scalar_lea.vmem [#allocation6], %s7884
        // Predicated region
        $region65: #{skblock_forward.1} parent=59 // pred_check
          %p7886 = pneg %p258
        $region66: #{skblock_forward.1} parent=59 // pred_check_branch
          %7888 = sbr.rel (%p7886) target = $region68
        $region67: #{skblock_forward.1} parent=59 // pred_region
          %7890 = vsyncadd %s7882, 0
          %s7891 = smul.addr %s25, 32
          %s7892 = smul.addr %s7891, 8
          %s7893 = scalar_lea.hbm %s10, %s7892
          %s7894 = sshll.u32 %s7885, 4
          %s7895 = int_to_ptr.vmem [resolvable:$true] %s7894
          %s7896 = sshll.u32 %s7893, 4
          %s7897 = int_to_ptr.hbm [resolvable:$true] %s7896
          %7902 = dma.vmem_to_hbm [thread:$0]  %s7895, 4096, %s7897, %s7882, 128, 128, 8
        $region68: #{skblock_forward.1} parent=59 // pred_fallthru
          _
      $region60: #{skblock_forward.1} parent=5 // pred_fallthru
        _
      %p7903 = scmp.le.s32.totalorder 2, %s20
      // Predicated region
      $region69: #{skblock_forward.1} parent=5 // pred_check
        %p7904 = pneg %p7903
      $region70: #{skblock_forward.1} parent=5 // pred_check_branch
        %7906 = sbr.rel (%p7904) target = $region72
      $region71: #{skblock_forward.1} parent=5 // pred_region
        %s7907 = ssub.s32 %s20, 2
        // Predicated region
        $region73: #{skblock_forward.1} parent=71 // pred_check
          %p7908 = pneg %p264
        $region74: #{skblock_forward.1} parent=71 // pred_check_branch
          %7910 = sbr.rel (%p7908) target = $region76
        $region75: #{skblock_forward.1} parent=71 // pred_region
          %s7911 = sand.u32 %s249, 1
          %s7912 = scalar_lea.sflag [#allocation4], %s7911
          %s7913 = sand.u32 %s249, 1
          %s7914 = smul.addr %s7913, 256
          %s7915 = scalar_lea.vmem [#allocation6], %s7914
          %7917 = dma.done %s7912, 4096
        $region76: #{skblock_forward.1} parent=71 // pred_fallthru
          _
      $region72: #{skblock_forward.1} parent=5 // pred_fallthru
        _
    $region6: #{skblock_forward.1} parent=1 // loop_footer
      %s24 = sadd.s32 1, %s20
    $region7: #{skblock_forward.1} parent=1 // loop_footer_branch
      %19 = sbr.rel target = $region3
    $region8: #{skblock_forward.1} parent=1 // loop_exit
      _
    %7918 = vsyncpa [#allocation4], 1
    %s7919 = scalar_lea.sflag [#allocation4], 1
    %7920 = vsyncpa %s7919, 1
    %7921 = vsyncpa [#allocation5], 1
    %s7922 = scalar_lea.sflag [#allocation5], 1
    %7923 = vsyncpa %s7922, 1

</llo_original>
